<compile_context>
chip_gen: v5e
topology: v5e:2x2
jax: 0.10.0
libtpu: 0.0.40
codegen_flags: <defaults>
</compile_context>

<pallas_src>
import functools

import jax
import jax.numpy as jnp
from jax.experimental import pallas as pl
from jax.experimental.pallas import tpu as pltpu  # noqa: F401  (no TPU-specific params needed)


# Layer configs: (kh, kw, cin, cout, (sh, sw), (ph, pw), relu)
CONV1_CFG = [
    (5, 5, 1, 24, (2, 2), (0, 0), True),
    (5, 5, 24, 36, (2, 2), (0, 0), True),
    (5, 5, 36, 48, (2, 2), (0, 0), True),
    (3, 3, 48, 64, (1, 1), (1, 1), True),
    (3, 3, 64, 64, (1, 1), (0, 0), False),
]
CONV2_CFG = [
    (5, 5, 1, 6, (2, 2), (0, 0), True),
    (5, 5, 6, 12, (2, 2), (0, 0), True),
    (5, 5, 12, 18, (2, 2), (0, 0), False),
]
CONV3_CFG = [
    (5, 5, 1, 6, (2, 2), (0, 0), True),
    (5, 5, 6, 12, (2, 2), (0, 0), False),
]


# ------------------------------ Pallas kernels ------------------------------

def _multi_gemm_kernel(*refs, relus):
    """`n` independent GEMM + bias (+ReLU) problems fused into one launch.

    Ref order: x_0..x_{n-1}, w_0..w_{n-1}, b_0..b_{n-1}, o_0..o_{n-1}.
    Every operand is a single full-array VMEM block; f32 accumulate on MXU.
    """
    n = len(relus)
    x_refs = refs[0:n]
    w_refs = refs[n:2 * n]
    b_refs = refs[2 * n:3 * n]
    o_refs = refs[3 * n:4 * n]
    for xr, wr, br, orf, relu in zip(x_refs, w_refs, b_refs, o_refs, relus):
        acc = jnp.dot(xr[...], wr[...], preferred_element_type=jnp.float32)
        acc = acc + br[...]
        if relu:
            acc = jnp.maximum(acc, 0.0)
        orf[...] = acc.astype(orf.dtype)


def _fc_head_kernel(f1_ref, f2_ref, f3_ref, w1a_ref, w1b_ref, w1c_ref,
                    w2_ref, w3_ref, w4_ref, o_ref):
    """Fused flatten/concat + bias-free MLP head 1454->100->50->10->6 (f32).

    w1 arrives pre-split into three row blocks (row-permuted to NHWC order),
    so `concat(f1,f2,f3) @ w1` becomes three dots accumulated in VMEM.
    """
    h = jnp.dot(f1_ref[...], w1a_ref[...], preferred_element_type=jnp.float32)
    h = h + jnp.dot(f2_ref[...], w1b_ref[...], preferred_element_type=jnp.float32)
    h = h + jnp.dot(f3_ref[...], w1c_ref[...], preferred_element_type=jnp.float32)
    h = jnp.maximum(h, 0.0)
    h = jnp.dot(h, w2_ref[...], preferred_element_type=jnp.float32)
    h = jnp.maximum(h, 0.0)
    h = jnp.dot(h, w3_ref[...], preferred_element_type=jnp.float32)
    h = jnp.maximum(h, 0.0)
    o_ref[...] = jnp.dot(h, w4_ref[...], preferred_element_type=jnp.float32)


# ------------------------------ Pallas wrappers ------------------------------

def fused_conv_gemms(xs, ws, bs, relus):
    """One pallas_call running len(xs) independent (M,K)@(K,Cout)+bias GEMMs."""
    out_shape = tuple(
        jax.ShapeDtypeStruct((x.shape[0], w.shape[1]), jnp.float32)
        for x, w in zip(xs, ws))
    return pl.pallas_call(
        functools.partial(_multi_gemm_kernel, relus=tuple(relus)),
        out_shape=out_shape,
    )(*xs, *ws, *bs)


def pallas_fc_head(f1, f2, f3, lin):
    """Fused concat + 4-layer bias-free FC head in a single pallas_call."""
    n = f1.shape[0]
    return pl.pallas_call(
        _fc_head_kernel,
        out_shape=jax.ShapeDtypeStruct((n, 6), jnp.float32),
    )(f1, f2, f3, *lin)


# ----------------------------------- im2col ----------------------------------

def im2col(x, cfg):
    """Patch matrix (N*Ho*Wo, kh*kw*C) in (n,oh,ow) row / (i,j,c) column order.

    `x` is (N, H, W, C), or squeezed (N, H, W) for Cin == 1 so the slicing is
    lane-dense (W on lanes).  Pure XLA glue; the GEMM runs in Pallas.
    """
    kh, kw, cin, _, (sh, sw), (ph, pw), _ = cfg
    squeezed = (x.ndim == 3)
    if ph or pw:
        pad_width = [(0, 0), (ph, ph), (pw, pw)]
        if not squeezed:
            pad_width.append((0, 0))
        x = jnp.pad(x, pad_width)
    n, h, w = x.shape[0], x.shape[1], x.shape[2]
    c = 1 if squeezed else x.shape[3]
    assert c == cin, (c, cin)
    ho = (h - kh) // sh + 1
    wo = (w - kw) // sw + 1
    cols = []
    for i in range(kh):
        for j in range(kw):
            if squeezed:
                cols.append(x[:, i:i + sh * ho:sh, j:j + sw * wo:sw])
            else:
                cols.append(x[:, i:i + sh * ho:sh, j:j + sw * wo:sw, :])
    p = jnp.stack(cols, axis=3)                    # (N,Ho,Wo,kh*kw[,C])
    return p.reshape(n * ho * wo, kh * kw * c), ho, wo


# ----------------------- deterministic parameter init ------------------------

def _conv_params(key, cout, cin, kh, kw):
    k1, k2 = jax.random.split(key)
    fan_in = cin * kh * kw
    bound = 1.0 / jnp.sqrt(fan_in)
    w = jax.random.uniform(k1, (cout, cin, kh, kw), jnp.float32, -bound, bound)
    b = jax.random.uniform(k2, (cout,), jnp.float32, -bound, bound)
    return {"w": w, "b": b}


def _linear_params(key, fout, fin):
    bound = 1.0 / jnp.sqrt(fin)
    w = jax.random.uniform(key, (fin, fout), jnp.float32, -bound, bound)
    return {"w": w}


def init_params(key):
    keys = jax.random.split(key, 14)
    return {
        "conv1": [
            _conv_params(keys[0], 24, 1, 5, 5),
            _conv_params(keys[1], 36, 24, 5, 5),
            _conv_params(keys[2], 48, 36, 5, 5),
            _conv_params(keys[3], 64, 48, 3, 3),
            _conv_params(keys[4], 64, 64, 3, 3),
        ],
        "conv2": [
            _conv_params(keys[5], 6, 1, 5, 5),
            _conv_params(keys[6], 12, 6, 5, 5),
            _conv_params(keys[7], 18, 12, 5, 5),
        ],
        "conv3": [
            _conv_params(keys[8], 6, 1, 5, 5),
            _conv_params(keys[9], 12, 6, 5, 5),
        ],
        "linear": [
            _linear_params(keys[10], 100, 1454),
            _linear_params(keys[11], 50, 100),
            _linear_params(keys[12], 10, 50),
            _linear_params(keys[13], 6, 10),
        ],
    }


# ------------------------- one-time weight pre-packing ------------------------

def prepare_params(params):
    """Re-layout all weights ONCE, outside the jitted forward (zero runtime cost)."""

    def pack_conv(p):
        w, b = p["w"], p["b"]
        cout, cin, kh, kw = w.shape
        # (Cout,Cin,kh,kw) -> (kh,kw,Cin,Cout) -> (K, Cout): matches im2col order.
        wmat = jnp.transpose(w, (2, 3, 1, 0)).reshape(kh * kw * cin, cout)
        bias = b.reshape(1, cout)
        return {"w": wmat.astype(jnp.float32), "b": bias.astype(jnp.float32)}

    def nchw_rows_to_nhwc(wblk, c, h, w):
        # Reorder w1 rows from PyTorch's NCHW-flatten order to our NHWC order.
        return (wblk.reshape(c, h, w, wblk.shape[1])
                    .transpose(1, 2, 0, 3)
                    .reshape(c * h * w, wblk.shape[1]))

    w1 = params["linear"][0]["w"]                 # (1454, 100), torch concat order
    w1a = nchw_rows_to_nhwc(w1[:1280], 64, 2, 10)          # conv1 features
    w1b = nchw_rows_to_nhwc(w1[1280:1442], 18, 3, 3)       # conv2 features
    w1c = nchw_rows_to_nhwc(w1[1442:1454], 12, 1, 1)       # conv3 features
    lin = [w1a, w1b, w1c,
           params["linear"][1]["w"],
           params["linear"][2]["w"],
           params["linear"][3]["w"]]
    lin = [w.astype(jnp.float32) for w in lin]

    return {
        "conv1": [pack_conv(p) for p in params["conv1"]],
        "conv2": [pack_conv(p) for p in params["conv2"]],
        "conv3": [pack_conv(p) for p in params["conv3"]],
        "linear": lin,
    }


# ---------------------------------- forward ----------------------------------

def nvidia_arch_forward(packed, x1, x2, x3):
    n = x1.shape[0]
    cfgs = (CONV1_CFG, CONV2_CFG, CONV3_CFG)
    convs = (packed["conv1"], packed["conv2"], packed["conv3"])

    # Squeeze the singleton input channel: first-layer im2col slices a dense
    # (N, H, W) array with W on lanes instead of NHWC with C == 1.
    acts = [x1[:, 0].astype(jnp.float32),
            x2[:, 0].astype(jnp.float32),
            x3[:, 0].astype(jnp.float32)]
    feats = [None, None, None]

    # One fused pallas_call per depth level across all still-live branches.
    max_depth = max(len(c) for c in cfgs)
    for d in range(max_depth):
        live = [b for b in range(3) if d < len(cfgs[b])]
        xs, ws, bs, relus, metas = [], [], [], [], []
        for b in live:
            cfg = cfgs[b][d]
            p, ho, wo = im2col(acts[b], cfg)
            xs.append(p)
            ws.append(convs[b][d]["w"])
            bs.append(convs[b][d]["b"])
            relus.append(cfg[-1])
            metas.append((b, ho, wo, cfg[3]))
        outs = fused_conv_gemms(xs, ws, bs, relus)
        for (b, ho, wo, cout), o in zip(metas, outs):
            if d + 1 < len(cfgs[b]):
                acts[b] = o.reshape(n, ho, wo, cout)        # stay NHWC, no transpose
            else:
                feats[b] = o.reshape(n, ho * wo * cout)     # NHWC-flattened features

    # Flatten / concat / NCHW-order transpose / pad are all folded into the
    # FC-head kernel (w1 was split + row-permuted at pack time).
    return pallas_fc_head(feats[0], feats[1], feats[2], packed["linear"])


nvidia_arch_forward_jit = jax.jit(nvidia_arch_forward)


if __name__ == "__main__":
    key = jax.random.PRNGKey(0)
    k_params, k1, k2, k3 = jax.random.split(key, 4)

    params = init_params(k_params)
    packed = prepare_params(params)   # one-time weight re-layout

    # Input shapes chosen so the flattened concat is exactly 1454 features
    # (as required by the first Linear layer):
    #   x1: main camera 60x120 -> 64*2*10 = 1280
    #   x2: minimap     50x50  -> 18*3*3  = 162
    #   x3: speedometer 14x14  -> 12*1*1  = 12
    batch = 2
    x1 = jax.random.normal(k1, (batch, 1, 60, 120), jnp.float32)
    x2 = jax.random.normal(k2, (batch, 1, 50, 50), jnp.float32)
    x3 = jax.random.normal(k3, (batch, 1, 14, 14), jnp.float32)

    out = nvidia_arch_forward_jit(packed, x1, x2, x3)
    out = jax.block_until_ready(out)
    assert out.shape == (batch, 6), out.shape
    print("KERNEL_OK")
</pallas_src>

<mosaic_0001>
module attributes {stable_mosaic.version = 11 : i64} {
  func.func @_multi_gemm_kernel(%arg0: memref<3248x25xf32, #tpu.memory_space<vmem>>, %arg1: memref<1058x25xf32, #tpu.memory_space<vmem>>, %arg2: memref<50x25xf32, #tpu.memory_space<vmem>>, %arg3: memref<25x24xf32, #tpu.memory_space<vmem>>, %arg4: memref<25x6xf32, #tpu.memory_space<vmem>>, %arg5: memref<25x6xf32, #tpu.memory_space<vmem>>, %arg6: memref<1x24xf32, #tpu.memory_space<vmem>>, %arg7: memref<1x6xf32, #tpu.memory_space<vmem>>, %arg8: memref<1x6xf32, #tpu.memory_space<vmem>>, %arg9: memref<3248x24xf32, #tpu.memory_space<vmem>>, %arg10: memref<1058x6xf32, #tpu.memory_space<vmem>>, %arg11: memref<50x6xf32, #tpu.memory_space<vmem>>) attributes {dimension_semantics = [], scalar_prefetch = 0 : i64, scratch_operands = 0 : i64, tpu.core_type = #tpu.core_type<tc>} {
    %c0 = arith.constant 0 : index
    %c0_0 = arith.constant 0 : index
    %0 = vector.load %arg0[%c0, %c0_0] : memref<3248x25xf32, #tpu.memory_space<vmem>>, vector<3248x25xf32>
    %c0_1 = arith.constant 0 : index
    %c0_2 = arith.constant 0 : index
    %1 = vector.load %arg3[%c0_1, %c0_2] : memref<25x24xf32, #tpu.memory_space<vmem>>, vector<25x24xf32>
    %cst = arith.constant dense<0.000000e+00> : vector<3248x24xf32>
    %2 = tpu.matmul %0, %1, %cst {dimension_numbers = #tpu.dot_dimension_numbers<[1], [0], [0], [1], [0, 0, 1, 1], [], []>} : vector<3248x25xf32>, vector<25x24xf32>, vector<3248x24xf32> -> vector<3248x24xf32>
    %c0_3 = arith.constant 0 : index
    %c0_4 = arith.constant 0 : index
    %3 = vector.load %arg6[%c0_3, %c0_4] : memref<1x24xf32, #tpu.memory_space<vmem>>, vector<1x24xf32>
    %4 = vector.broadcast %3 : vector<1x24xf32> to vector<3248x24xf32>
    %5 = arith.addf %2, %4 : vector<3248x24xf32>
    %cst_5 = arith.constant 0.000000e+00 : f32
    %6 = vector.broadcast %cst_5 : f32 to vector<3248x24xf32>
    %7 = arith.maximumf %5, %6 : vector<3248x24xf32>
    %c0_6 = arith.constant 0 : index
    %c0_7 = arith.constant 0 : index
    %8 = vector.load %arg9[%c0_6, %c0_7] : memref<3248x24xf32, #tpu.memory_space<vmem>>, vector<3248x24xf32>
    tpu.vector_store %arg9[%c0_6, %c0_7], %7 {strides = array<i32>} : memref<3248x24xf32, #tpu.memory_space<vmem>>, vector<3248x24xf32>,
    %c0_8 = arith.constant 0 : index
    %c0_9 = arith.constant 0 : index
    %9 = vector.load %arg1[%c0_8, %c0_9] : memref<1058x25xf32, #tpu.memory_space<vmem>>, vector<1058x25xf32>
    %c0_10 = arith.constant 0 : index
    %c0_11 = arith.constant 0 : index
    %10 = vector.load %arg4[%c0_10, %c0_11] : memref<25x6xf32, #tpu.memory_space<vmem>>, vector<25x6xf32>
    %cst_12 = arith.constant dense<0.000000e+00> : vector<1058x6xf32>
    %11 = tpu.matmul %9, %10, %cst_12 {dimension_numbers = #tpu.dot_dimension_numbers<[1], [0], [0], [1], [0, 0, 1, 1], [], []>} : vector<1058x25xf32>, vector<25x6xf32>, vector<1058x6xf32> -> vector<1058x6xf32>
    %c0_13 = arith.constant 0 : index
    %c0_14 = arith.constant 0 : index
    %12 = vector.load %arg7[%c0_13, %c0_14] : memref<1x6xf32, #tpu.memory_space<vmem>>, vector<1x6xf32>
    %13 = vector.broadcast %12 : vector<1x6xf32> to vector<1058x6xf32>
    %14 = arith.addf %11, %13 : vector<1058x6xf32>
    %cst_15 = arith.constant 0.000000e+00 : f32
    %15 = vector.broadcast %cst_15 : f32 to vector<1058x6xf32>
    %16 = arith.maximumf %14, %15 : vector<1058x6xf32>
    %c0_16 = arith.constant 0 : index
    %c0_17 = arith.constant 0 : index
    %17 = vector.load %arg10[%c0_16, %c0_17] : memref<1058x6xf32, #tpu.memory_space<vmem>>, vector<1058x6xf32>
    tpu.vector_store %arg10[%c0_16, %c0_17], %16 {strides = array<i32>} : memref<1058x6xf32, #tpu.memory_space<vmem>>, vector<1058x6xf32>,
    %c0_18 = arith.constant 0 : index
    %c0_19 = arith.constant 0 : index
    %18 = vector.load %arg2[%c0_18, %c0_19] : memref<50x25xf32, #tpu.memory_space<vmem>>, vector<50x25xf32>
    %c0_20 = arith.constant 0 : index
    %c0_21 = arith.constant 0 : index
    %19 = vector.load %arg5[%c0_20, %c0_21] : memref<25x6xf32, #tpu.memory_space<vmem>>, vector<25x6xf32>
    %cst_22 = arith.constant dense<0.000000e+00> : vector<50x6xf32>
    %20 = tpu.matmul %18, %19, %cst_22 {dimension_numbers = #tpu.dot_dimension_numbers<[1], [0], [0], [1], [0, 0, 1, 1], [], []>} : vector<50x25xf32>, vector<25x6xf32>, vector<50x6xf32> -> vector<50x6xf32>
    %c0_23 = arith.constant 0 : index
    %c0_24 = arith.constant 0 : index
    %21 = vector.load %arg8[%c0_23, %c0_24] : memref<1x6xf32, #tpu.memory_space<vmem>>, vector<1x6xf32>
    %22 = vector.broadcast %21 : vector<1x6xf32> to vector<50x6xf32>
    %23 = arith.addf %20, %22 : vector<50x6xf32>
    %cst_25 = arith.constant 0.000000e+00 : f32
    %24 = vector.broadcast %cst_25 : f32 to vector<50x6xf32>
    %25 = arith.maximumf %23, %24 : vector<50x6xf32>
    %c0_26 = arith.constant 0 : index
    %c0_27 = arith.constant 0 : index
    %26 = vector.load %arg11[%c0_26, %c0_27] : memref<50x6xf32, #tpu.memory_space<vmem>>, vector<50x6xf32>
    tpu.vector_store %arg11[%c0_26, %c0_27], %25 {strides = array<i32>} : memref<50x6xf32, #tpu.memory_space<vmem>>, vector<50x6xf32>,
    return
  }
}

module attributes {stable_mosaic.version = 11 : i64} {
  func.func @_multi_gemm_kernel(%arg0: memref<648x600xf32, #tpu.memory_space<vmem>>, %arg1: memref<200x150xf32, #tpu.memory_space<vmem>>, %arg2: memref<2x150xf32, #tpu.memory_space<vmem>>, %arg3: memref<600x36xf32, #tpu.memory_space<vmem>>, %arg4: memref<150x12xf32, #tpu.memory_space<vmem>>, %arg5: memref<150x12xf32, #tpu.memory_space<vmem>>, %arg6: memref<1x36xf32, #tpu.memory_space<vmem>>, %arg7: memref<1x12xf32, #tpu.memory_space<vmem>>, %arg8: memref<1x12xf32, #tpu.memory_space<vmem>>, %arg9: memref<648x36xf32, #tpu.memory_space<vmem>>, %arg10: memref<200x12xf32, #tpu.memory_space<vmem>>, %arg11: memref<2x12xf32, #tpu.memory_space<vmem>>) attributes {dimension_semantics = [], scalar_prefetch = 0 : i64, scratch_operands = 0 : i64, tpu.core_type = #tpu.core_type<tc>} {
    %c0 = arith.constant 0 : index
    %c0_0 = arith.constant 0 : index
    %0 = vector.load %arg0[%c0, %c0_0] : memref<648x600xf32, #tpu.memory_space<vmem>>, vector<648x600xf32>
    %c0_1 = arith.constant 0 : index
    %c0_2 = arith.constant 0 : index
    %1 = vector.load %arg3[%c0_1, %c0_2] : memref<600x36xf32, #tpu.memory_space<vmem>>, vector<600x36xf32>
    %cst = arith.constant dense<0.000000e+00> : vector<648x36xf32>
    %2 = tpu.matmul %0, %1, %cst {dimension_numbers = #tpu.dot_dimension_numbers<[1], [0], [0], [1], [0, 0, 1, 1], [], []>} : vector<648x600xf32>, vector<600x36xf32>, vector<648x36xf32> -> vector<648x36xf32>
    %c0_3 = arith.constant 0 : index
    %c0_4 = arith.constant 0 : index
    %3 = vector.load %arg6[%c0_3, %c0_4] : memref<1x36xf32, #tpu.memory_space<vmem>>, vector<1x36xf32>
    %4 = vector.broadcast %3 : vector<1x36xf32> to vector<648x36xf32>
    %5 = arith.addf %2, %4 : vector<648x36xf32>
    %cst_5 = arith.constant 0.000000e+00 : f32
    %6 = vector.broadcast %cst_5 : f32 to vector<648x36xf32>
    %7 = arith.maximumf %5, %6 : vector<648x36xf32>
    %c0_6 = arith.constant 0 : index
    %c0_7 = arith.constant 0 : index
    %8 = vector.load %arg9[%c0_6, %c0_7] : memref<648x36xf32, #tpu.memory_space<vmem>>, vector<648x36xf32>
    tpu.vector_store %arg9[%c0_6, %c0_7], %7 {strides = array<i32>} : memref<648x36xf32, #tpu.memory_space<vmem>>, vector<648x36xf32>,
    %c0_8 = arith.constant 0 : index
    %c0_9 = arith.constant 0 : index
    %9 = vector.load %arg1[%c0_8, %c0_9] : memref<200x150xf32, #tpu.memory_space<vmem>>, vector<200x150xf32>
    %c0_10 = arith.constant 0 : index
    %c0_11 = arith.constant 0 : index
    %10 = vector.load %arg4[%c0_10, %c0_11] : memref<150x12xf32, #tpu.memory_space<vmem>>, vector<150x12xf32>
    %cst_12 = arith.constant dense<0.000000e+00> : vector<200x12xf32>
    %11 = tpu.matmul %9, %10, %cst_12 {dimension_numbers = #tpu.dot_dimension_numbers<[1], [0], [0], [1], [0, 0, 1, 1], [], []>} : vector<200x150xf32>, vector<150x12xf32>, vector<200x12xf32> -> vector<200x12xf32>
    %c0_13 = arith.constant 0 : index
    %c0_14 = arith.constant 0 : index
    %12 = vector.load %arg7[%c0_13, %c0_14] : memref<1x12xf32, #tpu.memory_space<vmem>>, vector<1x12xf32>
    %13 = vector.broadcast %12 : vector<1x12xf32> to vector<200x12xf32>
    %14 = arith.addf %11, %13 : vector<200x12xf32>
    %cst_15 = arith.constant 0.000000e+00 : f32
    %15 = vector.broadcast %cst_15 : f32 to vector<200x12xf32>
    %16 = arith.maximumf %14, %15 : vector<200x12xf32>
    %c0_16 = arith.constant 0 : index
    %c0_17 = arith.constant 0 : index
    %17 = vector.load %arg10[%c0_16, %c0_17] : memref<200x12xf32, #tpu.memory_space<vmem>>, vector<200x12xf32>
    tpu.vector_store %arg10[%c0_16, %c0_17], %16 {strides = array<i32>} : memref<200x12xf32, #tpu.memory_space<vmem>>, vector<200x12xf32>,
    %c0_18 = arith.constant 0 : index
    %c0_19 = arith.constant 0 : index
    %18 = vector.load %arg2[%c0_18, %c0_19] : memref<2x150xf32, #tpu.memory_space<vmem>>, vector<2x150xf32>
    %c0_20 = arith.constant 0 : index
    %c0_21 = arith.constant 0 : index
    %19 = vector.load %arg5[%c0_20, %c0_21] : memref<150x12xf32, #tpu.memory_space<vmem>>, vector<150x12xf32>
    %cst_22 = arith.constant dense<0.000000e+00> : vector<2x12xf32>
    %20 = tpu.matmul %18, %19, %cst_22 {dimension_numbers = #tpu.dot_dimension_numbers<[1], [0], [0], [1], [0, 0, 1, 1], [], []>} : vector<2x150xf32>, vector<150x12xf32>, vector<2x12xf32> -> vector<2x12xf32>
    %c0_23 = arith.constant 0 : index
    %c0_24 = arith.constant 0 : index
    %21 = vector.load %arg8[%c0_23, %c0_24] : memref<1x12xf32, #tpu.memory_space<vmem>>, vector<1x12xf32>
    %22 = vector.broadcast %21 : vector<1x12xf32> to vector<2x12xf32>
    %23 = arith.addf %20, %22 : vector<2x12xf32>
    %c0_25 = arith.constant 0 : index
    %c0_26 = arith.constant 0 : index
    %24 = vector.load %arg11[%c0_25, %c0_26] : memref<2x12xf32, #tpu.memory_space<vmem>>, vector<2x12xf32>
    tpu.vector_store %arg11[%c0_25, %c0_26], %23 {strides = array<i32>} : memref<2x12xf32, #tpu.memory_space<vmem>>, vector<2x12xf32>,
    return
  }
}

module attributes {stable_mosaic.version = 11 : i64} {
  func.func @_multi_gemm_kernel(%arg0: memref<96x900xf32, #tpu.memory_space<vmem>>, %arg1: memref<18x300xf32, #tpu.memory_space<vmem>>, %arg2: memref<900x48xf32, #tpu.memory_space<vmem>>, %arg3: memref<300x18xf32, #tpu.memory_space<vmem>>, %arg4: memref<1x48xf32, #tpu.memory_space<vmem>>, %arg5: memref<1x18xf32, #tpu.memory_space<vmem>>, %arg6: memref<96x48xf32, #tpu.memory_space<vmem>>, %arg7: memref<18x18xf32, #tpu.memory_space<vmem>>) attributes {dimension_semantics = [], scalar_prefetch = 0 : i64, scratch_operands = 0 : i64, tpu.core_type = #tpu.core_type<tc>} {
    %c0 = arith.constant 0 : index
    %c0_0 = arith.constant 0 : index
    %0 = vector.load %arg0[%c0, %c0_0] : memref<96x900xf32, #tpu.memory_space<vmem>>, vector<96x900xf32>
    %c0_1 = arith.constant 0 : index
    %c0_2 = arith.constant 0 : index
    %1 = vector.load %arg2[%c0_1, %c0_2] : memref<900x48xf32, #tpu.memory_space<vmem>>, vector<900x48xf32>
    %cst = arith.constant dense<0.000000e+00> : vector<96x48xf32>
    %2 = tpu.matmul %0, %1, %cst {dimension_numbers = #tpu.dot_dimension_numbers<[1], [0], [0], [1], [0, 0, 1, 1], [], []>} : vector<96x900xf32>, vector<900x48xf32>, vector<96x48xf32> -> vector<96x48xf32>
    %c0_3 = arith.constant 0 : index
    %c0_4 = arith.constant 0 : index
    %3 = vector.load %arg4[%c0_3, %c0_4] : memref<1x48xf32, #tpu.memory_space<vmem>>, vector<1x48xf32>
    %4 = vector.broadcast %3 : vector<1x48xf32> to vector<96x48xf32>
    %5 = arith.addf %2, %4 : vector<96x48xf32>
    %cst_5 = arith.constant 0.000000e+00 : f32
    %6 = vector.broadcast %cst_5 : f32 to vector<96x48xf32>
    %7 = arith.maximumf %5, %6 : vector<96x48xf32>
    %c0_6 = arith.constant 0 : index
    %c0_7 = arith.constant 0 : index
    %8 = vector.load %arg6[%c0_6, %c0_7] : memref<96x48xf32, #tpu.memory_space<vmem>>, vector<96x48xf32>
    tpu.vector_store %arg6[%c0_6, %c0_7], %7 {strides = array<i32>} : memref<96x48xf32, #tpu.memory_space<vmem>>, vector<96x48xf32>,
    %c0_8 = arith.constant 0 : index
    %c0_9 = arith.constant 0 : index
    %9 = vector.load %arg1[%c0_8, %c0_9] : memref<18x300xf32, #tpu.memory_space<vmem>>, vector<18x300xf32>
    %c0_10 = arith.constant 0 : index
    %c0_11 = arith.constant 0 : index
    %10 = vector.load %arg3[%c0_10, %c0_11] : memref<300x18xf32, #tpu.memory_space<vmem>>, vector<300x18xf32>
    %cst_12 = arith.constant dense<0.000000e+00> : vector<18x18xf32>
    %11 = tpu.matmul %9, %10, %cst_12 {dimension_numbers = #tpu.dot_dimension_numbers<[1], [0], [0], [1], [0, 0, 1, 1], [], []>} : vector<18x300xf32>, vector<300x18xf32>, vector<18x18xf32> -> vector<18x18xf32>
    %c0_13 = arith.constant 0 : index
    %c0_14 = arith.constant 0 : index
    %12 = vector.load %arg5[%c0_13, %c0_14] : memref<1x18xf32, #tpu.memory_space<vmem>>, vector<1x18xf32>
    %13 = vector.broadcast %12 : vector<1x18xf32> to vector<18x18xf32>
    %14 = arith.addf %11, %13 : vector<18x18xf32>
    %c0_15 = arith.constant 0 : index
    %c0_16 = arith.constant 0 : index
    %15 = vector.load %arg7[%c0_15, %c0_16] : memref<18x18xf32, #tpu.memory_space<vmem>>, vector<18x18xf32>
    tpu.vector_store %arg7[%c0_15, %c0_16], %14 {strides = array<i32>} : memref<18x18xf32, #tpu.memory_space<vmem>>, vector<18x18xf32>,
    return
  }
}

module attributes {stable_mosaic.version = 11 : i64} {
  func.func @_multi_gemm_kernel(%arg0: memref<96x432xf32, #tpu.memory_space<vmem>>, %arg1: memref<432x64xf32, #tpu.memory_space<vmem>>, %arg2: memref<1x64xf32, #tpu.memory_space<vmem>>, %arg3: memref<96x64xf32, #tpu.memory_space<vmem>>) attributes {dimension_semantics = [], scalar_prefetch = 0 : i64, scratch_operands = 0 : i64, tpu.core_type = #tpu.core_type<tc>} {
    %c0 = arith.constant 0 : index
    %c0_0 = arith.constant 0 : index
    %0 = vector.load %arg0[%c0, %c0_0] : memref<96x432xf32, #tpu.memory_space<vmem>>, vector<96x432xf32>
    %c0_1 = arith.constant 0 : index
    %c0_2 = arith.constant 0 : index
    %1 = vector.load %arg1[%c0_1, %c0_2] : memref<432x64xf32, #tpu.memory_space<vmem>>, vector<432x64xf32>
    %cst = arith.constant dense<0.000000e+00> : vector<96x64xf32>
    %2 = tpu.matmul %0, %1, %cst {dimension_numbers = #tpu.dot_dimension_numbers<[1], [0], [0], [1], [0, 0, 1, 1], [], []>} : vector<96x432xf32>, vector<432x64xf32>, vector<96x64xf32> -> vector<96x64xf32>
    %c0_3 = arith.constant 0 : index
    %c0_4 = arith.constant 0 : index
    %3 = vector.load %arg2[%c0_3, %c0_4] : memref<1x64xf32, #tpu.memory_space<vmem>>, vector<1x64xf32>
    %4 = vector.broadcast %3 : vector<1x64xf32> to vector<96x64xf32>
    %5 = arith.addf %2, %4 : vector<96x64xf32>
    %cst_5 = arith.constant 0.000000e+00 : f32
    %6 = vector.broadcast %cst_5 : f32 to vector<96x64xf32>
    %7 = arith.maximumf %5, %6 : vector<96x64xf32>
    %c0_6 = arith.constant 0 : index
    %c0_7 = arith.constant 0 : index
    %8 = vector.load %arg3[%c0_6, %c0_7] : memref<96x64xf32, #tpu.memory_space<vmem>>, vector<96x64xf32>
    tpu.vector_store %arg3[%c0_6, %c0_7], %7 {strides = array<i32>} : memref<96x64xf32, #tpu.memory_space<vmem>>, vector<96x64xf32>,
    return
  }
}

module attributes {stable_mosaic.version = 11 : i64} {
  func.func @_multi_gemm_kernel(%arg0: memref<40x576xf32, #tpu.memory_space<vmem>>, %arg1: memref<576x64xf32, #tpu.memory_space<vmem>>, %arg2: memref<1x64xf32, #tpu.memory_space<vmem>>, %arg3: memref<40x64xf32, #tpu.memory_space<vmem>>) attributes {dimension_semantics = [], scalar_prefetch = 0 : i64, scratch_operands = 0 : i64, tpu.core_type = #tpu.core_type<tc>} {
    %c0 = arith.constant 0 : index
    %c0_0 = arith.constant 0 : index
    %0 = vector.load %arg0[%c0, %c0_0] : memref<40x576xf32, #tpu.memory_space<vmem>>, vector<40x576xf32>
    %c0_1 = arith.constant 0 : index
    %c0_2 = arith.constant 0 : index
    %1 = vector.load %arg1[%c0_1, %c0_2] : memref<576x64xf32, #tpu.memory_space<vmem>>, vector<576x64xf32>
    %cst = arith.constant dense<0.000000e+00> : vector<40x64xf32>
    %2 = tpu.matmul %0, %1, %cst {dimension_numbers = #tpu.dot_dimension_numbers<[1], [0], [0], [1], [0, 0, 1, 1], [], []>} : vector<40x576xf32>, vector<576x64xf32>, vector<40x64xf32> -> vector<40x64xf32>
    %c0_3 = arith.constant 0 : index
    %c0_4 = arith.constant 0 : index
    %3 = vector.load %arg2[%c0_3, %c0_4] : memref<1x64xf32, #tpu.memory_space<vmem>>, vector<1x64xf32>
    %4 = vector.broadcast %3 : vector<1x64xf32> to vector<40x64xf32>
    %5 = arith.addf %2, %4 : vector<40x64xf32>
    %c0_5 = arith.constant 0 : index
    %c0_6 = arith.constant 0 : index
    %6 = vector.load %arg3[%c0_5, %c0_6] : memref<40x64xf32, #tpu.memory_space<vmem>>, vector<40x64xf32>
    tpu.vector_store %arg3[%c0_5, %c0_6], %5 {strides = array<i32>} : memref<40x64xf32, #tpu.memory_space<vmem>>, vector<40x64xf32>,
    return
  }
}

module attributes {stable_mosaic.version = 11 : i64} {
  func.func @_fc_head_kernel(%arg0: memref<2x1280xf32, #tpu.memory_space<vmem>>, %arg1: memref<2x162xf32, #tpu.memory_space<vmem>>, %arg2: memref<2x12xf32, #tpu.memory_space<vmem>>, %arg3: memref<1280x100xf32, #tpu.memory_space<vmem>>, %arg4: memref<162x100xf32, #tpu.memory_space<vmem>>, %arg5: memref<12x100xf32, #tpu.memory_space<vmem>>, %arg6: memref<100x50xf32, #tpu.memory_space<vmem>>, %arg7: memref<50x10xf32, #tpu.memory_space<vmem>>, %arg8: memref<10x6xf32, #tpu.memory_space<vmem>>, %arg9: memref<2x6xf32, #tpu.memory_space<vmem>>) attributes {dimension_semantics = [], scalar_prefetch = 0 : i64, scratch_operands = 0 : i64, tpu.core_type = #tpu.core_type<tc>} {
    %c0 = arith.constant 0 : index
    %c0_0 = arith.constant 0 : index
    %0 = vector.load %arg0[%c0, %c0_0] : memref<2x1280xf32, #tpu.memory_space<vmem>>, vector<2x1280xf32>
    %c0_1 = arith.constant 0 : index
    %c0_2 = arith.constant 0 : index
    %1 = vector.load %arg3[%c0_1, %c0_2] : memref<1280x100xf32, #tpu.memory_space<vmem>>, vector<1280x100xf32>
    %cst = arith.constant dense<0.000000e+00> : vector<2x100xf32>
    %2 = tpu.matmul %0, %1, %cst {dimension_numbers = #tpu.dot_dimension_numbers<[1], [0], [0], [1], [0, 0, 1, 1], [], []>} : vector<2x1280xf32>, vector<1280x100xf32>, vector<2x100xf32> -> vector<2x100xf32>
    %c0_3 = arith.constant 0 : index
    %c0_4 = arith.constant 0 : index
    %3 = vector.load %arg1[%c0_3, %c0_4] : memref<2x162xf32, #tpu.memory_space<vmem>>, vector<2x162xf32>
    %c0_5 = arith.constant 0 : index
    %c0_6 = arith.constant 0 : index
    %4 = vector.load %arg4[%c0_5, %c0_6] : memref<162x100xf32, #tpu.memory_space<vmem>>, vector<162x100xf32>
    %cst_7 = arith.constant dense<0.000000e+00> : vector<2x100xf32>
    %5 = tpu.matmul %3, %4, %cst_7 {dimension_numbers = #tpu.dot_dimension_numbers<[1], [0], [0], [1], [0, 0, 1, 1], [], []>} : vector<2x162xf32>, vector<162x100xf32>, vector<2x100xf32> -> vector<2x100xf32>
    %6 = arith.addf %2, %5 : vector<2x100xf32>
    %c0_8 = arith.constant 0 : index
    %c0_9 = arith.constant 0 : index
    %7 = vector.load %arg2[%c0_8, %c0_9] : memref<2x12xf32, #tpu.memory_space<vmem>>, vector<2x12xf32>
    %c0_10 = arith.constant 0 : index
    %c0_11 = arith.constant 0 : index
    %8 = vector.load %arg5[%c0_10, %c0_11] : memref<12x100xf32, #tpu.memory_space<vmem>>, vector<12x100xf32>
    %cst_12 = arith.constant dense<0.000000e+00> : vector<2x100xf32>
    %9 = tpu.matmul %7, %8, %cst_12 {dimension_numbers = #tpu.dot_dimension_numbers<[1], [0], [0], [1], [0, 0, 1, 1], [], []>} : vector<2x12xf32>, vector<12x100xf32>, vector<2x100xf32> -> vector<2x100xf32>
    %10 = arith.addf %6, %9 : vector<2x100xf32>
    %cst_13 = arith.constant 0.000000e+00 : f32
    %11 = vector.broadcast %cst_13 : f32 to vector<2x100xf32>
    %12 = arith.maximumf %10, %11 : vector<2x100xf32>
    %c0_14 = arith.constant 0 : index
    %c0_15 = arith.constant 0 : index
    %13 = vector.load %arg6[%c0_14, %c0_15] : memref<100x50xf32, #tpu.memory_space<vmem>>, vector<100x50xf32>
    %cst_16 = arith.constant dense<0.000000e+00> : vector<2x50xf32>
    %14 = tpu.matmul %12, %13, %cst_16 {dimension_numbers = #tpu.dot_dimension_numbers<[1], [0], [0], [1], [0, 0, 1, 1], [], []>} : vector<2x100xf32>, vector<100x50xf32>, vector<2x50xf32> -> vector<2x50xf32>
    %cst_17 = arith.constant 0.000000e+00 : f32
    %15 = vector.broadcast %cst_17 : f32 to vector<2x50xf32>
    %16 = arith.maximumf %14, %15 : vector<2x50xf32>
    %c0_18 = arith.constant 0 : index
    %c0_19 = arith.constant 0 : index
    %17 = vector.load %arg7[%c0_18, %c0_19] : memref<50x10xf32, #tpu.memory_space<vmem>>, vector<50x10xf32>
    %cst_20 = arith.constant dense<0.000000e+00> : vector<2x10xf32>
    %18 = tpu.matmul %16, %17, %cst_20 {dimension_numbers = #tpu.dot_dimension_numbers<[1], [0], [0], [1], [0, 0, 1, 1], [], []>} : vector<2x50xf32>, vector<50x10xf32>, vector<2x10xf32> -> vector<2x10xf32>
    %cst_21 = arith.constant 0.000000e+00 : f32
    %19 = vector.broadcast %cst_21 : f32 to vector<2x10xf32>
    %20 = arith.maximumf %18, %19 : vector<2x10xf32>
    %c0_22 = arith.constant 0 : index
    %c0_23 = arith.constant 0 : index
    %21 = vector.load %arg8[%c0_22, %c0_23] : memref<10x6xf32, #tpu.memory_space<vmem>>, vector<10x6xf32>
    %cst_24 = arith.constant dense<0.000000e+00> : vector<2x6xf32>
    %22 = tpu.matmul %20, %21, %cst_24 {dimension_numbers = #tpu.dot_dimension_numbers<[1], [0], [0], [1], [0, 0, 1, 1], [], []>} : vector<2x10xf32>, vector<10x6xf32>, vector<2x6xf32> -> vector<2x6xf32>
    %c0_25 = arith.constant 0 : index
    %c0_26 = arith.constant 0 : index
    %23 = vector.load %arg9[%c0_25, %c0_26] : memref<2x6xf32, #tpu.memory_space<vmem>>, vector<2x6xf32>
    tpu.vector_store %arg9[%c0_25, %c0_26], %22 {strides = array<i32>} : memref<2x6xf32, #tpu.memory_space<vmem>>, vector<2x6xf32>,
    return
  }
}

</mosaic_0001>

<llo_original>
// kernel: nvidia_arch_forward.6
$region0: #{nvidia_arch_forward.6}
  #allocation0 [shape = 'u32[]', space=smem, size = 0x4, offset = 0x4, fixed_abs, tag = 'smem constant byte address 0x4 - core index']
  #allocation1 [shape = 'u32[72,128]{1,0:T(1,128)}', space=vmem, size = 0x9000, scoped, tag = 'internal scratch']
  %s0 = inlined_call_operand.vmem [shape: f32[3248,25], index: 0, kind: input, shape index: {}]
  %s1 = inlined_call_operand.vmem [shape: f32[1058,25], index: 1, kind: input, shape index: {}]
  %s2 = inlined_call_operand.vmem [shape: f32[50,25], index: 2, kind: input, shape index: {}]
  %s3 = inlined_call_operand.vmem [shape: f32[25,24], index: 3, kind: input, shape index: {}]
  %s4 = inlined_call_operand.vmem [shape: f32[25,6], index: 4, kind: input, shape index: {}]
  %s5 = inlined_call_operand.vmem [shape: f32[25,6], index: 5, kind: input, shape index: {}]
  %s6 = inlined_call_operand.vmem [shape: f32[1,24], index: 6, kind: input, shape index: {}]
  %s7 = inlined_call_operand.vmem [shape: f32[1,6], index: 7, kind: input, shape index: {}]
  %s8 = inlined_call_operand.vmem [shape: f32[1,6], index: 8, kind: input, shape index: {}]
  %s9 = inlined_call_operand.vmem [shape: f32[3248,24], index: 9, kind: output, shape index: {0}]
  %s10 = inlined_call_operand.vmem [shape: f32[1058,6], index: 10, kind: output, shape index: {1}]
  %s11 = inlined_call_operand.vmem [shape: f32[50,6], index: 11, kind: output, shape index: {2}]
  %12 = xla_tuple %s9, %s10, %s11
  %s13 = sld [smem:[#allocation0]]
  $region62: #{nvidia_arch_forward.6} parent=0
    _
  %s15 = ssub.s32 1, %s13
  %s16 = scalar_select 0, %s15, %s13
  // Predicated region
  $region2: #{nvidia_arch_forward.6} parent=0 // pred_check
    _
  $region3: #{nvidia_arch_forward.6} parent=0 // pred_check_branch
    %18 = sbr.rel (0) target = $region5
  $region4: #{nvidia_arch_forward.6} parent=0 // pred_region
    _
  $region5: #{nvidia_arch_forward.6} parent=0 // pred_fallthru
    _
  // Predicated region
  $region6: #{nvidia_arch_forward.6} parent=0 // pred_check
    _
  $region7: #{nvidia_arch_forward.6} parent=0 // pred_check_branch
    %20 = sbr.rel (0) target = $region9
  $region8: #{nvidia_arch_forward.6} parent=0 // pred_region
    _
  $region9: #{nvidia_arch_forward.6} parent=0 // pred_fallthru
    _
  // Predicated region
  $region10: #{nvidia_arch_forward.6} parent=0 // pred_check
    _
  $region11: #{nvidia_arch_forward.6} parent=0 // pred_check_branch
    %22 = sbr.rel (0) target = $region13
  $region12: #{nvidia_arch_forward.6} parent=0 // pred_region
    _
  $region13: #{nvidia_arch_forward.6} parent=0 // pred_fallthru
    _
  // Predicated region
  $region14: #{nvidia_arch_forward.6} parent=0 // pred_check
    _
  $region15: #{nvidia_arch_forward.6} parent=0 // pred_check_branch
    %24 = sbr.rel (0) target = $region17
  $region16: #{nvidia_arch_forward.6} parent=0 // pred_region
    _
  $region17: #{nvidia_arch_forward.6} parent=0 // pred_fallthru
    _
  // Predicated region
  $region18: #{nvidia_arch_forward.6} parent=0 // pred_check
    _
  $region19: #{nvidia_arch_forward.6} parent=0 // pred_check_branch
    %26 = sbr.rel (0) target = $region21
  $region20: #{nvidia_arch_forward.6} parent=0 // pred_region
    _
  $region21: #{nvidia_arch_forward.6} parent=0 // pred_fallthru
    _
  // Predicated region
  $region22: #{nvidia_arch_forward.6} parent=0 // pred_check
    _
  $region23: #{nvidia_arch_forward.6} parent=0 // pred_check_branch
    %28 = sbr.rel (0) target = $region25
  $region24: #{nvidia_arch_forward.6} parent=0 // pred_region
    _
  $region25: #{nvidia_arch_forward.6} parent=0 // pred_fallthru
    _
  // Predicated region
  $region26: #{nvidia_arch_forward.6} parent=0 // pred_check
    _
  $region27: #{nvidia_arch_forward.6} parent=0 // pred_check_branch
    %30 = sbr.rel (0) target = $region29
  $region28: #{nvidia_arch_forward.6} parent=0 // pred_region
    _
  $region29: #{nvidia_arch_forward.6} parent=0 // pred_fallthru
    _
  // Predicated region
  $region30: #{nvidia_arch_forward.6} parent=0 // pred_check
    _
  $region31: #{nvidia_arch_forward.6} parent=0 // pred_check_branch
    %32 = sbr.rel (0) target = $region33
  $region32: #{nvidia_arch_forward.6} parent=0 // pred_region
    _
  $region33: #{nvidia_arch_forward.6} parent=0 // pred_fallthru
    _
  // Predicated region
  $region34: #{nvidia_arch_forward.6} parent=0 // pred_check
    _
  $region35: #{nvidia_arch_forward.6} parent=0 // pred_check_branch
    %34 = sbr.rel (0) target = $region37
  $region36: #{nvidia_arch_forward.6} parent=0 // pred_region
    _
  $region37: #{nvidia_arch_forward.6} parent=0 // pred_fallthru
    _
  %v35 = vld [vmem:[%s0] sm:$0xff]
  %v36 = vld [vmem:[%s0 + $0x8] sm:$0xff]
  %v37 = vld [vmem:[%s0 + $0x10] sm:$0xff]
  %v38 = vld [vmem:[%s0 + $0x18] sm:$0xff]
  %v39 = vld [vmem:[%s0 + $0x20] sm:$0xff]
  %v40 = vld [vmem:[%s0 + $0x28] sm:$0xff]
  %v41 = vld [vmem:[%s0 + $0x30] sm:$0xff]
  %v42 = vld [vmem:[%s0 + $0x38] sm:$0xff]
  %v43 = vld [vmem:[%s0 + $0x40] sm:$0xff]
  %v44 = vld [vmem:[%s0 + $0x48] sm:$0xff]
  %v45 = vld [vmem:[%s0 + $0x50] sm:$0xff]
  %v46 = vld [vmem:[%s0 + $0x58] sm:$0xff]
  %v47 = vld [vmem:[%s0 + $0x60] sm:$0xff]
  %v48 = vld [vmem:[%s0 + $0x68] sm:$0xff]
  %v49 = vld [vmem:[%s0 + $0x70] sm:$0xff]
  %v50 = vld [vmem:[%s0 + $0x78] sm:$0xff]
  %v51 = vld [vmem:[%s0 + $0x80] sm:$0xff]
  %v52 = vld [vmem:[%s0 + $0x88] sm:$0xff]
  %v53 = vld [vmem:[%s0 + $0x90] sm:$0xff]
  %v54 = vld [vmem:[%s0 + $0x98] sm:$0xff]
  %v55 = vld [vmem:[%s0 + $0xa0] sm:$0xff]
  %v56 = vld [vmem:[%s0 + $0xa8] sm:$0xff]
  %v57 = vld [vmem:[%s0 + $0xb0] sm:$0xff]
  %v58 = vld [vmem:[%s0 + $0xb8] sm:$0xff]
  %v59 = vld [vmem:[%s0 + $0xc0] sm:$0xff]
  %v60 = vld [vmem:[%s0 + $0xc8] sm:$0xff]
  %v61 = vld [vmem:[%s0 + $0xd0] sm:$0xff]
  %v62 = vld [vmem:[%s0 + $0xd8] sm:$0xff]
  %v63 = vld [vmem:[%s0 + $0xe0] sm:$0xff]
  %v64 = vld [vmem:[%s0 + $0xe8] sm:$0xff]
  %v65 = vld [vmem:[%s0 + $0xf0] sm:$0xff]
  %v66 = vld [vmem:[%s0 + $0xf8] sm:$0xff]
  %v67 = vld [vmem:[%s0 + $0x100] sm:$0xff]
  %v68 = vld [vmem:[%s0 + $0x108] sm:$0xff]
  %v69 = vld [vmem:[%s0 + $0x110] sm:$0xff]
  %v70 = vld [vmem:[%s0 + $0x118] sm:$0xff]
  %v71 = vld [vmem:[%s0 + $0x120] sm:$0xff]
  %v72 = vld [vmem:[%s0 + $0x128] sm:$0xff]
  %v73 = vld [vmem:[%s0 + $0x130] sm:$0xff]
  %v74 = vld [vmem:[%s0 + $0x138] sm:$0xff]
  %v75 = vld [vmem:[%s0 + $0x140] sm:$0xff]
  %v76 = vld [vmem:[%s0 + $0x148] sm:$0xff]
  %v77 = vld [vmem:[%s0 + $0x150] sm:$0xff]
  %v78 = vld [vmem:[%s0 + $0x158] sm:$0xff]
  %v79 = vld [vmem:[%s0 + $0x160] sm:$0xff]
  %v80 = vld [vmem:[%s0 + $0x168] sm:$0xff]
  %v81 = vld [vmem:[%s0 + $0x170] sm:$0xff]
  %v82 = vld [vmem:[%s0 + $0x178] sm:$0xff]
  %v83 = vld [vmem:[%s0 + $0x180] sm:$0xff]
  %v84 = vld [vmem:[%s0 + $0x188] sm:$0xff]
  %v85 = vld [vmem:[%s0 + $0x190] sm:$0xff]
  %v86 = vld [vmem:[%s0 + $0x198] sm:$0xff]
  %v87 = vld [vmem:[%s0 + $0x1a0] sm:$0xff]
  %v88 = vld [vmem:[%s0 + $0x1a8] sm:$0xff]
  %v89 = vld [vmem:[%s0 + $0x1b0] sm:$0xff]
  %v90 = vld [vmem:[%s0 + $0x1b8] sm:$0xff]
  %v91 = vld [vmem:[%s0 + $0x1c0] sm:$0xff]
  %v92 = vld [vmem:[%s0 + $0x1c8] sm:$0xff]
  %v93 = vld [vmem:[%s0 + $0x1d0] sm:$0xff]
  %v94 = vld [vmem:[%s0 + $0x1d8] sm:$0xff]
  %v95 = vld [vmem:[%s0 + $0x1e0] sm:$0xff]
  %v96 = vld [vmem:[%s0 + $0x1e8] sm:$0xff]
  %v97 = vld [vmem:[%s0 + $0x1f0] sm:$0xff]
  %v98 = vld [vmem:[%s0 + $0x1f8] sm:$0xff]
  %v99 = vld [vmem:[%s0 + $0x200] sm:$0xff]
  %v100 = vld [vmem:[%s0 + $0x208] sm:$0xff]
  %v101 = vld [vmem:[%s0 + $0x210] sm:$0xff]
  %v102 = vld [vmem:[%s0 + $0x218] sm:$0xff]
  %v103 = vld [vmem:[%s0 + $0x220] sm:$0xff]
  %v104 = vld [vmem:[%s0 + $0x228] sm:$0xff]
  %v105 = vld [vmem:[%s0 + $0x230] sm:$0xff]
  %v106 = vld [vmem:[%s0 + $0x238] sm:$0xff]
  %v107 = vld [vmem:[%s0 + $0x240] sm:$0xff]
  %v108 = vld [vmem:[%s0 + $0x248] sm:$0xff]
  %v109 = vld [vmem:[%s0 + $0x250] sm:$0xff]
  %v110 = vld [vmem:[%s0 + $0x258] sm:$0xff]
  %v111 = vld [vmem:[%s0 + $0x260] sm:$0xff]
  %v112 = vld [vmem:[%s0 + $0x268] sm:$0xff]
  %v113 = vld [vmem:[%s0 + $0x270] sm:$0xff]
  %v114 = vld [vmem:[%s0 + $0x278] sm:$0xff]
  %v115 = vld [vmem:[%s0 + $0x280] sm:$0xff]
  %v116 = vld [vmem:[%s0 + $0x288] sm:$0xff]
  %v117 = vld [vmem:[%s0 + $0x290] sm:$0xff]
  %v118 = vld [vmem:[%s0 + $0x298] sm:$0xff]
  %v119 = vld [vmem:[%s0 + $0x2a0] sm:$0xff]
  %v120 = vld [vmem:[%s0 + $0x2a8] sm:$0xff]
  %v121 = vld [vmem:[%s0 + $0x2b0] sm:$0xff]
  %v122 = vld [vmem:[%s0 + $0x2b8] sm:$0xff]
  %v123 = vld [vmem:[%s0 + $0x2c0] sm:$0xff]
  %v124 = vld [vmem:[%s0 + $0x2c8] sm:$0xff]
  %v125 = vld [vmem:[%s0 + $0x2d0] sm:$0xff]
  %v126 = vld [vmem:[%s0 + $0x2d8] sm:$0xff]
  %v127 = vld [vmem:[%s0 + $0x2e0] sm:$0xff]
  %v128 = vld [vmem:[%s0 + $0x2e8] sm:$0xff]
  %v129 = vld [vmem:[%s0 + $0x2f0] sm:$0xff]
  %v130 = vld [vmem:[%s0 + $0x2f8] sm:$0xff]
  %v131 = vld [vmem:[%s0 + $0x300] sm:$0xff]
  %v132 = vld [vmem:[%s0 + $0x308] sm:$0xff]
  %v133 = vld [vmem:[%s0 + $0x310] sm:$0xff]
  %v134 = vld [vmem:[%s0 + $0x318] sm:$0xff]
  %v135 = vld [vmem:[%s0 + $0x320] sm:$0xff]
  %v136 = vld [vmem:[%s0 + $0x328] sm:$0xff]
  %v137 = vld [vmem:[%s0 + $0x330] sm:$0xff]
  %v138 = vld [vmem:[%s0 + $0x338] sm:$0xff]
  %v139 = vld [vmem:[%s0 + $0x340] sm:$0xff]
  %v140 = vld [vmem:[%s0 + $0x348] sm:$0xff]
  %v141 = vld [vmem:[%s0 + $0x350] sm:$0xff]
  %v142 = vld [vmem:[%s0 + $0x358] sm:$0xff]
  %v143 = vld [vmem:[%s0 + $0x360] sm:$0xff]
  %v144 = vld [vmem:[%s0 + $0x368] sm:$0xff]
  %v145 = vld [vmem:[%s0 + $0x370] sm:$0xff]
  %v146 = vld [vmem:[%s0 + $0x378] sm:$0xff]
  %v147 = vld [vmem:[%s0 + $0x380] sm:$0xff]
  %v148 = vld [vmem:[%s0 + $0x388] sm:$0xff]
  %v149 = vld [vmem:[%s0 + $0x390] sm:$0xff]
  %v150 = vld [vmem:[%s0 + $0x398] sm:$0xff]
  %v151 = vld [vmem:[%s0 + $0x3a0] sm:$0xff]
  %v152 = vld [vmem:[%s0 + $0x3a8] sm:$0xff]
  %v153 = vld [vmem:[%s0 + $0x3b0] sm:$0xff]
  %v154 = vld [vmem:[%s0 + $0x3b8] sm:$0xff]
  %v155 = vld [vmem:[%s0 + $0x3c0] sm:$0xff]
  %v156 = vld [vmem:[%s0 + $0x3c8] sm:$0xff]
  %v157 = vld [vmem:[%s0 + $0x3d0] sm:$0xff]
  %v158 = vld [vmem:[%s0 + $0x3d8] sm:$0xff]
  %v159 = vld [vmem:[%s0 + $0x3e0] sm:$0xff]
  %v160 = vld [vmem:[%s0 + $0x3e8] sm:$0xff]
  %v161 = vld [vmem:[%s0 + $0x3f0] sm:$0xff]
  %v162 = vld [vmem:[%s0 + $0x3f8] sm:$0xff]
  %v163 = vld [vmem:[%s0 + $0x400] sm:$0xff]
  %v164 = vld [vmem:[%s0 + $0x408] sm:$0xff]
  %v165 = vld [vmem:[%s0 + $0x410] sm:$0xff]
  %v166 = vld [vmem:[%s0 + $0x418] sm:$0xff]
  %v167 = vld [vmem:[%s0 + $0x420] sm:$0xff]
  %v168 = vld [vmem:[%s0 + $0x428] sm:$0xff]
  %v169 = vld [vmem:[%s0 + $0x430] sm:$0xff]
  %v170 = vld [vmem:[%s0 + $0x438] sm:$0xff]
  %v171 = vld [vmem:[%s0 + $0x440] sm:$0xff]
  %v172 = vld [vmem:[%s0 + $0x448] sm:$0xff]
  %v173 = vld [vmem:[%s0 + $0x450] sm:$0xff]
  %v174 = vld [vmem:[%s0 + $0x458] sm:$0xff]
  %v175 = vld [vmem:[%s0 + $0x460] sm:$0xff]
  %v176 = vld [vmem:[%s0 + $0x468] sm:$0xff]
  %v177 = vld [vmem:[%s0 + $0x470] sm:$0xff]
  %v178 = vld [vmem:[%s0 + $0x478] sm:$0xff]
  %v179 = vld [vmem:[%s0 + $0x480] sm:$0xff]
  %v180 = vld [vmem:[%s0 + $0x488] sm:$0xff]
  %v181 = vld [vmem:[%s0 + $0x490] sm:$0xff]
  %v182 = vld [vmem:[%s0 + $0x498] sm:$0xff]
  %v183 = vld [vmem:[%s0 + $0x4a0] sm:$0xff]
  %v184 = vld [vmem:[%s0 + $0x4a8] sm:$0xff]
  %v185 = vld [vmem:[%s0 + $0x4b0] sm:$0xff]
  %v186 = vld [vmem:[%s0 + $0x4b8] sm:$0xff]
  %v187 = vld [vmem:[%s0 + $0x4c0] sm:$0xff]
  %v188 = vld [vmem:[%s0 + $0x4c8] sm:$0xff]
  %v189 = vld [vmem:[%s0 + $0x4d0] sm:$0xff]
  %v190 = vld [vmem:[%s0 + $0x4d8] sm:$0xff]
  %v191 = vld [vmem:[%s0 + $0x4e0] sm:$0xff]
  %v192 = vld [vmem:[%s0 + $0x4e8] sm:$0xff]
  %v193 = vld [vmem:[%s0 + $0x4f0] sm:$0xff]
  %v194 = vld [vmem:[%s0 + $0x4f8] sm:$0xff]
  %v195 = vld [vmem:[%s0 + $0x500] sm:$0xff]
  %v196 = vld [vmem:[%s0 + $0x508] sm:$0xff]
  %v197 = vld [vmem:[%s0 + $0x510] sm:$0xff]
  %v198 = vld [vmem:[%s0 + $0x518] sm:$0xff]
  %v199 = vld [vmem:[%s0 + $0x520] sm:$0xff]
  %v200 = vld [vmem:[%s0 + $0x528] sm:$0xff]
  %v201 = vld [vmem:[%s0 + $0x530] sm:$0xff]
  %v202 = vld [vmem:[%s0 + $0x538] sm:$0xff]
  %v203 = vld [vmem:[%s0 + $0x540] sm:$0xff]
  %v204 = vld [vmem:[%s0 + $0x548] sm:$0xff]
  %v205 = vld [vmem:[%s0 + $0x550] sm:$0xff]
  %v206 = vld [vmem:[%s0 + $0x558] sm:$0xff]
  %v207 = vld [vmem:[%s0 + $0x560] sm:$0xff]
  %v208 = vld [vmem:[%s0 + $0x568] sm:$0xff]
  %v209 = vld [vmem:[%s0 + $0x570] sm:$0xff]
  %v210 = vld [vmem:[%s0 + $0x578] sm:$0xff]
  %v211 = vld [vmem:[%s0 + $0x580] sm:$0xff]
  %v212 = vld [vmem:[%s0 + $0x588] sm:$0xff]
  %v213 = vld [vmem:[%s0 + $0x590] sm:$0xff]
  %v214 = vld [vmem:[%s0 + $0x598] sm:$0xff]
  %v215 = vld [vmem:[%s0 + $0x5a0] sm:$0xff]
  %v216 = vld [vmem:[%s0 + $0x5a8] sm:$0xff]
  %v217 = vld [vmem:[%s0 + $0x5b0] sm:$0xff]
  %v218 = vld [vmem:[%s0 + $0x5b8] sm:$0xff]
  %v219 = vld [vmem:[%s0 + $0x5c0] sm:$0xff]
  %v220 = vld [vmem:[%s0 + $0x5c8] sm:$0xff]
  %v221 = vld [vmem:[%s0 + $0x5d0] sm:$0xff]
  %v222 = vld [vmem:[%s0 + $0x5d8] sm:$0xff]
  %v223 = vld [vmem:[%s0 + $0x5e0] sm:$0xff]
  %v224 = vld [vmem:[%s0 + $0x5e8] sm:$0xff]
  %v225 = vld [vmem:[%s0 + $0x5f0] sm:$0xff]
  %v226 = vld [vmem:[%s0 + $0x5f8] sm:$0xff]
  %v227 = vld [vmem:[%s0 + $0x600] sm:$0xff]
  %v228 = vld [vmem:[%s0 + $0x608] sm:$0xff]
  %v229 = vld [vmem:[%s0 + $0x610] sm:$0xff]
  %v230 = vld [vmem:[%s0 + $0x618] sm:$0xff]
  %v231 = vld [vmem:[%s0 + $0x620] sm:$0xff]
  %v232 = vld [vmem:[%s0 + $0x628] sm:$0xff]
  %v233 = vld [vmem:[%s0 + $0x630] sm:$0xff]
  %v234 = vld [vmem:[%s0 + $0x638] sm:$0xff]
  %v235 = vld [vmem:[%s0 + $0x640] sm:$0xff]
  %v236 = vld [vmem:[%s0 + $0x648] sm:$0xff]
  %v237 = vld [vmem:[%s0 + $0x650] sm:$0xff]
  %v238 = vld [vmem:[%s0 + $0x658] sm:$0xff]
  %v239 = vld [vmem:[%s0 + $0x660] sm:$0xff]
  %v240 = vld [vmem:[%s0 + $0x668] sm:$0xff]
  %v241 = vld [vmem:[%s0 + $0x670] sm:$0xff]
  %v242 = vld [vmem:[%s0 + $0x678] sm:$0xff]
  %v243 = vld [vmem:[%s0 + $0x680] sm:$0xff]
  %v244 = vld [vmem:[%s0 + $0x688] sm:$0xff]
  %v245 = vld [vmem:[%s0 + $0x690] sm:$0xff]
  %v246 = vld [vmem:[%s0 + $0x698] sm:$0xff]
  %v247 = vld [vmem:[%s0 + $0x6a0] sm:$0xff]
  %v248 = vld [vmem:[%s0 + $0x6a8] sm:$0xff]
  %v249 = vld [vmem:[%s0 + $0x6b0] sm:$0xff]
  %v250 = vld [vmem:[%s0 + $0x6b8] sm:$0xff]
  %v251 = vld [vmem:[%s0 + $0x6c0] sm:$0xff]
  %v252 = vld [vmem:[%s0 + $0x6c8] sm:$0xff]
  %v253 = vld [vmem:[%s0 + $0x6d0] sm:$0xff]
  %v254 = vld [vmem:[%s0 + $0x6d8] sm:$0xff]
  %v255 = vld [vmem:[%s0 + $0x6e0] sm:$0xff]
  %v256 = vld [vmem:[%s0 + $0x6e8] sm:$0xff]
  %v257 = vld [vmem:[%s0 + $0x6f0] sm:$0xff]
  %v258 = vld [vmem:[%s0 + $0x6f8] sm:$0xff]
  %v259 = vld [vmem:[%s0 + $0x700] sm:$0xff]
  %v260 = vld [vmem:[%s0 + $0x708] sm:$0xff]
  %v261 = vld [vmem:[%s0 + $0x710] sm:$0xff]
  %v262 = vld [vmem:[%s0 + $0x718] sm:$0xff]
  %v263 = vld [vmem:[%s0 + $0x720] sm:$0xff]
  %v264 = vld [vmem:[%s0 + $0x728] sm:$0xff]
  %v265 = vld [vmem:[%s0 + $0x730] sm:$0xff]
  %v266 = vld [vmem:[%s0 + $0x738] sm:$0xff]
  %v267 = vld [vmem:[%s0 + $0x740] sm:$0xff]
  %v268 = vld [vmem:[%s0 + $0x748] sm:$0xff]
  %v269 = vld [vmem:[%s0 + $0x750] sm:$0xff]
  %v270 = vld [vmem:[%s0 + $0x758] sm:$0xff]
  %v271 = vld [vmem:[%s0 + $0x760] sm:$0xff]
  %v272 = vld [vmem:[%s0 + $0x768] sm:$0xff]
  %v273 = vld [vmem:[%s0 + $0x770] sm:$0xff]
  %v274 = vld [vmem:[%s0 + $0x778] sm:$0xff]
  %v275 = vld [vmem:[%s0 + $0x780] sm:$0xff]
  %v276 = vld [vmem:[%s0 + $0x788] sm:$0xff]
  %v277 = vld [vmem:[%s0 + $0x790] sm:$0xff]
  %v278 = vld [vmem:[%s0 + $0x798] sm:$0xff]
  %v279 = vld [vmem:[%s0 + $0x7a0] sm:$0xff]
  %v280 = vld [vmem:[%s0 + $0x7a8] sm:$0xff]
  %v281 = vld [vmem:[%s0 + $0x7b0] sm:$0xff]
  %v282 = vld [vmem:[%s0 + $0x7b8] sm:$0xff]
  %v283 = vld [vmem:[%s0 + $0x7c0] sm:$0xff]
  %v284 = vld [vmem:[%s0 + $0x7c8] sm:$0xff]
  %v285 = vld [vmem:[%s0 + $0x7d0] sm:$0xff]
  %v286 = vld [vmem:[%s0 + $0x7d8] sm:$0xff]
  %v287 = vld [vmem:[%s0 + $0x7e0] sm:$0xff]
  %v288 = vld [vmem:[%s0 + $0x7e8] sm:$0xff]
  %v289 = vld [vmem:[%s0 + $0x7f0] sm:$0xff]
  %v290 = vld [vmem:[%s0 + $0x7f8] sm:$0xff]
  %v291 = vld [vmem:[%s0 + $0x800] sm:$0xff]
  %v292 = vld [vmem:[%s0 + $0x808] sm:$0xff]
  %v293 = vld [vmem:[%s0 + $0x810] sm:$0xff]
  %v294 = vld [vmem:[%s0 + $0x818] sm:$0xff]
  %v295 = vld [vmem:[%s0 + $0x820] sm:$0xff]
  %v296 = vld [vmem:[%s0 + $0x828] sm:$0xff]
  %v297 = vld [vmem:[%s0 + $0x830] sm:$0xff]
  %v298 = vld [vmem:[%s0 + $0x838] sm:$0xff]
  %v299 = vld [vmem:[%s0 + $0x840] sm:$0xff]
  %v300 = vld [vmem:[%s0 + $0x848] sm:$0xff]
  %v301 = vld [vmem:[%s0 + $0x850] sm:$0xff]
  %v302 = vld [vmem:[%s0 + $0x858] sm:$0xff]
  %v303 = vld [vmem:[%s0 + $0x860] sm:$0xff]
  %v304 = vld [vmem:[%s0 + $0x868] sm:$0xff]
  %v305 = vld [vmem:[%s0 + $0x870] sm:$0xff]
  %v306 = vld [vmem:[%s0 + $0x878] sm:$0xff]
  %v307 = vld [vmem:[%s0 + $0x880] sm:$0xff]
  %v308 = vld [vmem:[%s0 + $0x888] sm:$0xff]
  %v309 = vld [vmem:[%s0 + $0x890] sm:$0xff]
  %v310 = vld [vmem:[%s0 + $0x898] sm:$0xff]
  %v311 = vld [vmem:[%s0 + $0x8a0] sm:$0xff]
  %v312 = vld [vmem:[%s0 + $0x8a8] sm:$0xff]
  %v313 = vld [vmem:[%s0 + $0x8b0] sm:$0xff]
  %v314 = vld [vmem:[%s0 + $0x8b8] sm:$0xff]
  %v315 = vld [vmem:[%s0 + $0x8c0] sm:$0xff]
  %v316 = vld [vmem:[%s0 + $0x8c8] sm:$0xff]
  %v317 = vld [vmem:[%s0 + $0x8d0] sm:$0xff]
  %v318 = vld [vmem:[%s0 + $0x8d8] sm:$0xff]
  %v319 = vld [vmem:[%s0 + $0x8e0] sm:$0xff]
  %v320 = vld [vmem:[%s0 + $0x8e8] sm:$0xff]
  %v321 = vld [vmem:[%s0 + $0x8f0] sm:$0xff]
  %v322 = vld [vmem:[%s0 + $0x8f8] sm:$0xff]
  %v323 = vld [vmem:[%s0 + $0x900] sm:$0xff]
  %v324 = vld [vmem:[%s0 + $0x908] sm:$0xff]
  %v325 = vld [vmem:[%s0 + $0x910] sm:$0xff]
  %v326 = vld [vmem:[%s0 + $0x918] sm:$0xff]
  %v327 = vld [vmem:[%s0 + $0x920] sm:$0xff]
  %v328 = vld [vmem:[%s0 + $0x928] sm:$0xff]
  %v329 = vld [vmem:[%s0 + $0x930] sm:$0xff]
  %v330 = vld [vmem:[%s0 + $0x938] sm:$0xff]
  %v331 = vld [vmem:[%s0 + $0x940] sm:$0xff]
  %v332 = vld [vmem:[%s0 + $0x948] sm:$0xff]
  %v333 = vld [vmem:[%s0 + $0x950] sm:$0xff]
  %v334 = vld [vmem:[%s0 + $0x958] sm:$0xff]
  %v335 = vld [vmem:[%s0 + $0x960] sm:$0xff]
  %v336 = vld [vmem:[%s0 + $0x968] sm:$0xff]
  %v337 = vld [vmem:[%s0 + $0x970] sm:$0xff]
  %v338 = vld [vmem:[%s0 + $0x978] sm:$0xff]
  %v339 = vld [vmem:[%s0 + $0x980] sm:$0xff]
  %v340 = vld [vmem:[%s0 + $0x988] sm:$0xff]
  %v341 = vld [vmem:[%s0 + $0x990] sm:$0xff]
  %v342 = vld [vmem:[%s0 + $0x998] sm:$0xff]
  %v343 = vld [vmem:[%s0 + $0x9a0] sm:$0xff]
  %v344 = vld [vmem:[%s0 + $0x9a8] sm:$0xff]
  %v345 = vld [vmem:[%s0 + $0x9b0] sm:$0xff]
  %v346 = vld [vmem:[%s0 + $0x9b8] sm:$0xff]
  %v347 = vld [vmem:[%s0 + $0x9c0] sm:$0xff]
  %v348 = vld [vmem:[%s0 + $0x9c8] sm:$0xff]
  %v349 = vld [vmem:[%s0 + $0x9d0] sm:$0xff]
  %v350 = vld [vmem:[%s0 + $0x9d8] sm:$0xff]
  %v351 = vld [vmem:[%s0 + $0x9e0] sm:$0xff]
  %v352 = vld [vmem:[%s0 + $0x9e8] sm:$0xff]
  %v353 = vld [vmem:[%s0 + $0x9f0] sm:$0xff]
  %v354 = vld [vmem:[%s0 + $0x9f8] sm:$0xff]
  %v355 = vld [vmem:[%s0 + $0xa00] sm:$0xff]
  %v356 = vld [vmem:[%s0 + $0xa08] sm:$0xff]
  %v357 = vld [vmem:[%s0 + $0xa10] sm:$0xff]
  %v358 = vld [vmem:[%s0 + $0xa18] sm:$0xff]
  %v359 = vld [vmem:[%s0 + $0xa20] sm:$0xff]
  %v360 = vld [vmem:[%s0 + $0xa28] sm:$0xff]
  %v361 = vld [vmem:[%s0 + $0xa30] sm:$0xff]
  %v362 = vld [vmem:[%s0 + $0xa38] sm:$0xff]
  %v363 = vld [vmem:[%s0 + $0xa40] sm:$0xff]
  %v364 = vld [vmem:[%s0 + $0xa48] sm:$0xff]
  %v365 = vld [vmem:[%s0 + $0xa50] sm:$0xff]
  %v366 = vld [vmem:[%s0 + $0xa58] sm:$0xff]
  %v367 = vld [vmem:[%s0 + $0xa60] sm:$0xff]
  %v368 = vld [vmem:[%s0 + $0xa68] sm:$0xff]
  %v369 = vld [vmem:[%s0 + $0xa70] sm:$0xff]
  %v370 = vld [vmem:[%s0 + $0xa78] sm:$0xff]
  %v371 = vld [vmem:[%s0 + $0xa80] sm:$0xff]
  %v372 = vld [vmem:[%s0 + $0xa88] sm:$0xff]
  %v373 = vld [vmem:[%s0 + $0xa90] sm:$0xff]
  %v374 = vld [vmem:[%s0 + $0xa98] sm:$0xff]
  %v375 = vld [vmem:[%s0 + $0xaa0] sm:$0xff]
  %v376 = vld [vmem:[%s0 + $0xaa8] sm:$0xff]
  %v377 = vld [vmem:[%s0 + $0xab0] sm:$0xff]
  %v378 = vld [vmem:[%s0 + $0xab8] sm:$0xff]
  %v379 = vld [vmem:[%s0 + $0xac0] sm:$0xff]
  %v380 = vld [vmem:[%s0 + $0xac8] sm:$0xff]
  %v381 = vld [vmem:[%s0 + $0xad0] sm:$0xff]
  %v382 = vld [vmem:[%s0 + $0xad8] sm:$0xff]
  %v383 = vld [vmem:[%s0 + $0xae0] sm:$0xff]
  %v384 = vld [vmem:[%s0 + $0xae8] sm:$0xff]
  %v385 = vld [vmem:[%s0 + $0xaf0] sm:$0xff]
  %v386 = vld [vmem:[%s0 + $0xaf8] sm:$0xff]
  %v387 = vld [vmem:[%s0 + $0xb00] sm:$0xff]
  %v388 = vld [vmem:[%s0 + $0xb08] sm:$0xff]
  %v389 = vld [vmem:[%s0 + $0xb10] sm:$0xff]
  %v390 = vld [vmem:[%s0 + $0xb18] sm:$0xff]
  %v391 = vld [vmem:[%s0 + $0xb20] sm:$0xff]
  %v392 = vld [vmem:[%s0 + $0xb28] sm:$0xff]
  %v393 = vld [vmem:[%s0 + $0xb30] sm:$0xff]
  %v394 = vld [vmem:[%s0 + $0xb38] sm:$0xff]
  %v395 = vld [vmem:[%s0 + $0xb40] sm:$0xff]
  %v396 = vld [vmem:[%s0 + $0xb48] sm:$0xff]
  %v397 = vld [vmem:[%s0 + $0xb50] sm:$0xff]
  %v398 = vld [vmem:[%s0 + $0xb58] sm:$0xff]
  %v399 = vld [vmem:[%s0 + $0xb60] sm:$0xff]
  %v400 = vld [vmem:[%s0 + $0xb68] sm:$0xff]
  %v401 = vld [vmem:[%s0 + $0xb70] sm:$0xff]
  %v402 = vld [vmem:[%s0 + $0xb78] sm:$0xff]
  %v403 = vld [vmem:[%s0 + $0xb80] sm:$0xff]
  %v404 = vld [vmem:[%s0 + $0xb88] sm:$0xff]
  %v405 = vld [vmem:[%s0 + $0xb90] sm:$0xff]
  %v406 = vld [vmem:[%s0 + $0xb98] sm:$0xff]
  %v407 = vld [vmem:[%s0 + $0xba0] sm:$0xff]
  %v408 = vld [vmem:[%s0 + $0xba8] sm:$0xff]
  %v409 = vld [vmem:[%s0 + $0xbb0] sm:$0xff]
  %v410 = vld [vmem:[%s0 + $0xbb8] sm:$0xff]
  %v411 = vld [vmem:[%s0 + $0xbc0] sm:$0xff]
  %v412 = vld [vmem:[%s0 + $0xbc8] sm:$0xff]
  %v413 = vld [vmem:[%s0 + $0xbd0] sm:$0xff]
  %v414 = vld [vmem:[%s0 + $0xbd8] sm:$0xff]
  %v415 = vld [vmem:[%s0 + $0xbe0] sm:$0xff]
  %v416 = vld [vmem:[%s0 + $0xbe8] sm:$0xff]
  %v417 = vld [vmem:[%s0 + $0xbf0] sm:$0xff]
  %v418 = vld [vmem:[%s0 + $0xbf8] sm:$0xff]
  %v419 = vld [vmem:[%s0 + $0xc00] sm:$0xff]
  %v420 = vld [vmem:[%s0 + $0xc08] sm:$0xff]
  %v421 = vld [vmem:[%s0 + $0xc10] sm:$0xff]
  %v422 = vld [vmem:[%s0 + $0xc18] sm:$0xff]
  %v423 = vld [vmem:[%s0 + $0xc20] sm:$0xff]
  %v424 = vld [vmem:[%s0 + $0xc28] sm:$0xff]
  %v425 = vld [vmem:[%s0 + $0xc30] sm:$0xff]
  %v426 = vld [vmem:[%s0 + $0xc38] sm:$0xff]
  %v427 = vld [vmem:[%s0 + $0xc40] sm:$0xff]
  %v428 = vld [vmem:[%s0 + $0xc48] sm:$0xff]
  %v429 = vld [vmem:[%s0 + $0xc50] sm:$0xff]
  %v430 = vld [vmem:[%s0 + $0xc58] sm:$0xff]
  %v431 = vld [vmem:[%s0 + $0xc60] sm:$0xff]
  %v432 = vld [vmem:[%s0 + $0xc68] sm:$0xff]
  %v433 = vld [vmem:[%s0 + $0xc70] sm:$0xff]
  %v434 = vld [vmem:[%s0 + $0xc78] sm:$0xff]
  %v435 = vld [vmem:[%s0 + $0xc80] sm:$0xff]
  %v436 = vld [vmem:[%s0 + $0xc88] sm:$0xff]
  %v437 = vld [vmem:[%s0 + $0xc90] sm:$0xff]
  %v438 = vld [vmem:[%s0 + $0xc98] sm:$0xff]
  %v439 = vld [vmem:[%s0 + $0xca0] sm:$0xff]
  %v440 = vld [vmem:[%s0 + $0xca8] sm:$0xff]
  %v441 = vld [vmem:[%s3] sm:$0xff]
  %v442 = vld [vmem:[%s3 + $0x8] sm:$0xff]
  %v443 = vld [vmem:[%s3 + $0x10] sm:$0xff]
  %v444 = vld [vmem:[%s3 + $0x18] sm:$0x1]
  %v445 = vld [vmem:[%s6] sm:$0x1]
  %v447 = vperm.slane %v445, 0
  %vm449 = vcmask 203776
  %v451 = vsel %vm449, %v35, 0
  %v454 = vsel %vm449, %v36, 0
  %v457 = vsel %vm449, %v37, 0
  %v460 = vsel %vm449, %v38, 0
  %v463 = vsel %vm449, %v39, 0
  %v466 = vsel %vm449, %v40, 0
  %v469 = vsel %vm449, %v41, 0
  %v472 = vsel %vm449, %v42, 0
  %v475 = vsel %vm449, %v43, 0
  %v478 = vsel %vm449, %v44, 0
  %v481 = vsel %vm449, %v45, 0
  %v484 = vsel %vm449, %v46, 0
  %v487 = vsel %vm449, %v47, 0
  %v490 = vsel %vm449, %v48, 0
  %v493 = vsel %vm449, %v49, 0
  %v496 = vsel %vm449, %v50, 0
  %v499 = vsel %vm449, %v51, 0
  %v502 = vsel %vm449, %v52, 0
  %v505 = vsel %vm449, %v53, 0
  %v508 = vsel %vm449, %v54, 0
  %v511 = vsel %vm449, %v55, 0
  %v514 = vsel %vm449, %v56, 0
  %v517 = vsel %vm449, %v57, 0
  %v520 = vsel %vm449, %v58, 0
  %v523 = vsel %vm449, %v59, 0
  %v526 = vsel %vm449, %v60, 0
  %v529 = vsel %vm449, %v61, 0
  %v532 = vsel %vm449, %v62, 0
  %v535 = vsel %vm449, %v63, 0
  %v538 = vsel %vm449, %v64, 0
  %v541 = vsel %vm449, %v65, 0
  %v544 = vsel %vm449, %v66, 0
  %v547 = vsel %vm449, %v67, 0
  %v550 = vsel %vm449, %v68, 0
  %v553 = vsel %vm449, %v69, 0
  %v556 = vsel %vm449, %v70, 0
  %v559 = vsel %vm449, %v71, 0
  %v562 = vsel %vm449, %v72, 0
  %v565 = vsel %vm449, %v73, 0
  %v568 = vsel %vm449, %v74, 0
  %v571 = vsel %vm449, %v75, 0
  %v574 = vsel %vm449, %v76, 0
  %v577 = vsel %vm449, %v77, 0
  %v580 = vsel %vm449, %v78, 0
  %v583 = vsel %vm449, %v79, 0
  %v586 = vsel %vm449, %v80, 0
  %v589 = vsel %vm449, %v81, 0
  %v592 = vsel %vm449, %v82, 0
  %v595 = vsel %vm449, %v83, 0
  %v598 = vsel %vm449, %v84, 0
  %v601 = vsel %vm449, %v85, 0
  %v604 = vsel %vm449, %v86, 0
  %v607 = vsel %vm449, %v87, 0
  %v610 = vsel %vm449, %v88, 0
  %v613 = vsel %vm449, %v89, 0
  %v616 = vsel %vm449, %v90, 0
  %v619 = vsel %vm449, %v91, 0
  %v622 = vsel %vm449, %v92, 0
  %v625 = vsel %vm449, %v93, 0
  %v628 = vsel %vm449, %v94, 0
  %v631 = vsel %vm449, %v95, 0
  %v634 = vsel %vm449, %v96, 0
  %v637 = vsel %vm449, %v97, 0
  %v640 = vsel %vm449, %v98, 0
  %v643 = vsel %vm449, %v99, 0
  %v646 = vsel %vm449, %v100, 0
  %v649 = vsel %vm449, %v101, 0
  %v652 = vsel %vm449, %v102, 0
  %v655 = vsel %vm449, %v103, 0
  %v658 = vsel %vm449, %v104, 0
  %v661 = vsel %vm449, %v105, 0
  %v664 = vsel %vm449, %v106, 0
  %v667 = vsel %vm449, %v107, 0
  %v670 = vsel %vm449, %v108, 0
  %v673 = vsel %vm449, %v109, 0
  %v676 = vsel %vm449, %v110, 0
  %v679 = vsel %vm449, %v111, 0
  %v682 = vsel %vm449, %v112, 0
  %v685 = vsel %vm449, %v113, 0
  %v688 = vsel %vm449, %v114, 0
  %v691 = vsel %vm449, %v115, 0
  %v694 = vsel %vm449, %v116, 0
  %v697 = vsel %vm449, %v117, 0
  %v700 = vsel %vm449, %v118, 0
  %v703 = vsel %vm449, %v119, 0
  %v706 = vsel %vm449, %v120, 0
  %v709 = vsel %vm449, %v121, 0
  %v712 = vsel %vm449, %v122, 0
  %v715 = vsel %vm449, %v123, 0
  %v718 = vsel %vm449, %v124, 0
  %v721 = vsel %vm449, %v125, 0
  %v724 = vsel %vm449, %v126, 0
  %v727 = vsel %vm449, %v127, 0
  %v730 = vsel %vm449, %v128, 0
  %v733 = vsel %vm449, %v129, 0
  %v736 = vsel %vm449, %v130, 0
  %v739 = vsel %vm449, %v131, 0
  %v742 = vsel %vm449, %v132, 0
  %v745 = vsel %vm449, %v133, 0
  %v748 = vsel %vm449, %v134, 0
  %v751 = vsel %vm449, %v135, 0
  %v754 = vsel %vm449, %v136, 0
  %v757 = vsel %vm449, %v137, 0
  %v760 = vsel %vm449, %v138, 0
  %v763 = vsel %vm449, %v139, 0
  %v766 = vsel %vm449, %v140, 0
  %v769 = vsel %vm449, %v141, 0
  %v772 = vsel %vm449, %v142, 0
  %v775 = vsel %vm449, %v143, 0
  %v778 = vsel %vm449, %v144, 0
  %v781 = vsel %vm449, %v145, 0
  %v784 = vsel %vm449, %v146, 0
  %v787 = vsel %vm449, %v147, 0
  %v790 = vsel %vm449, %v148, 0
  %v793 = vsel %vm449, %v149, 0
  %v796 = vsel %vm449, %v150, 0
  %v799 = vsel %vm449, %v151, 0
  %v802 = vsel %vm449, %v152, 0
  %v805 = vsel %vm449, %v153, 0
  %v808 = vsel %vm449, %v154, 0
  %v811 = vsel %vm449, %v155, 0
  %v814 = vsel %vm449, %v156, 0
  %v817 = vsel %vm449, %v157, 0
  %v820 = vsel %vm449, %v158, 0
  %v823 = vsel %vm449, %v159, 0
  %v826 = vsel %vm449, %v160, 0
  %v829 = vsel %vm449, %v161, 0
  %v832 = vsel %vm449, %v162, 0
  %v835 = vsel %vm449, %v163, 0
  %v838 = vsel %vm449, %v164, 0
  %v841 = vsel %vm449, %v165, 0
  %v844 = vsel %vm449, %v166, 0
  %v847 = vsel %vm449, %v167, 0
  %v850 = vsel %vm449, %v168, 0
  %v853 = vsel %vm449, %v169, 0
  %v856 = vsel %vm449, %v170, 0
  %v859 = vsel %vm449, %v171, 0
  %v862 = vsel %vm449, %v172, 0
  %v865 = vsel %vm449, %v173, 0
  %v868 = vsel %vm449, %v174, 0
  %v871 = vsel %vm449, %v175, 0
  %v874 = vsel %vm449, %v176, 0
  %v877 = vsel %vm449, %v177, 0
  %v880 = vsel %vm449, %v178, 0
  %v883 = vsel %vm449, %v179, 0
  %v886 = vsel %vm449, %v180, 0
  %v889 = vsel %vm449, %v181, 0
  %v892 = vsel %vm449, %v182, 0
  %v895 = vsel %vm449, %v183, 0
  %v898 = vsel %vm449, %v184, 0
  %v901 = vsel %vm449, %v185, 0
  %v904 = vsel %vm449, %v186, 0
  %v907 = vsel %vm449, %v187, 0
  %v910 = vsel %vm449, %v188, 0
  %v913 = vsel %vm449, %v189, 0
  %v916 = vsel %vm449, %v190, 0
  %v919 = vsel %vm449, %v191, 0
  %v922 = vsel %vm449, %v192, 0
  %v925 = vsel %vm449, %v193, 0
  %v928 = vsel %vm449, %v194, 0
  %v931 = vsel %vm449, %v195, 0
  %v934 = vsel %vm449, %v196, 0
  %v937 = vsel %vm449, %v197, 0
  %v940 = vsel %vm449, %v198, 0
  %v943 = vsel %vm449, %v199, 0
  %v946 = vsel %vm449, %v200, 0
  %v949 = vsel %vm449, %v201, 0
  %v952 = vsel %vm449, %v202, 0
  %v955 = vsel %vm449, %v203, 0
  %v958 = vsel %vm449, %v204, 0
  %v961 = vsel %vm449, %v205, 0
  %v964 = vsel %vm449, %v206, 0
  %v967 = vsel %vm449, %v207, 0
  %v970 = vsel %vm449, %v208, 0
  %v973 = vsel %vm449, %v209, 0
  %v976 = vsel %vm449, %v210, 0
  %v979 = vsel %vm449, %v211, 0
  %v982 = vsel %vm449, %v212, 0
  %v985 = vsel %vm449, %v213, 0
  %v988 = vsel %vm449, %v214, 0
  %v991 = vsel %vm449, %v215, 0
  %v994 = vsel %vm449, %v216, 0
  %v997 = vsel %vm449, %v217, 0
  %v1000 = vsel %vm449, %v218, 0
  %v1003 = vsel %vm449, %v219, 0
  %v1006 = vsel %vm449, %v220, 0
  %v1009 = vsel %vm449, %v221, 0
  %v1012 = vsel %vm449, %v222, 0
  %v1015 = vsel %vm449, %v223, 0
  %v1018 = vsel %vm449, %v224, 0
  %v1021 = vsel %vm449, %v225, 0
  %v1024 = vsel %vm449, %v226, 0
  %v1027 = vsel %vm449, %v227, 0
  %v1030 = vsel %vm449, %v228, 0
  %v1033 = vsel %vm449, %v229, 0
  %v1036 = vsel %vm449, %v230, 0
  %v1039 = vsel %vm449, %v231, 0
  %v1042 = vsel %vm449, %v232, 0
  %v1045 = vsel %vm449, %v233, 0
  %v1048 = vsel %vm449, %v234, 0
  %v1051 = vsel %vm449, %v235, 0
  %v1054 = vsel %vm449, %v236, 0
  %v1057 = vsel %vm449, %v237, 0
  %v1060 = vsel %vm449, %v238, 0
  %v1063 = vsel %vm449, %v239, 0
  %v1066 = vsel %vm449, %v240, 0
  %v1069 = vsel %vm449, %v241, 0
  %v1072 = vsel %vm449, %v242, 0
  %v1075 = vsel %vm449, %v243, 0
  %v1078 = vsel %vm449, %v244, 0
  %v1081 = vsel %vm449, %v245, 0
  %v1084 = vsel %vm449, %v246, 0
  %v1087 = vsel %vm449, %v247, 0
  %v1090 = vsel %vm449, %v248, 0
  %v1093 = vsel %vm449, %v249, 0
  %v1096 = vsel %vm449, %v250, 0
  %v1099 = vsel %vm449, %v251, 0
  %v1102 = vsel %vm449, %v252, 0
  %v1105 = vsel %vm449, %v253, 0
  %v1108 = vsel %vm449, %v254, 0
  %v1111 = vsel %vm449, %v255, 0
  %v1114 = vsel %vm449, %v256, 0
  %v1117 = vsel %vm449, %v257, 0
  %v1120 = vsel %vm449, %v258, 0
  %v1123 = vsel %vm449, %v259, 0
  %v1126 = vsel %vm449, %v260, 0
  %v1129 = vsel %vm449, %v261, 0
  %v1132 = vsel %vm449, %v262, 0
  %v1135 = vsel %vm449, %v263, 0
  %v1138 = vsel %vm449, %v264, 0
  %v1141 = vsel %vm449, %v265, 0
  %v1144 = vsel %vm449, %v266, 0
  %v1147 = vsel %vm449, %v267, 0
  %v1150 = vsel %vm449, %v268, 0
  %v1153 = vsel %vm449, %v269, 0
  %v1156 = vsel %vm449, %v270, 0
  %v1159 = vsel %vm449, %v271, 0
  %v1162 = vsel %vm449, %v272, 0
  %v1165 = vsel %vm449, %v273, 0
  %v1168 = vsel %vm449, %v274, 0
  %v1171 = vsel %vm449, %v275, 0
  %v1174 = vsel %vm449, %v276, 0
  %v1177 = vsel %vm449, %v277, 0
  %v1180 = vsel %vm449, %v278, 0
  %v1183 = vsel %vm449, %v279, 0
  %v1186 = vsel %vm449, %v280, 0
  %v1189 = vsel %vm449, %v281, 0
  %v1192 = vsel %vm449, %v282, 0
  %v1195 = vsel %vm449, %v283, 0
  %v1198 = vsel %vm449, %v284, 0
  %v1201 = vsel %vm449, %v285, 0
  %v1204 = vsel %vm449, %v286, 0
  %v1207 = vsel %vm449, %v287, 0
  %v1210 = vsel %vm449, %v288, 0
  %v1213 = vsel %vm449, %v289, 0
  %v1216 = vsel %vm449, %v290, 0
  %v1219 = vsel %vm449, %v291, 0
  %v1222 = vsel %vm449, %v292, 0
  %v1225 = vsel %vm449, %v293, 0
  %v1228 = vsel %vm449, %v294, 0
  %v1231 = vsel %vm449, %v295, 0
  %v1234 = vsel %vm449, %v296, 0
  %v1237 = vsel %vm449, %v297, 0
  %v1240 = vsel %vm449, %v298, 0
  %v1243 = vsel %vm449, %v299, 0
  %v1246 = vsel %vm449, %v300, 0
  %v1249 = vsel %vm449, %v301, 0
  %v1252 = vsel %vm449, %v302, 0
  %v1255 = vsel %vm449, %v303, 0
  %v1258 = vsel %vm449, %v304, 0
  %v1261 = vsel %vm449, %v305, 0
  %v1264 = vsel %vm449, %v306, 0
  %v1267 = vsel %vm449, %v307, 0
  %v1270 = vsel %vm449, %v308, 0
  %v1273 = vsel %vm449, %v309, 0
  %v1276 = vsel %vm449, %v310, 0
  %v1279 = vsel %vm449, %v311, 0
  %v1282 = vsel %vm449, %v312, 0
  %v1285 = vsel %vm449, %v313, 0
  %v1288 = vsel %vm449, %v314, 0
  %v1291 = vsel %vm449, %v315, 0
  %v1294 = vsel %vm449, %v316, 0
  %v1297 = vsel %vm449, %v317, 0
  %v1300 = vsel %vm449, %v318, 0
  %v1303 = vsel %vm449, %v319, 0
  %v1306 = vsel %vm449, %v320, 0
  %v1309 = vsel %vm449, %v321, 0
  %v1312 = vsel %vm449, %v322, 0
  %v1315 = vsel %vm449, %v323, 0
  %v1318 = vsel %vm449, %v324, 0
  %v1321 = vsel %vm449, %v325, 0
  %v1324 = vsel %vm449, %v326, 0
  %v1327 = vsel %vm449, %v327, 0
  %v1330 = vsel %vm449, %v328, 0
  %v1333 = vsel %vm449, %v329, 0
  %v1336 = vsel %vm449, %v330, 0
  %v1339 = vsel %vm449, %v331, 0
  %v1342 = vsel %vm449, %v332, 0
  %v1345 = vsel %vm449, %v333, 0
  %v1348 = vsel %vm449, %v334, 0
  %v1351 = vsel %vm449, %v335, 0
  %v1354 = vsel %vm449, %v336, 0
  %v1357 = vsel %vm449, %v337, 0
  %v1360 = vsel %vm449, %v338, 0
  %v1363 = vsel %vm449, %v339, 0
  %v1366 = vsel %vm449, %v340, 0
  %v1369 = vsel %vm449, %v341, 0
  %v1372 = vsel %vm449, %v342, 0
  %v1375 = vsel %vm449, %v343, 0
  %v1378 = vsel %vm449, %v344, 0
  %v1381 = vsel %vm449, %v345, 0
  %v1384 = vsel %vm449, %v346, 0
  %v1387 = vsel %vm449, %v347, 0
  %v1390 = vsel %vm449, %v348, 0
  %v1393 = vsel %vm449, %v349, 0
  %v1396 = vsel %vm449, %v350, 0
  %v1399 = vsel %vm449, %v351, 0
  %v1402 = vsel %vm449, %v352, 0
  %v1405 = vsel %vm449, %v353, 0
  %v1408 = vsel %vm449, %v354, 0
  %v1411 = vsel %vm449, %v355, 0
  %v1414 = vsel %vm449, %v356, 0
  %v1417 = vsel %vm449, %v357, 0
  %v1420 = vsel %vm449, %v358, 0
  %v1423 = vsel %vm449, %v359, 0
  %v1426 = vsel %vm449, %v360, 0
  %v1429 = vsel %vm449, %v361, 0
  %v1432 = vsel %vm449, %v362, 0
  %v1435 = vsel %vm449, %v363, 0
  %v1438 = vsel %vm449, %v364, 0
  %v1441 = vsel %vm449, %v365, 0
  %v1444 = vsel %vm449, %v366, 0
  %v1447 = vsel %vm449, %v367, 0
  %v1450 = vsel %vm449, %v368, 0
  %v1453 = vsel %vm449, %v369, 0
  %v1456 = vsel %vm449, %v370, 0
  %v1459 = vsel %vm449, %v371, 0
  %v1462 = vsel %vm449, %v372, 0
  %v1465 = vsel %vm449, %v373, 0
  %v1468 = vsel %vm449, %v374, 0
  %v1471 = vsel %vm449, %v375, 0
  %v1474 = vsel %vm449, %v376, 0
  %v1477 = vsel %vm449, %v377, 0
  %v1480 = vsel %vm449, %v378, 0
  %v1483 = vsel %vm449, %v379, 0
  %v1486 = vsel %vm449, %v380, 0
  %v1489 = vsel %vm449, %v381, 0
  %v1492 = vsel %vm449, %v382, 0
  %v1495 = vsel %vm449, %v383, 0
  %v1498 = vsel %vm449, %v384, 0
  %v1501 = vsel %vm449, %v385, 0
  %v1504 = vsel %vm449, %v386, 0
  %v1507 = vsel %vm449, %v387, 0
  %v1510 = vsel %vm449, %v388, 0
  %v1513 = vsel %vm449, %v389, 0
  %v1516 = vsel %vm449, %v390, 0
  %v1519 = vsel %vm449, %v391, 0
  %v1522 = vsel %vm449, %v392, 0
  %v1525 = vsel %vm449, %v393, 0
  %v1528 = vsel %vm449, %v394, 0
  %v1531 = vsel %vm449, %v395, 0
  %v1534 = vsel %vm449, %v396, 0
  %v1537 = vsel %vm449, %v397, 0
  %v1540 = vsel %vm449, %v398, 0
  %v1543 = vsel %vm449, %v399, 0
  %v1546 = vsel %vm449, %v400, 0
  %v1549 = vsel %vm449, %v401, 0
  %v1552 = vsel %vm449, %v402, 0
  %v1555 = vsel %vm449, %v403, 0
  %v1558 = vsel %vm449, %v404, 0
  %v1561 = vsel %vm449, %v405, 0
  %v1564 = vsel %vm449, %v406, 0
  %v1567 = vsel %vm449, %v407, 0
  %v1570 = vsel %vm449, %v408, 0
  %v1573 = vsel %vm449, %v409, 0
  %v1576 = vsel %vm449, %v410, 0
  %v1579 = vsel %vm449, %v411, 0
  %v1582 = vsel %vm449, %v412, 0
  %v1585 = vsel %vm449, %v413, 0
  %v1588 = vsel %vm449, %v414, 0
  %v1591 = vsel %vm449, %v415, 0
  %v1594 = vsel %vm449, %v416, 0
  %v1597 = vsel %vm449, %v417, 0
  %v1600 = vsel %vm449, %v418, 0
  %v1603 = vsel %vm449, %v419, 0
  %v1606 = vsel %vm449, %v420, 0
  %v1609 = vsel %vm449, %v421, 0
  %v1612 = vsel %vm449, %v422, 0
  %v1615 = vsel %vm449, %v423, 0
  %v1618 = vsel %vm449, %v424, 0
  %v1621 = vsel %vm449, %v425, 0
  %v1624 = vsel %vm449, %v426, 0
  %v1627 = vsel %vm449, %v427, 0
  %v1630 = vsel %vm449, %v428, 0
  %v1633 = vsel %vm449, %v429, 0
  %v1636 = vsel %vm449, %v430, 0
  %v1639 = vsel %vm449, %v431, 0
  %v1642 = vsel %vm449, %v432, 0
  %v1645 = vsel %vm449, %v433, 0
  %v1648 = vsel %vm449, %v434, 0
  %v1651 = vsel %vm449, %v435, 0
  %v1654 = vsel %vm449, %v436, 0
  %v1657 = vsel %vm449, %v437, 0
  %v1660 = vsel %vm449, %v438, 0
  %v1663 = vsel %vm449, %v439, 0
  %v1666 = vsel %vm449, %v440, 0
  %vm1668 = vcmask 1040384
  %v1670 = vsel %vm1668, %v444, 0
  %1672 = vmatpush.msra.mxu0 0.0
  %1673 = vmatpush.msra.mxu0 0.0
  %1674 = vmatpush.msra.mxu0 0.0
  %1675 = vmatpush.msra.mxu0 0.0
  %1676 = vmatpush.msra.mxu0 0.0
  %1677 = vmatpush.msra.mxu0 0.0
  %1678 = vmatpush.msra.mxu0 0.0
  %1679 = vmatpush.msra.mxu0 0.0
  %1680 = vmatpush.msra.mxu0 0.0
  %1681 = vmatpush.msra.mxu0 0.0
  %1682 = vmatpush.msra.mxu0 0.0
  %1683 = vmatpush.msra.mxu0 0.0
  %1684 = vmatpush.msra.mxu0 %v1670
  %1685 = vmatpush.msra.mxu0 %v443
  %1686 = vmatpush.msra.mxu0 %v442
  %1687 = vmatpush.msra.mxu0 %v441
  %1688 = vmatmul.f32.gmra.mxu0 %v451
  %v1689 = vpop.f32.mrf.mxu0
  %v1690 = vadd.f32 %v447, %v1689
  %1691 = vmatmul.f32.gmra.mxu0 %v454
  %v1692 = vpop.f32.mrf.mxu0
  %v1693 = vadd.f32 %v447, %v1692
  %1694 = vmatmul.f32.gmra.mxu0 %v457
  %v1695 = vpop.f32.mrf.mxu0
  %v1696 = vadd.f32 %v447, %v1695
  %1697 = vmatmul.f32.gmra.mxu0 %v460
  %v1698 = vpop.f32.mrf.mxu0
  %v1699 = vadd.f32 %v447, %v1698
  %1700 = vmatmul.f32.gmra.mxu0 %v463
  %v1701 = vpop.f32.mrf.mxu0
  %v1702 = vadd.f32 %v447, %v1701
  %1703 = vmatmul.f32.gmra.mxu0 %v466
  %v1704 = vpop.f32.mrf.mxu0
  %v1705 = vadd.f32 %v447, %v1704
  %1706 = vmatmul.f32.gmra.mxu0 %v469
  %v1707 = vpop.f32.mrf.mxu0
  %v1708 = vadd.f32 %v447, %v1707
  %1709 = vmatmul.f32.gmra.mxu0 %v472
  %v1710 = vpop.f32.mrf.mxu0
  %v1711 = vadd.f32 %v447, %v1710
  %1712 = vmatmul.f32.gmra.mxu0 %v475
  %v1713 = vpop.f32.mrf.mxu0
  %v1714 = vadd.f32 %v447, %v1713
  %1715 = vmatmul.f32.gmra.mxu0 %v478
  %v1716 = vpop.f32.mrf.mxu0
  %v1717 = vadd.f32 %v447, %v1716
  %1718 = vmatmul.f32.gmra.mxu0 %v481
  %v1719 = vpop.f32.mrf.mxu0
  %v1720 = vadd.f32 %v447, %v1719
  %1721 = vmatmul.f32.gmra.mxu0 %v484
  %v1722 = vpop.f32.mrf.mxu0
  %v1723 = vadd.f32 %v447, %v1722
  %1724 = vmatmul.f32.gmra.mxu0 %v487
  %v1725 = vpop.f32.mrf.mxu0
  %v1726 = vadd.f32 %v447, %v1725
  %1727 = vmatmul.f32.gmra.mxu0 %v490
  %v1728 = vpop.f32.mrf.mxu0
  %v1729 = vadd.f32 %v447, %v1728
  %1730 = vmatmul.f32.gmra.mxu0 %v493
  %v1731 = vpop.f32.mrf.mxu0
  %v1732 = vadd.f32 %v447, %v1731
  %1733 = vmatmul.f32.gmra.mxu0 %v496
  %v1734 = vpop.f32.mrf.mxu0
  %v1735 = vadd.f32 %v447, %v1734
  %1736 = vmatmul.f32.gmra.mxu0 %v499
  %v1737 = vpop.f32.mrf.mxu0
  %v1738 = vadd.f32 %v447, %v1737
  %1739 = vmatmul.f32.gmra.mxu0 %v502
  %v1740 = vpop.f32.mrf.mxu0
  %v1741 = vadd.f32 %v447, %v1740
  %1742 = vmatmul.f32.gmra.mxu0 %v505
  %v1743 = vpop.f32.mrf.mxu0
  %v1744 = vadd.f32 %v447, %v1743
  %1745 = vmatmul.f32.gmra.mxu0 %v508
  %v1746 = vpop.f32.mrf.mxu0
  %v1747 = vadd.f32 %v447, %v1746
  %1748 = vmatmul.f32.gmra.mxu0 %v511
  %v1749 = vpop.f32.mrf.mxu0
  %v1750 = vadd.f32 %v447, %v1749
  %1751 = vmatmul.f32.gmra.mxu0 %v514
  %v1752 = vpop.f32.mrf.mxu0
  %v1753 = vadd.f32 %v447, %v1752
  %1754 = vmatmul.f32.gmra.mxu0 %v517
  %v1755 = vpop.f32.mrf.mxu0
  %v1756 = vadd.f32 %v447, %v1755
  %1757 = vmatmul.f32.gmra.mxu0 %v520
  %v1758 = vpop.f32.mrf.mxu0
  %v1759 = vadd.f32 %v447, %v1758
  %1760 = vmatmul.f32.gmra.mxu0 %v523
  %v1761 = vpop.f32.mrf.mxu0
  %v1762 = vadd.f32 %v447, %v1761
  %1763 = vmatmul.f32.gmra.mxu0 %v526
  %v1764 = vpop.f32.mrf.mxu0
  %v1765 = vadd.f32 %v447, %v1764
  %1766 = vmatmul.f32.gmra.mxu0 %v529
  %v1767 = vpop.f32.mrf.mxu0
  %v1768 = vadd.f32 %v447, %v1767
  %1769 = vmatmul.f32.gmra.mxu0 %v532
  %v1770 = vpop.f32.mrf.mxu0
  %v1771 = vadd.f32 %v447, %v1770
  %1772 = vmatmul.f32.gmra.mxu0 %v535
  %v1773 = vpop.f32.mrf.mxu0
  %v1774 = vadd.f32 %v447, %v1773
  %1775 = vmatmul.f32.gmra.mxu0 %v538
  %v1776 = vpop.f32.mrf.mxu0
  %v1777 = vadd.f32 %v447, %v1776
  %1778 = vmatmul.f32.gmra.mxu0 %v541
  %v1779 = vpop.f32.mrf.mxu0
  %v1780 = vadd.f32 %v447, %v1779
  %1781 = vmatmul.f32.gmra.mxu0 %v544
  %v1782 = vpop.f32.mrf.mxu0
  %v1783 = vadd.f32 %v447, %v1782
  %1784 = vmatmul.f32.gmra.mxu0 %v547
  %v1785 = vpop.f32.mrf.mxu0
  %v1786 = vadd.f32 %v447, %v1785
  %1787 = vmatmul.f32.gmra.mxu0 %v550
  %v1788 = vpop.f32.mrf.mxu0
  %v1789 = vadd.f32 %v447, %v1788
  %1790 = vmatmul.f32.gmra.mxu0 %v553
  %v1791 = vpop.f32.mrf.mxu0
  %v1792 = vadd.f32 %v447, %v1791
  %1793 = vmatmul.f32.gmra.mxu0 %v556
  %v1794 = vpop.f32.mrf.mxu0
  %v1795 = vadd.f32 %v447, %v1794
  %1796 = vmatmul.f32.gmra.mxu0 %v559
  %v1797 = vpop.f32.mrf.mxu0
  %v1798 = vadd.f32 %v447, %v1797
  %1799 = vmatmul.f32.gmra.mxu0 %v562
  %v1800 = vpop.f32.mrf.mxu0
  %v1801 = vadd.f32 %v447, %v1800
  %1802 = vmatmul.f32.gmra.mxu0 %v565
  %v1803 = vpop.f32.mrf.mxu0
  %v1804 = vadd.f32 %v447, %v1803
  %1805 = vmatmul.f32.gmra.mxu0 %v568
  %v1806 = vpop.f32.mrf.mxu0
  %v1807 = vadd.f32 %v447, %v1806
  %1808 = vmatmul.f32.gmra.mxu0 %v571
  %v1809 = vpop.f32.mrf.mxu0
  %v1810 = vadd.f32 %v447, %v1809
  %1811 = vmatmul.f32.gmra.mxu0 %v574
  %v1812 = vpop.f32.mrf.mxu0
  %v1813 = vadd.f32 %v447, %v1812
  %1814 = vmatmul.f32.gmra.mxu0 %v577
  %v1815 = vpop.f32.mrf.mxu0
  %v1816 = vadd.f32 %v447, %v1815
  %1817 = vmatmul.f32.gmra.mxu0 %v580
  %v1818 = vpop.f32.mrf.mxu0
  %v1819 = vadd.f32 %v447, %v1818
  %1820 = vmatmul.f32.gmra.mxu0 %v583
  %v1821 = vpop.f32.mrf.mxu0
  %v1822 = vadd.f32 %v447, %v1821
  %1823 = vmatmul.f32.gmra.mxu0 %v586
  %v1824 = vpop.f32.mrf.mxu0
  %v1825 = vadd.f32 %v447, %v1824
  %1826 = vmatmul.f32.gmra.mxu0 %v589
  %v1827 = vpop.f32.mrf.mxu0
  %v1828 = vadd.f32 %v447, %v1827
  %1829 = vmatmul.f32.gmra.mxu0 %v592
  %v1830 = vpop.f32.mrf.mxu0
  %v1831 = vadd.f32 %v447, %v1830
  %1832 = vmatmul.f32.gmra.mxu0 %v595
  %v1833 = vpop.f32.mrf.mxu0
  %v1834 = vadd.f32 %v447, %v1833
  %1835 = vmatmul.f32.gmra.mxu0 %v598
  %v1836 = vpop.f32.mrf.mxu0
  %v1837 = vadd.f32 %v447, %v1836
  %1838 = vmatmul.f32.gmra.mxu0 %v601
  %v1839 = vpop.f32.mrf.mxu0
  %v1840 = vadd.f32 %v447, %v1839
  %1841 = vmatmul.f32.gmra.mxu0 %v604
  %v1842 = vpop.f32.mrf.mxu0
  %v1843 = vadd.f32 %v447, %v1842
  %1844 = vmatmul.f32.gmra.mxu0 %v607
  %v1845 = vpop.f32.mrf.mxu0
  %v1846 = vadd.f32 %v447, %v1845
  %1847 = vmatmul.f32.gmra.mxu0 %v610
  %v1848 = vpop.f32.mrf.mxu0
  %v1849 = vadd.f32 %v447, %v1848
  %1850 = vmatmul.f32.gmra.mxu0 %v613
  %v1851 = vpop.f32.mrf.mxu0
  %v1852 = vadd.f32 %v447, %v1851
  %1853 = vmatmul.f32.gmra.mxu0 %v616
  %v1854 = vpop.f32.mrf.mxu0
  %v1855 = vadd.f32 %v447, %v1854
  %1856 = vmatmul.f32.gmra.mxu0 %v619
  %v1857 = vpop.f32.mrf.mxu0
  %v1858 = vadd.f32 %v447, %v1857
  %1859 = vmatmul.f32.gmra.mxu0 %v622
  %v1860 = vpop.f32.mrf.mxu0
  %v1861 = vadd.f32 %v447, %v1860
  %1862 = vmatmul.f32.gmra.mxu0 %v625
  %v1863 = vpop.f32.mrf.mxu0
  %v1864 = vadd.f32 %v447, %v1863
  %1865 = vmatmul.f32.gmra.mxu0 %v628
  %v1866 = vpop.f32.mrf.mxu0
  %v1867 = vadd.f32 %v447, %v1866
  %1868 = vmatmul.f32.gmra.mxu0 %v631
  %v1869 = vpop.f32.mrf.mxu0
  %v1870 = vadd.f32 %v447, %v1869
  %1871 = vmatmul.f32.gmra.mxu0 %v634
  %v1872 = vpop.f32.mrf.mxu0
  %v1873 = vadd.f32 %v447, %v1872
  %1874 = vmatmul.f32.gmra.mxu0 %v637
  %v1875 = vpop.f32.mrf.mxu0
  %v1876 = vadd.f32 %v447, %v1875
  %1877 = vmatmul.f32.gmra.mxu0 %v640
  %v1878 = vpop.f32.mrf.mxu0
  %v1879 = vadd.f32 %v447, %v1878
  %1880 = vmatmul.f32.gmra.mxu0 %v643
  %v1881 = vpop.f32.mrf.mxu0
  %v1882 = vadd.f32 %v447, %v1881
  %1883 = vmatmul.f32.gmra.mxu0 %v646
  %v1884 = vpop.f32.mrf.mxu0
  %v1885 = vadd.f32 %v447, %v1884
  %1886 = vmatmul.f32.gmra.mxu0 %v649
  %v1887 = vpop.f32.mrf.mxu0
  %v1888 = vadd.f32 %v447, %v1887
  %1889 = vmatmul.f32.gmra.mxu0 %v652
  %v1890 = vpop.f32.mrf.mxu0
  %v1891 = vadd.f32 %v447, %v1890
  %1892 = vmatmul.f32.gmra.mxu0 %v655
  %v1893 = vpop.f32.mrf.mxu0
  %v1894 = vadd.f32 %v447, %v1893
  %1895 = vmatmul.f32.gmra.mxu0 %v658
  %v1896 = vpop.f32.mrf.mxu0
  %v1897 = vadd.f32 %v447, %v1896
  %1898 = vmatmul.f32.gmra.mxu0 %v661
  %v1899 = vpop.f32.mrf.mxu0
  %v1900 = vadd.f32 %v447, %v1899
  %1901 = vmatmul.f32.gmra.mxu0 %v664
  %v1902 = vpop.f32.mrf.mxu0
  %v1903 = vadd.f32 %v447, %v1902
  %1904 = vmatmul.f32.gmra.mxu0 %v667
  %v1905 = vpop.f32.mrf.mxu0
  %v1906 = vadd.f32 %v447, %v1905
  %1907 = vmatmul.f32.gmra.mxu0 %v670
  %v1908 = vpop.f32.mrf.mxu0
  %v1909 = vadd.f32 %v447, %v1908
  %1910 = vmatmul.f32.gmra.mxu0 %v673
  %v1911 = vpop.f32.mrf.mxu0
  %v1912 = vadd.f32 %v447, %v1911
  %1913 = vmatmul.f32.gmra.mxu0 %v676
  %v1914 = vpop.f32.mrf.mxu0
  %v1915 = vadd.f32 %v447, %v1914
  %1916 = vmatmul.f32.gmra.mxu0 %v679
  %v1917 = vpop.f32.mrf.mxu0
  %v1918 = vadd.f32 %v447, %v1917
  %1919 = vmatmul.f32.gmra.mxu0 %v682
  %v1920 = vpop.f32.mrf.mxu0
  %v1921 = vadd.f32 %v447, %v1920
  %1922 = vmatmul.f32.gmra.mxu0 %v685
  %v1923 = vpop.f32.mrf.mxu0
  %v1924 = vadd.f32 %v447, %v1923
  %1925 = vmatmul.f32.gmra.mxu0 %v688
  %v1926 = vpop.f32.mrf.mxu0
  %v1927 = vadd.f32 %v447, %v1926
  %1928 = vmatmul.f32.gmra.mxu0 %v691
  %v1929 = vpop.f32.mrf.mxu0
  %v1930 = vadd.f32 %v447, %v1929
  %1931 = vmatmul.f32.gmra.mxu0 %v694
  %v1932 = vpop.f32.mrf.mxu0
  %v1933 = vadd.f32 %v447, %v1932
  %1934 = vmatmul.f32.gmra.mxu0 %v697
  %v1935 = vpop.f32.mrf.mxu0
  %v1936 = vadd.f32 %v447, %v1935
  %1937 = vmatmul.f32.gmra.mxu0 %v700
  %v1938 = vpop.f32.mrf.mxu0
  %v1939 = vadd.f32 %v447, %v1938
  %1940 = vmatmul.f32.gmra.mxu0 %v703
  %v1941 = vpop.f32.mrf.mxu0
  %v1942 = vadd.f32 %v447, %v1941
  %1943 = vmatmul.f32.gmra.mxu0 %v706
  %v1944 = vpop.f32.mrf.mxu0
  %v1945 = vadd.f32 %v447, %v1944
  %1946 = vmatmul.f32.gmra.mxu0 %v709
  %v1947 = vpop.f32.mrf.mxu0
  %v1948 = vadd.f32 %v447, %v1947
  %1949 = vmatmul.f32.gmra.mxu0 %v712
  %v1950 = vpop.f32.mrf.mxu0
  %v1951 = vadd.f32 %v447, %v1950
  %1952 = vmatmul.f32.gmra.mxu0 %v715
  %v1953 = vpop.f32.mrf.mxu0
  %v1954 = vadd.f32 %v447, %v1953
  %1955 = vmatmul.f32.gmra.mxu0 %v718
  %v1956 = vpop.f32.mrf.mxu0
  %v1957 = vadd.f32 %v447, %v1956
  %1958 = vmatmul.f32.gmra.mxu0 %v721
  %v1959 = vpop.f32.mrf.mxu0
  %v1960 = vadd.f32 %v447, %v1959
  %1961 = vmatmul.f32.gmra.mxu0 %v724
  %v1962 = vpop.f32.mrf.mxu0
  %v1963 = vadd.f32 %v447, %v1962
  %1964 = vmatmul.f32.gmra.mxu0 %v727
  %v1965 = vpop.f32.mrf.mxu0
  %v1966 = vadd.f32 %v447, %v1965
  %1967 = vmatmul.f32.gmra.mxu0 %v730
  %v1968 = vpop.f32.mrf.mxu0
  %v1969 = vadd.f32 %v447, %v1968
  %1970 = vmatmul.f32.gmra.mxu0 %v733
  %v1971 = vpop.f32.mrf.mxu0
  %v1972 = vadd.f32 %v447, %v1971
  %1973 = vmatmul.f32.gmra.mxu0 %v736
  %v1974 = vpop.f32.mrf.mxu0
  %v1975 = vadd.f32 %v447, %v1974
  %1976 = vmatmul.f32.gmra.mxu0 %v739
  %v1977 = vpop.f32.mrf.mxu0
  %v1978 = vadd.f32 %v447, %v1977
  %1979 = vmatmul.f32.gmra.mxu0 %v742
  %v1980 = vpop.f32.mrf.mxu0
  %v1981 = vadd.f32 %v447, %v1980
  %1982 = vmatmul.f32.gmra.mxu0 %v745
  %v1983 = vpop.f32.mrf.mxu0
  %v1984 = vadd.f32 %v447, %v1983
  %1985 = vmatmul.f32.gmra.mxu0 %v748
  %v1986 = vpop.f32.mrf.mxu0
  %v1987 = vadd.f32 %v447, %v1986
  %1988 = vmatmul.f32.gmra.mxu0 %v751
  %v1989 = vpop.f32.mrf.mxu0
  %v1990 = vadd.f32 %v447, %v1989
  %1991 = vmatmul.f32.gmra.mxu0 %v754
  %v1992 = vpop.f32.mrf.mxu0
  %v1993 = vadd.f32 %v447, %v1992
  %1994 = vmatmul.f32.gmra.mxu0 %v757
  %v1995 = vpop.f32.mrf.mxu0
  %v1996 = vadd.f32 %v447, %v1995
  %1997 = vmatmul.f32.gmra.mxu0 %v760
  %v1998 = vpop.f32.mrf.mxu0
  %v1999 = vadd.f32 %v447, %v1998
  %2000 = vmatmul.f32.gmra.mxu0 %v763
  %v2001 = vpop.f32.mrf.mxu0
  %v2002 = vadd.f32 %v447, %v2001
  %2003 = vmatmul.f32.gmra.mxu0 %v766
  %v2004 = vpop.f32.mrf.mxu0
  %v2005 = vadd.f32 %v447, %v2004
  %2006 = vmatmul.f32.gmra.mxu0 %v769
  %v2007 = vpop.f32.mrf.mxu0
  %v2008 = vadd.f32 %v447, %v2007
  %2009 = vmatmul.f32.gmra.mxu0 %v772
  %v2010 = vpop.f32.mrf.mxu0
  %v2011 = vadd.f32 %v447, %v2010
  %2012 = vmatmul.f32.gmra.mxu0 %v775
  %v2013 = vpop.f32.mrf.mxu0
  %v2014 = vadd.f32 %v447, %v2013
  %2015 = vmatmul.f32.gmra.mxu0 %v778
  %v2016 = vpop.f32.mrf.mxu0
  %v2017 = vadd.f32 %v447, %v2016
  %2018 = vmatmul.f32.gmra.mxu0 %v781
  %v2019 = vpop.f32.mrf.mxu0
  %v2020 = vadd.f32 %v447, %v2019
  %2021 = vmatmul.f32.gmra.mxu0 %v784
  %v2022 = vpop.f32.mrf.mxu0
  %v2023 = vadd.f32 %v447, %v2022
  %2024 = vmatmul.f32.gmra.mxu0 %v787
  %v2025 = vpop.f32.mrf.mxu0
  %v2026 = vadd.f32 %v447, %v2025
  %2027 = vmatmul.f32.gmra.mxu0 %v790
  %v2028 = vpop.f32.mrf.mxu0
  %v2029 = vadd.f32 %v447, %v2028
  %2030 = vmatmul.f32.gmra.mxu0 %v793
  %v2031 = vpop.f32.mrf.mxu0
  %v2032 = vadd.f32 %v447, %v2031
  %2033 = vmatmul.f32.gmra.mxu0 %v796
  %v2034 = vpop.f32.mrf.mxu0
  %v2035 = vadd.f32 %v447, %v2034
  %2036 = vmatmul.f32.gmra.mxu0 %v799
  %v2037 = vpop.f32.mrf.mxu0
  %v2038 = vadd.f32 %v447, %v2037
  %2039 = vmatmul.f32.gmra.mxu0 %v802
  %v2040 = vpop.f32.mrf.mxu0
  %v2041 = vadd.f32 %v447, %v2040
  %2042 = vmatmul.f32.gmra.mxu0 %v805
  %v2043 = vpop.f32.mrf.mxu0
  %v2044 = vadd.f32 %v447, %v2043
  %2045 = vmatmul.f32.gmra.mxu0 %v808
  %v2046 = vpop.f32.mrf.mxu0
  %v2047 = vadd.f32 %v447, %v2046
  %2048 = vmatmul.f32.gmra.mxu0 %v811
  %v2049 = vpop.f32.mrf.mxu0
  %v2050 = vadd.f32 %v447, %v2049
  %2051 = vmatmul.f32.gmra.mxu0 %v814
  %v2052 = vpop.f32.mrf.mxu0
  %v2053 = vadd.f32 %v447, %v2052
  %2054 = vmatmul.f32.gmra.mxu0 %v817
  %v2055 = vpop.f32.mrf.mxu0
  %v2056 = vadd.f32 %v447, %v2055
  %2057 = vmatmul.f32.gmra.mxu0 %v820
  %v2058 = vpop.f32.mrf.mxu0
  %v2059 = vadd.f32 %v447, %v2058
  %2060 = vmatmul.f32.gmra.mxu0 %v823
  %v2061 = vpop.f32.mrf.mxu0
  %v2062 = vadd.f32 %v447, %v2061
  %2063 = vmatmul.f32.gmra.mxu0 %v826
  %v2064 = vpop.f32.mrf.mxu0
  %v2065 = vadd.f32 %v447, %v2064
  %2066 = vmatmul.f32.gmra.mxu0 %v829
  %v2067 = vpop.f32.mrf.mxu0
  %v2068 = vadd.f32 %v447, %v2067
  %2069 = vmatmul.f32.gmra.mxu0 %v832
  %v2070 = vpop.f32.mrf.mxu0
  %v2071 = vadd.f32 %v447, %v2070
  %2072 = vmatmul.f32.gmra.mxu0 %v835
  %v2073 = vpop.f32.mrf.mxu0
  %v2074 = vadd.f32 %v447, %v2073
  %2075 = vmatmul.f32.gmra.mxu0 %v838
  %v2076 = vpop.f32.mrf.mxu0
  %v2077 = vadd.f32 %v447, %v2076
  %2078 = vmatmul.f32.gmra.mxu0 %v841
  %v2079 = vpop.f32.mrf.mxu0
  %v2080 = vadd.f32 %v447, %v2079
  %2081 = vmatmul.f32.gmra.mxu0 %v844
  %v2082 = vpop.f32.mrf.mxu0
  %v2083 = vadd.f32 %v447, %v2082
  %2084 = vmatmul.f32.gmra.mxu0 %v847
  %v2085 = vpop.f32.mrf.mxu0
  %v2086 = vadd.f32 %v447, %v2085
  %2087 = vmatmul.f32.gmra.mxu0 %v850
  %v2088 = vpop.f32.mrf.mxu0
  %v2089 = vadd.f32 %v447, %v2088
  %2090 = vmatmul.f32.gmra.mxu0 %v853
  %v2091 = vpop.f32.mrf.mxu0
  %v2092 = vadd.f32 %v447, %v2091
  %2093 = vmatmul.f32.gmra.mxu0 %v856
  %v2094 = vpop.f32.mrf.mxu0
  %v2095 = vadd.f32 %v447, %v2094
  %2096 = vmatmul.f32.gmra.mxu0 %v859
  %v2097 = vpop.f32.mrf.mxu0
  %v2098 = vadd.f32 %v447, %v2097
  %2099 = vmatmul.f32.gmra.mxu0 %v862
  %v2100 = vpop.f32.mrf.mxu0
  %v2101 = vadd.f32 %v447, %v2100
  %2102 = vmatmul.f32.gmra.mxu0 %v865
  %v2103 = vpop.f32.mrf.mxu0
  %v2104 = vadd.f32 %v447, %v2103
  %2105 = vmatmul.f32.gmra.mxu0 %v868
  %v2106 = vpop.f32.mrf.mxu0
  %v2107 = vadd.f32 %v447, %v2106
  %2108 = vmatmul.f32.gmra.mxu0 %v871
  %v2109 = vpop.f32.mrf.mxu0
  %v2110 = vadd.f32 %v447, %v2109
  %2111 = vmatmul.f32.gmra.mxu0 %v874
  %v2112 = vpop.f32.mrf.mxu0
  %v2113 = vadd.f32 %v447, %v2112
  %2114 = vmatmul.f32.gmra.mxu0 %v877
  %v2115 = vpop.f32.mrf.mxu0
  %v2116 = vadd.f32 %v447, %v2115
  %2117 = vmatmul.f32.gmra.mxu0 %v880
  %v2118 = vpop.f32.mrf.mxu0
  %v2119 = vadd.f32 %v447, %v2118
  %2120 = vmatmul.f32.gmra.mxu0 %v883
  %v2121 = vpop.f32.mrf.mxu0
  %v2122 = vadd.f32 %v447, %v2121
  %2123 = vmatmul.f32.gmra.mxu0 %v886
  %v2124 = vpop.f32.mrf.mxu0
  %v2125 = vadd.f32 %v447, %v2124
  %2126 = vmatmul.f32.gmra.mxu0 %v889
  %v2127 = vpop.f32.mrf.mxu0
  %v2128 = vadd.f32 %v447, %v2127
  %2129 = vmatmul.f32.gmra.mxu0 %v892
  %v2130 = vpop.f32.mrf.mxu0
  %v2131 = vadd.f32 %v447, %v2130
  %2132 = vmatmul.f32.gmra.mxu0 %v895
  %v2133 = vpop.f32.mrf.mxu0
  %v2134 = vadd.f32 %v447, %v2133
  %2135 = vmatmul.f32.gmra.mxu0 %v898
  %v2136 = vpop.f32.mrf.mxu0
  %v2137 = vadd.f32 %v447, %v2136
  %2138 = vmatmul.f32.gmra.mxu0 %v901
  %v2139 = vpop.f32.mrf.mxu0
  %v2140 = vadd.f32 %v447, %v2139
  %2141 = vmatmul.f32.gmra.mxu0 %v904
  %v2142 = vpop.f32.mrf.mxu0
  %v2143 = vadd.f32 %v447, %v2142
  %2144 = vmatmul.f32.gmra.mxu0 %v907
  %v2145 = vpop.f32.mrf.mxu0
  %v2146 = vadd.f32 %v447, %v2145
  %2147 = vmatmul.f32.gmra.mxu0 %v910
  %v2148 = vpop.f32.mrf.mxu0
  %v2149 = vadd.f32 %v447, %v2148
  %2150 = vmatmul.f32.gmra.mxu0 %v913
  %v2151 = vpop.f32.mrf.mxu0
  %v2152 = vadd.f32 %v447, %v2151
  %2153 = vmatmul.f32.gmra.mxu0 %v916
  %v2154 = vpop.f32.mrf.mxu0
  %v2155 = vadd.f32 %v447, %v2154
  %2156 = vmatmul.f32.gmra.mxu0 %v919
  %v2157 = vpop.f32.mrf.mxu0
  %v2158 = vadd.f32 %v447, %v2157
  %2159 = vmatmul.f32.gmra.mxu0 %v922
  %v2160 = vpop.f32.mrf.mxu0
  %v2161 = vadd.f32 %v447, %v2160
  %2162 = vmatmul.f32.gmra.mxu0 %v925
  %v2163 = vpop.f32.mrf.mxu0
  %v2164 = vadd.f32 %v447, %v2163
  %2165 = vmatmul.f32.gmra.mxu0 %v928
  %v2166 = vpop.f32.mrf.mxu0
  %v2167 = vadd.f32 %v447, %v2166
  %2168 = vmatmul.f32.gmra.mxu0 %v931
  %v2169 = vpop.f32.mrf.mxu0
  %v2170 = vadd.f32 %v447, %v2169
  %2171 = vmatmul.f32.gmra.mxu0 %v934
  %v2172 = vpop.f32.mrf.mxu0
  %v2173 = vadd.f32 %v447, %v2172
  %2174 = vmatmul.f32.gmra.mxu0 %v937
  %v2175 = vpop.f32.mrf.mxu0
  %v2176 = vadd.f32 %v447, %v2175
  %2177 = vmatmul.f32.gmra.mxu0 %v940
  %v2178 = vpop.f32.mrf.mxu0
  %v2179 = vadd.f32 %v447, %v2178
  %2180 = vmatmul.f32.gmra.mxu0 %v943
  %v2181 = vpop.f32.mrf.mxu0
  %v2182 = vadd.f32 %v447, %v2181
  %2183 = vmatmul.f32.gmra.mxu0 %v946
  %v2184 = vpop.f32.mrf.mxu0
  %v2185 = vadd.f32 %v447, %v2184
  %2186 = vmatmul.f32.gmra.mxu0 %v949
  %v2187 = vpop.f32.mrf.mxu0
  %v2188 = vadd.f32 %v447, %v2187
  %2189 = vmatmul.f32.gmra.mxu0 %v952
  %v2190 = vpop.f32.mrf.mxu0
  %v2191 = vadd.f32 %v447, %v2190
  %2192 = vmatmul.f32.gmra.mxu0 %v955
  %v2193 = vpop.f32.mrf.mxu0
  %v2194 = vadd.f32 %v447, %v2193
  %2195 = vmatmul.f32.gmra.mxu0 %v958
  %v2196 = vpop.f32.mrf.mxu0
  %v2197 = vadd.f32 %v447, %v2196
  %2198 = vmatmul.f32.gmra.mxu0 %v961
  %v2199 = vpop.f32.mrf.mxu0
  %v2200 = vadd.f32 %v447, %v2199
  %2201 = vmatmul.f32.gmra.mxu0 %v964
  %v2202 = vpop.f32.mrf.mxu0
  %v2203 = vadd.f32 %v447, %v2202
  %2204 = vmatmul.f32.gmra.mxu0 %v967
  %v2205 = vpop.f32.mrf.mxu0
  %v2206 = vadd.f32 %v447, %v2205
  %2207 = vmatmul.f32.gmra.mxu0 %v970
  %v2208 = vpop.f32.mrf.mxu0
  %v2209 = vadd.f32 %v447, %v2208
  %2210 = vmatmul.f32.gmra.mxu0 %v973
  %v2211 = vpop.f32.mrf.mxu0
  %v2212 = vadd.f32 %v447, %v2211
  %2213 = vmatmul.f32.gmra.mxu0 %v976
  %v2214 = vpop.f32.mrf.mxu0
  %v2215 = vadd.f32 %v447, %v2214
  %2216 = vmatmul.f32.gmra.mxu0 %v979
  %v2217 = vpop.f32.mrf.mxu0
  %v2218 = vadd.f32 %v447, %v2217
  %2219 = vmatmul.f32.gmra.mxu0 %v982
  %v2220 = vpop.f32.mrf.mxu0
  %v2221 = vadd.f32 %v447, %v2220
  %2222 = vmatmul.f32.gmra.mxu0 %v985
  %v2223 = vpop.f32.mrf.mxu0
  %v2224 = vadd.f32 %v447, %v2223
  %2225 = vmatmul.f32.gmra.mxu0 %v988
  %v2226 = vpop.f32.mrf.mxu0
  %v2227 = vadd.f32 %v447, %v2226
  %2228 = vmatmul.f32.gmra.mxu0 %v991
  %v2229 = vpop.f32.mrf.mxu0
  %v2230 = vadd.f32 %v447, %v2229
  %2231 = vmatmul.f32.gmra.mxu0 %v994
  %v2232 = vpop.f32.mrf.mxu0
  %v2233 = vadd.f32 %v447, %v2232
  %2234 = vmatmul.f32.gmra.mxu0 %v997
  %v2235 = vpop.f32.mrf.mxu0
  %v2236 = vadd.f32 %v447, %v2235
  %2237 = vmatmul.f32.gmra.mxu0 %v1000
  %v2238 = vpop.f32.mrf.mxu0
  %v2239 = vadd.f32 %v447, %v2238
  %2240 = vmatmul.f32.gmra.mxu0 %v1003
  %v2241 = vpop.f32.mrf.mxu0
  %v2242 = vadd.f32 %v447, %v2241
  %2243 = vmatmul.f32.gmra.mxu0 %v1006
  %v2244 = vpop.f32.mrf.mxu0
  %v2245 = vadd.f32 %v447, %v2244
  %2246 = vmatmul.f32.gmra.mxu0 %v1009
  %v2247 = vpop.f32.mrf.mxu0
  %v2248 = vadd.f32 %v447, %v2247
  %2249 = vmatmul.f32.gmra.mxu0 %v1012
  %v2250 = vpop.f32.mrf.mxu0
  %v2251 = vadd.f32 %v447, %v2250
  %2252 = vmatmul.f32.gmra.mxu0 %v1015
  %v2253 = vpop.f32.mrf.mxu0
  %v2254 = vadd.f32 %v447, %v2253
  %2255 = vmatmul.f32.gmra.mxu0 %v1018
  %v2256 = vpop.f32.mrf.mxu0
  %v2257 = vadd.f32 %v447, %v2256
  %2258 = vmatmul.f32.gmra.mxu0 %v1021
  %v2259 = vpop.f32.mrf.mxu0
  %v2260 = vadd.f32 %v447, %v2259
  %2261 = vmatmul.f32.gmra.mxu0 %v1024
  %v2262 = vpop.f32.mrf.mxu0
  %v2263 = vadd.f32 %v447, %v2262
  %2264 = vmatmul.f32.gmra.mxu0 %v1027
  %v2265 = vpop.f32.mrf.mxu0
  %v2266 = vadd.f32 %v447, %v2265
  %2267 = vmatmul.f32.gmra.mxu0 %v1030
  %v2268 = vpop.f32.mrf.mxu0
  %v2269 = vadd.f32 %v447, %v2268
  %2270 = vmatmul.f32.gmra.mxu0 %v1033
  %v2271 = vpop.f32.mrf.mxu0
  %v2272 = vadd.f32 %v447, %v2271
  %2273 = vmatmul.f32.gmra.mxu0 %v1036
  %v2274 = vpop.f32.mrf.mxu0
  %v2275 = vadd.f32 %v447, %v2274
  %2276 = vmatmul.f32.gmra.mxu0 %v1039
  %v2277 = vpop.f32.mrf.mxu0
  %v2278 = vadd.f32 %v447, %v2277
  %2279 = vmatmul.f32.gmra.mxu0 %v1042
  %v2280 = vpop.f32.mrf.mxu0
  %v2281 = vadd.f32 %v447, %v2280
  %2282 = vmatmul.f32.gmra.mxu0 %v1045
  %v2283 = vpop.f32.mrf.mxu0
  %v2284 = vadd.f32 %v447, %v2283
  %2285 = vmatmul.f32.gmra.mxu0 %v1048
  %v2286 = vpop.f32.mrf.mxu0
  %v2287 = vadd.f32 %v447, %v2286
  %2288 = vmatmul.f32.gmra.mxu0 %v1051
  %v2289 = vpop.f32.mrf.mxu0
  %v2290 = vadd.f32 %v447, %v2289
  %2291 = vmatmul.f32.gmra.mxu0 %v1054
  %v2292 = vpop.f32.mrf.mxu0
  %v2293 = vadd.f32 %v447, %v2292
  %2294 = vmatmul.f32.gmra.mxu0 %v1057
  %v2295 = vpop.f32.mrf.mxu0
  %v2296 = vadd.f32 %v447, %v2295
  %2297 = vmatmul.f32.gmra.mxu0 %v1060
  %v2298 = vpop.f32.mrf.mxu0
  %v2299 = vadd.f32 %v447, %v2298
  %2300 = vmatmul.f32.gmra.mxu0 %v1063
  %v2301 = vpop.f32.mrf.mxu0
  %v2302 = vadd.f32 %v447, %v2301
  %2303 = vmatmul.f32.gmra.mxu0 %v1066
  %v2304 = vpop.f32.mrf.mxu0
  %v2305 = vadd.f32 %v447, %v2304
  %2306 = vmatmul.f32.gmra.mxu0 %v1069
  %v2307 = vpop.f32.mrf.mxu0
  %v2308 = vadd.f32 %v447, %v2307
  %2309 = vmatmul.f32.gmra.mxu0 %v1072
  %v2310 = vpop.f32.mrf.mxu0
  %v2311 = vadd.f32 %v447, %v2310
  %2312 = vmatmul.f32.gmra.mxu0 %v1075
  %v2313 = vpop.f32.mrf.mxu0
  %v2314 = vadd.f32 %v447, %v2313
  %2315 = vmatmul.f32.gmra.mxu0 %v1078
  %v2316 = vpop.f32.mrf.mxu0
  %v2317 = vadd.f32 %v447, %v2316
  %2318 = vmatmul.f32.gmra.mxu0 %v1081
  %v2319 = vpop.f32.mrf.mxu0
  %v2320 = vadd.f32 %v447, %v2319
  %2321 = vmatmul.f32.gmra.mxu0 %v1084
  %v2322 = vpop.f32.mrf.mxu0
  %v2323 = vadd.f32 %v447, %v2322
  %2324 = vmatmul.f32.gmra.mxu0 %v1087
  %v2325 = vpop.f32.mrf.mxu0
  %v2326 = vadd.f32 %v447, %v2325
  %2327 = vmatmul.f32.gmra.mxu0 %v1090
  %v2328 = vpop.f32.mrf.mxu0
  %v2329 = vadd.f32 %v447, %v2328
  %2330 = vmatmul.f32.gmra.mxu0 %v1093
  %v2331 = vpop.f32.mrf.mxu0
  %v2332 = vadd.f32 %v447, %v2331
  %2333 = vmatmul.f32.gmra.mxu0 %v1096
  %v2334 = vpop.f32.mrf.mxu0
  %v2335 = vadd.f32 %v447, %v2334
  %2336 = vmatmul.f32.gmra.mxu0 %v1099
  %v2337 = vpop.f32.mrf.mxu0
  %v2338 = vadd.f32 %v447, %v2337
  %2339 = vmatmul.f32.gmra.mxu0 %v1102
  %v2340 = vpop.f32.mrf.mxu0
  %v2341 = vadd.f32 %v447, %v2340
  %2342 = vmatmul.f32.gmra.mxu0 %v1105
  %v2343 = vpop.f32.mrf.mxu0
  %v2344 = vadd.f32 %v447, %v2343
  %2345 = vmatmul.f32.gmra.mxu0 %v1108
  %v2346 = vpop.f32.mrf.mxu0
  %v2347 = vadd.f32 %v447, %v2346
  %2348 = vmatmul.f32.gmra.mxu0 %v1111
  %v2349 = vpop.f32.mrf.mxu0
  %v2350 = vadd.f32 %v447, %v2349
  %2351 = vmatmul.f32.gmra.mxu0 %v1114
  %v2352 = vpop.f32.mrf.mxu0
  %v2353 = vadd.f32 %v447, %v2352
  %2354 = vmatmul.f32.gmra.mxu0 %v1117
  %v2355 = vpop.f32.mrf.mxu0
  %v2356 = vadd.f32 %v447, %v2355
  %2357 = vmatmul.f32.gmra.mxu0 %v1120
  %v2358 = vpop.f32.mrf.mxu0
  %v2359 = vadd.f32 %v447, %v2358
  %2360 = vmatmul.f32.gmra.mxu0 %v1123
  %v2361 = vpop.f32.mrf.mxu0
  %v2362 = vadd.f32 %v447, %v2361
  %2363 = vmatmul.f32.gmra.mxu0 %v1126
  %v2364 = vpop.f32.mrf.mxu0
  %v2365 = vadd.f32 %v447, %v2364
  %2366 = vmatmul.f32.gmra.mxu0 %v1129
  %v2367 = vpop.f32.mrf.mxu0
  %v2368 = vadd.f32 %v447, %v2367
  %2369 = vmatmul.f32.gmra.mxu0 %v1132
  %v2370 = vpop.f32.mrf.mxu0
  %v2371 = vadd.f32 %v447, %v2370
  %2372 = vmatmul.f32.gmra.mxu0 %v1135
  %v2373 = vpop.f32.mrf.mxu0
  %v2374 = vadd.f32 %v447, %v2373
  %2375 = vmatmul.f32.gmra.mxu0 %v1138
  %v2376 = vpop.f32.mrf.mxu0
  %v2377 = vadd.f32 %v447, %v2376
  %2378 = vmatmul.f32.gmra.mxu0 %v1141
  %v2379 = vpop.f32.mrf.mxu0
  %v2380 = vadd.f32 %v447, %v2379
  %2381 = vmatmul.f32.gmra.mxu0 %v1144
  %v2382 = vpop.f32.mrf.mxu0
  %v2383 = vadd.f32 %v447, %v2382
  %2384 = vmatmul.f32.gmra.mxu0 %v1147
  %v2385 = vpop.f32.mrf.mxu0
  %v2386 = vadd.f32 %v447, %v2385
  %2387 = vmatmul.f32.gmra.mxu0 %v1150
  %v2388 = vpop.f32.mrf.mxu0
  %v2389 = vadd.f32 %v447, %v2388
  %2390 = vmatmul.f32.gmra.mxu0 %v1153
  %v2391 = vpop.f32.mrf.mxu0
  %v2392 = vadd.f32 %v447, %v2391
  %2393 = vmatmul.f32.gmra.mxu0 %v1156
  %v2394 = vpop.f32.mrf.mxu0
  %v2395 = vadd.f32 %v447, %v2394
  %2396 = vmatmul.f32.gmra.mxu0 %v1159
  %v2397 = vpop.f32.mrf.mxu0
  %v2398 = vadd.f32 %v447, %v2397
  %2399 = vmatmul.f32.gmra.mxu0 %v1162
  %v2400 = vpop.f32.mrf.mxu0
  %v2401 = vadd.f32 %v447, %v2400
  %2402 = vmatmul.f32.gmra.mxu0 %v1165
  %v2403 = vpop.f32.mrf.mxu0
  %v2404 = vadd.f32 %v447, %v2403
  %2405 = vmatmul.f32.gmra.mxu0 %v1168
  %v2406 = vpop.f32.mrf.mxu0
  %v2407 = vadd.f32 %v447, %v2406
  %2408 = vmatmul.f32.gmra.mxu0 %v1171
  %v2409 = vpop.f32.mrf.mxu0
  %v2410 = vadd.f32 %v447, %v2409
  %2411 = vmatmul.f32.gmra.mxu0 %v1174
  %v2412 = vpop.f32.mrf.mxu0
  %v2413 = vadd.f32 %v447, %v2412
  %2414 = vmatmul.f32.gmra.mxu0 %v1177
  %v2415 = vpop.f32.mrf.mxu0
  %v2416 = vadd.f32 %v447, %v2415
  %2417 = vmatmul.f32.gmra.mxu0 %v1180
  %v2418 = vpop.f32.mrf.mxu0
  %v2419 = vadd.f32 %v447, %v2418
  %2420 = vmatmul.f32.gmra.mxu0 %v1183
  %v2421 = vpop.f32.mrf.mxu0
  %v2422 = vadd.f32 %v447, %v2421
  %2423 = vmatmul.f32.gmra.mxu0 %v1186
  %v2424 = vpop.f32.mrf.mxu0
  %v2425 = vadd.f32 %v447, %v2424
  %2426 = vmatmul.f32.gmra.mxu0 %v1189
  %v2427 = vpop.f32.mrf.mxu0
  %v2428 = vadd.f32 %v447, %v2427
  %2429 = vmatmul.f32.gmra.mxu0 %v1192
  %v2430 = vpop.f32.mrf.mxu0
  %v2431 = vadd.f32 %v447, %v2430
  %2432 = vmatmul.f32.gmra.mxu0 %v1195
  %v2433 = vpop.f32.mrf.mxu0
  %v2434 = vadd.f32 %v447, %v2433
  %2435 = vmatmul.f32.gmra.mxu0 %v1198
  %v2436 = vpop.f32.mrf.mxu0
  %v2437 = vadd.f32 %v447, %v2436
  %2438 = vmatmul.f32.gmra.mxu0 %v1201
  %v2439 = vpop.f32.mrf.mxu0
  %v2440 = vadd.f32 %v447, %v2439
  %2441 = vmatmul.f32.gmra.mxu0 %v1204
  %v2442 = vpop.f32.mrf.mxu0
  %v2443 = vadd.f32 %v447, %v2442
  %2444 = vmatmul.f32.gmra.mxu0 %v1207
  %v2445 = vpop.f32.mrf.mxu0
  %v2446 = vadd.f32 %v447, %v2445
  %2447 = vmatmul.f32.gmra.mxu0 %v1210
  %v2448 = vpop.f32.mrf.mxu0
  %v2449 = vadd.f32 %v447, %v2448
  %2450 = vmatmul.f32.gmra.mxu0 %v1213
  %v2451 = vpop.f32.mrf.mxu0
  %v2452 = vadd.f32 %v447, %v2451
  %2453 = vmatmul.f32.gmra.mxu0 %v1216
  %v2454 = vpop.f32.mrf.mxu0
  %v2455 = vadd.f32 %v447, %v2454
  %2456 = vmatmul.f32.gmra.mxu0 %v1219
  %v2457 = vpop.f32.mrf.mxu0
  %v2458 = vadd.f32 %v447, %v2457
  %2459 = vmatmul.f32.gmra.mxu0 %v1222
  %v2460 = vpop.f32.mrf.mxu0
  %v2461 = vadd.f32 %v447, %v2460
  %2462 = vmatmul.f32.gmra.mxu0 %v1225
  %v2463 = vpop.f32.mrf.mxu0
  %v2464 = vadd.f32 %v447, %v2463
  %2465 = vmatmul.f32.gmra.mxu0 %v1228
  %v2466 = vpop.f32.mrf.mxu0
  %v2467 = vadd.f32 %v447, %v2466
  %2468 = vmatmul.f32.gmra.mxu0 %v1231
  %v2469 = vpop.f32.mrf.mxu0
  %v2470 = vadd.f32 %v447, %v2469
  %2471 = vmatmul.f32.gmra.mxu0 %v1234
  %v2472 = vpop.f32.mrf.mxu0
  %v2473 = vadd.f32 %v447, %v2472
  %2474 = vmatmul.f32.gmra.mxu0 %v1237
  %v2475 = vpop.f32.mrf.mxu0
  %v2476 = vadd.f32 %v447, %v2475
  %2477 = vmatmul.f32.gmra.mxu0 %v1240
  %v2478 = vpop.f32.mrf.mxu0
  %v2479 = vadd.f32 %v447, %v2478
  %2480 = vmatmul.f32.gmra.mxu0 %v1243
  %v2481 = vpop.f32.mrf.mxu0
  %v2482 = vadd.f32 %v447, %v2481
  %2483 = vmatmul.f32.gmra.mxu0 %v1246
  %v2484 = vpop.f32.mrf.mxu0
  %v2485 = vadd.f32 %v447, %v2484
  %2486 = vmatmul.f32.gmra.mxu0 %v1249
  %v2487 = vpop.f32.mrf.mxu0
  %v2488 = vadd.f32 %v447, %v2487
  %2489 = vmatmul.f32.gmra.mxu0 %v1252
  %v2490 = vpop.f32.mrf.mxu0
  %v2491 = vadd.f32 %v447, %v2490
  %2492 = vmatmul.f32.gmra.mxu0 %v1255
  %v2493 = vpop.f32.mrf.mxu0
  %v2494 = vadd.f32 %v447, %v2493
  %2495 = vmatmul.f32.gmra.mxu0 %v1258
  %v2496 = vpop.f32.mrf.mxu0
  %v2497 = vadd.f32 %v447, %v2496
  %2498 = vmatmul.f32.gmra.mxu0 %v1261
  %v2499 = vpop.f32.mrf.mxu0
  %v2500 = vadd.f32 %v447, %v2499
  %2501 = vmatmul.f32.gmra.mxu0 %v1264
  %v2502 = vpop.f32.mrf.mxu0
  %v2503 = vadd.f32 %v447, %v2502
  %2504 = vmatmul.f32.gmra.mxu0 %v1267
  %v2505 = vpop.f32.mrf.mxu0
  %v2506 = vadd.f32 %v447, %v2505
  %2507 = vmatmul.f32.gmra.mxu0 %v1270
  %v2508 = vpop.f32.mrf.mxu0
  %v2509 = vadd.f32 %v447, %v2508
  %2510 = vmatmul.f32.gmra.mxu0 %v1273
  %v2511 = vpop.f32.mrf.mxu0
  %v2512 = vadd.f32 %v447, %v2511
  %2513 = vmatmul.f32.gmra.mxu0 %v1276
  %v2514 = vpop.f32.mrf.mxu0
  %v2515 = vadd.f32 %v447, %v2514
  %2516 = vmatmul.f32.gmra.mxu0 %v1279
  %v2517 = vpop.f32.mrf.mxu0
  %v2518 = vadd.f32 %v447, %v2517
  %2519 = vmatmul.f32.gmra.mxu0 %v1282
  %v2520 = vpop.f32.mrf.mxu0
  %v2521 = vadd.f32 %v447, %v2520
  %2522 = vmatmul.f32.gmra.mxu0 %v1285
  %v2523 = vpop.f32.mrf.mxu0
  %v2524 = vadd.f32 %v447, %v2523
  %2525 = vmatmul.f32.gmra.mxu0 %v1288
  %v2526 = vpop.f32.mrf.mxu0
  %v2527 = vadd.f32 %v447, %v2526
  %2528 = vmatmul.f32.gmra.mxu0 %v1291
  %v2529 = vpop.f32.mrf.mxu0
  %v2530 = vadd.f32 %v447, %v2529
  %2531 = vmatmul.f32.gmra.mxu0 %v1294
  %v2532 = vpop.f32.mrf.mxu0
  %v2533 = vadd.f32 %v447, %v2532
  %2534 = vmatmul.f32.gmra.mxu0 %v1297
  %v2535 = vpop.f32.mrf.mxu0
  %v2536 = vadd.f32 %v447, %v2535
  %2537 = vmatmul.f32.gmra.mxu0 %v1300
  %v2538 = vpop.f32.mrf.mxu0
  %v2539 = vadd.f32 %v447, %v2538
  %2540 = vmatmul.f32.gmra.mxu0 %v1303
  %v2541 = vpop.f32.mrf.mxu0
  %v2542 = vadd.f32 %v447, %v2541
  %2543 = vmatmul.f32.gmra.mxu0 %v1306
  %v2544 = vpop.f32.mrf.mxu0
  %v2545 = vadd.f32 %v447, %v2544
  %2546 = vmatmul.f32.gmra.mxu0 %v1309
  %v2547 = vpop.f32.mrf.mxu0
  %v2548 = vadd.f32 %v447, %v2547
  %2549 = vmatmul.f32.gmra.mxu0 %v1312
  %v2550 = vpop.f32.mrf.mxu0
  %v2551 = vadd.f32 %v447, %v2550
  %2552 = vmatmul.f32.gmra.mxu0 %v1315
  %v2553 = vpop.f32.mrf.mxu0
  %v2554 = vadd.f32 %v447, %v2553
  %2555 = vmatmul.f32.gmra.mxu0 %v1318
  %v2556 = vpop.f32.mrf.mxu0
  %v2557 = vadd.f32 %v447, %v2556
  %2558 = vmatmul.f32.gmra.mxu0 %v1321
  %v2559 = vpop.f32.mrf.mxu0
  %v2560 = vadd.f32 %v447, %v2559
  %2561 = vmatmul.f32.gmra.mxu0 %v1324
  %v2562 = vpop.f32.mrf.mxu0
  %v2563 = vadd.f32 %v447, %v2562
  %2564 = vmatmul.f32.gmra.mxu0 %v1327
  %v2565 = vpop.f32.mrf.mxu0
  %v2566 = vadd.f32 %v447, %v2565
  %2567 = vmatmul.f32.gmra.mxu0 %v1330
  %v2568 = vpop.f32.mrf.mxu0
  %v2569 = vadd.f32 %v447, %v2568
  %2570 = vmatmul.f32.gmra.mxu0 %v1333
  %v2571 = vpop.f32.mrf.mxu0
  %v2572 = vadd.f32 %v447, %v2571
  %2573 = vmatmul.f32.gmra.mxu0 %v1336
  %v2574 = vpop.f32.mrf.mxu0
  %v2575 = vadd.f32 %v447, %v2574
  %2576 = vmatmul.f32.gmra.mxu0 %v1339
  %v2577 = vpop.f32.mrf.mxu0
  %v2578 = vadd.f32 %v447, %v2577
  %2579 = vmatmul.f32.gmra.mxu0 %v1342
  %v2580 = vpop.f32.mrf.mxu0
  %v2581 = vadd.f32 %v447, %v2580
  %2582 = vmatmul.f32.gmra.mxu0 %v1345
  %v2583 = vpop.f32.mrf.mxu0
  %v2584 = vadd.f32 %v447, %v2583
  %2585 = vmatmul.f32.gmra.mxu0 %v1348
  %v2586 = vpop.f32.mrf.mxu0
  %v2587 = vadd.f32 %v447, %v2586
  %2588 = vmatmul.f32.gmra.mxu0 %v1351
  %v2589 = vpop.f32.mrf.mxu0
  %v2590 = vadd.f32 %v447, %v2589
  %2591 = vmatmul.f32.gmra.mxu0 %v1354
  %v2592 = vpop.f32.mrf.mxu0
  %v2593 = vadd.f32 %v447, %v2592
  %2594 = vmatmul.f32.gmra.mxu0 %v1357
  %v2595 = vpop.f32.mrf.mxu0
  %v2596 = vadd.f32 %v447, %v2595
  %2597 = vmatmul.f32.gmra.mxu0 %v1360
  %v2598 = vpop.f32.mrf.mxu0
  %v2599 = vadd.f32 %v447, %v2598
  %2600 = vmatmul.f32.gmra.mxu0 %v1363
  %v2601 = vpop.f32.mrf.mxu0
  %v2602 = vadd.f32 %v447, %v2601
  %2603 = vmatmul.f32.gmra.mxu0 %v1366
  %v2604 = vpop.f32.mrf.mxu0
  %v2605 = vadd.f32 %v447, %v2604
  %2606 = vmatmul.f32.gmra.mxu0 %v1369
  %v2607 = vpop.f32.mrf.mxu0
  %v2608 = vadd.f32 %v447, %v2607
  %2609 = vmatmul.f32.gmra.mxu0 %v1372
  %v2610 = vpop.f32.mrf.mxu0
  %v2611 = vadd.f32 %v447, %v2610
  %2612 = vmatmul.f32.gmra.mxu0 %v1375
  %v2613 = vpop.f32.mrf.mxu0
  %v2614 = vadd.f32 %v447, %v2613
  %2615 = vmatmul.f32.gmra.mxu0 %v1378
  %v2616 = vpop.f32.mrf.mxu0
  %v2617 = vadd.f32 %v447, %v2616
  %2618 = vmatmul.f32.gmra.mxu0 %v1381
  %v2619 = vpop.f32.mrf.mxu0
  %v2620 = vadd.f32 %v447, %v2619
  %2621 = vmatmul.f32.gmra.mxu0 %v1384
  %v2622 = vpop.f32.mrf.mxu0
  %v2623 = vadd.f32 %v447, %v2622
  %2624 = vmatmul.f32.gmra.mxu0 %v1387
  %v2625 = vpop.f32.mrf.mxu0
  %v2626 = vadd.f32 %v447, %v2625
  %2627 = vmatmul.f32.gmra.mxu0 %v1390
  %v2628 = vpop.f32.mrf.mxu0
  %v2629 = vadd.f32 %v447, %v2628
  %2630 = vmatmul.f32.gmra.mxu0 %v1393
  %v2631 = vpop.f32.mrf.mxu0
  %v2632 = vadd.f32 %v447, %v2631
  %2633 = vmatmul.f32.gmra.mxu0 %v1396
  %v2634 = vpop.f32.mrf.mxu0
  %v2635 = vadd.f32 %v447, %v2634
  %2636 = vmatmul.f32.gmra.mxu0 %v1399
  %v2637 = vpop.f32.mrf.mxu0
  %v2638 = vadd.f32 %v447, %v2637
  %2639 = vmatmul.f32.gmra.mxu0 %v1402
  %v2640 = vpop.f32.mrf.mxu0
  %v2641 = vadd.f32 %v447, %v2640
  %2642 = vmatmul.f32.gmra.mxu0 %v1405
  %v2643 = vpop.f32.mrf.mxu0
  %v2644 = vadd.f32 %v447, %v2643
  %2645 = vmatmul.f32.gmra.mxu0 %v1408
  %v2646 = vpop.f32.mrf.mxu0
  %v2647 = vadd.f32 %v447, %v2646
  %2648 = vmatmul.f32.gmra.mxu0 %v1411
  %v2649 = vpop.f32.mrf.mxu0
  %v2650 = vadd.f32 %v447, %v2649
  %2651 = vmatmul.f32.gmra.mxu0 %v1414
  %v2652 = vpop.f32.mrf.mxu0
  %v2653 = vadd.f32 %v447, %v2652
  %2654 = vmatmul.f32.gmra.mxu0 %v1417
  %v2655 = vpop.f32.mrf.mxu0
  %v2656 = vadd.f32 %v447, %v2655
  %2657 = vmatmul.f32.gmra.mxu0 %v1420
  %v2658 = vpop.f32.mrf.mxu0
  %v2659 = vadd.f32 %v447, %v2658
  %2660 = vmatmul.f32.gmra.mxu0 %v1423
  %v2661 = vpop.f32.mrf.mxu0
  %v2662 = vadd.f32 %v447, %v2661
  %2663 = vmatmul.f32.gmra.mxu0 %v1426
  %v2664 = vpop.f32.mrf.mxu0
  %v2665 = vadd.f32 %v447, %v2664
  %2666 = vmatmul.f32.gmra.mxu0 %v1429
  %v2667 = vpop.f32.mrf.mxu0
  %v2668 = vadd.f32 %v447, %v2667
  %2669 = vmatmul.f32.gmra.mxu0 %v1432
  %v2670 = vpop.f32.mrf.mxu0
  %v2671 = vadd.f32 %v447, %v2670
  %2672 = vmatmul.f32.gmra.mxu0 %v1435
  %v2673 = vpop.f32.mrf.mxu0
  %v2674 = vadd.f32 %v447, %v2673
  %2675 = vmatmul.f32.gmra.mxu0 %v1438
  %v2676 = vpop.f32.mrf.mxu0
  %v2677 = vadd.f32 %v447, %v2676
  %2678 = vmatmul.f32.gmra.mxu0 %v1441
  %v2679 = vpop.f32.mrf.mxu0
  %v2680 = vadd.f32 %v447, %v2679
  %2681 = vmatmul.f32.gmra.mxu0 %v1444
  %v2682 = vpop.f32.mrf.mxu0
  %v2683 = vadd.f32 %v447, %v2682
  %2684 = vmatmul.f32.gmra.mxu0 %v1447
  %v2685 = vpop.f32.mrf.mxu0
  %v2686 = vadd.f32 %v447, %v2685
  %2687 = vmatmul.f32.gmra.mxu0 %v1450
  %v2688 = vpop.f32.mrf.mxu0
  %v2689 = vadd.f32 %v447, %v2688
  %2690 = vmatmul.f32.gmra.mxu0 %v1453
  %v2691 = vpop.f32.mrf.mxu0
  %v2692 = vadd.f32 %v447, %v2691
  %2693 = vmatmul.f32.gmra.mxu0 %v1456
  %v2694 = vpop.f32.mrf.mxu0
  %v2695 = vadd.f32 %v447, %v2694
  %2696 = vmatmul.f32.gmra.mxu0 %v1459
  %v2697 = vpop.f32.mrf.mxu0
  %v2698 = vadd.f32 %v447, %v2697
  %2699 = vmatmul.f32.gmra.mxu0 %v1462
  %v2700 = vpop.f32.mrf.mxu0
  %v2701 = vadd.f32 %v447, %v2700
  %2702 = vmatmul.f32.gmra.mxu0 %v1465
  %v2703 = vpop.f32.mrf.mxu0
  %v2704 = vadd.f32 %v447, %v2703
  %2705 = vmatmul.f32.gmra.mxu0 %v1468
  %v2706 = vpop.f32.mrf.mxu0
  %v2707 = vadd.f32 %v447, %v2706
  %2708 = vmatmul.f32.gmra.mxu0 %v1471
  %v2709 = vpop.f32.mrf.mxu0
  %v2710 = vadd.f32 %v447, %v2709
  %2711 = vmatmul.f32.gmra.mxu0 %v1474
  %v2712 = vpop.f32.mrf.mxu0
  %v2713 = vadd.f32 %v447, %v2712
  %2714 = vmatmul.f32.gmra.mxu0 %v1477
  %v2715 = vpop.f32.mrf.mxu0
  %v2716 = vadd.f32 %v447, %v2715
  %2717 = vmatmul.f32.gmra.mxu0 %v1480
  %v2718 = vpop.f32.mrf.mxu0
  %v2719 = vadd.f32 %v447, %v2718
  %2720 = vmatmul.f32.gmra.mxu0 %v1483
  %v2721 = vpop.f32.mrf.mxu0
  %v2722 = vadd.f32 %v447, %v2721
  %2723 = vmatmul.f32.gmra.mxu0 %v1486
  %v2724 = vpop.f32.mrf.mxu0
  %v2725 = vadd.f32 %v447, %v2724
  %2726 = vmatmul.f32.gmra.mxu0 %v1489
  %v2727 = vpop.f32.mrf.mxu0
  %v2728 = vadd.f32 %v447, %v2727
  %2729 = vmatmul.f32.gmra.mxu0 %v1492
  %v2730 = vpop.f32.mrf.mxu0
  %v2731 = vadd.f32 %v447, %v2730
  %2732 = vmatmul.f32.gmra.mxu0 %v1495
  %v2733 = vpop.f32.mrf.mxu0
  %v2734 = vadd.f32 %v447, %v2733
  %2735 = vmatmul.f32.gmra.mxu0 %v1498
  %v2736 = vpop.f32.mrf.mxu0
  %v2737 = vadd.f32 %v447, %v2736
  %2738 = vmatmul.f32.gmra.mxu0 %v1501
  %v2739 = vpop.f32.mrf.mxu0
  %v2740 = vadd.f32 %v447, %v2739
  %2741 = vmatmul.f32.gmra.mxu0 %v1504
  %v2742 = vpop.f32.mrf.mxu0
  %v2743 = vadd.f32 %v447, %v2742
  %2744 = vmatmul.f32.gmra.mxu0 %v1507
  %v2745 = vpop.f32.mrf.mxu0
  %v2746 = vadd.f32 %v447, %v2745
  %2747 = vmatmul.f32.gmra.mxu0 %v1510
  %v2748 = vpop.f32.mrf.mxu0
  %v2749 = vadd.f32 %v447, %v2748
  %2750 = vmatmul.f32.gmra.mxu0 %v1513
  %v2751 = vpop.f32.mrf.mxu0
  %v2752 = vadd.f32 %v447, %v2751
  %2753 = vmatmul.f32.gmra.mxu0 %v1516
  %v2754 = vpop.f32.mrf.mxu0
  %v2755 = vadd.f32 %v447, %v2754
  %2756 = vmatmul.f32.gmra.mxu0 %v1519
  %v2757 = vpop.f32.mrf.mxu0
  %v2758 = vadd.f32 %v447, %v2757
  %2759 = vmatmul.f32.gmra.mxu0 %v1522
  %v2760 = vpop.f32.mrf.mxu0
  %v2761 = vadd.f32 %v447, %v2760
  %2762 = vmatmul.f32.gmra.mxu0 %v1525
  %v2763 = vpop.f32.mrf.mxu0
  %v2764 = vadd.f32 %v447, %v2763
  %2765 = vmatmul.f32.gmra.mxu0 %v1528
  %v2766 = vpop.f32.mrf.mxu0
  %v2767 = vadd.f32 %v447, %v2766
  %2768 = vmatmul.f32.gmra.mxu0 %v1531
  %v2769 = vpop.f32.mrf.mxu0
  %v2770 = vadd.f32 %v447, %v2769
  %2771 = vmatmul.f32.gmra.mxu0 %v1534
  %v2772 = vpop.f32.mrf.mxu0
  %v2773 = vadd.f32 %v447, %v2772
  %2774 = vmatmul.f32.gmra.mxu0 %v1537
  %v2775 = vpop.f32.mrf.mxu0
  %v2776 = vadd.f32 %v447, %v2775
  %2777 = vmatmul.f32.gmra.mxu0 %v1540
  %v2778 = vpop.f32.mrf.mxu0
  %v2779 = vadd.f32 %v447, %v2778
  %2780 = vmatmul.f32.gmra.mxu0 %v1543
  %v2781 = vpop.f32.mrf.mxu0
  %v2782 = vadd.f32 %v447, %v2781
  %2783 = vmatmul.f32.gmra.mxu0 %v1546
  %v2784 = vpop.f32.mrf.mxu0
  %v2785 = vadd.f32 %v447, %v2784
  %2786 = vmatmul.f32.gmra.mxu0 %v1549
  %v2787 = vpop.f32.mrf.mxu0
  %v2788 = vadd.f32 %v447, %v2787
  %2789 = vmatmul.f32.gmra.mxu0 %v1552
  %v2790 = vpop.f32.mrf.mxu0
  %v2791 = vadd.f32 %v447, %v2790
  %2792 = vmatmul.f32.gmra.mxu0 %v1555
  %v2793 = vpop.f32.mrf.mxu0
  %v2794 = vadd.f32 %v447, %v2793
  %2795 = vmatmul.f32.gmra.mxu0 %v1558
  %v2796 = vpop.f32.mrf.mxu0
  %v2797 = vadd.f32 %v447, %v2796
  %2798 = vmatmul.f32.gmra.mxu0 %v1561
  %v2799 = vpop.f32.mrf.mxu0
  %v2800 = vadd.f32 %v447, %v2799
  %2801 = vmatmul.f32.gmra.mxu0 %v1564
  %v2802 = vpop.f32.mrf.mxu0
  %v2803 = vadd.f32 %v447, %v2802
  %2804 = vmatmul.f32.gmra.mxu0 %v1567
  %v2805 = vpop.f32.mrf.mxu0
  %v2806 = vadd.f32 %v447, %v2805
  %2807 = vmatmul.f32.gmra.mxu0 %v1570
  %v2808 = vpop.f32.mrf.mxu0
  %v2809 = vadd.f32 %v447, %v2808
  %2810 = vmatmul.f32.gmra.mxu0 %v1573
  %v2811 = vpop.f32.mrf.mxu0
  %v2812 = vadd.f32 %v447, %v2811
  %2813 = vmatmul.f32.gmra.mxu0 %v1576
  %v2814 = vpop.f32.mrf.mxu0
  %v2815 = vadd.f32 %v447, %v2814
  %2816 = vmatmul.f32.gmra.mxu0 %v1579
  %v2817 = vpop.f32.mrf.mxu0
  %v2818 = vadd.f32 %v447, %v2817
  %2819 = vmatmul.f32.gmra.mxu0 %v1582
  %v2820 = vpop.f32.mrf.mxu0
  %v2821 = vadd.f32 %v447, %v2820
  %2822 = vmatmul.f32.gmra.mxu0 %v1585
  %v2823 = vpop.f32.mrf.mxu0
  %v2824 = vadd.f32 %v447, %v2823
  %2825 = vmatmul.f32.gmra.mxu0 %v1588
  %v2826 = vpop.f32.mrf.mxu0
  %v2827 = vadd.f32 %v447, %v2826
  %2828 = vmatmul.f32.gmra.mxu0 %v1591
  %v2829 = vpop.f32.mrf.mxu0
  %v2830 = vadd.f32 %v447, %v2829
  %2831 = vmatmul.f32.gmra.mxu0 %v1594
  %v2832 = vpop.f32.mrf.mxu0
  %v2833 = vadd.f32 %v447, %v2832
  %2834 = vmatmul.f32.gmra.mxu0 %v1597
  %v2835 = vpop.f32.mrf.mxu0
  %v2836 = vadd.f32 %v447, %v2835
  %2837 = vmatmul.f32.gmra.mxu0 %v1600
  %v2838 = vpop.f32.mrf.mxu0
  %v2839 = vadd.f32 %v447, %v2838
  %2840 = vmatmul.f32.gmra.mxu0 %v1603
  %v2841 = vpop.f32.mrf.mxu0
  %v2842 = vadd.f32 %v447, %v2841
  %2843 = vmatmul.f32.gmra.mxu0 %v1606
  %v2844 = vpop.f32.mrf.mxu0
  %v2845 = vadd.f32 %v447, %v2844
  %2846 = vmatmul.f32.gmra.mxu0 %v1609
  %v2847 = vpop.f32.mrf.mxu0
  %v2848 = vadd.f32 %v447, %v2847
  %2849 = vmatmul.f32.gmra.mxu0 %v1612
  %v2850 = vpop.f32.mrf.mxu0
  %v2851 = vadd.f32 %v447, %v2850
  %2852 = vmatmul.f32.gmra.mxu0 %v1615
  %v2853 = vpop.f32.mrf.mxu0
  %v2854 = vadd.f32 %v447, %v2853
  %2855 = vmatmul.f32.gmra.mxu0 %v1618
  %v2856 = vpop.f32.mrf.mxu0
  %v2857 = vadd.f32 %v447, %v2856
  %2858 = vmatmul.f32.gmra.mxu0 %v1621
  %v2859 = vpop.f32.mrf.mxu0
  %v2860 = vadd.f32 %v447, %v2859
  %2861 = vmatmul.f32.gmra.mxu0 %v1624
  %v2862 = vpop.f32.mrf.mxu0
  %v2863 = vadd.f32 %v447, %v2862
  %2864 = vmatmul.f32.gmra.mxu0 %v1627
  %v2865 = vpop.f32.mrf.mxu0
  %v2866 = vadd.f32 %v447, %v2865
  %2867 = vmatmul.f32.gmra.mxu0 %v1630
  %v2868 = vpop.f32.mrf.mxu0
  %v2869 = vadd.f32 %v447, %v2868
  %2870 = vmatmul.f32.gmra.mxu0 %v1633
  %v2871 = vpop.f32.mrf.mxu0
  %v2872 = vadd.f32 %v447, %v2871
  %2873 = vmatmul.f32.gmra.mxu0 %v1636
  %v2874 = vpop.f32.mrf.mxu0
  %v2875 = vadd.f32 %v447, %v2874
  %2876 = vmatmul.f32.gmra.mxu0 %v1639
  %v2877 = vpop.f32.mrf.mxu0
  %v2878 = vadd.f32 %v447, %v2877
  %2879 = vmatmul.f32.gmra.mxu0 %v1642
  %v2880 = vpop.f32.mrf.mxu0
  %v2881 = vadd.f32 %v447, %v2880
  %2882 = vmatmul.f32.gmra.mxu0 %v1645
  %v2883 = vpop.f32.mrf.mxu0
  %v2884 = vadd.f32 %v447, %v2883
  %2885 = vmatmul.f32.gmra.mxu0 %v1648
  %v2886 = vpop.f32.mrf.mxu0
  %v2887 = vadd.f32 %v447, %v2886
  %2888 = vmatmul.f32.gmra.mxu0 %v1651
  %v2889 = vpop.f32.mrf.mxu0
  %v2890 = vadd.f32 %v447, %v2889
  %2891 = vmatmul.f32.gmra.mxu0 %v1654
  %v2892 = vpop.f32.mrf.mxu0
  %v2893 = vadd.f32 %v447, %v2892
  %2894 = vmatmul.f32.gmra.mxu0 %v1657
  %v2895 = vpop.f32.mrf.mxu0
  %v2896 = vadd.f32 %v447, %v2895
  %2897 = vmatmul.f32.gmra.mxu0 %v1660
  %v2898 = vpop.f32.mrf.mxu0
  %v2899 = vadd.f32 %v447, %v2898
  %2900 = vmatmul.f32.gmra.mxu0 %v1663
  %v2901 = vpop.f32.mrf.mxu0
  %v2902 = vadd.f32 %v447, %v2901
  %2903 = vmatmul.f32.gmra.mxu0 %v1666
  %v2904 = vpop.f32.mrf.mxu0
  %v2905 = vadd.f32 %v447, %v2904
  %2906 = vdwg.mxu0
  %v2907 = vmax.f32 %v1690, 0.0
  %v2908 = vmax.f32 %v1693, 0.0
  %v2909 = vmax.f32 %v1696, 0.0
  %v2910 = vmax.f32 %v1699, 0.0
  %v2911 = vmax.f32 %v1702, 0.0
  %v2912 = vmax.f32 %v1705, 0.0
  %v2913 = vmax.f32 %v1708, 0.0
  %v2914 = vmax.f32 %v1711, 0.0
  %v2915 = vmax.f32 %v1714, 0.0
  %v2916 = vmax.f32 %v1717, 0.0
  %v2917 = vmax.f32 %v1720, 0.0
  %v2918 = vmax.f32 %v1723, 0.0
  %v2919 = vmax.f32 %v1726, 0.0
  %v2920 = vmax.f32 %v1729, 0.0
  %v2921 = vmax.f32 %v1732, 0.0
  %v2922 = vmax.f32 %v1735, 0.0
  %v2923 = vmax.f32 %v1738, 0.0
  %v2924 = vmax.f32 %v1741, 0.0
  %v2925 = vmax.f32 %v1744, 0.0
  %v2926 = vmax.f32 %v1747, 0.0
  %v2927 = vmax.f32 %v1750, 0.0
  %v2928 = vmax.f32 %v1753, 0.0
  %v2929 = vmax.f32 %v1756, 0.0
  %v2930 = vmax.f32 %v1759, 0.0
  %v2931 = vmax.f32 %v1762, 0.0
  %v2932 = vmax.f32 %v1765, 0.0
  %v2933 = vmax.f32 %v1768, 0.0
  %v2934 = vmax.f32 %v1771, 0.0
  %v2935 = vmax.f32 %v1774, 0.0
  %v2936 = vmax.f32 %v1777, 0.0
  %v2937 = vmax.f32 %v1780, 0.0
  %v2938 = vmax.f32 %v1783, 0.0
  %v2939 = vmax.f32 %v1786, 0.0
  %v2940 = vmax.f32 %v1789, 0.0
  %v2941 = vmax.f32 %v1792, 0.0
  %v2942 = vmax.f32 %v1795, 0.0
  %v2943 = vmax.f32 %v1798, 0.0
  %v2944 = vmax.f32 %v1801, 0.0
  %v2945 = vmax.f32 %v1804, 0.0
  %v2946 = vmax.f32 %v1807, 0.0
  %v2947 = vmax.f32 %v1810, 0.0
  %v2948 = vmax.f32 %v1813, 0.0
  %v2949 = vmax.f32 %v1816, 0.0
  %v2950 = vmax.f32 %v1819, 0.0
  %v2951 = vmax.f32 %v1822, 0.0
  %v2952 = vmax.f32 %v1825, 0.0
  %v2953 = vmax.f32 %v1828, 0.0
  %v2954 = vmax.f32 %v1831, 0.0
  %v2955 = vmax.f32 %v1834, 0.0
  %v2956 = vmax.f32 %v1837, 0.0
  %v2957 = vmax.f32 %v1840, 0.0
  %v2958 = vmax.f32 %v1843, 0.0
  %v2959 = vmax.f32 %v1846, 0.0
  %v2960 = vmax.f32 %v1849, 0.0
  %v2961 = vmax.f32 %v1852, 0.0
  %v2962 = vmax.f32 %v1855, 0.0
  %v2963 = vmax.f32 %v1858, 0.0
  %v2964 = vmax.f32 %v1861, 0.0
  %v2965 = vmax.f32 %v1864, 0.0
  %v2966 = vmax.f32 %v1867, 0.0
  %v2967 = vmax.f32 %v1870, 0.0
  %v2968 = vmax.f32 %v1873, 0.0
  %v2969 = vmax.f32 %v1876, 0.0
  %v2970 = vmax.f32 %v1879, 0.0
  %v2971 = vmax.f32 %v1882, 0.0
  %v2972 = vmax.f32 %v1885, 0.0
  %v2973 = vmax.f32 %v1888, 0.0
  %v2974 = vmax.f32 %v1891, 0.0
  %v2975 = vmax.f32 %v1894, 0.0
  %v2976 = vmax.f32 %v1897, 0.0
  %v2977 = vmax.f32 %v1900, 0.0
  %v2978 = vmax.f32 %v1903, 0.0
  %v2979 = vmax.f32 %v1906, 0.0
  %v2980 = vmax.f32 %v1909, 0.0
  %v2981 = vmax.f32 %v1912, 0.0
  %v2982 = vmax.f32 %v1915, 0.0
  %v2983 = vmax.f32 %v1918, 0.0
  %v2984 = vmax.f32 %v1921, 0.0
  %v2985 = vmax.f32 %v1924, 0.0
  %v2986 = vmax.f32 %v1927, 0.0
  %v2987 = vmax.f32 %v1930, 0.0
  %v2988 = vmax.f32 %v1933, 0.0
  %v2989 = vmax.f32 %v1936, 0.0
  %v2990 = vmax.f32 %v1939, 0.0
  %v2991 = vmax.f32 %v1942, 0.0
  %v2992 = vmax.f32 %v1945, 0.0
  %v2993 = vmax.f32 %v1948, 0.0
  %v2994 = vmax.f32 %v1951, 0.0
  %v2995 = vmax.f32 %v1954, 0.0
  %v2996 = vmax.f32 %v1957, 0.0
  %v2997 = vmax.f32 %v1960, 0.0
  %v2998 = vmax.f32 %v1963, 0.0
  %v2999 = vmax.f32 %v1966, 0.0
  %v3000 = vmax.f32 %v1969, 0.0
  %v3001 = vmax.f32 %v1972, 0.0
  %v3002 = vmax.f32 %v1975, 0.0
  %v3003 = vmax.f32 %v1978, 0.0
  %v3004 = vmax.f32 %v1981, 0.0
  %v3005 = vmax.f32 %v1984, 0.0
  %v3006 = vmax.f32 %v1987, 0.0
  %v3007 = vmax.f32 %v1990, 0.0
  %v3008 = vmax.f32 %v1993, 0.0
  %v3009 = vmax.f32 %v1996, 0.0
  %v3010 = vmax.f32 %v1999, 0.0
  %v3011 = vmax.f32 %v2002, 0.0
  %v3012 = vmax.f32 %v2005, 0.0
  %v3013 = vmax.f32 %v2008, 0.0
  %v3014 = vmax.f32 %v2011, 0.0
  %v3015 = vmax.f32 %v2014, 0.0
  %v3016 = vmax.f32 %v2017, 0.0
  %v3017 = vmax.f32 %v2020, 0.0
  %v3018 = vmax.f32 %v2023, 0.0
  %v3019 = vmax.f32 %v2026, 0.0
  %v3020 = vmax.f32 %v2029, 0.0
  %v3021 = vmax.f32 %v2032, 0.0
  %v3022 = vmax.f32 %v2035, 0.0
  %v3023 = vmax.f32 %v2038, 0.0
  %v3024 = vmax.f32 %v2041, 0.0
  %v3025 = vmax.f32 %v2044, 0.0
  %v3026 = vmax.f32 %v2047, 0.0
  %v3027 = vmax.f32 %v2050, 0.0
  %v3028 = vmax.f32 %v2053, 0.0
  %v3029 = vmax.f32 %v2056, 0.0
  %v3030 = vmax.f32 %v2059, 0.0
  %v3031 = vmax.f32 %v2062, 0.0
  %v3032 = vmax.f32 %v2065, 0.0
  %v3033 = vmax.f32 %v2068, 0.0
  %v3034 = vmax.f32 %v2071, 0.0
  %v3035 = vmax.f32 %v2074, 0.0
  %v3036 = vmax.f32 %v2077, 0.0
  %v3037 = vmax.f32 %v2080, 0.0
  %v3038 = vmax.f32 %v2083, 0.0
  %v3039 = vmax.f32 %v2086, 0.0
  %v3040 = vmax.f32 %v2089, 0.0
  %v3041 = vmax.f32 %v2092, 0.0
  %v3042 = vmax.f32 %v2095, 0.0
  %v3043 = vmax.f32 %v2098, 0.0
  %v3044 = vmax.f32 %v2101, 0.0
  %v3045 = vmax.f32 %v2104, 0.0
  %v3046 = vmax.f32 %v2107, 0.0
  %v3047 = vmax.f32 %v2110, 0.0
  %v3048 = vmax.f32 %v2113, 0.0
  %v3049 = vmax.f32 %v2116, 0.0
  %v3050 = vmax.f32 %v2119, 0.0
  %v3051 = vmax.f32 %v2122, 0.0
  %v3052 = vmax.f32 %v2125, 0.0
  %v3053 = vmax.f32 %v2128, 0.0
  %v3054 = vmax.f32 %v2131, 0.0
  %v3055 = vmax.f32 %v2134, 0.0
  %v3056 = vmax.f32 %v2137, 0.0
  %v3057 = vmax.f32 %v2140, 0.0
  %v3058 = vmax.f32 %v2143, 0.0
  %v3059 = vmax.f32 %v2146, 0.0
  %v3060 = vmax.f32 %v2149, 0.0
  %v3061 = vmax.f32 %v2152, 0.0
  %v3062 = vmax.f32 %v2155, 0.0
  %v3063 = vmax.f32 %v2158, 0.0
  %v3064 = vmax.f32 %v2161, 0.0
  %v3065 = vmax.f32 %v2164, 0.0
  %v3066 = vmax.f32 %v2167, 0.0
  %v3067 = vmax.f32 %v2170, 0.0
  %v3068 = vmax.f32 %v2173, 0.0
  %v3069 = vmax.f32 %v2176, 0.0
  %v3070 = vmax.f32 %v2179, 0.0
  %v3071 = vmax.f32 %v2182, 0.0
  %v3072 = vmax.f32 %v2185, 0.0
  %v3073 = vmax.f32 %v2188, 0.0
  %v3074 = vmax.f32 %v2191, 0.0
  %v3075 = vmax.f32 %v2194, 0.0
  %v3076 = vmax.f32 %v2197, 0.0
  %v3077 = vmax.f32 %v2200, 0.0
  %v3078 = vmax.f32 %v2203, 0.0
  %v3079 = vmax.f32 %v2206, 0.0
  %v3080 = vmax.f32 %v2209, 0.0
  %v3081 = vmax.f32 %v2212, 0.0
  %v3082 = vmax.f32 %v2215, 0.0
  %v3083 = vmax.f32 %v2218, 0.0
  %v3084 = vmax.f32 %v2221, 0.0
  %v3085 = vmax.f32 %v2224, 0.0
  %v3086 = vmax.f32 %v2227, 0.0
  %v3087 = vmax.f32 %v2230, 0.0
  %v3088 = vmax.f32 %v2233, 0.0
  %v3089 = vmax.f32 %v2236, 0.0
  %v3090 = vmax.f32 %v2239, 0.0
  %v3091 = vmax.f32 %v2242, 0.0
  %v3092 = vmax.f32 %v2245, 0.0
  %v3093 = vmax.f32 %v2248, 0.0
  %v3094 = vmax.f32 %v2251, 0.0
  %v3095 = vmax.f32 %v2254, 0.0
  %v3096 = vmax.f32 %v2257, 0.0
  %v3097 = vmax.f32 %v2260, 0.0
  %v3098 = vmax.f32 %v2263, 0.0
  %v3099 = vmax.f32 %v2266, 0.0
  %v3100 = vmax.f32 %v2269, 0.0
  %v3101 = vmax.f32 %v2272, 0.0
  %v3102 = vmax.f32 %v2275, 0.0
  %v3103 = vmax.f32 %v2278, 0.0
  %v3104 = vmax.f32 %v2281, 0.0
  %v3105 = vmax.f32 %v2284, 0.0
  %v3106 = vmax.f32 %v2287, 0.0
  %v3107 = vmax.f32 %v2290, 0.0
  %v3108 = vmax.f32 %v2293, 0.0
  %v3109 = vmax.f32 %v2296, 0.0
  %v3110 = vmax.f32 %v2299, 0.0
  %v3111 = vmax.f32 %v2302, 0.0
  %v3112 = vmax.f32 %v2305, 0.0
  %v3113 = vmax.f32 %v2308, 0.0
  %v3114 = vmax.f32 %v2311, 0.0
  %v3115 = vmax.f32 %v2314, 0.0
  %v3116 = vmax.f32 %v2317, 0.0
  %v3117 = vmax.f32 %v2320, 0.0
  %v3118 = vmax.f32 %v2323, 0.0
  %v3119 = vmax.f32 %v2326, 0.0
  %v3120 = vmax.f32 %v2329, 0.0
  %v3121 = vmax.f32 %v2332, 0.0
  %v3122 = vmax.f32 %v2335, 0.0
  %v3123 = vmax.f32 %v2338, 0.0
  %v3124 = vmax.f32 %v2341, 0.0
  %v3125 = vmax.f32 %v2344, 0.0
  %v3126 = vmax.f32 %v2347, 0.0
  %v3127 = vmax.f32 %v2350, 0.0
  %v3128 = vmax.f32 %v2353, 0.0
  %v3129 = vmax.f32 %v2356, 0.0
  %v3130 = vmax.f32 %v2359, 0.0
  %v3131 = vmax.f32 %v2362, 0.0
  %v3132 = vmax.f32 %v2365, 0.0
  %v3133 = vmax.f32 %v2368, 0.0
  %v3134 = vmax.f32 %v2371, 0.0
  %v3135 = vmax.f32 %v2374, 0.0
  %v3136 = vmax.f32 %v2377, 0.0
  %v3137 = vmax.f32 %v2380, 0.0
  %v3138 = vmax.f32 %v2383, 0.0
  %v3139 = vmax.f32 %v2386, 0.0
  %v3140 = vmax.f32 %v2389, 0.0
  %v3141 = vmax.f32 %v2392, 0.0
  %v3142 = vmax.f32 %v2395, 0.0
  %v3143 = vmax.f32 %v2398, 0.0
  %v3144 = vmax.f32 %v2401, 0.0
  %v3145 = vmax.f32 %v2404, 0.0
  %v3146 = vmax.f32 %v2407, 0.0
  %v3147 = vmax.f32 %v2410, 0.0
  %v3148 = vmax.f32 %v2413, 0.0
  %v3149 = vmax.f32 %v2416, 0.0
  %v3150 = vmax.f32 %v2419, 0.0
  %v3151 = vmax.f32 %v2422, 0.0
  %v3152 = vmax.f32 %v2425, 0.0
  %v3153 = vmax.f32 %v2428, 0.0
  %v3154 = vmax.f32 %v2431, 0.0
  %v3155 = vmax.f32 %v2434, 0.0
  %v3156 = vmax.f32 %v2437, 0.0
  %v3157 = vmax.f32 %v2440, 0.0
  %v3158 = vmax.f32 %v2443, 0.0
  %v3159 = vmax.f32 %v2446, 0.0
  %v3160 = vmax.f32 %v2449, 0.0
  %v3161 = vmax.f32 %v2452, 0.0
  %v3162 = vmax.f32 %v2455, 0.0
  %v3163 = vmax.f32 %v2458, 0.0
  %v3164 = vmax.f32 %v2461, 0.0
  %v3165 = vmax.f32 %v2464, 0.0
  %v3166 = vmax.f32 %v2467, 0.0
  %v3167 = vmax.f32 %v2470, 0.0
  %v3168 = vmax.f32 %v2473, 0.0
  %v3169 = vmax.f32 %v2476, 0.0
  %v3170 = vmax.f32 %v2479, 0.0
  %v3171 = vmax.f32 %v2482, 0.0
  %v3172 = vmax.f32 %v2485, 0.0
  %v3173 = vmax.f32 %v2488, 0.0
  %v3174 = vmax.f32 %v2491, 0.0
  %v3175 = vmax.f32 %v2494, 0.0
  %v3176 = vmax.f32 %v2497, 0.0
  %v3177 = vmax.f32 %v2500, 0.0
  %v3178 = vmax.f32 %v2503, 0.0
  %v3179 = vmax.f32 %v2506, 0.0
  %v3180 = vmax.f32 %v2509, 0.0
  %v3181 = vmax.f32 %v2512, 0.0
  %v3182 = vmax.f32 %v2515, 0.0
  %v3183 = vmax.f32 %v2518, 0.0
  %v3184 = vmax.f32 %v2521, 0.0
  %v3185 = vmax.f32 %v2524, 0.0
  %v3186 = vmax.f32 %v2527, 0.0
  %v3187 = vmax.f32 %v2530, 0.0
  %v3188 = vmax.f32 %v2533, 0.0
  %v3189 = vmax.f32 %v2536, 0.0
  %v3190 = vmax.f32 %v2539, 0.0
  %v3191 = vmax.f32 %v2542, 0.0
  %v3192 = vmax.f32 %v2545, 0.0
  %v3193 = vmax.f32 %v2548, 0.0
  %v3194 = vmax.f32 %v2551, 0.0
  %v3195 = vmax.f32 %v2554, 0.0
  %v3196 = vmax.f32 %v2557, 0.0
  %v3197 = vmax.f32 %v2560, 0.0
  %v3198 = vmax.f32 %v2563, 0.0
  %v3199 = vmax.f32 %v2566, 0.0
  %v3200 = vmax.f32 %v2569, 0.0
  %v3201 = vmax.f32 %v2572, 0.0
  %v3202 = vmax.f32 %v2575, 0.0
  %v3203 = vmax.f32 %v2578, 0.0
  %v3204 = vmax.f32 %v2581, 0.0
  %v3205 = vmax.f32 %v2584, 0.0
  %v3206 = vmax.f32 %v2587, 0.0
  %v3207 = vmax.f32 %v2590, 0.0
  %v3208 = vmax.f32 %v2593, 0.0
  %v3209 = vmax.f32 %v2596, 0.0
  %v3210 = vmax.f32 %v2599, 0.0
  %v3211 = vmax.f32 %v2602, 0.0
  %v3212 = vmax.f32 %v2605, 0.0
  %v3213 = vmax.f32 %v2608, 0.0
  %v3214 = vmax.f32 %v2611, 0.0
  %v3215 = vmax.f32 %v2614, 0.0
  %v3216 = vmax.f32 %v2617, 0.0
  %v3217 = vmax.f32 %v2620, 0.0
  %v3218 = vmax.f32 %v2623, 0.0
  %v3219 = vmax.f32 %v2626, 0.0
  %v3220 = vmax.f32 %v2629, 0.0
  %v3221 = vmax.f32 %v2632, 0.0
  %v3222 = vmax.f32 %v2635, 0.0
  %v3223 = vmax.f32 %v2638, 0.0
  %v3224 = vmax.f32 %v2641, 0.0
  %v3225 = vmax.f32 %v2644, 0.0
  %v3226 = vmax.f32 %v2647, 0.0
  %v3227 = vmax.f32 %v2650, 0.0
  %v3228 = vmax.f32 %v2653, 0.0
  %v3229 = vmax.f32 %v2656, 0.0
  %v3230 = vmax.f32 %v2659, 0.0
  %v3231 = vmax.f32 %v2662, 0.0
  %v3232 = vmax.f32 %v2665, 0.0
  %v3233 = vmax.f32 %v2668, 0.0
  %v3234 = vmax.f32 %v2671, 0.0
  %v3235 = vmax.f32 %v2674, 0.0
  %v3236 = vmax.f32 %v2677, 0.0
  %v3237 = vmax.f32 %v2680, 0.0
  %v3238 = vmax.f32 %v2683, 0.0
  %v3239 = vmax.f32 %v2686, 0.0
  %v3240 = vmax.f32 %v2689, 0.0
  %v3241 = vmax.f32 %v2692, 0.0
  %v3242 = vmax.f32 %v2695, 0.0
  %v3243 = vmax.f32 %v2698, 0.0
  %v3244 = vmax.f32 %v2701, 0.0
  %v3245 = vmax.f32 %v2704, 0.0
  %v3246 = vmax.f32 %v2707, 0.0
  %v3247 = vmax.f32 %v2710, 0.0
  %v3248 = vmax.f32 %v2713, 0.0
  %v3249 = vmax.f32 %v2716, 0.0
  %v3250 = vmax.f32 %v2719, 0.0
  %v3251 = vmax.f32 %v2722, 0.0
  %v3252 = vmax.f32 %v2725, 0.0
  %v3253 = vmax.f32 %v2728, 0.0
  %v3254 = vmax.f32 %v2731, 0.0
  %v3255 = vmax.f32 %v2734, 0.0
  %v3256 = vmax.f32 %v2737, 0.0
  %v3257 = vmax.f32 %v2740, 0.0
  %v3258 = vmax.f32 %v2743, 0.0
  %v3259 = vmax.f32 %v2746, 0.0
  %v3260 = vmax.f32 %v2749, 0.0
  %v3261 = vmax.f32 %v2752, 0.0
  %v3262 = vmax.f32 %v2755, 0.0
  %v3263 = vmax.f32 %v2758, 0.0
  %v3264 = vmax.f32 %v2761, 0.0
  %v3265 = vmax.f32 %v2764, 0.0
  %v3266 = vmax.f32 %v2767, 0.0
  %v3267 = vmax.f32 %v2770, 0.0
  %v3268 = vmax.f32 %v2773, 0.0
  %v3269 = vmax.f32 %v2776, 0.0
  %v3270 = vmax.f32 %v2779, 0.0
  %v3271 = vmax.f32 %v2782, 0.0
  %v3272 = vmax.f32 %v2785, 0.0
  %v3273 = vmax.f32 %v2788, 0.0
  %v3274 = vmax.f32 %v2791, 0.0
  %v3275 = vmax.f32 %v2794, 0.0
  %v3276 = vmax.f32 %v2797, 0.0
  %v3277 = vmax.f32 %v2800, 0.0
  %v3278 = vmax.f32 %v2803, 0.0
  %v3279 = vmax.f32 %v2806, 0.0
  %v3280 = vmax.f32 %v2809, 0.0
  %v3281 = vmax.f32 %v2812, 0.0
  %v3282 = vmax.f32 %v2815, 0.0
  %v3283 = vmax.f32 %v2818, 0.0
  %v3284 = vmax.f32 %v2821, 0.0
  %v3285 = vmax.f32 %v2824, 0.0
  %v3286 = vmax.f32 %v2827, 0.0
  %v3287 = vmax.f32 %v2830, 0.0
  %v3288 = vmax.f32 %v2833, 0.0
  %v3289 = vmax.f32 %v2836, 0.0
  %v3290 = vmax.f32 %v2839, 0.0
  %v3291 = vmax.f32 %v2842, 0.0
  %v3292 = vmax.f32 %v2845, 0.0
  %v3293 = vmax.f32 %v2848, 0.0
  %v3294 = vmax.f32 %v2851, 0.0
  %v3295 = vmax.f32 %v2854, 0.0
  %v3296 = vmax.f32 %v2857, 0.0
  %v3297 = vmax.f32 %v2860, 0.0
  %v3298 = vmax.f32 %v2863, 0.0
  %v3299 = vmax.f32 %v2866, 0.0
  %v3300 = vmax.f32 %v2869, 0.0
  %v3301 = vmax.f32 %v2872, 0.0
  %v3302 = vmax.f32 %v2875, 0.0
  %v3303 = vmax.f32 %v2878, 0.0
  %v3304 = vmax.f32 %v2881, 0.0
  %v3305 = vmax.f32 %v2884, 0.0
  %v3306 = vmax.f32 %v2887, 0.0
  %v3307 = vmax.f32 %v2890, 0.0
  %v3308 = vmax.f32 %v2893, 0.0
  %v3309 = vmax.f32 %v2896, 0.0
  %v3310 = vmax.f32 %v2899, 0.0
  %v3311 = vmax.f32 %v2902, 0.0
  %v3312 = vmax.f32 %v2905, 0.0
  %vm3313 = vcmask 195584
  %3314 = vst.msk [vmem:[%s9] sm:$0xff] %vm3313, %v2907
  %3315 = vst.msk [vmem:[%s9 + $0x8] sm:$0xff] %vm3313, %v2908
  %3316 = vst.msk [vmem:[%s9 + $0x10] sm:$0xff] %vm3313, %v2909
  %3317 = vst.msk [vmem:[%s9 + $0x18] sm:$0xff] %vm3313, %v2910
  %3318 = vst.msk [vmem:[%s9 + $0x20] sm:$0xff] %vm3313, %v2911
  %3319 = vst.msk [vmem:[%s9 + $0x28] sm:$0xff] %vm3313, %v2912
  %3320 = vst.msk [vmem:[%s9 + $0x30] sm:$0xff] %vm3313, %v2913
  %3321 = vst.msk [vmem:[%s9 + $0x38] sm:$0xff] %vm3313, %v2914
  %3322 = vst.msk [vmem:[%s9 + $0x40] sm:$0xff] %vm3313, %v2915
  %3323 = vst.msk [vmem:[%s9 + $0x48] sm:$0xff] %vm3313, %v2916
  %3324 = vst.msk [vmem:[%s9 + $0x50] sm:$0xff] %vm3313, %v2917
  %3325 = vst.msk [vmem:[%s9 + $0x58] sm:$0xff] %vm3313, %v2918
  %3326 = vst.msk [vmem:[%s9 + $0x60] sm:$0xff] %vm3313, %v2919
  %3327 = vst.msk [vmem:[%s9 + $0x68] sm:$0xff] %vm3313, %v2920
  %3328 = vst.msk [vmem:[%s9 + $0x70] sm:$0xff] %vm3313, %v2921
  %3329 = vst.msk [vmem:[%s9 + $0x78] sm:$0xff] %vm3313, %v2922
  %3330 = vst.msk [vmem:[%s9 + $0x80] sm:$0xff] %vm3313, %v2923
  %3331 = vst.msk [vmem:[%s9 + $0x88] sm:$0xff] %vm3313, %v2924
  %3332 = vst.msk [vmem:[%s9 + $0x90] sm:$0xff] %vm3313, %v2925
  %3333 = vst.msk [vmem:[%s9 + $0x98] sm:$0xff] %vm3313, %v2926
  %3334 = vst.msk [vmem:[%s9 + $0xa0] sm:$0xff] %vm3313, %v2927
  %3335 = vst.msk [vmem:[%s9 + $0xa8] sm:$0xff] %vm3313, %v2928
  %3336 = vst.msk [vmem:[%s9 + $0xb0] sm:$0xff] %vm3313, %v2929
  %3337 = vst.msk [vmem:[%s9 + $0xb8] sm:$0xff] %vm3313, %v2930
  %3338 = vst.msk [vmem:[%s9 + $0xc0] sm:$0xff] %vm3313, %v2931
  %3339 = vst.msk [vmem:[%s9 + $0xc8] sm:$0xff] %vm3313, %v2932
  %3340 = vst.msk [vmem:[%s9 + $0xd0] sm:$0xff] %vm3313, %v2933
  %3341 = vst.msk [vmem:[%s9 + $0xd8] sm:$0xff] %vm3313, %v2934
  %3342 = vst.msk [vmem:[%s9 + $0xe0] sm:$0xff] %vm3313, %v2935
  %3343 = vst.msk [vmem:[%s9 + $0xe8] sm:$0xff] %vm3313, %v2936
  %3344 = vst.msk [vmem:[%s9 + $0xf0] sm:$0xff] %vm3313, %v2937
  %3345 = vst.msk [vmem:[%s9 + $0xf8] sm:$0xff] %vm3313, %v2938
  %3346 = vst.msk [vmem:[%s9 + $0x100] sm:$0xff] %vm3313, %v2939
  %3347 = vst.msk [vmem:[%s9 + $0x108] sm:$0xff] %vm3313, %v2940
  %3348 = vst.msk [vmem:[%s9 + $0x110] sm:$0xff] %vm3313, %v2941
  %3349 = vst.msk [vmem:[%s9 + $0x118] sm:$0xff] %vm3313, %v2942
  %3350 = vst.msk [vmem:[%s9 + $0x120] sm:$0xff] %vm3313, %v2943
  %3351 = vst.msk [vmem:[%s9 + $0x128] sm:$0xff] %vm3313, %v2944
  %3352 = vst.msk [vmem:[%s9 + $0x130] sm:$0xff] %vm3313, %v2945
  %3353 = vst.msk [vmem:[%s9 + $0x138] sm:$0xff] %vm3313, %v2946
  %3354 = vst.msk [vmem:[%s9 + $0x140] sm:$0xff] %vm3313, %v2947
  %3355 = vst.msk [vmem:[%s9 + $0x148] sm:$0xff] %vm3313, %v2948
  %3356 = vst.msk [vmem:[%s9 + $0x150] sm:$0xff] %vm3313, %v2949
  %3357 = vst.msk [vmem:[%s9 + $0x158] sm:$0xff] %vm3313, %v2950
  %3358 = vst.msk [vmem:[%s9 + $0x160] sm:$0xff] %vm3313, %v2951
  %3359 = vst.msk [vmem:[%s9 + $0x168] sm:$0xff] %vm3313, %v2952
  %3360 = vst.msk [vmem:[%s9 + $0x170] sm:$0xff] %vm3313, %v2953
  %3361 = vst.msk [vmem:[%s9 + $0x178] sm:$0xff] %vm3313, %v2954
  %3362 = vst.msk [vmem:[%s9 + $0x180] sm:$0xff] %vm3313, %v2955
  %3363 = vst.msk [vmem:[%s9 + $0x188] sm:$0xff] %vm3313, %v2956
  %3364 = vst.msk [vmem:[%s9 + $0x190] sm:$0xff] %vm3313, %v2957
  %3365 = vst.msk [vmem:[%s9 + $0x198] sm:$0xff] %vm3313, %v2958
  %3366 = vst.msk [vmem:[%s9 + $0x1a0] sm:$0xff] %vm3313, %v2959
  %3367 = vst.msk [vmem:[%s9 + $0x1a8] sm:$0xff] %vm3313, %v2960
  %3368 = vst.msk [vmem:[%s9 + $0x1b0] sm:$0xff] %vm3313, %v2961
  %3369 = vst.msk [vmem:[%s9 + $0x1b8] sm:$0xff] %vm3313, %v2962
  %3370 = vst.msk [vmem:[%s9 + $0x1c0] sm:$0xff] %vm3313, %v2963
  %3371 = vst.msk [vmem:[%s9 + $0x1c8] sm:$0xff] %vm3313, %v2964
  %3372 = vst.msk [vmem:[%s9 + $0x1d0] sm:$0xff] %vm3313, %v2965
  %3373 = vst.msk [vmem:[%s9 + $0x1d8] sm:$0xff] %vm3313, %v2966
  %3374 = vst.msk [vmem:[%s9 + $0x1e0] sm:$0xff] %vm3313, %v2967
  %3375 = vst.msk [vmem:[%s9 + $0x1e8] sm:$0xff] %vm3313, %v2968
  %3376 = vst.msk [vmem:[%s9 + $0x1f0] sm:$0xff] %vm3313, %v2969
  %3377 = vst.msk [vmem:[%s9 + $0x1f8] sm:$0xff] %vm3313, %v2970
  %3378 = vst.msk [vmem:[%s9 + $0x200] sm:$0xff] %vm3313, %v2971
  %3379 = vst.msk [vmem:[%s9 + $0x208] sm:$0xff] %vm3313, %v2972
  %3380 = vst.msk [vmem:[%s9 + $0x210] sm:$0xff] %vm3313, %v2973
  %3381 = vst.msk [vmem:[%s9 + $0x218] sm:$0xff] %vm3313, %v2974
  %3382 = vst.msk [vmem:[%s9 + $0x220] sm:$0xff] %vm3313, %v2975
  %3383 = vst.msk [vmem:[%s9 + $0x228] sm:$0xff] %vm3313, %v2976
  %3384 = vst.msk [vmem:[%s9 + $0x230] sm:$0xff] %vm3313, %v2977
  %3385 = vst.msk [vmem:[%s9 + $0x238] sm:$0xff] %vm3313, %v2978
  %3386 = vst.msk [vmem:[%s9 + $0x240] sm:$0xff] %vm3313, %v2979
  %3387 = vst.msk [vmem:[%s9 + $0x248] sm:$0xff] %vm3313, %v2980
  %3388 = vst.msk [vmem:[%s9 + $0x250] sm:$0xff] %vm3313, %v2981
  %3389 = vst.msk [vmem:[%s9 + $0x258] sm:$0xff] %vm3313, %v2982
  %3390 = vst.msk [vmem:[%s9 + $0x260] sm:$0xff] %vm3313, %v2983
  %3391 = vst.msk [vmem:[%s9 + $0x268] sm:$0xff] %vm3313, %v2984
  %3392 = vst.msk [vmem:[%s9 + $0x270] sm:$0xff] %vm3313, %v2985
  %3393 = vst.msk [vmem:[%s9 + $0x278] sm:$0xff] %vm3313, %v2986
  %3394 = vst.msk [vmem:[%s9 + $0x280] sm:$0xff] %vm3313, %v2987
  %3395 = vst.msk [vmem:[%s9 + $0x288] sm:$0xff] %vm3313, %v2988
  %3396 = vst.msk [vmem:[%s9 + $0x290] sm:$0xff] %vm3313, %v2989
  %3397 = vst.msk [vmem:[%s9 + $0x298] sm:$0xff] %vm3313, %v2990
  %3398 = vst.msk [vmem:[%s9 + $0x2a0] sm:$0xff] %vm3313, %v2991
  %3399 = vst.msk [vmem:[%s9 + $0x2a8] sm:$0xff] %vm3313, %v2992
  %3400 = vst.msk [vmem:[%s9 + $0x2b0] sm:$0xff] %vm3313, %v2993
  %3401 = vst.msk [vmem:[%s9 + $0x2b8] sm:$0xff] %vm3313, %v2994
  %3402 = vst.msk [vmem:[%s9 + $0x2c0] sm:$0xff] %vm3313, %v2995
  %3403 = vst.msk [vmem:[%s9 + $0x2c8] sm:$0xff] %vm3313, %v2996
  %3404 = vst.msk [vmem:[%s9 + $0x2d0] sm:$0xff] %vm3313, %v2997
  %3405 = vst.msk [vmem:[%s9 + $0x2d8] sm:$0xff] %vm3313, %v2998
  %3406 = vst.msk [vmem:[%s9 + $0x2e0] sm:$0xff] %vm3313, %v2999
  %3407 = vst.msk [vmem:[%s9 + $0x2e8] sm:$0xff] %vm3313, %v3000
  %3408 = vst.msk [vmem:[%s9 + $0x2f0] sm:$0xff] %vm3313, %v3001
  %3409 = vst.msk [vmem:[%s9 + $0x2f8] sm:$0xff] %vm3313, %v3002
  %3410 = vst.msk [vmem:[%s9 + $0x300] sm:$0xff] %vm3313, %v3003
  %3411 = vst.msk [vmem:[%s9 + $0x308] sm:$0xff] %vm3313, %v3004
  %3412 = vst.msk [vmem:[%s9 + $0x310] sm:$0xff] %vm3313, %v3005
  %3413 = vst.msk [vmem:[%s9 + $0x318] sm:$0xff] %vm3313, %v3006
  %3414 = vst.msk [vmem:[%s9 + $0x320] sm:$0xff] %vm3313, %v3007
  %3415 = vst.msk [vmem:[%s9 + $0x328] sm:$0xff] %vm3313, %v3008
  %3416 = vst.msk [vmem:[%s9 + $0x330] sm:$0xff] %vm3313, %v3009
  %3417 = vst.msk [vmem:[%s9 + $0x338] sm:$0xff] %vm3313, %v3010
  %3418 = vst.msk [vmem:[%s9 + $0x340] sm:$0xff] %vm3313, %v3011
  %3419 = vst.msk [vmem:[%s9 + $0x348] sm:$0xff] %vm3313, %v3012
  %3420 = vst.msk [vmem:[%s9 + $0x350] sm:$0xff] %vm3313, %v3013
  %3421 = vst.msk [vmem:[%s9 + $0x358] sm:$0xff] %vm3313, %v3014
  %3422 = vst.msk [vmem:[%s9 + $0x360] sm:$0xff] %vm3313, %v3015
  %3423 = vst.msk [vmem:[%s9 + $0x368] sm:$0xff] %vm3313, %v3016
  %3424 = vst.msk [vmem:[%s9 + $0x370] sm:$0xff] %vm3313, %v3017
  %3425 = vst.msk [vmem:[%s9 + $0x378] sm:$0xff] %vm3313, %v3018
  %3426 = vst.msk [vmem:[%s9 + $0x380] sm:$0xff] %vm3313, %v3019
  %3427 = vst.msk [vmem:[%s9 + $0x388] sm:$0xff] %vm3313, %v3020
  %3428 = vst.msk [vmem:[%s9 + $0x390] sm:$0xff] %vm3313, %v3021
  %3429 = vst.msk [vmem:[%s9 + $0x398] sm:$0xff] %vm3313, %v3022
  %3430 = vst.msk [vmem:[%s9 + $0x3a0] sm:$0xff] %vm3313, %v3023
  %3431 = vst.msk [vmem:[%s9 + $0x3a8] sm:$0xff] %vm3313, %v3024
  %3432 = vst.msk [vmem:[%s9 + $0x3b0] sm:$0xff] %vm3313, %v3025
  %3433 = vst.msk [vmem:[%s9 + $0x3b8] sm:$0xff] %vm3313, %v3026
  %3434 = vst.msk [vmem:[%s9 + $0x3c0] sm:$0xff] %vm3313, %v3027
  %3435 = vst.msk [vmem:[%s9 + $0x3c8] sm:$0xff] %vm3313, %v3028
  %3436 = vst.msk [vmem:[%s9 + $0x3d0] sm:$0xff] %vm3313, %v3029
  %3437 = vst.msk [vmem:[%s9 + $0x3d8] sm:$0xff] %vm3313, %v3030
  %3438 = vst.msk [vmem:[%s9 + $0x3e0] sm:$0xff] %vm3313, %v3031
  %3439 = vst.msk [vmem:[%s9 + $0x3e8] sm:$0xff] %vm3313, %v3032
  %3440 = vst.msk [vmem:[%s9 + $0x3f0] sm:$0xff] %vm3313, %v3033
  %3441 = vst.msk [vmem:[%s9 + $0x3f8] sm:$0xff] %vm3313, %v3034
  %3442 = vst.msk [vmem:[%s9 + $0x400] sm:$0xff] %vm3313, %v3035
  %3443 = vst.msk [vmem:[%s9 + $0x408] sm:$0xff] %vm3313, %v3036
  %3444 = vst.msk [vmem:[%s9 + $0x410] sm:$0xff] %vm3313, %v3037
  %3445 = vst.msk [vmem:[%s9 + $0x418] sm:$0xff] %vm3313, %v3038
  %3446 = vst.msk [vmem:[%s9 + $0x420] sm:$0xff] %vm3313, %v3039
  %3447 = vst.msk [vmem:[%s9 + $0x428] sm:$0xff] %vm3313, %v3040
  %3448 = vst.msk [vmem:[%s9 + $0x430] sm:$0xff] %vm3313, %v3041
  %3449 = vst.msk [vmem:[%s9 + $0x438] sm:$0xff] %vm3313, %v3042
  %3450 = vst.msk [vmem:[%s9 + $0x440] sm:$0xff] %vm3313, %v3043
  %3451 = vst.msk [vmem:[%s9 + $0x448] sm:$0xff] %vm3313, %v3044
  %3452 = vst.msk [vmem:[%s9 + $0x450] sm:$0xff] %vm3313, %v3045
  %3453 = vst.msk [vmem:[%s9 + $0x458] sm:$0xff] %vm3313, %v3046
  %3454 = vst.msk [vmem:[%s9 + $0x460] sm:$0xff] %vm3313, %v3047
  %3455 = vst.msk [vmem:[%s9 + $0x468] sm:$0xff] %vm3313, %v3048
  %3456 = vst.msk [vmem:[%s9 + $0x470] sm:$0xff] %vm3313, %v3049
  %3457 = vst.msk [vmem:[%s9 + $0x478] sm:$0xff] %vm3313, %v3050
  %3458 = vst.msk [vmem:[%s9 + $0x480] sm:$0xff] %vm3313, %v3051
  %3459 = vst.msk [vmem:[%s9 + $0x488] sm:$0xff] %vm3313, %v3052
  %3460 = vst.msk [vmem:[%s9 + $0x490] sm:$0xff] %vm3313, %v3053
  %3461 = vst.msk [vmem:[%s9 + $0x498] sm:$0xff] %vm3313, %v3054
  %3462 = vst.msk [vmem:[%s9 + $0x4a0] sm:$0xff] %vm3313, %v3055
  %3463 = vst.msk [vmem:[%s9 + $0x4a8] sm:$0xff] %vm3313, %v3056
  %3464 = vst.msk [vmem:[%s9 + $0x4b0] sm:$0xff] %vm3313, %v3057
  %3465 = vst.msk [vmem:[%s9 + $0x4b8] sm:$0xff] %vm3313, %v3058
  %3466 = vst.msk [vmem:[%s9 + $0x4c0] sm:$0xff] %vm3313, %v3059
  %3467 = vst.msk [vmem:[%s9 + $0x4c8] sm:$0xff] %vm3313, %v3060
  %3468 = vst.msk [vmem:[%s9 + $0x4d0] sm:$0xff] %vm3313, %v3061
  %3469 = vst.msk [vmem:[%s9 + $0x4d8] sm:$0xff] %vm3313, %v3062
  %3470 = vst.msk [vmem:[%s9 + $0x4e0] sm:$0xff] %vm3313, %v3063
  %3471 = vst.msk [vmem:[%s9 + $0x4e8] sm:$0xff] %vm3313, %v3064
  %3472 = vst.msk [vmem:[%s9 + $0x4f0] sm:$0xff] %vm3313, %v3065
  %3473 = vst.msk [vmem:[%s9 + $0x4f8] sm:$0xff] %vm3313, %v3066
  %3474 = vst.msk [vmem:[%s9 + $0x500] sm:$0xff] %vm3313, %v3067
  %3475 = vst.msk [vmem:[%s9 + $0x508] sm:$0xff] %vm3313, %v3068
  %3476 = vst.msk [vmem:[%s9 + $0x510] sm:$0xff] %vm3313, %v3069
  %3477 = vst.msk [vmem:[%s9 + $0x518] sm:$0xff] %vm3313, %v3070
  %3478 = vst.msk [vmem:[%s9 + $0x520] sm:$0xff] %vm3313, %v3071
  %3479 = vst.msk [vmem:[%s9 + $0x528] sm:$0xff] %vm3313, %v3072
  %3480 = vst.msk [vmem:[%s9 + $0x530] sm:$0xff] %vm3313, %v3073
  %3481 = vst.msk [vmem:[%s9 + $0x538] sm:$0xff] %vm3313, %v3074
  %3482 = vst.msk [vmem:[%s9 + $0x540] sm:$0xff] %vm3313, %v3075
  %3483 = vst.msk [vmem:[%s9 + $0x548] sm:$0xff] %vm3313, %v3076
  %3484 = vst.msk [vmem:[%s9 + $0x550] sm:$0xff] %vm3313, %v3077
  %3485 = vst.msk [vmem:[%s9 + $0x558] sm:$0xff] %vm3313, %v3078
  %3486 = vst.msk [vmem:[%s9 + $0x560] sm:$0xff] %vm3313, %v3079
  %3487 = vst.msk [vmem:[%s9 + $0x568] sm:$0xff] %vm3313, %v3080
  %3488 = vst.msk [vmem:[%s9 + $0x570] sm:$0xff] %vm3313, %v3081
  %3489 = vst.msk [vmem:[%s9 + $0x578] sm:$0xff] %vm3313, %v3082
  %3490 = vst.msk [vmem:[%s9 + $0x580] sm:$0xff] %vm3313, %v3083
  %3491 = vst.msk [vmem:[%s9 + $0x588] sm:$0xff] %vm3313, %v3084
  %3492 = vst.msk [vmem:[%s9 + $0x590] sm:$0xff] %vm3313, %v3085
  %3493 = vst.msk [vmem:[%s9 + $0x598] sm:$0xff] %vm3313, %v3086
  %3494 = vst.msk [vmem:[%s9 + $0x5a0] sm:$0xff] %vm3313, %v3087
  %3495 = vst.msk [vmem:[%s9 + $0x5a8] sm:$0xff] %vm3313, %v3088
  %3496 = vst.msk [vmem:[%s9 + $0x5b0] sm:$0xff] %vm3313, %v3089
  %3497 = vst.msk [vmem:[%s9 + $0x5b8] sm:$0xff] %vm3313, %v3090
  %3498 = vst.msk [vmem:[%s9 + $0x5c0] sm:$0xff] %vm3313, %v3091
  %3499 = vst.msk [vmem:[%s9 + $0x5c8] sm:$0xff] %vm3313, %v3092
  %3500 = vst.msk [vmem:[%s9 + $0x5d0] sm:$0xff] %vm3313, %v3093
  %3501 = vst.msk [vmem:[%s9 + $0x5d8] sm:$0xff] %vm3313, %v3094
  %3502 = vst.msk [vmem:[%s9 + $0x5e0] sm:$0xff] %vm3313, %v3095
  %3503 = vst.msk [vmem:[%s9 + $0x5e8] sm:$0xff] %vm3313, %v3096
  %3504 = vst.msk [vmem:[%s9 + $0x5f0] sm:$0xff] %vm3313, %v3097
  %3505 = vst.msk [vmem:[%s9 + $0x5f8] sm:$0xff] %vm3313, %v3098
  %3506 = vst.msk [vmem:[%s9 + $0x600] sm:$0xff] %vm3313, %v3099
  %3507 = vst.msk [vmem:[%s9 + $0x608] sm:$0xff] %vm3313, %v3100
  %3508 = vst.msk [vmem:[%s9 + $0x610] sm:$0xff] %vm3313, %v3101
  %3509 = vst.msk [vmem:[%s9 + $0x618] sm:$0xff] %vm3313, %v3102
  %3510 = vst.msk [vmem:[%s9 + $0x620] sm:$0xff] %vm3313, %v3103
  %3511 = vst.msk [vmem:[%s9 + $0x628] sm:$0xff] %vm3313, %v3104
  %3512 = vst.msk [vmem:[%s9 + $0x630] sm:$0xff] %vm3313, %v3105
  %3513 = vst.msk [vmem:[%s9 + $0x638] sm:$0xff] %vm3313, %v3106
  %3514 = vst.msk [vmem:[%s9 + $0x640] sm:$0xff] %vm3313, %v3107
  %3515 = vst.msk [vmem:[%s9 + $0x648] sm:$0xff] %vm3313, %v3108
  %3516 = vst.msk [vmem:[%s9 + $0x650] sm:$0xff] %vm3313, %v3109
  %3517 = vst.msk [vmem:[%s9 + $0x658] sm:$0xff] %vm3313, %v3110
  %3518 = vst.msk [vmem:[%s9 + $0x660] sm:$0xff] %vm3313, %v3111
  %3519 = vst.msk [vmem:[%s9 + $0x668] sm:$0xff] %vm3313, %v3112
  %3520 = vst.msk [vmem:[%s9 + $0x670] sm:$0xff] %vm3313, %v3113
  %3521 = vst.msk [vmem:[%s9 + $0x678] sm:$0xff] %vm3313, %v3114
  %3522 = vst.msk [vmem:[%s9 + $0x680] sm:$0xff] %vm3313, %v3115
  %3523 = vst.msk [vmem:[%s9 + $0x688] sm:$0xff] %vm3313, %v3116
  %3524 = vst.msk [vmem:[%s9 + $0x690] sm:$0xff] %vm3313, %v3117
  %3525 = vst.msk [vmem:[%s9 + $0x698] sm:$0xff] %vm3313, %v3118
  %3526 = vst.msk [vmem:[%s9 + $0x6a0] sm:$0xff] %vm3313, %v3119
  %3527 = vst.msk [vmem:[%s9 + $0x6a8] sm:$0xff] %vm3313, %v3120
  %3528 = vst.msk [vmem:[%s9 + $0x6b0] sm:$0xff] %vm3313, %v3121
  %3529 = vst.msk [vmem:[%s9 + $0x6b8] sm:$0xff] %vm3313, %v3122
  %3530 = vst.msk [vmem:[%s9 + $0x6c0] sm:$0xff] %vm3313, %v3123
  %3531 = vst.msk [vmem:[%s9 + $0x6c8] sm:$0xff] %vm3313, %v3124
  %3532 = vst.msk [vmem:[%s9 + $0x6d0] sm:$0xff] %vm3313, %v3125
  %3533 = vst.msk [vmem:[%s9 + $0x6d8] sm:$0xff] %vm3313, %v3126
  %3534 = vst.msk [vmem:[%s9 + $0x6e0] sm:$0xff] %vm3313, %v3127
  %3535 = vst.msk [vmem:[%s9 + $0x6e8] sm:$0xff] %vm3313, %v3128
  %3536 = vst.msk [vmem:[%s9 + $0x6f0] sm:$0xff] %vm3313, %v3129
  %3537 = vst.msk [vmem:[%s9 + $0x6f8] sm:$0xff] %vm3313, %v3130
  %3538 = vst.msk [vmem:[%s9 + $0x700] sm:$0xff] %vm3313, %v3131
  %3539 = vst.msk [vmem:[%s9 + $0x708] sm:$0xff] %vm3313, %v3132
  %3540 = vst.msk [vmem:[%s9 + $0x710] sm:$0xff] %vm3313, %v3133
  %3541 = vst.msk [vmem:[%s9 + $0x718] sm:$0xff] %vm3313, %v3134
  %3542 = vst.msk [vmem:[%s9 + $0x720] sm:$0xff] %vm3313, %v3135
  %3543 = vst.msk [vmem:[%s9 + $0x728] sm:$0xff] %vm3313, %v3136
  %3544 = vst.msk [vmem:[%s9 + $0x730] sm:$0xff] %vm3313, %v3137
  %3545 = vst.msk [vmem:[%s9 + $0x738] sm:$0xff] %vm3313, %v3138
  %3546 = vst.msk [vmem:[%s9 + $0x740] sm:$0xff] %vm3313, %v3139
  %3547 = vst.msk [vmem:[%s9 + $0x748] sm:$0xff] %vm3313, %v3140
  %3548 = vst.msk [vmem:[%s9 + $0x750] sm:$0xff] %vm3313, %v3141
  %3549 = vst.msk [vmem:[%s9 + $0x758] sm:$0xff] %vm3313, %v3142
  %3550 = vst.msk [vmem:[%s9 + $0x760] sm:$0xff] %vm3313, %v3143
  %3551 = vst.msk [vmem:[%s9 + $0x768] sm:$0xff] %vm3313, %v3144
  %3552 = vst.msk [vmem:[%s9 + $0x770] sm:$0xff] %vm3313, %v3145
  %3553 = vst.msk [vmem:[%s9 + $0x778] sm:$0xff] %vm3313, %v3146
  %3554 = vst.msk [vmem:[%s9 + $0x780] sm:$0xff] %vm3313, %v3147
  %3555 = vst.msk [vmem:[%s9 + $0x788] sm:$0xff] %vm3313, %v3148
  %3556 = vst.msk [vmem:[%s9 + $0x790] sm:$0xff] %vm3313, %v3149
  %3557 = vst.msk [vmem:[%s9 + $0x798] sm:$0xff] %vm3313, %v3150
  %3558 = vst.msk [vmem:[%s9 + $0x7a0] sm:$0xff] %vm3313, %v3151
  %3559 = vst.msk [vmem:[%s9 + $0x7a8] sm:$0xff] %vm3313, %v3152
  %3560 = vst.msk [vmem:[%s9 + $0x7b0] sm:$0xff] %vm3313, %v3153
  %3561 = vst.msk [vmem:[%s9 + $0x7b8] sm:$0xff] %vm3313, %v3154
  %3562 = vst.msk [vmem:[%s9 + $0x7c0] sm:$0xff] %vm3313, %v3155
  %3563 = vst.msk [vmem:[%s9 + $0x7c8] sm:$0xff] %vm3313, %v3156
  %3564 = vst.msk [vmem:[%s9 + $0x7d0] sm:$0xff] %vm3313, %v3157
  %3565 = vst.msk [vmem:[%s9 + $0x7d8] sm:$0xff] %vm3313, %v3158
  %3566 = vst.msk [vmem:[%s9 + $0x7e0] sm:$0xff] %vm3313, %v3159
  %3567 = vst.msk [vmem:[%s9 + $0x7e8] sm:$0xff] %vm3313, %v3160
  %3568 = vst.msk [vmem:[%s9 + $0x7f0] sm:$0xff] %vm3313, %v3161
  %3569 = vst.msk [vmem:[%s9 + $0x7f8] sm:$0xff] %vm3313, %v3162
  %3570 = vst.msk [vmem:[%s9 + $0x800] sm:$0xff] %vm3313, %v3163
  %3571 = vst.msk [vmem:[%s9 + $0x808] sm:$0xff] %vm3313, %v3164
  %3572 = vst.msk [vmem:[%s9 + $0x810] sm:$0xff] %vm3313, %v3165
  %3573 = vst.msk [vmem:[%s9 + $0x818] sm:$0xff] %vm3313, %v3166
  %3574 = vst.msk [vmem:[%s9 + $0x820] sm:$0xff] %vm3313, %v3167
  %3575 = vst.msk [vmem:[%s9 + $0x828] sm:$0xff] %vm3313, %v3168
  %3576 = vst.msk [vmem:[%s9 + $0x830] sm:$0xff] %vm3313, %v3169
  %3577 = vst.msk [vmem:[%s9 + $0x838] sm:$0xff] %vm3313, %v3170
  %3578 = vst.msk [vmem:[%s9 + $0x840] sm:$0xff] %vm3313, %v3171
  %3579 = vst.msk [vmem:[%s9 + $0x848] sm:$0xff] %vm3313, %v3172
  %3580 = vst.msk [vmem:[%s9 + $0x850] sm:$0xff] %vm3313, %v3173
  %3581 = vst.msk [vmem:[%s9 + $0x858] sm:$0xff] %vm3313, %v3174
  %3582 = vst.msk [vmem:[%s9 + $0x860] sm:$0xff] %vm3313, %v3175
  %3583 = vst.msk [vmem:[%s9 + $0x868] sm:$0xff] %vm3313, %v3176
  %3584 = vst.msk [vmem:[%s9 + $0x870] sm:$0xff] %vm3313, %v3177
  %3585 = vst.msk [vmem:[%s9 + $0x878] sm:$0xff] %vm3313, %v3178
  %3586 = vst.msk [vmem:[%s9 + $0x880] sm:$0xff] %vm3313, %v3179
  %3587 = vst.msk [vmem:[%s9 + $0x888] sm:$0xff] %vm3313, %v3180
  %3588 = vst.msk [vmem:[%s9 + $0x890] sm:$0xff] %vm3313, %v3181
  %3589 = vst.msk [vmem:[%s9 + $0x898] sm:$0xff] %vm3313, %v3182
  %3590 = vst.msk [vmem:[%s9 + $0x8a0] sm:$0xff] %vm3313, %v3183
  %3591 = vst.msk [vmem:[%s9 + $0x8a8] sm:$0xff] %vm3313, %v3184
  %3592 = vst.msk [vmem:[%s9 + $0x8b0] sm:$0xff] %vm3313, %v3185
  %3593 = vst.msk [vmem:[%s9 + $0x8b8] sm:$0xff] %vm3313, %v3186
  %3594 = vst.msk [vmem:[%s9 + $0x8c0] sm:$0xff] %vm3313, %v3187
  %3595 = vst.msk [vmem:[%s9 + $0x8c8] sm:$0xff] %vm3313, %v3188
  %3596 = vst.msk [vmem:[%s9 + $0x8d0] sm:$0xff] %vm3313, %v3189
  %3597 = vst.msk [vmem:[%s9 + $0x8d8] sm:$0xff] %vm3313, %v3190
  %3598 = vst.msk [vmem:[%s9 + $0x8e0] sm:$0xff] %vm3313, %v3191
  %3599 = vst.msk [vmem:[%s9 + $0x8e8] sm:$0xff] %vm3313, %v3192
  %3600 = vst.msk [vmem:[%s9 + $0x8f0] sm:$0xff] %vm3313, %v3193
  %3601 = vst.msk [vmem:[%s9 + $0x8f8] sm:$0xff] %vm3313, %v3194
  %3602 = vst.msk [vmem:[%s9 + $0x900] sm:$0xff] %vm3313, %v3195
  %3603 = vst.msk [vmem:[%s9 + $0x908] sm:$0xff] %vm3313, %v3196
  %3604 = vst.msk [vmem:[%s9 + $0x910] sm:$0xff] %vm3313, %v3197
  %3605 = vst.msk [vmem:[%s9 + $0x918] sm:$0xff] %vm3313, %v3198
  %3606 = vst.msk [vmem:[%s9 + $0x920] sm:$0xff] %vm3313, %v3199
  %3607 = vst.msk [vmem:[%s9 + $0x928] sm:$0xff] %vm3313, %v3200
  %3608 = vst.msk [vmem:[%s9 + $0x930] sm:$0xff] %vm3313, %v3201
  %3609 = vst.msk [vmem:[%s9 + $0x938] sm:$0xff] %vm3313, %v3202
  %3610 = vst.msk [vmem:[%s9 + $0x940] sm:$0xff] %vm3313, %v3203
  %3611 = vst.msk [vmem:[%s9 + $0x948] sm:$0xff] %vm3313, %v3204
  %3612 = vst.msk [vmem:[%s9 + $0x950] sm:$0xff] %vm3313, %v3205
  %3613 = vst.msk [vmem:[%s9 + $0x958] sm:$0xff] %vm3313, %v3206
  %3614 = vst.msk [vmem:[%s9 + $0x960] sm:$0xff] %vm3313, %v3207
  %3615 = vst.msk [vmem:[%s9 + $0x968] sm:$0xff] %vm3313, %v3208
  %3616 = vst.msk [vmem:[%s9 + $0x970] sm:$0xff] %vm3313, %v3209
  %3617 = vst.msk [vmem:[%s9 + $0x978] sm:$0xff] %vm3313, %v3210
  %3618 = vst.msk [vmem:[%s9 + $0x980] sm:$0xff] %vm3313, %v3211
  %3619 = vst.msk [vmem:[%s9 + $0x988] sm:$0xff] %vm3313, %v3212
  %3620 = vst.msk [vmem:[%s9 + $0x990] sm:$0xff] %vm3313, %v3213
  %3621 = vst.msk [vmem:[%s9 + $0x998] sm:$0xff] %vm3313, %v3214
  %3622 = vst.msk [vmem:[%s9 + $0x9a0] sm:$0xff] %vm3313, %v3215
  %3623 = vst.msk [vmem:[%s9 + $0x9a8] sm:$0xff] %vm3313, %v3216
  %3624 = vst.msk [vmem:[%s9 + $0x9b0] sm:$0xff] %vm3313, %v3217
  %3625 = vst.msk [vmem:[%s9 + $0x9b8] sm:$0xff] %vm3313, %v3218
  %3626 = vst.msk [vmem:[%s9 + $0x9c0] sm:$0xff] %vm3313, %v3219
  %3627 = vst.msk [vmem:[%s9 + $0x9c8] sm:$0xff] %vm3313, %v3220
  %3628 = vst.msk [vmem:[%s9 + $0x9d0] sm:$0xff] %vm3313, %v3221
  %3629 = vst.msk [vmem:[%s9 + $0x9d8] sm:$0xff] %vm3313, %v3222
  %3630 = vst.msk [vmem:[%s9 + $0x9e0] sm:$0xff] %vm3313, %v3223
  %3631 = vst.msk [vmem:[%s9 + $0x9e8] sm:$0xff] %vm3313, %v3224
  %3632 = vst.msk [vmem:[%s9 + $0x9f0] sm:$0xff] %vm3313, %v3225
  %3633 = vst.msk [vmem:[%s9 + $0x9f8] sm:$0xff] %vm3313, %v3226
  %3634 = vst.msk [vmem:[%s9 + $0xa00] sm:$0xff] %vm3313, %v3227
  %3635 = vst.msk [vmem:[%s9 + $0xa08] sm:$0xff] %vm3313, %v3228
  %3636 = vst.msk [vmem:[%s9 + $0xa10] sm:$0xff] %vm3313, %v3229
  %3637 = vst.msk [vmem:[%s9 + $0xa18] sm:$0xff] %vm3313, %v3230
  %3638 = vst.msk [vmem:[%s9 + $0xa20] sm:$0xff] %vm3313, %v3231
  %3639 = vst.msk [vmem:[%s9 + $0xa28] sm:$0xff] %vm3313, %v3232
  %3640 = vst.msk [vmem:[%s9 + $0xa30] sm:$0xff] %vm3313, %v3233
  %3641 = vst.msk [vmem:[%s9 + $0xa38] sm:$0xff] %vm3313, %v3234
  %3642 = vst.msk [vmem:[%s9 + $0xa40] sm:$0xff] %vm3313, %v3235
  %3643 = vst.msk [vmem:[%s9 + $0xa48] sm:$0xff] %vm3313, %v3236
  %3644 = vst.msk [vmem:[%s9 + $0xa50] sm:$0xff] %vm3313, %v3237
  %3645 = vst.msk [vmem:[%s9 + $0xa58] sm:$0xff] %vm3313, %v3238
  %3646 = vst.msk [vmem:[%s9 + $0xa60] sm:$0xff] %vm3313, %v3239
  %3647 = vst.msk [vmem:[%s9 + $0xa68] sm:$0xff] %vm3313, %v3240
  %3648 = vst.msk [vmem:[%s9 + $0xa70] sm:$0xff] %vm3313, %v3241
  %3649 = vst.msk [vmem:[%s9 + $0xa78] sm:$0xff] %vm3313, %v3242
  %3650 = vst.msk [vmem:[%s9 + $0xa80] sm:$0xff] %vm3313, %v3243
  %3651 = vst.msk [vmem:[%s9 + $0xa88] sm:$0xff] %vm3313, %v3244
  %3652 = vst.msk [vmem:[%s9 + $0xa90] sm:$0xff] %vm3313, %v3245
  %3653 = vst.msk [vmem:[%s9 + $0xa98] sm:$0xff] %vm3313, %v3246
  %3654 = vst.msk [vmem:[%s9 + $0xaa0] sm:$0xff] %vm3313, %v3247
  %3655 = vst.msk [vmem:[%s9 + $0xaa8] sm:$0xff] %vm3313, %v3248
  %3656 = vst.msk [vmem:[%s9 + $0xab0] sm:$0xff] %vm3313, %v3249
  %3657 = vst.msk [vmem:[%s9 + $0xab8] sm:$0xff] %vm3313, %v3250
  %3658 = vst.msk [vmem:[%s9 + $0xac0] sm:$0xff] %vm3313, %v3251
  %3659 = vst.msk [vmem:[%s9 + $0xac8] sm:$0xff] %vm3313, %v3252
  %3660 = vst.msk [vmem:[%s9 + $0xad0] sm:$0xff] %vm3313, %v3253
  %3661 = vst.msk [vmem:[%s9 + $0xad8] sm:$0xff] %vm3313, %v3254
  %3662 = vst.msk [vmem:[%s9 + $0xae0] sm:$0xff] %vm3313, %v3255
  %3663 = vst.msk [vmem:[%s9 + $0xae8] sm:$0xff] %vm3313, %v3256
  %3664 = vst.msk [vmem:[%s9 + $0xaf0] sm:$0xff] %vm3313, %v3257
  %3665 = vst.msk [vmem:[%s9 + $0xaf8] sm:$0xff] %vm3313, %v3258
  %3666 = vst.msk [vmem:[%s9 + $0xb00] sm:$0xff] %vm3313, %v3259
  %3667 = vst.msk [vmem:[%s9 + $0xb08] sm:$0xff] %vm3313, %v3260
  %3668 = vst.msk [vmem:[%s9 + $0xb10] sm:$0xff] %vm3313, %v3261
  %3669 = vst.msk [vmem:[%s9 + $0xb18] sm:$0xff] %vm3313, %v3262
  %3670 = vst.msk [vmem:[%s9 + $0xb20] sm:$0xff] %vm3313, %v3263
  %3671 = vst.msk [vmem:[%s9 + $0xb28] sm:$0xff] %vm3313, %v3264
  %3672 = vst.msk [vmem:[%s9 + $0xb30] sm:$0xff] %vm3313, %v3265
  %3673 = vst.msk [vmem:[%s9 + $0xb38] sm:$0xff] %vm3313, %v3266
  %3674 = vst.msk [vmem:[%s9 + $0xb40] sm:$0xff] %vm3313, %v3267
  %3675 = vst.msk [vmem:[%s9 + $0xb48] sm:$0xff] %vm3313, %v3268
  %3676 = vst.msk [vmem:[%s9 + $0xb50] sm:$0xff] %vm3313, %v3269
  %3677 = vst.msk [vmem:[%s9 + $0xb58] sm:$0xff] %vm3313, %v3270
  %3678 = vst.msk [vmem:[%s9 + $0xb60] sm:$0xff] %vm3313, %v3271
  %3679 = vst.msk [vmem:[%s9 + $0xb68] sm:$0xff] %vm3313, %v3272
  %3680 = vst.msk [vmem:[%s9 + $0xb70] sm:$0xff] %vm3313, %v3273
  %3681 = vst.msk [vmem:[%s9 + $0xb78] sm:$0xff] %vm3313, %v3274
  %3682 = vst.msk [vmem:[%s9 + $0xb80] sm:$0xff] %vm3313, %v3275
  %3683 = vst.msk [vmem:[%s9 + $0xb88] sm:$0xff] %vm3313, %v3276
  %3684 = vst.msk [vmem:[%s9 + $0xb90] sm:$0xff] %vm3313, %v3277
  %3685 = vst.msk [vmem:[%s9 + $0xb98] sm:$0xff] %vm3313, %v3278
  %3686 = vst.msk [vmem:[%s9 + $0xba0] sm:$0xff] %vm3313, %v3279
  %3687 = vst.msk [vmem:[%s9 + $0xba8] sm:$0xff] %vm3313, %v3280
  %3688 = vst.msk [vmem:[%s9 + $0xbb0] sm:$0xff] %vm3313, %v3281
  %3689 = vst.msk [vmem:[%s9 + $0xbb8] sm:$0xff] %vm3313, %v3282
  %3690 = vst.msk [vmem:[%s9 + $0xbc0] sm:$0xff] %vm3313, %v3283
  %3691 = vst.msk [vmem:[%s9 + $0xbc8] sm:$0xff] %vm3313, %v3284
  %3692 = vst.msk [vmem:[%s9 + $0xbd0] sm:$0xff] %vm3313, %v3285
  %3693 = vst.msk [vmem:[%s9 + $0xbd8] sm:$0xff] %vm3313, %v3286
  %3694 = vst.msk [vmem:[%s9 + $0xbe0] sm:$0xff] %vm3313, %v3287
  %3695 = vst.msk [vmem:[%s9 + $0xbe8] sm:$0xff] %vm3313, %v3288
  %3696 = vst.msk [vmem:[%s9 + $0xbf0] sm:$0xff] %vm3313, %v3289
  %3697 = vst.msk [vmem:[%s9 + $0xbf8] sm:$0xff] %vm3313, %v3290
  %3698 = vst.msk [vmem:[%s9 + $0xc00] sm:$0xff] %vm3313, %v3291
  %3699 = vst.msk [vmem:[%s9 + $0xc08] sm:$0xff] %vm3313, %v3292
  %3700 = vst.msk [vmem:[%s9 + $0xc10] sm:$0xff] %vm3313, %v3293
  %3701 = vst.msk [vmem:[%s9 + $0xc18] sm:$0xff] %vm3313, %v3294
  %3702 = vst.msk [vmem:[%s9 + $0xc20] sm:$0xff] %vm3313, %v3295
  %3703 = vst.msk [vmem:[%s9 + $0xc28] sm:$0xff] %vm3313, %v3296
  %3704 = vst.msk [vmem:[%s9 + $0xc30] sm:$0xff] %vm3313, %v3297
  %3705 = vst.msk [vmem:[%s9 + $0xc38] sm:$0xff] %vm3313, %v3298
  %3706 = vst.msk [vmem:[%s9 + $0xc40] sm:$0xff] %vm3313, %v3299
  %3707 = vst.msk [vmem:[%s9 + $0xc48] sm:$0xff] %vm3313, %v3300
  %3708 = vst.msk [vmem:[%s9 + $0xc50] sm:$0xff] %vm3313, %v3301
  %3709 = vst.msk [vmem:[%s9 + $0xc58] sm:$0xff] %vm3313, %v3302
  %3710 = vst.msk [vmem:[%s9 + $0xc60] sm:$0xff] %vm3313, %v3303
  %3711 = vst.msk [vmem:[%s9 + $0xc68] sm:$0xff] %vm3313, %v3304
  %3712 = vst.msk [vmem:[%s9 + $0xc70] sm:$0xff] %vm3313, %v3305
  %3713 = vst.msk [vmem:[%s9 + $0xc78] sm:$0xff] %vm3313, %v3306
  %3714 = vst.msk [vmem:[%s9 + $0xc80] sm:$0xff] %vm3313, %v3307
  %3715 = vst.msk [vmem:[%s9 + $0xc88] sm:$0xff] %vm3313, %v3308
  %3716 = vst.msk [vmem:[%s9 + $0xc90] sm:$0xff] %vm3313, %v3309
  %3717 = vst.msk [vmem:[%s9 + $0xc98] sm:$0xff] %vm3313, %v3310
  %3718 = vst.msk [vmem:[%s9 + $0xca0] sm:$0xff] %vm3313, %v3311
  %3719 = vst.msk [vmem:[%s9 + $0xca8] sm:$0xff] %vm3313, %v3312
  %v3720 = vld [vmem:[%s1] sm:$0xff]
  %v3721 = vld [vmem:[%s1 + $0x8] sm:$0xff]
  %v3722 = vld [vmem:[%s1 + $0x10] sm:$0xff]
  %v3723 = vld [vmem:[%s1 + $0x18] sm:$0xff]
  %v3724 = vld [vmem:[%s1 + $0x20] sm:$0xff]
  %v3725 = vld [vmem:[%s1 + $0x28] sm:$0xff]
  %v3726 = vld [vmem:[%s1 + $0x30] sm:$0xff]
  %v3727 = vld [vmem:[%s1 + $0x38] sm:$0xff]
  %v3728 = vld [vmem:[%s1 + $0x40] sm:$0xff]
  %v3729 = vld [vmem:[%s1 + $0x48] sm:$0xff]
  %v3730 = vld [vmem:[%s1 + $0x50] sm:$0xff]
  %v3731 = vld [vmem:[%s1 + $0x58] sm:$0xff]
  %v3732 = vld [vmem:[%s1 + $0x60] sm:$0xff]
  %v3733 = vld [vmem:[%s1 + $0x68] sm:$0xff]
  %v3734 = vld [vmem:[%s1 + $0x70] sm:$0xff]
  %v3735 = vld [vmem:[%s1 + $0x78] sm:$0xff]
  %v3736 = vld [vmem:[%s1 + $0x80] sm:$0xff]
  %v3737 = vld [vmem:[%s1 + $0x88] sm:$0xff]
  %v3738 = vld [vmem:[%s1 + $0x90] sm:$0xff]
  %v3739 = vld [vmem:[%s1 + $0x98] sm:$0xff]
  %v3740 = vld [vmem:[%s1 + $0xa0] sm:$0xff]
  %v3741 = vld [vmem:[%s1 + $0xa8] sm:$0xff]
  %v3742 = vld [vmem:[%s1 + $0xb0] sm:$0xff]
  %v3743 = vld [vmem:[%s1 + $0xb8] sm:$0xff]
  %v3744 = vld [vmem:[%s1 + $0xc0] sm:$0xff]
  %v3745 = vld [vmem:[%s1 + $0xc8] sm:$0xff]
  %v3746 = vld [vmem:[%s1 + $0xd0] sm:$0xff]
  %v3747 = vld [vmem:[%s1 + $0xd8] sm:$0xff]
  %v3748 = vld [vmem:[%s1 + $0xe0] sm:$0xff]
  %v3749 = vld [vmem:[%s1 + $0xe8] sm:$0xff]
  %v3750 = vld [vmem:[%s1 + $0xf0] sm:$0xff]
  %v3751 = vld [vmem:[%s1 + $0xf8] sm:$0xff]
  %v3752 = vld [vmem:[%s1 + $0x100] sm:$0xff]
  %v3753 = vld [vmem:[%s1 + $0x108] sm:$0xff]
  %v3754 = vld [vmem:[%s1 + $0x110] sm:$0xff]
  %v3755 = vld [vmem:[%s1 + $0x118] sm:$0xff]
  %v3756 = vld [vmem:[%s1 + $0x120] sm:$0xff]
  %v3757 = vld [vmem:[%s1 + $0x128] sm:$0xff]
  %v3758 = vld [vmem:[%s1 + $0x130] sm:$0xff]
  %v3759 = vld [vmem:[%s1 + $0x138] sm:$0xff]
  %v3760 = vld [vmem:[%s1 + $0x140] sm:$0xff]
  %v3761 = vld [vmem:[%s1 + $0x148] sm:$0xff]
  %v3762 = vld [vmem:[%s1 + $0x150] sm:$0xff]
  %v3763 = vld [vmem:[%s1 + $0x158] sm:$0xff]
  %v3764 = vld [vmem:[%s1 + $0x160] sm:$0xff]
  %v3765 = vld [vmem:[%s1 + $0x168] sm:$0xff]
  %v3766 = vld [vmem:[%s1 + $0x170] sm:$0xff]
  %v3767 = vld [vmem:[%s1 + $0x178] sm:$0xff]
  %v3768 = vld [vmem:[%s1 + $0x180] sm:$0xff]
  %v3769 = vld [vmem:[%s1 + $0x188] sm:$0xff]
  %v3770 = vld [vmem:[%s1 + $0x190] sm:$0xff]
  %v3771 = vld [vmem:[%s1 + $0x198] sm:$0xff]
  %v3772 = vld [vmem:[%s1 + $0x1a0] sm:$0xff]
  %v3773 = vld [vmem:[%s1 + $0x1a8] sm:$0xff]
  %v3774 = vld [vmem:[%s1 + $0x1b0] sm:$0xff]
  %v3775 = vld [vmem:[%s1 + $0x1b8] sm:$0xff]
  %v3776 = vld [vmem:[%s1 + $0x1c0] sm:$0xff]
  %v3777 = vld [vmem:[%s1 + $0x1c8] sm:$0xff]
  %v3778 = vld [vmem:[%s1 + $0x1d0] sm:$0xff]
  %v3779 = vld [vmem:[%s1 + $0x1d8] sm:$0xff]
  %v3780 = vld [vmem:[%s1 + $0x1e0] sm:$0xff]
  %v3781 = vld [vmem:[%s1 + $0x1e8] sm:$0xff]
  %v3782 = vld [vmem:[%s1 + $0x1f0] sm:$0xff]
  %v3783 = vld [vmem:[%s1 + $0x1f8] sm:$0xff]
  %v3784 = vld [vmem:[%s1 + $0x200] sm:$0xff]
  %v3785 = vld [vmem:[%s1 + $0x208] sm:$0xff]
  %v3786 = vld [vmem:[%s1 + $0x210] sm:$0xff]
  %v3787 = vld [vmem:[%s1 + $0x218] sm:$0xff]
  %v3788 = vld [vmem:[%s1 + $0x220] sm:$0xff]
  %v3789 = vld [vmem:[%s1 + $0x228] sm:$0xff]
  %v3790 = vld [vmem:[%s1 + $0x230] sm:$0xff]
  %v3791 = vld [vmem:[%s1 + $0x238] sm:$0xff]
  %v3792 = vld [vmem:[%s1 + $0x240] sm:$0xff]
  %v3793 = vld [vmem:[%s1 + $0x248] sm:$0xff]
  %v3794 = vld [vmem:[%s1 + $0x250] sm:$0xff]
  %v3795 = vld [vmem:[%s1 + $0x258] sm:$0xff]
  %v3796 = vld [vmem:[%s1 + $0x260] sm:$0xff]
  %v3797 = vld [vmem:[%s1 + $0x268] sm:$0xff]
  %v3798 = vld [vmem:[%s1 + $0x270] sm:$0xff]
  %v3799 = vld [vmem:[%s1 + $0x278] sm:$0xff]
  %v3800 = vld [vmem:[%s1 + $0x280] sm:$0xff]
  %v3801 = vld [vmem:[%s1 + $0x288] sm:$0xff]
  %v3802 = vld [vmem:[%s1 + $0x290] sm:$0xff]
  %v3803 = vld [vmem:[%s1 + $0x298] sm:$0xff]
  %v3804 = vld [vmem:[%s1 + $0x2a0] sm:$0xff]
  %v3805 = vld [vmem:[%s1 + $0x2a8] sm:$0xff]
  %v3806 = vld [vmem:[%s1 + $0x2b0] sm:$0xff]
  %v3807 = vld [vmem:[%s1 + $0x2b8] sm:$0xff]
  %v3808 = vld [vmem:[%s1 + $0x2c0] sm:$0xff]
  %v3809 = vld [vmem:[%s1 + $0x2c8] sm:$0xff]
  %v3810 = vld [vmem:[%s1 + $0x2d0] sm:$0xff]
  %v3811 = vld [vmem:[%s1 + $0x2d8] sm:$0xff]
  %v3812 = vld [vmem:[%s1 + $0x2e0] sm:$0xff]
  %v3813 = vld [vmem:[%s1 + $0x2e8] sm:$0xff]
  %v3814 = vld [vmem:[%s1 + $0x2f0] sm:$0xff]
  %v3815 = vld [vmem:[%s1 + $0x2f8] sm:$0xff]
  %v3816 = vld [vmem:[%s1 + $0x300] sm:$0xff]
  %v3817 = vld [vmem:[%s1 + $0x308] sm:$0xff]
  %v3818 = vld [vmem:[%s1 + $0x310] sm:$0xff]
  %v3819 = vld [vmem:[%s1 + $0x318] sm:$0xff]
  %v3820 = vld [vmem:[%s1 + $0x320] sm:$0xff]
  %v3821 = vld [vmem:[%s1 + $0x328] sm:$0xff]
  %v3822 = vld [vmem:[%s1 + $0x330] sm:$0xff]
  %v3823 = vld [vmem:[%s1 + $0x338] sm:$0xff]
  %v3824 = vld [vmem:[%s1 + $0x340] sm:$0xff]
  %v3825 = vld [vmem:[%s1 + $0x348] sm:$0xff]
  %v3826 = vld [vmem:[%s1 + $0x350] sm:$0xff]
  %v3827 = vld [vmem:[%s1 + $0x358] sm:$0xff]
  %v3828 = vld [vmem:[%s1 + $0x360] sm:$0xff]
  %v3829 = vld [vmem:[%s1 + $0x368] sm:$0xff]
  %v3830 = vld [vmem:[%s1 + $0x370] sm:$0xff]
  %v3831 = vld [vmem:[%s1 + $0x378] sm:$0xff]
  %v3832 = vld [vmem:[%s1 + $0x380] sm:$0xff]
  %v3833 = vld [vmem:[%s1 + $0x388] sm:$0xff]
  %v3834 = vld [vmem:[%s1 + $0x390] sm:$0xff]
  %v3835 = vld [vmem:[%s1 + $0x398] sm:$0xff]
  %v3836 = vld [vmem:[%s1 + $0x3a0] sm:$0xff]
  %v3837 = vld [vmem:[%s1 + $0x3a8] sm:$0xff]
  %v3838 = vld [vmem:[%s1 + $0x3b0] sm:$0xff]
  %v3839 = vld [vmem:[%s1 + $0x3b8] sm:$0xff]
  %v3840 = vld [vmem:[%s1 + $0x3c0] sm:$0xff]
  %v3841 = vld [vmem:[%s1 + $0x3c8] sm:$0xff]
  %v3842 = vld [vmem:[%s1 + $0x3d0] sm:$0xff]
  %v3843 = vld [vmem:[%s1 + $0x3d8] sm:$0xff]
  %v3844 = vld [vmem:[%s1 + $0x3e0] sm:$0xff]
  %v3845 = vld [vmem:[%s1 + $0x3e8] sm:$0xff]
  %v3846 = vld [vmem:[%s1 + $0x3f0] sm:$0xff]
  %v3847 = vld [vmem:[%s1 + $0x3f8] sm:$0xff]
  %v3848 = vld [vmem:[%s1 + $0x400] sm:$0xff]
  %v3849 = vld [vmem:[%s1 + $0x408] sm:$0xff]
  %v3850 = vld [vmem:[%s1 + $0x410] sm:$0xff]
  %v3851 = vld [vmem:[%s1 + $0x418] sm:$0xff]
  %v3852 = vld [vmem:[%s1 + $0x420] sm:$0x3]
  %v3853 = vld [vmem:[%s4] sm:$0xff]
  %v3854 = vld [vmem:[%s4 + $0x8] sm:$0xff]
  %v3855 = vld [vmem:[%s4 + $0x10] sm:$0xff]
  %v3856 = vld [vmem:[%s4 + $0x18] sm:$0x1]
  %v3857 = vld [vmem:[%s7] sm:$0x1]
  %v3859 = vperm.slane %v3857, 0
  %v3862 = vsel %vm449, %v3720, 0
  %v3865 = vsel %vm449, %v3721, 0
  %v3868 = vsel %vm449, %v3722, 0
  %v3871 = vsel %vm449, %v3723, 0
  %v3874 = vsel %vm449, %v3724, 0
  %v3877 = vsel %vm449, %v3725, 0
  %v3880 = vsel %vm449, %v3726, 0
  %v3883 = vsel %vm449, %v3727, 0
  %v3886 = vsel %vm449, %v3728, 0
  %v3889 = vsel %vm449, %v3729, 0
  %v3892 = vsel %vm449, %v3730, 0
  %v3895 = vsel %vm449, %v3731, 0
  %v3898 = vsel %vm449, %v3732, 0
  %v3901 = vsel %vm449, %v3733, 0
  %v3904 = vsel %vm449, %v3734, 0
  %v3907 = vsel %vm449, %v3735, 0
  %v3910 = vsel %vm449, %v3736, 0
  %v3913 = vsel %vm449, %v3737, 0
  %v3916 = vsel %vm449, %v3738, 0
  %v3919 = vsel %vm449, %v3739, 0
  %v3922 = vsel %vm449, %v3740, 0
  %v3925 = vsel %vm449, %v3741, 0
  %v3928 = vsel %vm449, %v3742, 0
  %v3931 = vsel %vm449, %v3743, 0
  %v3934 = vsel %vm449, %v3744, 0
  %v3937 = vsel %vm449, %v3745, 0
  %v3940 = vsel %vm449, %v3746, 0
  %v3943 = vsel %vm449, %v3747, 0
  %v3946 = vsel %vm449, %v3748, 0
  %v3949 = vsel %vm449, %v3749, 0
  %v3952 = vsel %vm449, %v3750, 0
  %v3955 = vsel %vm449, %v3751, 0
  %v3958 = vsel %vm449, %v3752, 0
  %v3961 = vsel %vm449, %v3753, 0
  %v3964 = vsel %vm449, %v3754, 0
  %v3967 = vsel %vm449, %v3755, 0
  %v3970 = vsel %vm449, %v3756, 0
  %v3973 = vsel %vm449, %v3757, 0
  %v3976 = vsel %vm449, %v3758, 0
  %v3979 = vsel %vm449, %v3759, 0
  %v3982 = vsel %vm449, %v3760, 0
  %v3985 = vsel %vm449, %v3761, 0
  %v3988 = vsel %vm449, %v3762, 0
  %v3991 = vsel %vm449, %v3763, 0
  %v3994 = vsel %vm449, %v3764, 0
  %v3997 = vsel %vm449, %v3765, 0
  %v4000 = vsel %vm449, %v3766, 0
  %v4003 = vsel %vm449, %v3767, 0
  %v4006 = vsel %vm449, %v3768, 0
  %v4009 = vsel %vm449, %v3769, 0
  %v4012 = vsel %vm449, %v3770, 0
  %v4015 = vsel %vm449, %v3771, 0
  %v4018 = vsel %vm449, %v3772, 0
  %v4021 = vsel %vm449, %v3773, 0
  %v4024 = vsel %vm449, %v3774, 0
  %v4027 = vsel %vm449, %v3775, 0
  %v4030 = vsel %vm449, %v3776, 0
  %v4033 = vsel %vm449, %v3777, 0
  %v4036 = vsel %vm449, %v3778, 0
  %v4039 = vsel %vm449, %v3779, 0
  %v4042 = vsel %vm449, %v3780, 0
  %v4045 = vsel %vm449, %v3781, 0
  %v4048 = vsel %vm449, %v3782, 0
  %v4051 = vsel %vm449, %v3783, 0
  %v4054 = vsel %vm449, %v3784, 0
  %v4057 = vsel %vm449, %v3785, 0
  %v4060 = vsel %vm449, %v3786, 0
  %v4063 = vsel %vm449, %v3787, 0
  %v4066 = vsel %vm449, %v3788, 0
  %v4069 = vsel %vm449, %v3789, 0
  %v4072 = vsel %vm449, %v3790, 0
  %v4075 = vsel %vm449, %v3791, 0
  %v4078 = vsel %vm449, %v3792, 0
  %v4081 = vsel %vm449, %v3793, 0
  %v4084 = vsel %vm449, %v3794, 0
  %v4087 = vsel %vm449, %v3795, 0
  %v4090 = vsel %vm449, %v3796, 0
  %v4093 = vsel %vm449, %v3797, 0
  %v4096 = vsel %vm449, %v3798, 0
  %v4099 = vsel %vm449, %v3799, 0
  %v4102 = vsel %vm449, %v3800, 0
  %v4105 = vsel %vm449, %v3801, 0
  %v4108 = vsel %vm449, %v3802, 0
  %v4111 = vsel %vm449, %v3803, 0
  %v4114 = vsel %vm449, %v3804, 0
  %v4117 = vsel %vm449, %v3805, 0
  %v4120 = vsel %vm449, %v3806, 0
  %v4123 = vsel %vm449, %v3807, 0
  %v4126 = vsel %vm449, %v3808, 0
  %v4129 = vsel %vm449, %v3809, 0
  %v4132 = vsel %vm449, %v3810, 0
  %v4135 = vsel %vm449, %v3811, 0
  %v4138 = vsel %vm449, %v3812, 0
  %v4141 = vsel %vm449, %v3813, 0
  %v4144 = vsel %vm449, %v3814, 0
  %v4147 = vsel %vm449, %v3815, 0
  %v4150 = vsel %vm449, %v3816, 0
  %v4153 = vsel %vm449, %v3817, 0
  %v4156 = vsel %vm449, %v3818, 0
  %v4159 = vsel %vm449, %v3819, 0
  %v4162 = vsel %vm449, %v3820, 0
  %v4165 = vsel %vm449, %v3821, 0
  %v4168 = vsel %vm449, %v3822, 0
  %v4171 = vsel %vm449, %v3823, 0
  %v4174 = vsel %vm449, %v3824, 0
  %v4177 = vsel %vm449, %v3825, 0
  %v4180 = vsel %vm449, %v3826, 0
  %v4183 = vsel %vm449, %v3827, 0
  %v4186 = vsel %vm449, %v3828, 0
  %v4189 = vsel %vm449, %v3829, 0
  %v4192 = vsel %vm449, %v3830, 0
  %v4195 = vsel %vm449, %v3831, 0
  %v4198 = vsel %vm449, %v3832, 0
  %v4201 = vsel %vm449, %v3833, 0
  %v4204 = vsel %vm449, %v3834, 0
  %v4207 = vsel %vm449, %v3835, 0
  %v4210 = vsel %vm449, %v3836, 0
  %v4213 = vsel %vm449, %v3837, 0
  %v4216 = vsel %vm449, %v3838, 0
  %v4219 = vsel %vm449, %v3839, 0
  %v4222 = vsel %vm449, %v3840, 0
  %v4225 = vsel %vm449, %v3841, 0
  %v4228 = vsel %vm449, %v3842, 0
  %v4231 = vsel %vm449, %v3843, 0
  %v4234 = vsel %vm449, %v3844, 0
  %v4237 = vsel %vm449, %v3845, 0
  %v4240 = vsel %vm449, %v3846, 0
  %v4243 = vsel %vm449, %v3847, 0
  %v4246 = vsel %vm449, %v3848, 0
  %v4249 = vsel %vm449, %v3849, 0
  %v4252 = vsel %vm449, %v3850, 0
  %v4255 = vsel %vm449, %v3851, 0
  %v4258 = vsel %vm449, %v3852, 0
  %v4261 = vsel %vm1668, %v3856, 0
  %4263 = vmatpush.msra.mxu0 0.0
  %4264 = vmatpush.msra.mxu0 0.0
  %4265 = vmatpush.msra.mxu0 0.0
  %4266 = vmatpush.msra.mxu0 0.0
  %4267 = vmatpush.msra.mxu0 0.0
  %4268 = vmatpush.msra.mxu0 0.0
  %4269 = vmatpush.msra.mxu0 0.0
  %4270 = vmatpush.msra.mxu0 0.0
  %4271 = vmatpush.msra.mxu0 0.0
  %4272 = vmatpush.msra.mxu0 0.0
  %4273 = vmatpush.msra.mxu0 0.0
  %4274 = vmatpush.msra.mxu0 0.0
  %4275 = vmatpush.msra.mxu0 %v4261
  %4276 = vmatpush.msra.mxu0 %v3855
  %4277 = vmatpush.msra.mxu0 %v3854
  %4278 = vmatpush.msra.mxu0 %v3853
  %4279 = vmatmul.f32.gmra.mxu0 %v3862
  %v4280 = vpop.f32.mrf.mxu0
  %v4281 = vadd.f32 %v3859, %v4280
  %4282 = vmatmul.f32.gmra.mxu0 %v3865
  %v4283 = vpop.f32.mrf.mxu0
  %v4284 = vadd.f32 %v3859, %v4283
  %4285 = vmatmul.f32.gmra.mxu0 %v3868
  %v4286 = vpop.f32.mrf.mxu0
  %v4287 = vadd.f32 %v3859, %v4286
  %4288 = vmatmul.f32.gmra.mxu0 %v3871
  %v4289 = vpop.f32.mrf.mxu0
  %v4290 = vadd.f32 %v3859, %v4289
  %4291 = vmatmul.f32.gmra.mxu0 %v3874
  %v4292 = vpop.f32.mrf.mxu0
  %v4293 = vadd.f32 %v3859, %v4292
  %4294 = vmatmul.f32.gmra.mxu0 %v3877
  %v4295 = vpop.f32.mrf.mxu0
  %v4296 = vadd.f32 %v3859, %v4295
  %4297 = vmatmul.f32.gmra.mxu0 %v3880
  %v4298 = vpop.f32.mrf.mxu0
  %v4299 = vadd.f32 %v3859, %v4298
  %4300 = vmatmul.f32.gmra.mxu0 %v3883
  %v4301 = vpop.f32.mrf.mxu0
  %v4302 = vadd.f32 %v3859, %v4301
  %4303 = vmatmul.f32.gmra.mxu0 %v3886
  %v4304 = vpop.f32.mrf.mxu0
  %v4305 = vadd.f32 %v3859, %v4304
  %4306 = vmatmul.f32.gmra.mxu0 %v3889
  %v4307 = vpop.f32.mrf.mxu0
  %v4308 = vadd.f32 %v3859, %v4307
  %4309 = vmatmul.f32.gmra.mxu0 %v3892
  %v4310 = vpop.f32.mrf.mxu0
  %v4311 = vadd.f32 %v3859, %v4310
  %4312 = vmatmul.f32.gmra.mxu0 %v3895
  %v4313 = vpop.f32.mrf.mxu0
  %v4314 = vadd.f32 %v3859, %v4313
  %4315 = vmatmul.f32.gmra.mxu0 %v3898
  %v4316 = vpop.f32.mrf.mxu0
  %v4317 = vadd.f32 %v3859, %v4316
  %4318 = vmatmul.f32.gmra.mxu0 %v3901
  %v4319 = vpop.f32.mrf.mxu0
  %v4320 = vadd.f32 %v3859, %v4319
  %4321 = vmatmul.f32.gmra.mxu0 %v3904
  %v4322 = vpop.f32.mrf.mxu0
  %v4323 = vadd.f32 %v3859, %v4322
  %4324 = vmatmul.f32.gmra.mxu0 %v3907
  %v4325 = vpop.f32.mrf.mxu0
  %v4326 = vadd.f32 %v3859, %v4325
  %4327 = vmatmul.f32.gmra.mxu0 %v3910
  %v4328 = vpop.f32.mrf.mxu0
  %v4329 = vadd.f32 %v3859, %v4328
  %4330 = vmatmul.f32.gmra.mxu0 %v3913
  %v4331 = vpop.f32.mrf.mxu0
  %v4332 = vadd.f32 %v3859, %v4331
  %4333 = vmatmul.f32.gmra.mxu0 %v3916
  %v4334 = vpop.f32.mrf.mxu0
  %v4335 = vadd.f32 %v3859, %v4334
  %4336 = vmatmul.f32.gmra.mxu0 %v3919
  %v4337 = vpop.f32.mrf.mxu0
  %v4338 = vadd.f32 %v3859, %v4337
  %4339 = vmatmul.f32.gmra.mxu0 %v3922
  %v4340 = vpop.f32.mrf.mxu0
  %v4341 = vadd.f32 %v3859, %v4340
  %4342 = vmatmul.f32.gmra.mxu0 %v3925
  %v4343 = vpop.f32.mrf.mxu0
  %v4344 = vadd.f32 %v3859, %v4343
  %4345 = vmatmul.f32.gmra.mxu0 %v3928
  %v4346 = vpop.f32.mrf.mxu0
  %v4347 = vadd.f32 %v3859, %v4346
  %4348 = vmatmul.f32.gmra.mxu0 %v3931
  %v4349 = vpop.f32.mrf.mxu0
  %v4350 = vadd.f32 %v3859, %v4349
  %4351 = vmatmul.f32.gmra.mxu0 %v3934
  %v4352 = vpop.f32.mrf.mxu0
  %v4353 = vadd.f32 %v3859, %v4352
  %4354 = vmatmul.f32.gmra.mxu0 %v3937
  %v4355 = vpop.f32.mrf.mxu0
  %v4356 = vadd.f32 %v3859, %v4355
  %4357 = vmatmul.f32.gmra.mxu0 %v3940
  %v4358 = vpop.f32.mrf.mxu0
  %v4359 = vadd.f32 %v3859, %v4358
  %4360 = vmatmul.f32.gmra.mxu0 %v3943
  %v4361 = vpop.f32.mrf.mxu0
  %v4362 = vadd.f32 %v3859, %v4361
  %4363 = vmatmul.f32.gmra.mxu0 %v3946
  %v4364 = vpop.f32.mrf.mxu0
  %v4365 = vadd.f32 %v3859, %v4364
  %4366 = vmatmul.f32.gmra.mxu0 %v3949
  %v4367 = vpop.f32.mrf.mxu0
  %v4368 = vadd.f32 %v3859, %v4367
  %4369 = vmatmul.f32.gmra.mxu0 %v3952
  %v4370 = vpop.f32.mrf.mxu0
  %v4371 = vadd.f32 %v3859, %v4370
  %4372 = vmatmul.f32.gmra.mxu0 %v3955
  %v4373 = vpop.f32.mrf.mxu0
  %v4374 = vadd.f32 %v3859, %v4373
  %4375 = vmatmul.f32.gmra.mxu0 %v3958
  %v4376 = vpop.f32.mrf.mxu0
  %v4377 = vadd.f32 %v3859, %v4376
  %4378 = vmatmul.f32.gmra.mxu0 %v3961
  %v4379 = vpop.f32.mrf.mxu0
  %v4380 = vadd.f32 %v3859, %v4379
  %4381 = vmatmul.f32.gmra.mxu0 %v3964
  %v4382 = vpop.f32.mrf.mxu0
  %v4383 = vadd.f32 %v3859, %v4382
  %4384 = vmatmul.f32.gmra.mxu0 %v3967
  %v4385 = vpop.f32.mrf.mxu0
  %v4386 = vadd.f32 %v3859, %v4385
  %4387 = vmatmul.f32.gmra.mxu0 %v3970
  %v4388 = vpop.f32.mrf.mxu0
  %v4389 = vadd.f32 %v3859, %v4388
  %4390 = vmatmul.f32.gmra.mxu0 %v3973
  %v4391 = vpop.f32.mrf.mxu0
  %v4392 = vadd.f32 %v3859, %v4391
  %4393 = vmatmul.f32.gmra.mxu0 %v3976
  %v4394 = vpop.f32.mrf.mxu0
  %v4395 = vadd.f32 %v3859, %v4394
  %4396 = vmatmul.f32.gmra.mxu0 %v3979
  %v4397 = vpop.f32.mrf.mxu0
  %v4398 = vadd.f32 %v3859, %v4397
  %4399 = vmatmul.f32.gmra.mxu0 %v3982
  %v4400 = vpop.f32.mrf.mxu0
  %v4401 = vadd.f32 %v3859, %v4400
  %4402 = vmatmul.f32.gmra.mxu0 %v3985
  %v4403 = vpop.f32.mrf.mxu0
  %v4404 = vadd.f32 %v3859, %v4403
  %4405 = vmatmul.f32.gmra.mxu0 %v3988
  %v4406 = vpop.f32.mrf.mxu0
  %v4407 = vadd.f32 %v3859, %v4406
  %4408 = vmatmul.f32.gmra.mxu0 %v3991
  %v4409 = vpop.f32.mrf.mxu0
  %v4410 = vadd.f32 %v3859, %v4409
  %4411 = vmatmul.f32.gmra.mxu0 %v3994
  %v4412 = vpop.f32.mrf.mxu0
  %v4413 = vadd.f32 %v3859, %v4412
  %4414 = vmatmul.f32.gmra.mxu0 %v3997
  %v4415 = vpop.f32.mrf.mxu0
  %v4416 = vadd.f32 %v3859, %v4415
  %4417 = vmatmul.f32.gmra.mxu0 %v4000
  %v4418 = vpop.f32.mrf.mxu0
  %v4419 = vadd.f32 %v3859, %v4418
  %4420 = vmatmul.f32.gmra.mxu0 %v4003
  %v4421 = vpop.f32.mrf.mxu0
  %v4422 = vadd.f32 %v3859, %v4421
  %4423 = vmatmul.f32.gmra.mxu0 %v4006
  %v4424 = vpop.f32.mrf.mxu0
  %v4425 = vadd.f32 %v3859, %v4424
  %4426 = vmatmul.f32.gmra.mxu0 %v4009
  %v4427 = vpop.f32.mrf.mxu0
  %v4428 = vadd.f32 %v3859, %v4427
  %4429 = vmatmul.f32.gmra.mxu0 %v4012
  %v4430 = vpop.f32.mrf.mxu0
  %v4431 = vadd.f32 %v3859, %v4430
  %4432 = vmatmul.f32.gmra.mxu0 %v4015
  %v4433 = vpop.f32.mrf.mxu0
  %v4434 = vadd.f32 %v3859, %v4433
  %4435 = vmatmul.f32.gmra.mxu0 %v4018
  %v4436 = vpop.f32.mrf.mxu0
  %v4437 = vadd.f32 %v3859, %v4436
  %4438 = vmatmul.f32.gmra.mxu0 %v4021
  %v4439 = vpop.f32.mrf.mxu0
  %v4440 = vadd.f32 %v3859, %v4439
  %4441 = vmatmul.f32.gmra.mxu0 %v4024
  %v4442 = vpop.f32.mrf.mxu0
  %v4443 = vadd.f32 %v3859, %v4442
  %4444 = vmatmul.f32.gmra.mxu0 %v4027
  %v4445 = vpop.f32.mrf.mxu0
  %v4446 = vadd.f32 %v3859, %v4445
  %4447 = vmatmul.f32.gmra.mxu0 %v4030
  %v4448 = vpop.f32.mrf.mxu0
  %v4449 = vadd.f32 %v3859, %v4448
  %4450 = vmatmul.f32.gmra.mxu0 %v4033
  %v4451 = vpop.f32.mrf.mxu0
  %v4452 = vadd.f32 %v3859, %v4451
  %4453 = vmatmul.f32.gmra.mxu0 %v4036
  %v4454 = vpop.f32.mrf.mxu0
  %v4455 = vadd.f32 %v3859, %v4454
  %4456 = vmatmul.f32.gmra.mxu0 %v4039
  %v4457 = vpop.f32.mrf.mxu0
  %v4458 = vadd.f32 %v3859, %v4457
  %4459 = vmatmul.f32.gmra.mxu0 %v4042
  %v4460 = vpop.f32.mrf.mxu0
  %v4461 = vadd.f32 %v3859, %v4460
  %4462 = vmatmul.f32.gmra.mxu0 %v4045
  %v4463 = vpop.f32.mrf.mxu0
  %v4464 = vadd.f32 %v3859, %v4463
  %4465 = vmatmul.f32.gmra.mxu0 %v4048
  %v4466 = vpop.f32.mrf.mxu0
  %v4467 = vadd.f32 %v3859, %v4466
  %4468 = vmatmul.f32.gmra.mxu0 %v4051
  %v4469 = vpop.f32.mrf.mxu0
  %v4470 = vadd.f32 %v3859, %v4469
  %4471 = vmatmul.f32.gmra.mxu0 %v4054
  %v4472 = vpop.f32.mrf.mxu0
  %v4473 = vadd.f32 %v3859, %v4472
  %4474 = vmatmul.f32.gmra.mxu0 %v4057
  %v4475 = vpop.f32.mrf.mxu0
  %v4476 = vadd.f32 %v3859, %v4475
  %4477 = vmatmul.f32.gmra.mxu0 %v4060
  %v4478 = vpop.f32.mrf.mxu0
  %v4479 = vadd.f32 %v3859, %v4478
  %4480 = vmatmul.f32.gmra.mxu0 %v4063
  %v4481 = vpop.f32.mrf.mxu0
  %v4482 = vadd.f32 %v3859, %v4481
  %4483 = vmatmul.f32.gmra.mxu0 %v4066
  %v4484 = vpop.f32.mrf.mxu0
  %v4485 = vadd.f32 %v3859, %v4484
  %4486 = vmatmul.f32.gmra.mxu0 %v4069
  %v4487 = vpop.f32.mrf.mxu0
  %v4488 = vadd.f32 %v3859, %v4487
  %4489 = vmatmul.f32.gmra.mxu0 %v4072
  %v4490 = vpop.f32.mrf.mxu0
  %v4491 = vadd.f32 %v3859, %v4490
  %4492 = vmatmul.f32.gmra.mxu0 %v4075
  %v4493 = vpop.f32.mrf.mxu0
  %v4494 = vadd.f32 %v3859, %v4493
  %4495 = vmatmul.f32.gmra.mxu0 %v4078
  %v4496 = vpop.f32.mrf.mxu0
  %v4497 = vadd.f32 %v3859, %v4496
  %4498 = vmatmul.f32.gmra.mxu0 %v4081
  %v4499 = vpop.f32.mrf.mxu0
  %v4500 = vadd.f32 %v3859, %v4499
  %4501 = vmatmul.f32.gmra.mxu0 %v4084
  %v4502 = vpop.f32.mrf.mxu0
  %v4503 = vadd.f32 %v3859, %v4502
  %4504 = vmatmul.f32.gmra.mxu0 %v4087
  %v4505 = vpop.f32.mrf.mxu0
  %v4506 = vadd.f32 %v3859, %v4505
  %4507 = vmatmul.f32.gmra.mxu0 %v4090
  %v4508 = vpop.f32.mrf.mxu0
  %v4509 = vadd.f32 %v3859, %v4508
  %4510 = vmatmul.f32.gmra.mxu0 %v4093
  %v4511 = vpop.f32.mrf.mxu0
  %v4512 = vadd.f32 %v3859, %v4511
  %4513 = vmatmul.f32.gmra.mxu0 %v4096
  %v4514 = vpop.f32.mrf.mxu0
  %v4515 = vadd.f32 %v3859, %v4514
  %4516 = vmatmul.f32.gmra.mxu0 %v4099
  %v4517 = vpop.f32.mrf.mxu0
  %v4518 = vadd.f32 %v3859, %v4517
  %4519 = vmatmul.f32.gmra.mxu0 %v4102
  %v4520 = vpop.f32.mrf.mxu0
  %v4521 = vadd.f32 %v3859, %v4520
  %4522 = vmatmul.f32.gmra.mxu0 %v4105
  %v4523 = vpop.f32.mrf.mxu0
  %v4524 = vadd.f32 %v3859, %v4523
  %4525 = vmatmul.f32.gmra.mxu0 %v4108
  %v4526 = vpop.f32.mrf.mxu0
  %v4527 = vadd.f32 %v3859, %v4526
  %4528 = vmatmul.f32.gmra.mxu0 %v4111
  %v4529 = vpop.f32.mrf.mxu0
  %v4530 = vadd.f32 %v3859, %v4529
  %4531 = vmatmul.f32.gmra.mxu0 %v4114
  %v4532 = vpop.f32.mrf.mxu0
  %v4533 = vadd.f32 %v3859, %v4532
  %4534 = vmatmul.f32.gmra.mxu0 %v4117
  %v4535 = vpop.f32.mrf.mxu0
  %v4536 = vadd.f32 %v3859, %v4535
  %4537 = vmatmul.f32.gmra.mxu0 %v4120
  %v4538 = vpop.f32.mrf.mxu0
  %v4539 = vadd.f32 %v3859, %v4538
  %4540 = vmatmul.f32.gmra.mxu0 %v4123
  %v4541 = vpop.f32.mrf.mxu0
  %v4542 = vadd.f32 %v3859, %v4541
  %4543 = vmatmul.f32.gmra.mxu0 %v4126
  %v4544 = vpop.f32.mrf.mxu0
  %v4545 = vadd.f32 %v3859, %v4544
  %4546 = vmatmul.f32.gmra.mxu0 %v4129
  %v4547 = vpop.f32.mrf.mxu0
  %v4548 = vadd.f32 %v3859, %v4547
  %4549 = vmatmul.f32.gmra.mxu0 %v4132
  %v4550 = vpop.f32.mrf.mxu0
  %v4551 = vadd.f32 %v3859, %v4550
  %4552 = vmatmul.f32.gmra.mxu0 %v4135
  %v4553 = vpop.f32.mrf.mxu0
  %v4554 = vadd.f32 %v3859, %v4553
  %4555 = vmatmul.f32.gmra.mxu0 %v4138
  %v4556 = vpop.f32.mrf.mxu0
  %v4557 = vadd.f32 %v3859, %v4556
  %4558 = vmatmul.f32.gmra.mxu0 %v4141
  %v4559 = vpop.f32.mrf.mxu0
  %v4560 = vadd.f32 %v3859, %v4559
  %4561 = vmatmul.f32.gmra.mxu0 %v4144
  %v4562 = vpop.f32.mrf.mxu0
  %v4563 = vadd.f32 %v3859, %v4562
  %4564 = vmatmul.f32.gmra.mxu0 %v4147
  %v4565 = vpop.f32.mrf.mxu0
  %v4566 = vadd.f32 %v3859, %v4565
  %4567 = vmatmul.f32.gmra.mxu0 %v4150
  %v4568 = vpop.f32.mrf.mxu0
  %v4569 = vadd.f32 %v3859, %v4568
  %4570 = vmatmul.f32.gmra.mxu0 %v4153
  %v4571 = vpop.f32.mrf.mxu0
  %v4572 = vadd.f32 %v3859, %v4571
  %4573 = vmatmul.f32.gmra.mxu0 %v4156
  %v4574 = vpop.f32.mrf.mxu0
  %v4575 = vadd.f32 %v3859, %v4574
  %4576 = vmatmul.f32.gmra.mxu0 %v4159
  %v4577 = vpop.f32.mrf.mxu0
  %v4578 = vadd.f32 %v3859, %v4577
  %4579 = vmatmul.f32.gmra.mxu0 %v4162
  %v4580 = vpop.f32.mrf.mxu0
  %v4581 = vadd.f32 %v3859, %v4580
  %4582 = vmatmul.f32.gmra.mxu0 %v4165
  %v4583 = vpop.f32.mrf.mxu0
  %v4584 = vadd.f32 %v3859, %v4583
  %4585 = vmatmul.f32.gmra.mxu0 %v4168
  %v4586 = vpop.f32.mrf.mxu0
  %v4587 = vadd.f32 %v3859, %v4586
  %4588 = vmatmul.f32.gmra.mxu0 %v4171
  %v4589 = vpop.f32.mrf.mxu0
  %v4590 = vadd.f32 %v3859, %v4589
  %4591 = vmatmul.f32.gmra.mxu0 %v4174
  %v4592 = vpop.f32.mrf.mxu0
  %v4593 = vadd.f32 %v3859, %v4592
  %4594 = vmatmul.f32.gmra.mxu0 %v4177
  %v4595 = vpop.f32.mrf.mxu0
  %v4596 = vadd.f32 %v3859, %v4595
  %4597 = vmatmul.f32.gmra.mxu0 %v4180
  %v4598 = vpop.f32.mrf.mxu0
  %v4599 = vadd.f32 %v3859, %v4598
  %4600 = vmatmul.f32.gmra.mxu0 %v4183
  %v4601 = vpop.f32.mrf.mxu0
  %v4602 = vadd.f32 %v3859, %v4601
  %4603 = vmatmul.f32.gmra.mxu0 %v4186
  %v4604 = vpop.f32.mrf.mxu0
  %v4605 = vadd.f32 %v3859, %v4604
  %4606 = vmatmul.f32.gmra.mxu0 %v4189
  %v4607 = vpop.f32.mrf.mxu0
  %v4608 = vadd.f32 %v3859, %v4607
  %4609 = vmatmul.f32.gmra.mxu0 %v4192
  %v4610 = vpop.f32.mrf.mxu0
  %v4611 = vadd.f32 %v3859, %v4610
  %4612 = vmatmul.f32.gmra.mxu0 %v4195
  %v4613 = vpop.f32.mrf.mxu0
  %v4614 = vadd.f32 %v3859, %v4613
  %4615 = vmatmul.f32.gmra.mxu0 %v4198
  %v4616 = vpop.f32.mrf.mxu0
  %v4617 = vadd.f32 %v3859, %v4616
  %4618 = vmatmul.f32.gmra.mxu0 %v4201
  %v4619 = vpop.f32.mrf.mxu0
  %v4620 = vadd.f32 %v3859, %v4619
  %4621 = vmatmul.f32.gmra.mxu0 %v4204
  %v4622 = vpop.f32.mrf.mxu0
  %v4623 = vadd.f32 %v3859, %v4622
  %4624 = vmatmul.f32.gmra.mxu0 %v4207
  %v4625 = vpop.f32.mrf.mxu0
  %v4626 = vadd.f32 %v3859, %v4625
  %4627 = vmatmul.f32.gmra.mxu0 %v4210
  %v4628 = vpop.f32.mrf.mxu0
  %v4629 = vadd.f32 %v3859, %v4628
  %4630 = vmatmul.f32.gmra.mxu0 %v4213
  %v4631 = vpop.f32.mrf.mxu0
  %v4632 = vadd.f32 %v3859, %v4631
  %4633 = vmatmul.f32.gmra.mxu0 %v4216
  %v4634 = vpop.f32.mrf.mxu0
  %v4635 = vadd.f32 %v3859, %v4634
  %4636 = vmatmul.f32.gmra.mxu0 %v4219
  %v4637 = vpop.f32.mrf.mxu0
  %v4638 = vadd.f32 %v3859, %v4637
  %4639 = vmatmul.f32.gmra.mxu0 %v4222
  %v4640 = vpop.f32.mrf.mxu0
  %v4641 = vadd.f32 %v3859, %v4640
  %4642 = vmatmul.f32.gmra.mxu0 %v4225
  %v4643 = vpop.f32.mrf.mxu0
  %v4644 = vadd.f32 %v3859, %v4643
  %4645 = vmatmul.f32.gmra.mxu0 %v4228
  %v4646 = vpop.f32.mrf.mxu0
  %v4647 = vadd.f32 %v3859, %v4646
  %4648 = vmatmul.f32.gmra.mxu0 %v4231
  %v4649 = vpop.f32.mrf.mxu0
  %v4650 = vadd.f32 %v3859, %v4649
  %4651 = vmatmul.f32.gmra.mxu0 %v4234
  %v4652 = vpop.f32.mrf.mxu0
  %v4653 = vadd.f32 %v3859, %v4652
  %4654 = vmatmul.f32.gmra.mxu0 %v4237
  %v4655 = vpop.f32.mrf.mxu0
  %v4656 = vadd.f32 %v3859, %v4655
  %4657 = vmatmul.f32.gmra.mxu0 %v4240
  %v4658 = vpop.f32.mrf.mxu0
  %v4659 = vadd.f32 %v3859, %v4658
  %4660 = vmatmul.f32.gmra.mxu0 %v4243
  %v4661 = vpop.f32.mrf.mxu0
  %v4662 = vadd.f32 %v3859, %v4661
  %4663 = vmatmul.f32.gmra.mxu0 %v4246
  %v4664 = vpop.f32.mrf.mxu0
  %v4665 = vadd.f32 %v3859, %v4664
  %4666 = vmatmul.f32.gmra.mxu0 %v4249
  %v4667 = vpop.f32.mrf.mxu0
  %v4668 = vadd.f32 %v3859, %v4667
  %4669 = vmatmul.f32.gmra.mxu0 %v4252
  %v4670 = vpop.f32.mrf.mxu0
  %v4671 = vadd.f32 %v3859, %v4670
  %4672 = vmatmul.f32.gmra.mxu0 %v4255
  %v4673 = vpop.f32.mrf.mxu0
  %v4674 = vadd.f32 %v3859, %v4673
  %4675 = vmatmul.f32.gmra.mxu0 %v4258
  %v4676 = vpop.f32.mrf.mxu0
  %v4677 = vadd.f32 %v3859, %v4676
  %4678 = vdwg.mxu0
  %v4679 = vmax.f32 %v4281, 0.0
  %v4680 = vmax.f32 %v4284, 0.0
  %v4681 = vmax.f32 %v4287, 0.0
  %v4682 = vmax.f32 %v4290, 0.0
  %v4683 = vmax.f32 %v4293, 0.0
  %v4684 = vmax.f32 %v4296, 0.0
  %v4685 = vmax.f32 %v4299, 0.0
  %v4686 = vmax.f32 %v4302, 0.0
  %v4687 = vmax.f32 %v4305, 0.0
  %v4688 = vmax.f32 %v4308, 0.0
  %v4689 = vmax.f32 %v4311, 0.0
  %v4690 = vmax.f32 %v4314, 0.0
  %v4691 = vmax.f32 %v4317, 0.0
  %v4692 = vmax.f32 %v4320, 0.0
  %v4693 = vmax.f32 %v4323, 0.0
  %v4694 = vmax.f32 %v4326, 0.0
  %v4695 = vmax.f32 %v4329, 0.0
  %v4696 = vmax.f32 %v4332, 0.0
  %v4697 = vmax.f32 %v4335, 0.0
  %v4698 = vmax.f32 %v4338, 0.0
  %v4699 = vmax.f32 %v4341, 0.0
  %v4700 = vmax.f32 %v4344, 0.0
  %v4701 = vmax.f32 %v4347, 0.0
  %v4702 = vmax.f32 %v4350, 0.0
  %v4703 = vmax.f32 %v4353, 0.0
  %v4704 = vmax.f32 %v4356, 0.0
  %v4705 = vmax.f32 %v4359, 0.0
  %v4706 = vmax.f32 %v4362, 0.0
  %v4707 = vmax.f32 %v4365, 0.0
  %v4708 = vmax.f32 %v4368, 0.0
  %v4709 = vmax.f32 %v4371, 0.0
  %v4710 = vmax.f32 %v4374, 0.0
  %v4711 = vmax.f32 %v4377, 0.0
  %v4712 = vmax.f32 %v4380, 0.0
  %v4713 = vmax.f32 %v4383, 0.0
  %v4714 = vmax.f32 %v4386, 0.0
  %v4715 = vmax.f32 %v4389, 0.0
  %v4716 = vmax.f32 %v4392, 0.0
  %v4717 = vmax.f32 %v4395, 0.0
  %v4718 = vmax.f32 %v4398, 0.0
  %v4719 = vmax.f32 %v4401, 0.0
  %v4720 = vmax.f32 %v4404, 0.0
  %v4721 = vmax.f32 %v4407, 0.0
  %v4722 = vmax.f32 %v4410, 0.0
  %v4723 = vmax.f32 %v4413, 0.0
  %v4724 = vmax.f32 %v4416, 0.0
  %v4725 = vmax.f32 %v4419, 0.0
  %v4726 = vmax.f32 %v4422, 0.0
  %v4727 = vmax.f32 %v4425, 0.0
  %v4728 = vmax.f32 %v4428, 0.0
  %v4729 = vmax.f32 %v4431, 0.0
  %v4730 = vmax.f32 %v4434, 0.0
  %v4731 = vmax.f32 %v4437, 0.0
  %v4732 = vmax.f32 %v4440, 0.0
  %v4733 = vmax.f32 %v4443, 0.0
  %v4734 = vmax.f32 %v4446, 0.0
  %v4735 = vmax.f32 %v4449, 0.0
  %v4736 = vmax.f32 %v4452, 0.0
  %v4737 = vmax.f32 %v4455, 0.0
  %v4738 = vmax.f32 %v4458, 0.0
  %v4739 = vmax.f32 %v4461, 0.0
  %v4740 = vmax.f32 %v4464, 0.0
  %v4741 = vmax.f32 %v4467, 0.0
  %v4742 = vmax.f32 %v4470, 0.0
  %v4743 = vmax.f32 %v4473, 0.0
  %v4744 = vmax.f32 %v4476, 0.0
  %v4745 = vmax.f32 %v4479, 0.0
  %v4746 = vmax.f32 %v4482, 0.0
  %v4747 = vmax.f32 %v4485, 0.0
  %v4748 = vmax.f32 %v4488, 0.0
  %v4749 = vmax.f32 %v4491, 0.0
  %v4750 = vmax.f32 %v4494, 0.0
  %v4751 = vmax.f32 %v4497, 0.0
  %v4752 = vmax.f32 %v4500, 0.0
  %v4753 = vmax.f32 %v4503, 0.0
  %v4754 = vmax.f32 %v4506, 0.0
  %v4755 = vmax.f32 %v4509, 0.0
  %v4756 = vmax.f32 %v4512, 0.0
  %v4757 = vmax.f32 %v4515, 0.0
  %v4758 = vmax.f32 %v4518, 0.0
  %v4759 = vmax.f32 %v4521, 0.0
  %v4760 = vmax.f32 %v4524, 0.0
  %v4761 = vmax.f32 %v4527, 0.0
  %v4762 = vmax.f32 %v4530, 0.0
  %v4763 = vmax.f32 %v4533, 0.0
  %v4764 = vmax.f32 %v4536, 0.0
  %v4765 = vmax.f32 %v4539, 0.0
  %v4766 = vmax.f32 %v4542, 0.0
  %v4767 = vmax.f32 %v4545, 0.0
  %v4768 = vmax.f32 %v4548, 0.0
  %v4769 = vmax.f32 %v4551, 0.0
  %v4770 = vmax.f32 %v4554, 0.0
  %v4771 = vmax.f32 %v4557, 0.0
  %v4772 = vmax.f32 %v4560, 0.0
  %v4773 = vmax.f32 %v4563, 0.0
  %v4774 = vmax.f32 %v4566, 0.0
  %v4775 = vmax.f32 %v4569, 0.0
  %v4776 = vmax.f32 %v4572, 0.0
  %v4777 = vmax.f32 %v4575, 0.0
  %v4778 = vmax.f32 %v4578, 0.0
  %v4779 = vmax.f32 %v4581, 0.0
  %v4780 = vmax.f32 %v4584, 0.0
  %v4781 = vmax.f32 %v4587, 0.0
  %v4782 = vmax.f32 %v4590, 0.0
  %v4783 = vmax.f32 %v4593, 0.0
  %v4784 = vmax.f32 %v4596, 0.0
  %v4785 = vmax.f32 %v4599, 0.0
  %v4786 = vmax.f32 %v4602, 0.0
  %v4787 = vmax.f32 %v4605, 0.0
  %v4788 = vmax.f32 %v4608, 0.0
  %v4789 = vmax.f32 %v4611, 0.0
  %v4790 = vmax.f32 %v4614, 0.0
  %v4791 = vmax.f32 %v4617, 0.0
  %v4792 = vmax.f32 %v4620, 0.0
  %v4793 = vmax.f32 %v4623, 0.0
  %v4794 = vmax.f32 %v4626, 0.0
  %v4795 = vmax.f32 %v4629, 0.0
  %v4796 = vmax.f32 %v4632, 0.0
  %v4797 = vmax.f32 %v4635, 0.0
  %v4798 = vmax.f32 %v4638, 0.0
  %v4799 = vmax.f32 %v4641, 0.0
  %v4800 = vmax.f32 %v4644, 0.0
  %v4801 = vmax.f32 %v4647, 0.0
  %v4802 = vmax.f32 %v4650, 0.0
  %v4803 = vmax.f32 %v4653, 0.0
  %v4804 = vmax.f32 %v4656, 0.0
  %v4805 = vmax.f32 %v4659, 0.0
  %v4806 = vmax.f32 %v4662, 0.0
  %v4807 = vmax.f32 %v4665, 0.0
  %v4808 = vmax.f32 %v4668, 0.0
  %v4809 = vmax.f32 %v4671, 0.0
  %v4810 = vmax.f32 %v4674, 0.0
  %v4811 = vmax.f32 %v4677, 0.0
  %vm4812 = vcmask 48128
  %4813 = vst.msk [vmem:[%s10] sm:$0xff] %vm4812, %v4679
  %4814 = vst.msk [vmem:[%s10 + $0x8] sm:$0xff] %vm4812, %v4680
  %4815 = vst.msk [vmem:[%s10 + $0x10] sm:$0xff] %vm4812, %v4681
  %4816 = vst.msk [vmem:[%s10 + $0x18] sm:$0xff] %vm4812, %v4682
  %4817 = vst.msk [vmem:[%s10 + $0x20] sm:$0xff] %vm4812, %v4683
  %4818 = vst.msk [vmem:[%s10 + $0x28] sm:$0xff] %vm4812, %v4684
  %4819 = vst.msk [vmem:[%s10 + $0x30] sm:$0xff] %vm4812, %v4685
  %4820 = vst.msk [vmem:[%s10 + $0x38] sm:$0xff] %vm4812, %v4686
  %4821 = vst.msk [vmem:[%s10 + $0x40] sm:$0xff] %vm4812, %v4687
  %4822 = vst.msk [vmem:[%s10 + $0x48] sm:$0xff] %vm4812, %v4688
  %4823 = vst.msk [vmem:[%s10 + $0x50] sm:$0xff] %vm4812, %v4689
  %4824 = vst.msk [vmem:[%s10 + $0x58] sm:$0xff] %vm4812, %v4690
  %4825 = vst.msk [vmem:[%s10 + $0x60] sm:$0xff] %vm4812, %v4691
  %4826 = vst.msk [vmem:[%s10 + $0x68] sm:$0xff] %vm4812, %v4692
  %4827 = vst.msk [vmem:[%s10 + $0x70] sm:$0xff] %vm4812, %v4693
  %4828 = vst.msk [vmem:[%s10 + $0x78] sm:$0xff] %vm4812, %v4694
  %4829 = vst.msk [vmem:[%s10 + $0x80] sm:$0xff] %vm4812, %v4695
  %4830 = vst.msk [vmem:[%s10 + $0x88] sm:$0xff] %vm4812, %v4696
  %4831 = vst.msk [vmem:[%s10 + $0x90] sm:$0xff] %vm4812, %v4697
  %4832 = vst.msk [vmem:[%s10 + $0x98] sm:$0xff] %vm4812, %v4698
  %4833 = vst.msk [vmem:[%s10 + $0xa0] sm:$0xff] %vm4812, %v4699
  %4834 = vst.msk [vmem:[%s10 + $0xa8] sm:$0xff] %vm4812, %v4700
  %4835 = vst.msk [vmem:[%s10 + $0xb0] sm:$0xff] %vm4812, %v4701
  %4836 = vst.msk [vmem:[%s10 + $0xb8] sm:$0xff] %vm4812, %v4702
  %4837 = vst.msk [vmem:[%s10 + $0xc0] sm:$0xff] %vm4812, %v4703
  %4838 = vst.msk [vmem:[%s10 + $0xc8] sm:$0xff] %vm4812, %v4704
  %4839 = vst.msk [vmem:[%s10 + $0xd0] sm:$0xff] %vm4812, %v4705
  %4840 = vst.msk [vmem:[%s10 + $0xd8] sm:$0xff] %vm4812, %v4706
  %4841 = vst.msk [vmem:[%s10 + $0xe0] sm:$0xff] %vm4812, %v4707
  %4842 = vst.msk [vmem:[%s10 + $0xe8] sm:$0xff] %vm4812, %v4708
  %4843 = vst.msk [vmem:[%s10 + $0xf0] sm:$0xff] %vm4812, %v4709
  %4844 = vst.msk [vmem:[%s10 + $0xf8] sm:$0xff] %vm4812, %v4710
  %4845 = vst.msk [vmem:[%s10 + $0x100] sm:$0xff] %vm4812, %v4711
  %4846 = vst.msk [vmem:[%s10 + $0x108] sm:$0xff] %vm4812, %v4712
  %4847 = vst.msk [vmem:[%s10 + $0x110] sm:$0xff] %vm4812, %v4713
  %4848 = vst.msk [vmem:[%s10 + $0x118] sm:$0xff] %vm4812, %v4714
  %4849 = vst.msk [vmem:[%s10 + $0x120] sm:$0xff] %vm4812, %v4715
  %4850 = vst.msk [vmem:[%s10 + $0x128] sm:$0xff] %vm4812, %v4716
  %4851 = vst.msk [vmem:[%s10 + $0x130] sm:$0xff] %vm4812, %v4717
  %4852 = vst.msk [vmem:[%s10 + $0x138] sm:$0xff] %vm4812, %v4718
  %4853 = vst.msk [vmem:[%s10 + $0x140] sm:$0xff] %vm4812, %v4719
  %4854 = vst.msk [vmem:[%s10 + $0x148] sm:$0xff] %vm4812, %v4720
  %4855 = vst.msk [vmem:[%s10 + $0x150] sm:$0xff] %vm4812, %v4721
  %4856 = vst.msk [vmem:[%s10 + $0x158] sm:$0xff] %vm4812, %v4722
  %4857 = vst.msk [vmem:[%s10 + $0x160] sm:$0xff] %vm4812, %v4723
  %4858 = vst.msk [vmem:[%s10 + $0x168] sm:$0xff] %vm4812, %v4724
  %4859 = vst.msk [vmem:[%s10 + $0x170] sm:$0xff] %vm4812, %v4725
  %4860 = vst.msk [vmem:[%s10 + $0x178] sm:$0xff] %vm4812, %v4726
  %4861 = vst.msk [vmem:[%s10 + $0x180] sm:$0xff] %vm4812, %v4727
  %4862 = vst.msk [vmem:[%s10 + $0x188] sm:$0xff] %vm4812, %v4728
  %4863 = vst.msk [vmem:[%s10 + $0x190] sm:$0xff] %vm4812, %v4729
  %4864 = vst.msk [vmem:[%s10 + $0x198] sm:$0xff] %vm4812, %v4730
  %4865 = vst.msk [vmem:[%s10 + $0x1a0] sm:$0xff] %vm4812, %v4731
  %4866 = vst.msk [vmem:[%s10 + $0x1a8] sm:$0xff] %vm4812, %v4732
  %4867 = vst.msk [vmem:[%s10 + $0x1b0] sm:$0xff] %vm4812, %v4733
  %4868 = vst.msk [vmem:[%s10 + $0x1b8] sm:$0xff] %vm4812, %v4734
  %4869 = vst.msk [vmem:[%s10 + $0x1c0] sm:$0xff] %vm4812, %v4735
  %4870 = vst.msk [vmem:[%s10 + $0x1c8] sm:$0xff] %vm4812, %v4736
  %4871 = vst.msk [vmem:[%s10 + $0x1d0] sm:$0xff] %vm4812, %v4737
  %4872 = vst.msk [vmem:[%s10 + $0x1d8] sm:$0xff] %vm4812, %v4738
  %4873 = vst.msk [vmem:[%s10 + $0x1e0] sm:$0xff] %vm4812, %v4739
  %4874 = vst.msk [vmem:[%s10 + $0x1e8] sm:$0xff] %vm4812, %v4740
  %4875 = vst.msk [vmem:[%s10 + $0x1f0] sm:$0xff] %vm4812, %v4741
  %4876 = vst.msk [vmem:[%s10 + $0x1f8] sm:$0xff] %vm4812, %v4742
  %4877 = vst.msk [vmem:[%s10 + $0x200] sm:$0xff] %vm4812, %v4743
  %4878 = vst.msk [vmem:[%s10 + $0x208] sm:$0xff] %vm4812, %v4744
  %4879 = vst.msk [vmem:[%s10 + $0x210] sm:$0xff] %vm4812, %v4745
  %4880 = vst.msk [vmem:[%s10 + $0x218] sm:$0xff] %vm4812, %v4746
  %4881 = vst.msk [vmem:[%s10 + $0x220] sm:$0xff] %vm4812, %v4747
  %4882 = vst.msk [vmem:[%s10 + $0x228] sm:$0xff] %vm4812, %v4748
  %4883 = vst.msk [vmem:[%s10 + $0x230] sm:$0xff] %vm4812, %v4749
  %4884 = vst.msk [vmem:[%s10 + $0x238] sm:$0xff] %vm4812, %v4750
  %4885 = vst.msk [vmem:[%s10 + $0x240] sm:$0xff] %vm4812, %v4751
  %4886 = vst.msk [vmem:[%s10 + $0x248] sm:$0xff] %vm4812, %v4752
  %4887 = vst.msk [vmem:[%s10 + $0x250] sm:$0xff] %vm4812, %v4753
  %4888 = vst.msk [vmem:[%s10 + $0x258] sm:$0xff] %vm4812, %v4754
  %4889 = vst.msk [vmem:[%s10 + $0x260] sm:$0xff] %vm4812, %v4755
  %4890 = vst.msk [vmem:[%s10 + $0x268] sm:$0xff] %vm4812, %v4756
  %4891 = vst.msk [vmem:[%s10 + $0x270] sm:$0xff] %vm4812, %v4757
  %4892 = vst.msk [vmem:[%s10 + $0x278] sm:$0xff] %vm4812, %v4758
  %4893 = vst.msk [vmem:[%s10 + $0x280] sm:$0xff] %vm4812, %v4759
  %4894 = vst.msk [vmem:[%s10 + $0x288] sm:$0xff] %vm4812, %v4760
  %4895 = vst.msk [vmem:[%s10 + $0x290] sm:$0xff] %vm4812, %v4761
  %4896 = vst.msk [vmem:[%s10 + $0x298] sm:$0xff] %vm4812, %v4762
  %4897 = vst.msk [vmem:[%s10 + $0x2a0] sm:$0xff] %vm4812, %v4763
  %4898 = vst.msk [vmem:[%s10 + $0x2a8] sm:$0xff] %vm4812, %v4764
  %4899 = vst.msk [vmem:[%s10 + $0x2b0] sm:$0xff] %vm4812, %v4765
  %4900 = vst.msk [vmem:[%s10 + $0x2b8] sm:$0xff] %vm4812, %v4766
  %4901 = vst.msk [vmem:[%s10 + $0x2c0] sm:$0xff] %vm4812, %v4767
  %4902 = vst.msk [vmem:[%s10 + $0x2c8] sm:$0xff] %vm4812, %v4768
  %4903 = vst.msk [vmem:[%s10 + $0x2d0] sm:$0xff] %vm4812, %v4769
  %4904 = vst.msk [vmem:[%s10 + $0x2d8] sm:$0xff] %vm4812, %v4770
  %4905 = vst.msk [vmem:[%s10 + $0x2e0] sm:$0xff] %vm4812, %v4771
  %4906 = vst.msk [vmem:[%s10 + $0x2e8] sm:$0xff] %vm4812, %v4772
  %4907 = vst.msk [vmem:[%s10 + $0x2f0] sm:$0xff] %vm4812, %v4773
  %4908 = vst.msk [vmem:[%s10 + $0x2f8] sm:$0xff] %vm4812, %v4774
  %4909 = vst.msk [vmem:[%s10 + $0x300] sm:$0xff] %vm4812, %v4775
  %4910 = vst.msk [vmem:[%s10 + $0x308] sm:$0xff] %vm4812, %v4776
  %4911 = vst.msk [vmem:[%s10 + $0x310] sm:$0xff] %vm4812, %v4777
  %4912 = vst.msk [vmem:[%s10 + $0x318] sm:$0xff] %vm4812, %v4778
  %4913 = vst.msk [vmem:[%s10 + $0x320] sm:$0xff] %vm4812, %v4779
  %4914 = vst.msk [vmem:[%s10 + $0x328] sm:$0xff] %vm4812, %v4780
  %4915 = vst.msk [vmem:[%s10 + $0x330] sm:$0xff] %vm4812, %v4781
  %4916 = vst.msk [vmem:[%s10 + $0x338] sm:$0xff] %vm4812, %v4782
  %4917 = vst.msk [vmem:[%s10 + $0x340] sm:$0xff] %vm4812, %v4783
  %4918 = vst.msk [vmem:[%s10 + $0x348] sm:$0xff] %vm4812, %v4784
  %4919 = vst.msk [vmem:[%s10 + $0x350] sm:$0xff] %vm4812, %v4785
  %4920 = vst.msk [vmem:[%s10 + $0x358] sm:$0xff] %vm4812, %v4786
  %4921 = vst.msk [vmem:[%s10 + $0x360] sm:$0xff] %vm4812, %v4787
  %4922 = vst.msk [vmem:[%s10 + $0x368] sm:$0xff] %vm4812, %v4788
  %4923 = vst.msk [vmem:[%s10 + $0x370] sm:$0xff] %vm4812, %v4789
  %4924 = vst.msk [vmem:[%s10 + $0x378] sm:$0xff] %vm4812, %v4790
  %4925 = vst.msk [vmem:[%s10 + $0x380] sm:$0xff] %vm4812, %v4791
  %4926 = vst.msk [vmem:[%s10 + $0x388] sm:$0xff] %vm4812, %v4792
  %4927 = vst.msk [vmem:[%s10 + $0x390] sm:$0xff] %vm4812, %v4793
  %4928 = vst.msk [vmem:[%s10 + $0x398] sm:$0xff] %vm4812, %v4794
  %4929 = vst.msk [vmem:[%s10 + $0x3a0] sm:$0xff] %vm4812, %v4795
  %4930 = vst.msk [vmem:[%s10 + $0x3a8] sm:$0xff] %vm4812, %v4796
  %4931 = vst.msk [vmem:[%s10 + $0x3b0] sm:$0xff] %vm4812, %v4797
  %4932 = vst.msk [vmem:[%s10 + $0x3b8] sm:$0xff] %vm4812, %v4798
  %4933 = vst.msk [vmem:[%s10 + $0x3c0] sm:$0xff] %vm4812, %v4799
  %4934 = vst.msk [vmem:[%s10 + $0x3c8] sm:$0xff] %vm4812, %v4800
  %4935 = vst.msk [vmem:[%s10 + $0x3d0] sm:$0xff] %vm4812, %v4801
  %4936 = vst.msk [vmem:[%s10 + $0x3d8] sm:$0xff] %vm4812, %v4802
  %4937 = vst.msk [vmem:[%s10 + $0x3e0] sm:$0xff] %vm4812, %v4803
  %4938 = vst.msk [vmem:[%s10 + $0x3e8] sm:$0xff] %vm4812, %v4804
  %4939 = vst.msk [vmem:[%s10 + $0x3f0] sm:$0xff] %vm4812, %v4805
  %4940 = vst.msk [vmem:[%s10 + $0x3f8] sm:$0xff] %vm4812, %v4806
  %4941 = vst.msk [vmem:[%s10 + $0x400] sm:$0xff] %vm4812, %v4807
  %4942 = vst.msk [vmem:[%s10 + $0x408] sm:$0xff] %vm4812, %v4808
  %4943 = vst.msk [vmem:[%s10 + $0x410] sm:$0xff] %vm4812, %v4809
  %4944 = vst.msk [vmem:[%s10 + $0x418] sm:$0xff] %vm4812, %v4810
  %vm4945 = vcmask 41984
  %4946 = vst.msk [vmem:[%s10 + $0x420] sm:$0x3] %vm4945, %v4811
  %v4947 = vld [vmem:[%s2] sm:$0xff]
  %v4948 = vld [vmem:[%s2 + $0x8] sm:$0xff]
  %v4949 = vld [vmem:[%s2 + $0x10] sm:$0xff]
  %v4950 = vld [vmem:[%s2 + $0x18] sm:$0xff]
  %v4951 = vld [vmem:[%s2 + $0x20] sm:$0xff]
  %v4952 = vld [vmem:[%s2 + $0x28] sm:$0xff]
  %v4953 = vld [vmem:[%s2 + $0x30] sm:$0x3]
  %v4954 = vld [vmem:[%s5] sm:$0xff]
  %v4955 = vld [vmem:[%s5 + $0x8] sm:$0xff]
  %v4956 = vld [vmem:[%s5 + $0x10] sm:$0xff]
  %v4957 = vld [vmem:[%s5 + $0x18] sm:$0x1]
  %v4958 = vld [vmem:[%s8] sm:$0x1]
  %v4960 = vperm.slane %v4958, 0
  %v4963 = vsel %vm449, %v4947, 0
  %v4966 = vsel %vm449, %v4948, 0
  %v4969 = vsel %vm449, %v4949, 0
  %v4972 = vsel %vm449, %v4950, 0
  %v4975 = vsel %vm449, %v4951, 0
  %v4978 = vsel %vm449, %v4952, 0
  %v4981 = vsel %vm449, %v4953, 0
  %v4984 = vsel %vm1668, %v4957, 0
  %4986 = vmatpush.msra.mxu0 0.0
  %4987 = vmatpush.msra.mxu0 0.0
  %4988 = vmatpush.msra.mxu0 0.0
  %4989 = vmatpush.msra.mxu0 0.0
  %4990 = vmatpush.msra.mxu0 0.0
  %4991 = vmatpush.msra.mxu0 0.0
  %4992 = vmatpush.msra.mxu0 0.0
  %4993 = vmatpush.msra.mxu0 0.0
  %4994 = vmatpush.msra.mxu0 0.0
  %4995 = vmatpush.msra.mxu0 0.0
  %4996 = vmatpush.msra.mxu0 0.0
  %4997 = vmatpush.msra.mxu0 0.0
  %4998 = vmatpush.msra.mxu0 %v4984
  %4999 = vmatpush.msra.mxu0 %v4956
  %5000 = vmatpush.msra.mxu0 %v4955
  %5001 = vmatpush.msra.mxu0 %v4954
  %5002 = vmatmul.f32.gmra.mxu0 %v4963
  %v5003 = vpop.f32.mrf.mxu0
  %v5004 = vadd.f32 %v4960, %v5003
  %5005 = vmatmul.f32.gmra.mxu0 %v4966
  %v5006 = vpop.f32.mrf.mxu0
  %v5007 = vadd.f32 %v4960, %v5006
  %5008 = vmatmul.f32.gmra.mxu0 %v4969
  %v5009 = vpop.f32.mrf.mxu0
  %v5010 = vadd.f32 %v4960, %v5009
  %5011 = vmatmul.f32.gmra.mxu0 %v4972
  %v5012 = vpop.f32.mrf.mxu0
  %v5013 = vadd.f32 %v4960, %v5012
  %5014 = vmatmul.f32.gmra.mxu0 %v4975
  %v5015 = vpop.f32.mrf.mxu0
  %v5016 = vadd.f32 %v4960, %v5015
  %5017 = vmatmul.f32.gmra.mxu0 %v4978
  %v5018 = vpop.f32.mrf.mxu0
  %v5019 = vadd.f32 %v4960, %v5018
  %5020 = vmatmul.f32.gmra.mxu0 %v4981
  %v5021 = vpop.f32.mrf.mxu0
  %v5022 = vadd.f32 %v4960, %v5021
  %5023 = vdwg.mxu0
  %v5024 = vmax.f32 %v5004, 0.0
  %v5025 = vmax.f32 %v5007, 0.0
  %v5026 = vmax.f32 %v5010, 0.0
  %v5027 = vmax.f32 %v5013, 0.0
  %v5028 = vmax.f32 %v5016, 0.0
  %v5029 = vmax.f32 %v5019, 0.0
  %v5030 = vmax.f32 %v5022, 0.0
  %5031 = vst.msk [vmem:[%s11] sm:$0xff] %vm4812, %v5024
  %5032 = vst.msk [vmem:[%s11 + $0x8] sm:$0xff] %vm4812, %v5025
  %5033 = vst.msk [vmem:[%s11 + $0x10] sm:$0xff] %vm4812, %v5026
  %5034 = vst.msk [vmem:[%s11 + $0x18] sm:$0xff] %vm4812, %v5027
  %5035 = vst.msk [vmem:[%s11 + $0x20] sm:$0xff] %vm4812, %v5028
  %5036 = vst.msk [vmem:[%s11 + $0x28] sm:$0xff] %vm4812, %v5029
  %5037 = vst.msk [vmem:[%s11 + $0x30] sm:$0x3] %vm4945, %v5030
  // Predicated region
  $region38: #{nvidia_arch_forward.6} parent=0 // pred_check
    _
  $region39: #{nvidia_arch_forward.6} parent=0 // pred_check_branch
    %5039 = sbr.rel (0) target = $region41
  $region40: #{nvidia_arch_forward.6} parent=0 // pred_region
    _
  $region41: #{nvidia_arch_forward.6} parent=0 // pred_fallthru
    _
  // Predicated region
  $region42: #{nvidia_arch_forward.6} parent=0 // pred_check
    _
  $region43: #{nvidia_arch_forward.6} parent=0 // pred_check_branch
    %5041 = sbr.rel (0) target = $region45
  $region44: #{nvidia_arch_forward.6} parent=0 // pred_region
    _
  $region45: #{nvidia_arch_forward.6} parent=0 // pred_fallthru
    _
  // Predicated region
  $region46: #{nvidia_arch_forward.6} parent=0 // pred_check
    _
  $region47: #{nvidia_arch_forward.6} parent=0 // pred_check_branch
    %5043 = sbr.rel (0) target = $region49
  $region48: #{nvidia_arch_forward.6} parent=0 // pred_region
    _
  $region49: #{nvidia_arch_forward.6} parent=0 // pred_fallthru
    _
  // Predicated region
  $region50: #{nvidia_arch_forward.6} parent=0 // pred_check
    _
  $region51: #{nvidia_arch_forward.6} parent=0 // pred_check_branch
    %5045 = sbr.rel (0) target = $region53
  $region52: #{nvidia_arch_forward.6} parent=0 // pred_region
    _
  $region53: #{nvidia_arch_forward.6} parent=0 // pred_fallthru
    _
  // Predicated region
  $region54: #{nvidia_arch_forward.6} parent=0 // pred_check
    _
  $region55: #{nvidia_arch_forward.6} parent=0 // pred_check_branch
    %5047 = sbr.rel (0) target = $region57
  $region56: #{nvidia_arch_forward.6} parent=0 // pred_region
    _
  $region57: #{nvidia_arch_forward.6} parent=0 // pred_fallthru
    _
  // Predicated region
  $region58: #{nvidia_arch_forward.6} parent=0 // pred_check
    _
  $region59: #{nvidia_arch_forward.6} parent=0 // pred_check_branch
    %5049 = sbr.rel (0) target = $region61
  $region60: #{nvidia_arch_forward.6} parent=0 // pred_region
    _
  $region61: #{nvidia_arch_forward.6} parent=0 // pred_fallthru
    _

// kernel: nvidia_arch_forward.7
$region0: #{nvidia_arch_forward.7}
  #allocation0 [shape = 'u32[]', space=smem, size = 0x4, offset = 0x4, fixed_abs, tag = 'smem constant byte address 0x4 - core index']
  #allocation1 [shape = 'u32[72,128]{1,0:T(1,128)}', space=vmem, size = 0x9000, scoped, tag = 'internal scratch']
  %s0 = inlined_call_operand.vmem [shape: f32[648,600], index: 0, kind: input, shape index: {}]
  %s1 = inlined_call_operand.vmem [shape: f32[200,150], index: 1, kind: input, shape index: {}]
  %s2 = inlined_call_operand.vmem [shape: f32[2,150], index: 2, kind: input, shape index: {}]
  %s3 = inlined_call_operand.vmem [shape: f32[600,36], index: 3, kind: input, shape index: {}]
  %s4 = inlined_call_operand.vmem [shape: f32[150,12], index: 4, kind: input, shape index: {}]
  %s5 = inlined_call_operand.vmem [shape: f32[150,12], index: 5, kind: input, shape index: {}]
  %s6 = inlined_call_operand.vmem [shape: f32[1,36], index: 6, kind: input, shape index: {}]
  %s7 = inlined_call_operand.vmem [shape: f32[1,12], index: 7, kind: input, shape index: {}]
  %s8 = inlined_call_operand.vmem [shape: f32[1,12], index: 8, kind: input, shape index: {}]
  %s9 = inlined_call_operand.vmem [shape: f32[648,36], index: 9, kind: output, shape index: {0}]
  %s10 = inlined_call_operand.vmem [shape: f32[200,12], index: 10, kind: output, shape index: {1}]
  %s11 = inlined_call_operand.vmem [shape: f32[2,12], index: 11, kind: output, shape index: {2}]
  %12 = xla_tuple %s9, %s10, %s11
  %s13 = sld [smem:[#allocation0]]
  $region62: #{nvidia_arch_forward.7} parent=0
    _
  %s15 = ssub.s32 1, %s13
  %s16 = scalar_select 0, %s15, %s13
  // Predicated region
  $region2: #{nvidia_arch_forward.7} parent=0 // pred_check
    _
  $region3: #{nvidia_arch_forward.7} parent=0 // pred_check_branch
    %18 = sbr.rel (0) target = $region5
  $region4: #{nvidia_arch_forward.7} parent=0 // pred_region
    _
  $region5: #{nvidia_arch_forward.7} parent=0 // pred_fallthru
    _
  // Predicated region
  $region6: #{nvidia_arch_forward.7} parent=0 // pred_check
    _
  $region7: #{nvidia_arch_forward.7} parent=0 // pred_check_branch
    %20 = sbr.rel (0) target = $region9
  $region8: #{nvidia_arch_forward.7} parent=0 // pred_region
    _
  $region9: #{nvidia_arch_forward.7} parent=0 // pred_fallthru
    _
  // Predicated region
  $region10: #{nvidia_arch_forward.7} parent=0 // pred_check
    _
  $region11: #{nvidia_arch_forward.7} parent=0 // pred_check_branch
    %22 = sbr.rel (0) target = $region13
  $region12: #{nvidia_arch_forward.7} parent=0 // pred_region
    _
  $region13: #{nvidia_arch_forward.7} parent=0 // pred_fallthru
    _
  // Predicated region
  $region14: #{nvidia_arch_forward.7} parent=0 // pred_check
    _
  $region15: #{nvidia_arch_forward.7} parent=0 // pred_check_branch
    %24 = sbr.rel (0) target = $region17
  $region16: #{nvidia_arch_forward.7} parent=0 // pred_region
    _
  $region17: #{nvidia_arch_forward.7} parent=0 // pred_fallthru
    _
  // Predicated region
  $region18: #{nvidia_arch_forward.7} parent=0 // pred_check
    _
  $region19: #{nvidia_arch_forward.7} parent=0 // pred_check_branch
    %26 = sbr.rel (0) target = $region21
  $region20: #{nvidia_arch_forward.7} parent=0 // pred_region
    _
  $region21: #{nvidia_arch_forward.7} parent=0 // pred_fallthru
    _
  // Predicated region
  $region22: #{nvidia_arch_forward.7} parent=0 // pred_check
    _
  $region23: #{nvidia_arch_forward.7} parent=0 // pred_check_branch
    %28 = sbr.rel (0) target = $region25
  $region24: #{nvidia_arch_forward.7} parent=0 // pred_region
    _
  $region25: #{nvidia_arch_forward.7} parent=0 // pred_fallthru
    _
  // Predicated region
  $region26: #{nvidia_arch_forward.7} parent=0 // pred_check
    _
  $region27: #{nvidia_arch_forward.7} parent=0 // pred_check_branch
    %30 = sbr.rel (0) target = $region29
  $region28: #{nvidia_arch_forward.7} parent=0 // pred_region
    _
  $region29: #{nvidia_arch_forward.7} parent=0 // pred_fallthru
    _
  // Predicated region
  $region30: #{nvidia_arch_forward.7} parent=0 // pred_check
    _
  $region31: #{nvidia_arch_forward.7} parent=0 // pred_check_branch
    %32 = sbr.rel (0) target = $region33
  $region32: #{nvidia_arch_forward.7} parent=0 // pred_region
    _
  $region33: #{nvidia_arch_forward.7} parent=0 // pred_fallthru
    _
  // Predicated region
  $region34: #{nvidia_arch_forward.7} parent=0 // pred_check
    _
  $region35: #{nvidia_arch_forward.7} parent=0 // pred_check_branch
    %34 = sbr.rel (0) target = $region37
  $region36: #{nvidia_arch_forward.7} parent=0 // pred_region
    _
  $region37: #{nvidia_arch_forward.7} parent=0 // pred_fallthru
    _
  %v35 = vld [vmem:[%s0] sm:$0xff]
  %v36 = vld [vmem:[%s0 + $0x8] sm:$0xff]
  %v37 = vld [vmem:[%s0 + $0x10] sm:$0xff]
  %v38 = vld [vmem:[%s0 + $0x18] sm:$0xff]
  %v39 = vld [vmem:[%s0 + $0x20] sm:$0xff]
  %v40 = vld [vmem:[%s0 + $0x28] sm:$0xff]
  %v41 = vld [vmem:[%s0 + $0x30] sm:$0xff]
  %v42 = vld [vmem:[%s0 + $0x38] sm:$0xff]
  %v43 = vld [vmem:[%s0 + $0x40] sm:$0xff]
  %v44 = vld [vmem:[%s0 + $0x48] sm:$0xff]
  %v45 = vld [vmem:[%s0 + $0x50] sm:$0xff]
  %v46 = vld [vmem:[%s0 + $0x58] sm:$0xff]
  %v47 = vld [vmem:[%s0 + $0x60] sm:$0xff]
  %v48 = vld [vmem:[%s0 + $0x68] sm:$0xff]
  %v49 = vld [vmem:[%s0 + $0x70] sm:$0xff]
  %v50 = vld [vmem:[%s0 + $0x78] sm:$0xff]
  %v51 = vld [vmem:[%s0 + $0x80] sm:$0xff]
  %v52 = vld [vmem:[%s0 + $0x88] sm:$0xff]
  %v53 = vld [vmem:[%s0 + $0x90] sm:$0xff]
  %v54 = vld [vmem:[%s0 + $0x98] sm:$0xff]
  %v55 = vld [vmem:[%s0 + $0xa0] sm:$0xff]
  %v56 = vld [vmem:[%s0 + $0xa8] sm:$0xff]
  %v57 = vld [vmem:[%s0 + $0xb0] sm:$0xff]
  %v58 = vld [vmem:[%s0 + $0xb8] sm:$0xff]
  %v59 = vld [vmem:[%s0 + $0xc0] sm:$0xff]
  %v60 = vld [vmem:[%s0 + $0xc8] sm:$0xff]
  %v61 = vld [vmem:[%s0 + $0xd0] sm:$0xff]
  %v62 = vld [vmem:[%s0 + $0xd8] sm:$0xff]
  %v63 = vld [vmem:[%s0 + $0xe0] sm:$0xff]
  %v64 = vld [vmem:[%s0 + $0xe8] sm:$0xff]
  %v65 = vld [vmem:[%s0 + $0xf0] sm:$0xff]
  %v66 = vld [vmem:[%s0 + $0xf8] sm:$0xff]
  %v67 = vld [vmem:[%s0 + $0x100] sm:$0xff]
  %v68 = vld [vmem:[%s0 + $0x108] sm:$0xff]
  %v69 = vld [vmem:[%s0 + $0x110] sm:$0xff]
  %v70 = vld [vmem:[%s0 + $0x118] sm:$0xff]
  %v71 = vld [vmem:[%s0 + $0x120] sm:$0xff]
  %v72 = vld [vmem:[%s0 + $0x128] sm:$0xff]
  %v73 = vld [vmem:[%s0 + $0x130] sm:$0xff]
  %v74 = vld [vmem:[%s0 + $0x138] sm:$0xff]
  %v75 = vld [vmem:[%s0 + $0x140] sm:$0xff]
  %v76 = vld [vmem:[%s0 + $0x148] sm:$0xff]
  %v77 = vld [vmem:[%s0 + $0x150] sm:$0xff]
  %v78 = vld [vmem:[%s0 + $0x158] sm:$0xff]
  %v79 = vld [vmem:[%s0 + $0x160] sm:$0xff]
  %v80 = vld [vmem:[%s0 + $0x168] sm:$0xff]
  %v81 = vld [vmem:[%s0 + $0x170] sm:$0xff]
  %v82 = vld [vmem:[%s0 + $0x178] sm:$0xff]
  %v83 = vld [vmem:[%s0 + $0x180] sm:$0xff]
  %v84 = vld [vmem:[%s0 + $0x188] sm:$0xff]
  %v85 = vld [vmem:[%s0 + $0x190] sm:$0xff]
  %v86 = vld [vmem:[%s0 + $0x198] sm:$0xff]
  %v87 = vld [vmem:[%s0 + $0x1a0] sm:$0xff]
  %v88 = vld [vmem:[%s0 + $0x1a8] sm:$0xff]
  %v89 = vld [vmem:[%s0 + $0x1b0] sm:$0xff]
  %v90 = vld [vmem:[%s0 + $0x1b8] sm:$0xff]
  %v91 = vld [vmem:[%s0 + $0x1c0] sm:$0xff]
  %v92 = vld [vmem:[%s0 + $0x1c8] sm:$0xff]
  %v93 = vld [vmem:[%s0 + $0x1d0] sm:$0xff]
  %v94 = vld [vmem:[%s0 + $0x1d8] sm:$0xff]
  %v95 = vld [vmem:[%s0 + $0x1e0] sm:$0xff]
  %v96 = vld [vmem:[%s0 + $0x1e8] sm:$0xff]
  %v97 = vld [vmem:[%s0 + $0x1f0] sm:$0xff]
  %v98 = vld [vmem:[%s0 + $0x1f8] sm:$0xff]
  %v99 = vld [vmem:[%s0 + $0x200] sm:$0xff]
  %v100 = vld [vmem:[%s0 + $0x208] sm:$0xff]
  %v101 = vld [vmem:[%s0 + $0x210] sm:$0xff]
  %v102 = vld [vmem:[%s0 + $0x218] sm:$0xff]
  %v103 = vld [vmem:[%s0 + $0x220] sm:$0xff]
  %v104 = vld [vmem:[%s0 + $0x228] sm:$0xff]
  %v105 = vld [vmem:[%s0 + $0x230] sm:$0xff]
  %v106 = vld [vmem:[%s0 + $0x238] sm:$0xff]
  %v107 = vld [vmem:[%s0 + $0x240] sm:$0xff]
  %v108 = vld [vmem:[%s0 + $0x248] sm:$0xff]
  %v109 = vld [vmem:[%s0 + $0x250] sm:$0xff]
  %v110 = vld [vmem:[%s0 + $0x258] sm:$0xff]
  %v111 = vld [vmem:[%s0 + $0x260] sm:$0xff]
  %v112 = vld [vmem:[%s0 + $0x268] sm:$0xff]
  %v113 = vld [vmem:[%s0 + $0x270] sm:$0xff]
  %v114 = vld [vmem:[%s0 + $0x278] sm:$0xff]
  %v115 = vld [vmem:[%s0 + $0x280] sm:$0xff]
  %v116 = vld [vmem:[%s0 + $0x288] sm:$0xff]
  %v117 = vld [vmem:[%s0 + $0x290] sm:$0xff]
  %v118 = vld [vmem:[%s0 + $0x298] sm:$0xff]
  %v119 = vld [vmem:[%s0 + $0x2a0] sm:$0xff]
  %v120 = vld [vmem:[%s0 + $0x2a8] sm:$0xff]
  %v121 = vld [vmem:[%s0 + $0x2b0] sm:$0xff]
  %v122 = vld [vmem:[%s0 + $0x2b8] sm:$0xff]
  %v123 = vld [vmem:[%s0 + $0x2c0] sm:$0xff]
  %v124 = vld [vmem:[%s0 + $0x2c8] sm:$0xff]
  %v125 = vld [vmem:[%s0 + $0x2d0] sm:$0xff]
  %v126 = vld [vmem:[%s0 + $0x2d8] sm:$0xff]
  %v127 = vld [vmem:[%s0 + $0x2e0] sm:$0xff]
  %v128 = vld [vmem:[%s0 + $0x2e8] sm:$0xff]
  %v129 = vld [vmem:[%s0 + $0x2f0] sm:$0xff]
  %v130 = vld [vmem:[%s0 + $0x2f8] sm:$0xff]
  %v131 = vld [vmem:[%s0 + $0x300] sm:$0xff]
  %v132 = vld [vmem:[%s0 + $0x308] sm:$0xff]
  %v133 = vld [vmem:[%s0 + $0x310] sm:$0xff]
  %v134 = vld [vmem:[%s0 + $0x318] sm:$0xff]
  %v135 = vld [vmem:[%s0 + $0x320] sm:$0xff]
  %v136 = vld [vmem:[%s0 + $0x328] sm:$0xff]
  %v137 = vld [vmem:[%s0 + $0x330] sm:$0xff]
  %v138 = vld [vmem:[%s0 + $0x338] sm:$0xff]
  %v139 = vld [vmem:[%s0 + $0x340] sm:$0xff]
  %v140 = vld [vmem:[%s0 + $0x348] sm:$0xff]
  %v141 = vld [vmem:[%s0 + $0x350] sm:$0xff]
  %v142 = vld [vmem:[%s0 + $0x358] sm:$0xff]
  %v143 = vld [vmem:[%s0 + $0x360] sm:$0xff]
  %v144 = vld [vmem:[%s0 + $0x368] sm:$0xff]
  %v145 = vld [vmem:[%s0 + $0x370] sm:$0xff]
  %v146 = vld [vmem:[%s0 + $0x378] sm:$0xff]
  %v147 = vld [vmem:[%s0 + $0x380] sm:$0xff]
  %v148 = vld [vmem:[%s0 + $0x388] sm:$0xff]
  %v149 = vld [vmem:[%s0 + $0x390] sm:$0xff]
  %v150 = vld [vmem:[%s0 + $0x398] sm:$0xff]
  %v151 = vld [vmem:[%s0 + $0x3a0] sm:$0xff]
  %v152 = vld [vmem:[%s0 + $0x3a8] sm:$0xff]
  %v153 = vld [vmem:[%s0 + $0x3b0] sm:$0xff]
  %v154 = vld [vmem:[%s0 + $0x3b8] sm:$0xff]
  %v155 = vld [vmem:[%s0 + $0x3c0] sm:$0xff]
  %v156 = vld [vmem:[%s0 + $0x3c8] sm:$0xff]
  %v157 = vld [vmem:[%s0 + $0x3d0] sm:$0xff]
  %v158 = vld [vmem:[%s0 + $0x3d8] sm:$0xff]
  %v159 = vld [vmem:[%s0 + $0x3e0] sm:$0xff]
  %v160 = vld [vmem:[%s0 + $0x3e8] sm:$0xff]
  %v161 = vld [vmem:[%s0 + $0x3f0] sm:$0xff]
  %v162 = vld [vmem:[%s0 + $0x3f8] sm:$0xff]
  %v163 = vld [vmem:[%s0 + $0x400] sm:$0xff]
  %v164 = vld [vmem:[%s0 + $0x408] sm:$0xff]
  %v165 = vld [vmem:[%s0 + $0x410] sm:$0xff]
  %v166 = vld [vmem:[%s0 + $0x418] sm:$0xff]
  %v167 = vld [vmem:[%s0 + $0x420] sm:$0xff]
  %v168 = vld [vmem:[%s0 + $0x428] sm:$0xff]
  %v169 = vld [vmem:[%s0 + $0x430] sm:$0xff]
  %v170 = vld [vmem:[%s0 + $0x438] sm:$0xff]
  %v171 = vld [vmem:[%s0 + $0x440] sm:$0xff]
  %v172 = vld [vmem:[%s0 + $0x448] sm:$0xff]
  %v173 = vld [vmem:[%s0 + $0x450] sm:$0xff]
  %v174 = vld [vmem:[%s0 + $0x458] sm:$0xff]
  %v175 = vld [vmem:[%s0 + $0x460] sm:$0xff]
  %v176 = vld [vmem:[%s0 + $0x468] sm:$0xff]
  %v177 = vld [vmem:[%s0 + $0x470] sm:$0xff]
  %v178 = vld [vmem:[%s0 + $0x478] sm:$0xff]
  %v179 = vld [vmem:[%s0 + $0x480] sm:$0xff]
  %v180 = vld [vmem:[%s0 + $0x488] sm:$0xff]
  %v181 = vld [vmem:[%s0 + $0x490] sm:$0xff]
  %v182 = vld [vmem:[%s0 + $0x498] sm:$0xff]
  %v183 = vld [vmem:[%s0 + $0x4a0] sm:$0xff]
  %v184 = vld [vmem:[%s0 + $0x4a8] sm:$0xff]
  %v185 = vld [vmem:[%s0 + $0x4b0] sm:$0xff]
  %v186 = vld [vmem:[%s0 + $0x4b8] sm:$0xff]
  %v187 = vld [vmem:[%s0 + $0x4c0] sm:$0xff]
  %v188 = vld [vmem:[%s0 + $0x4c8] sm:$0xff]
  %v189 = vld [vmem:[%s0 + $0x4d0] sm:$0xff]
  %v190 = vld [vmem:[%s0 + $0x4d8] sm:$0xff]
  %v191 = vld [vmem:[%s0 + $0x4e0] sm:$0xff]
  %v192 = vld [vmem:[%s0 + $0x4e8] sm:$0xff]
  %v193 = vld [vmem:[%s0 + $0x4f0] sm:$0xff]
  %v194 = vld [vmem:[%s0 + $0x4f8] sm:$0xff]
  %v195 = vld [vmem:[%s0 + $0x500] sm:$0xff]
  %v196 = vld [vmem:[%s0 + $0x508] sm:$0xff]
  %v197 = vld [vmem:[%s0 + $0x510] sm:$0xff]
  %v198 = vld [vmem:[%s0 + $0x518] sm:$0xff]
  %v199 = vld [vmem:[%s0 + $0x520] sm:$0xff]
  %v200 = vld [vmem:[%s0 + $0x528] sm:$0xff]
  %v201 = vld [vmem:[%s0 + $0x530] sm:$0xff]
  %v202 = vld [vmem:[%s0 + $0x538] sm:$0xff]
  %v203 = vld [vmem:[%s0 + $0x540] sm:$0xff]
  %v204 = vld [vmem:[%s0 + $0x548] sm:$0xff]
  %v205 = vld [vmem:[%s0 + $0x550] sm:$0xff]
  %v206 = vld [vmem:[%s0 + $0x558] sm:$0xff]
  %v207 = vld [vmem:[%s0 + $0x560] sm:$0xff]
  %v208 = vld [vmem:[%s0 + $0x568] sm:$0xff]
  %v209 = vld [vmem:[%s0 + $0x570] sm:$0xff]
  %v210 = vld [vmem:[%s0 + $0x578] sm:$0xff]
  %v211 = vld [vmem:[%s0 + $0x580] sm:$0xff]
  %v212 = vld [vmem:[%s0 + $0x588] sm:$0xff]
  %v213 = vld [vmem:[%s0 + $0x590] sm:$0xff]
  %v214 = vld [vmem:[%s0 + $0x598] sm:$0xff]
  %v215 = vld [vmem:[%s0 + $0x5a0] sm:$0xff]
  %v216 = vld [vmem:[%s0 + $0x5a8] sm:$0xff]
  %v217 = vld [vmem:[%s0 + $0x5b0] sm:$0xff]
  %v218 = vld [vmem:[%s0 + $0x5b8] sm:$0xff]
  %v219 = vld [vmem:[%s0 + $0x5c0] sm:$0xff]
  %v220 = vld [vmem:[%s0 + $0x5c8] sm:$0xff]
  %v221 = vld [vmem:[%s0 + $0x5d0] sm:$0xff]
  %v222 = vld [vmem:[%s0 + $0x5d8] sm:$0xff]
  %v223 = vld [vmem:[%s0 + $0x5e0] sm:$0xff]
  %v224 = vld [vmem:[%s0 + $0x5e8] sm:$0xff]
  %v225 = vld [vmem:[%s0 + $0x5f0] sm:$0xff]
  %v226 = vld [vmem:[%s0 + $0x5f8] sm:$0xff]
  %v227 = vld [vmem:[%s0 + $0x600] sm:$0xff]
  %v228 = vld [vmem:[%s0 + $0x608] sm:$0xff]
  %v229 = vld [vmem:[%s0 + $0x610] sm:$0xff]
  %v230 = vld [vmem:[%s0 + $0x618] sm:$0xff]
  %v231 = vld [vmem:[%s0 + $0x620] sm:$0xff]
  %v232 = vld [vmem:[%s0 + $0x628] sm:$0xff]
  %v233 = vld [vmem:[%s0 + $0x630] sm:$0xff]
  %v234 = vld [vmem:[%s0 + $0x638] sm:$0xff]
  %v235 = vld [vmem:[%s0 + $0x640] sm:$0xff]
  %v236 = vld [vmem:[%s0 + $0x648] sm:$0xff]
  %v237 = vld [vmem:[%s0 + $0x650] sm:$0xff]
  %v238 = vld [vmem:[%s0 + $0x658] sm:$0xff]
  %v239 = vld [vmem:[%s0 + $0x660] sm:$0xff]
  %v240 = vld [vmem:[%s0 + $0x668] sm:$0xff]
  %v241 = vld [vmem:[%s0 + $0x670] sm:$0xff]
  %v242 = vld [vmem:[%s0 + $0x678] sm:$0xff]
  %v243 = vld [vmem:[%s0 + $0x680] sm:$0xff]
  %v244 = vld [vmem:[%s0 + $0x688] sm:$0xff]
  %v245 = vld [vmem:[%s0 + $0x690] sm:$0xff]
  %v246 = vld [vmem:[%s0 + $0x698] sm:$0xff]
  %v247 = vld [vmem:[%s0 + $0x6a0] sm:$0xff]
  %v248 = vld [vmem:[%s0 + $0x6a8] sm:$0xff]
  %v249 = vld [vmem:[%s0 + $0x6b0] sm:$0xff]
  %v250 = vld [vmem:[%s0 + $0x6b8] sm:$0xff]
  %v251 = vld [vmem:[%s0 + $0x6c0] sm:$0xff]
  %v252 = vld [vmem:[%s0 + $0x6c8] sm:$0xff]
  %v253 = vld [vmem:[%s0 + $0x6d0] sm:$0xff]
  %v254 = vld [vmem:[%s0 + $0x6d8] sm:$0xff]
  %v255 = vld [vmem:[%s0 + $0x6e0] sm:$0xff]
  %v256 = vld [vmem:[%s0 + $0x6e8] sm:$0xff]
  %v257 = vld [vmem:[%s0 + $0x6f0] sm:$0xff]
  %v258 = vld [vmem:[%s0 + $0x6f8] sm:$0xff]
  %v259 = vld [vmem:[%s0 + $0x700] sm:$0xff]
  %v260 = vld [vmem:[%s0 + $0x708] sm:$0xff]
  %v261 = vld [vmem:[%s0 + $0x710] sm:$0xff]
  %v262 = vld [vmem:[%s0 + $0x718] sm:$0xff]
  %v263 = vld [vmem:[%s0 + $0x720] sm:$0xff]
  %v264 = vld [vmem:[%s0 + $0x728] sm:$0xff]
  %v265 = vld [vmem:[%s0 + $0x730] sm:$0xff]
  %v266 = vld [vmem:[%s0 + $0x738] sm:$0xff]
  %v267 = vld [vmem:[%s0 + $0x740] sm:$0xff]
  %v268 = vld [vmem:[%s0 + $0x748] sm:$0xff]
  %v269 = vld [vmem:[%s0 + $0x750] sm:$0xff]
  %v270 = vld [vmem:[%s0 + $0x758] sm:$0xff]
  %v271 = vld [vmem:[%s0 + $0x760] sm:$0xff]
  %v272 = vld [vmem:[%s0 + $0x768] sm:$0xff]
  %v273 = vld [vmem:[%s0 + $0x770] sm:$0xff]
  %v274 = vld [vmem:[%s0 + $0x778] sm:$0xff]
  %v275 = vld [vmem:[%s0 + $0x780] sm:$0xff]
  %v276 = vld [vmem:[%s0 + $0x788] sm:$0xff]
  %v277 = vld [vmem:[%s0 + $0x790] sm:$0xff]
  %v278 = vld [vmem:[%s0 + $0x798] sm:$0xff]
  %v279 = vld [vmem:[%s0 + $0x7a0] sm:$0xff]
  %v280 = vld [vmem:[%s0 + $0x7a8] sm:$0xff]
  %v281 = vld [vmem:[%s0 + $0x7b0] sm:$0xff]
  %v282 = vld [vmem:[%s0 + $0x7b8] sm:$0xff]
  %v283 = vld [vmem:[%s0 + $0x7c0] sm:$0xff]
  %v284 = vld [vmem:[%s0 + $0x7c8] sm:$0xff]
  %v285 = vld [vmem:[%s0 + $0x7d0] sm:$0xff]
  %v286 = vld [vmem:[%s0 + $0x7d8] sm:$0xff]
  %v287 = vld [vmem:[%s0 + $0x7e0] sm:$0xff]
  %v288 = vld [vmem:[%s0 + $0x7e8] sm:$0xff]
  %v289 = vld [vmem:[%s0 + $0x7f0] sm:$0xff]
  %v290 = vld [vmem:[%s0 + $0x7f8] sm:$0xff]
  %v291 = vld [vmem:[%s0 + $0x800] sm:$0xff]
  %v292 = vld [vmem:[%s0 + $0x808] sm:$0xff]
  %v293 = vld [vmem:[%s0 + $0x810] sm:$0xff]
  %v294 = vld [vmem:[%s0 + $0x818] sm:$0xff]
  %v295 = vld [vmem:[%s0 + $0x820] sm:$0xff]
  %v296 = vld [vmem:[%s0 + $0x828] sm:$0xff]
  %v297 = vld [vmem:[%s0 + $0x830] sm:$0xff]
  %v298 = vld [vmem:[%s0 + $0x838] sm:$0xff]
  %v299 = vld [vmem:[%s0 + $0x840] sm:$0xff]
  %v300 = vld [vmem:[%s0 + $0x848] sm:$0xff]
  %v301 = vld [vmem:[%s0 + $0x850] sm:$0xff]
  %v302 = vld [vmem:[%s0 + $0x858] sm:$0xff]
  %v303 = vld [vmem:[%s0 + $0x860] sm:$0xff]
  %v304 = vld [vmem:[%s0 + $0x868] sm:$0xff]
  %v305 = vld [vmem:[%s0 + $0x870] sm:$0xff]
  %v306 = vld [vmem:[%s0 + $0x878] sm:$0xff]
  %v307 = vld [vmem:[%s0 + $0x880] sm:$0xff]
  %v308 = vld [vmem:[%s0 + $0x888] sm:$0xff]
  %v309 = vld [vmem:[%s0 + $0x890] sm:$0xff]
  %v310 = vld [vmem:[%s0 + $0x898] sm:$0xff]
  %v311 = vld [vmem:[%s0 + $0x8a0] sm:$0xff]
  %v312 = vld [vmem:[%s0 + $0x8a8] sm:$0xff]
  %v313 = vld [vmem:[%s0 + $0x8b0] sm:$0xff]
  %v314 = vld [vmem:[%s0 + $0x8b8] sm:$0xff]
  %v315 = vld [vmem:[%s0 + $0x8c0] sm:$0xff]
  %v316 = vld [vmem:[%s0 + $0x8c8] sm:$0xff]
  %v317 = vld [vmem:[%s0 + $0x8d0] sm:$0xff]
  %v318 = vld [vmem:[%s0 + $0x8d8] sm:$0xff]
  %v319 = vld [vmem:[%s0 + $0x8e0] sm:$0xff]
  %v320 = vld [vmem:[%s0 + $0x8e8] sm:$0xff]
  %v321 = vld [vmem:[%s0 + $0x8f0] sm:$0xff]
  %v322 = vld [vmem:[%s0 + $0x8f8] sm:$0xff]
  %v323 = vld [vmem:[%s0 + $0x900] sm:$0xff]
  %v324 = vld [vmem:[%s0 + $0x908] sm:$0xff]
  %v325 = vld [vmem:[%s0 + $0x910] sm:$0xff]
  %v326 = vld [vmem:[%s0 + $0x918] sm:$0xff]
  %v327 = vld [vmem:[%s0 + $0x920] sm:$0xff]
  %v328 = vld [vmem:[%s0 + $0x928] sm:$0xff]
  %v329 = vld [vmem:[%s0 + $0x930] sm:$0xff]
  %v330 = vld [vmem:[%s0 + $0x938] sm:$0xff]
  %v331 = vld [vmem:[%s0 + $0x940] sm:$0xff]
  %v332 = vld [vmem:[%s0 + $0x948] sm:$0xff]
  %v333 = vld [vmem:[%s0 + $0x950] sm:$0xff]
  %v334 = vld [vmem:[%s0 + $0x958] sm:$0xff]
  %v335 = vld [vmem:[%s0 + $0x960] sm:$0xff]
  %v336 = vld [vmem:[%s0 + $0x968] sm:$0xff]
  %v337 = vld [vmem:[%s0 + $0x970] sm:$0xff]
  %v338 = vld [vmem:[%s0 + $0x978] sm:$0xff]
  %v339 = vld [vmem:[%s0 + $0x980] sm:$0xff]
  %v340 = vld [vmem:[%s0 + $0x988] sm:$0xff]
  %v341 = vld [vmem:[%s0 + $0x990] sm:$0xff]
  %v342 = vld [vmem:[%s0 + $0x998] sm:$0xff]
  %v343 = vld [vmem:[%s0 + $0x9a0] sm:$0xff]
  %v344 = vld [vmem:[%s0 + $0x9a8] sm:$0xff]
  %v345 = vld [vmem:[%s0 + $0x9b0] sm:$0xff]
  %v346 = vld [vmem:[%s0 + $0x9b8] sm:$0xff]
  %v347 = vld [vmem:[%s0 + $0x9c0] sm:$0xff]
  %v348 = vld [vmem:[%s0 + $0x9c8] sm:$0xff]
  %v349 = vld [vmem:[%s0 + $0x9d0] sm:$0xff]
  %v350 = vld [vmem:[%s0 + $0x9d8] sm:$0xff]
  %v351 = vld [vmem:[%s0 + $0x9e0] sm:$0xff]
  %v352 = vld [vmem:[%s0 + $0x9e8] sm:$0xff]
  %v353 = vld [vmem:[%s0 + $0x9f0] sm:$0xff]
  %v354 = vld [vmem:[%s0 + $0x9f8] sm:$0xff]
  %v355 = vld [vmem:[%s0 + $0xa00] sm:$0xff]
  %v356 = vld [vmem:[%s0 + $0xa08] sm:$0xff]
  %v357 = vld [vmem:[%s0 + $0xa10] sm:$0xff]
  %v358 = vld [vmem:[%s0 + $0xa18] sm:$0xff]
  %v359 = vld [vmem:[%s0 + $0xa20] sm:$0xff]
  %v360 = vld [vmem:[%s0 + $0xa28] sm:$0xff]
  %v361 = vld [vmem:[%s0 + $0xa30] sm:$0xff]
  %v362 = vld [vmem:[%s0 + $0xa38] sm:$0xff]
  %v363 = vld [vmem:[%s0 + $0xa40] sm:$0xff]
  %v364 = vld [vmem:[%s0 + $0xa48] sm:$0xff]
  %v365 = vld [vmem:[%s0 + $0xa50] sm:$0xff]
  %v366 = vld [vmem:[%s0 + $0xa58] sm:$0xff]
  %v367 = vld [vmem:[%s0 + $0xa60] sm:$0xff]
  %v368 = vld [vmem:[%s0 + $0xa68] sm:$0xff]
  %v369 = vld [vmem:[%s0 + $0xa70] sm:$0xff]
  %v370 = vld [vmem:[%s0 + $0xa78] sm:$0xff]
  %v371 = vld [vmem:[%s0 + $0xa80] sm:$0xff]
  %v372 = vld [vmem:[%s0 + $0xa88] sm:$0xff]
  %v373 = vld [vmem:[%s0 + $0xa90] sm:$0xff]
  %v374 = vld [vmem:[%s0 + $0xa98] sm:$0xff]
  %v375 = vld [vmem:[%s0 + $0xaa0] sm:$0xff]
  %v376 = vld [vmem:[%s0 + $0xaa8] sm:$0xff]
  %v377 = vld [vmem:[%s0 + $0xab0] sm:$0xff]
  %v378 = vld [vmem:[%s0 + $0xab8] sm:$0xff]
  %v379 = vld [vmem:[%s0 + $0xac0] sm:$0xff]
  %v380 = vld [vmem:[%s0 + $0xac8] sm:$0xff]
  %v381 = vld [vmem:[%s0 + $0xad0] sm:$0xff]
  %v382 = vld [vmem:[%s0 + $0xad8] sm:$0xff]
  %v383 = vld [vmem:[%s0 + $0xae0] sm:$0xff]
  %v384 = vld [vmem:[%s0 + $0xae8] sm:$0xff]
  %v385 = vld [vmem:[%s0 + $0xaf0] sm:$0xff]
  %v386 = vld [vmem:[%s0 + $0xaf8] sm:$0xff]
  %v387 = vld [vmem:[%s0 + $0xb00] sm:$0xff]
  %v388 = vld [vmem:[%s0 + $0xb08] sm:$0xff]
  %v389 = vld [vmem:[%s0 + $0xb10] sm:$0xff]
  %v390 = vld [vmem:[%s0 + $0xb18] sm:$0xff]
  %v391 = vld [vmem:[%s0 + $0xb20] sm:$0xff]
  %v392 = vld [vmem:[%s0 + $0xb28] sm:$0xff]
  %v393 = vld [vmem:[%s0 + $0xb30] sm:$0xff]
  %v394 = vld [vmem:[%s0 + $0xb38] sm:$0xff]
  %v395 = vld [vmem:[%s0 + $0xb40] sm:$0xff]
  %v396 = vld [vmem:[%s0 + $0xb48] sm:$0xff]
  %v397 = vld [vmem:[%s0 + $0xb50] sm:$0xff]
  %v398 = vld [vmem:[%s0 + $0xb58] sm:$0xff]
  %v399 = vld [vmem:[%s0 + $0xb60] sm:$0xff]
  %v400 = vld [vmem:[%s0 + $0xb68] sm:$0xff]
  %v401 = vld [vmem:[%s0 + $0xb70] sm:$0xff]
  %v402 = vld [vmem:[%s0 + $0xb78] sm:$0xff]
  %v403 = vld [vmem:[%s0 + $0xb80] sm:$0xff]
  %v404 = vld [vmem:[%s0 + $0xb88] sm:$0xff]
  %v405 = vld [vmem:[%s0 + $0xb90] sm:$0xff]
  %v406 = vld [vmem:[%s0 + $0xb98] sm:$0xff]
  %v407 = vld [vmem:[%s0 + $0xba0] sm:$0xff]
  %v408 = vld [vmem:[%s0 + $0xba8] sm:$0xff]
  %v409 = vld [vmem:[%s0 + $0xbb0] sm:$0xff]
  %v410 = vld [vmem:[%s0 + $0xbb8] sm:$0xff]
  %v411 = vld [vmem:[%s0 + $0xbc0] sm:$0xff]
  %v412 = vld [vmem:[%s0 + $0xbc8] sm:$0xff]
  %v413 = vld [vmem:[%s0 + $0xbd0] sm:$0xff]
  %v414 = vld [vmem:[%s0 + $0xbd8] sm:$0xff]
  %v415 = vld [vmem:[%s0 + $0xbe0] sm:$0xff]
  %v416 = vld [vmem:[%s0 + $0xbe8] sm:$0xff]
  %v417 = vld [vmem:[%s0 + $0xbf0] sm:$0xff]
  %v418 = vld [vmem:[%s0 + $0xbf8] sm:$0xff]
  %v419 = vld [vmem:[%s0 + $0xc00] sm:$0xff]
  %v420 = vld [vmem:[%s0 + $0xc08] sm:$0xff]
  %v421 = vld [vmem:[%s0 + $0xc10] sm:$0xff]
  %v422 = vld [vmem:[%s0 + $0xc18] sm:$0xff]
  %v423 = vld [vmem:[%s0 + $0xc20] sm:$0xff]
  %v424 = vld [vmem:[%s0 + $0xc28] sm:$0xff]
  %v425 = vld [vmem:[%s0 + $0xc30] sm:$0xff]
  %v426 = vld [vmem:[%s0 + $0xc38] sm:$0xff]
  %v427 = vld [vmem:[%s0 + $0xc40] sm:$0xff]
  %v428 = vld [vmem:[%s0 + $0xc48] sm:$0xff]
  %v429 = vld [vmem:[%s0 + $0xc50] sm:$0xff]
  %v430 = vld [vmem:[%s0 + $0xc58] sm:$0xff]
  %v431 = vld [vmem:[%s0 + $0xc60] sm:$0xff]
  %v432 = vld [vmem:[%s0 + $0xc68] sm:$0xff]
  %v433 = vld [vmem:[%s0 + $0xc70] sm:$0xff]
  %v434 = vld [vmem:[%s0 + $0xc78] sm:$0xff]
  %v435 = vld [vmem:[%s0 + $0xc80] sm:$0xff]
  %v436 = vld [vmem:[%s0 + $0xc88] sm:$0xff]
  %v437 = vld [vmem:[%s0 + $0xc90] sm:$0xff]
  %v438 = vld [vmem:[%s0 + $0xc98] sm:$0xff]
  %v439 = vld [vmem:[%s0 + $0xca0] sm:$0xff]
  %v440 = vld [vmem:[%s3] sm:$0xff]
  %v441 = vld [vmem:[%s3 + $0x8] sm:$0xff]
  %v442 = vld [vmem:[%s3 + $0x10] sm:$0xff]
  %v443 = vld [vmem:[%s3 + $0x18] sm:$0xff]
  %v444 = vld [vmem:[%s3 + $0x20] sm:$0xff]
  %v445 = vld [vmem:[%s3 + $0x28] sm:$0xff]
  %v446 = vld [vmem:[%s3 + $0x30] sm:$0xff]
  %v447 = vld [vmem:[%s3 + $0x38] sm:$0xff]
  %v448 = vld [vmem:[%s3 + $0x40] sm:$0xff]
  %v449 = vld [vmem:[%s3 + $0x48] sm:$0xff]
  %v450 = vld [vmem:[%s3 + $0x50] sm:$0xff]
  %v451 = vld [vmem:[%s3 + $0x58] sm:$0xff]
  %v452 = vld [vmem:[%s3 + $0x60] sm:$0xff]
  %v453 = vld [vmem:[%s3 + $0x68] sm:$0xff]
  %v454 = vld [vmem:[%s3 + $0x70] sm:$0xff]
  %v455 = vld [vmem:[%s3 + $0x78] sm:$0xff]
  %v456 = vld [vmem:[%s3 + $0x80] sm:$0xff]
  %v457 = vld [vmem:[%s3 + $0x88] sm:$0xff]
  %v458 = vld [vmem:[%s3 + $0x90] sm:$0xff]
  %v459 = vld [vmem:[%s3 + $0x98] sm:$0xff]
  %v460 = vld [vmem:[%s3 + $0xa0] sm:$0xff]
  %v461 = vld [vmem:[%s3 + $0xa8] sm:$0xff]
  %v462 = vld [vmem:[%s3 + $0xb0] sm:$0xff]
  %v463 = vld [vmem:[%s3 + $0xb8] sm:$0xff]
  %v464 = vld [vmem:[%s3 + $0xc0] sm:$0xff]
  %v465 = vld [vmem:[%s3 + $0xc8] sm:$0xff]
  %v466 = vld [vmem:[%s3 + $0xd0] sm:$0xff]
  %v467 = vld [vmem:[%s3 + $0xd8] sm:$0xff]
  %v468 = vld [vmem:[%s3 + $0xe0] sm:$0xff]
  %v469 = vld [vmem:[%s3 + $0xe8] sm:$0xff]
  %v470 = vld [vmem:[%s3 + $0xf0] sm:$0xff]
  %v471 = vld [vmem:[%s3 + $0xf8] sm:$0xff]
  %v472 = vld [vmem:[%s3 + $0x100] sm:$0xff]
  %v473 = vld [vmem:[%s3 + $0x108] sm:$0xff]
  %v474 = vld [vmem:[%s3 + $0x110] sm:$0xff]
  %v475 = vld [vmem:[%s3 + $0x118] sm:$0xff]
  %v476 = vld [vmem:[%s3 + $0x120] sm:$0xff]
  %v477 = vld [vmem:[%s3 + $0x128] sm:$0xff]
  %v478 = vld [vmem:[%s3 + $0x130] sm:$0xff]
  %v479 = vld [vmem:[%s3 + $0x138] sm:$0xff]
  %v480 = vld [vmem:[%s3 + $0x140] sm:$0xff]
  %v481 = vld [vmem:[%s3 + $0x148] sm:$0xff]
  %v482 = vld [vmem:[%s3 + $0x150] sm:$0xff]
  %v483 = vld [vmem:[%s3 + $0x158] sm:$0xff]
  %v484 = vld [vmem:[%s3 + $0x160] sm:$0xff]
  %v485 = vld [vmem:[%s3 + $0x168] sm:$0xff]
  %v486 = vld [vmem:[%s3 + $0x170] sm:$0xff]
  %v487 = vld [vmem:[%s3 + $0x178] sm:$0xff]
  %v488 = vld [vmem:[%s3 + $0x180] sm:$0xff]
  %v489 = vld [vmem:[%s3 + $0x188] sm:$0xff]
  %v490 = vld [vmem:[%s3 + $0x190] sm:$0xff]
  %v491 = vld [vmem:[%s3 + $0x198] sm:$0xff]
  %v492 = vld [vmem:[%s3 + $0x1a0] sm:$0xff]
  %v493 = vld [vmem:[%s3 + $0x1a8] sm:$0xff]
  %v494 = vld [vmem:[%s3 + $0x1b0] sm:$0xff]
  %v495 = vld [vmem:[%s3 + $0x1b8] sm:$0xff]
  %v496 = vld [vmem:[%s3 + $0x1c0] sm:$0xff]
  %v497 = vld [vmem:[%s3 + $0x1c8] sm:$0xff]
  %v498 = vld [vmem:[%s3 + $0x1d0] sm:$0xff]
  %v499 = vld [vmem:[%s3 + $0x1d8] sm:$0xff]
  %v500 = vld [vmem:[%s3 + $0x1e0] sm:$0xff]
  %v501 = vld [vmem:[%s3 + $0x1e8] sm:$0xff]
  %v502 = vld [vmem:[%s3 + $0x1f0] sm:$0xff]
  %v503 = vld [vmem:[%s3 + $0x1f8] sm:$0xff]
  %v504 = vld [vmem:[%s3 + $0x200] sm:$0xff]
  %v505 = vld [vmem:[%s3 + $0x208] sm:$0xff]
  %v506 = vld [vmem:[%s3 + $0x210] sm:$0xff]
  %v507 = vld [vmem:[%s3 + $0x218] sm:$0xff]
  %v508 = vld [vmem:[%s3 + $0x220] sm:$0xff]
  %v509 = vld [vmem:[%s3 + $0x228] sm:$0xff]
  %v510 = vld [vmem:[%s3 + $0x230] sm:$0xff]
  %v511 = vld [vmem:[%s3 + $0x238] sm:$0xff]
  %v512 = vld [vmem:[%s3 + $0x240] sm:$0xff]
  %v513 = vld [vmem:[%s3 + $0x248] sm:$0xff]
  %v514 = vld [vmem:[%s3 + $0x250] sm:$0xff]
  %v515 = vld [vmem:[%s6] sm:$0x1]
  %v517 = vperm.slane %v515, 0
  %vm519 = vcmask 719872
  %v521 = vsel %vm519, %v39, 0
  %v524 = vsel %vm519, %v44, 0
  %v527 = vsel %vm519, %v49, 0
  %v530 = vsel %vm519, %v54, 0
  %v533 = vsel %vm519, %v59, 0
  %v536 = vsel %vm519, %v64, 0
  %v539 = vsel %vm519, %v69, 0
  %v542 = vsel %vm519, %v74, 0
  %v545 = vsel %vm519, %v79, 0
  %v548 = vsel %vm519, %v84, 0
  %v551 = vsel %vm519, %v89, 0
  %v554 = vsel %vm519, %v94, 0
  %v557 = vsel %vm519, %v99, 0
  %v560 = vsel %vm519, %v104, 0
  %v563 = vsel %vm519, %v109, 0
  %v566 = vsel %vm519, %v114, 0
  %v569 = vsel %vm519, %v119, 0
  %v572 = vsel %vm519, %v124, 0
  %v575 = vsel %vm519, %v129, 0
  %v578 = vsel %vm519, %v134, 0
  %v581 = vsel %vm519, %v139, 0
  %v584 = vsel %vm519, %v144, 0
  %v587 = vsel %vm519, %v149, 0
  %v590 = vsel %vm519, %v154, 0
  %v593 = vsel %vm519, %v159, 0
  %v596 = vsel %vm519, %v164, 0
  %v599 = vsel %vm519, %v169, 0
  %v602 = vsel %vm519, %v174, 0
  %v605 = vsel %vm519, %v179, 0
  %v608 = vsel %vm519, %v184, 0
  %v611 = vsel %vm519, %v189, 0
  %v614 = vsel %vm519, %v194, 0
  %v617 = vsel %vm519, %v199, 0
  %v620 = vsel %vm519, %v204, 0
  %v623 = vsel %vm519, %v209, 0
  %v626 = vsel %vm519, %v214, 0
  %v629 = vsel %vm519, %v219, 0
  %v632 = vsel %vm519, %v224, 0
  %v635 = vsel %vm519, %v229, 0
  %v638 = vsel %vm519, %v234, 0
  %v641 = vsel %vm519, %v239, 0
  %v644 = vsel %vm519, %v244, 0
  %v647 = vsel %vm519, %v249, 0
  %v650 = vsel %vm519, %v254, 0
  %v653 = vsel %vm519, %v259, 0
  %v656 = vsel %vm519, %v264, 0
  %v659 = vsel %vm519, %v269, 0
  %v662 = vsel %vm519, %v274, 0
  %v665 = vsel %vm519, %v279, 0
  %v668 = vsel %vm519, %v284, 0
  %v671 = vsel %vm519, %v289, 0
  %v674 = vsel %vm519, %v294, 0
  %v677 = vsel %vm519, %v299, 0
  %v680 = vsel %vm519, %v304, 0
  %v683 = vsel %vm519, %v309, 0
  %v686 = vsel %vm519, %v314, 0
  %v689 = vsel %vm519, %v319, 0
  %v692 = vsel %vm519, %v324, 0
  %v695 = vsel %vm519, %v329, 0
  %v698 = vsel %vm519, %v334, 0
  %v701 = vsel %vm519, %v339, 0
  %v704 = vsel %vm519, %v344, 0
  %v707 = vsel %vm519, %v349, 0
  %v710 = vsel %vm519, %v354, 0
  %v713 = vsel %vm519, %v359, 0
  %v716 = vsel %vm519, %v364, 0
  %v719 = vsel %vm519, %v369, 0
  %v722 = vsel %vm519, %v374, 0
  %v725 = vsel %vm519, %v379, 0
  %v728 = vsel %vm519, %v384, 0
  %v731 = vsel %vm519, %v389, 0
  %v734 = vsel %vm519, %v394, 0
  %v737 = vsel %vm519, %v399, 0
  %v740 = vsel %vm519, %v404, 0
  %v743 = vsel %vm519, %v409, 0
  %v746 = vsel %vm519, %v414, 0
  %v749 = vsel %vm519, %v419, 0
  %v752 = vsel %vm519, %v424, 0
  %v755 = vsel %vm519, %v429, 0
  %v758 = vsel %vm519, %v434, 0
  %v761 = vsel %vm519, %v439, 0
  %763 = vmatpush.msra.mxu0 %v455
  %764 = vmatpush.msra.mxu0 %v454
  %765 = vmatpush.msra.mxu0 %v453
  %766 = vmatpush.msra.mxu0 %v452
  %767 = vmatpush.msra.mxu0 %v451
  %768 = vmatpush.msra.mxu0 %v450
  %769 = vmatpush.msra.mxu0 %v449
  %770 = vmatpush.msra.mxu0 %v448
  %771 = vmatpush.msra.mxu0 %v447
  %772 = vmatpush.msra.mxu0 %v446
  %773 = vmatpush.msra.mxu0 %v445
  %774 = vmatpush.msra.mxu0 %v444
  %775 = vmatpush.msra.mxu0 %v443
  %776 = vmatpush.msra.mxu0 %v442
  %777 = vmatpush.msra.mxu0 %v441
  %778 = vmatpush.msra.mxu0 %v440
  %779 = vmatmul.f32.gmra.mxu0 %v35
  %v780 = vpop.f32.mrf.mxu0
  %v781 = vadd.f32 %v517, %v780
  %782 = vmatmul.f32.gmra.mxu0 %v40
  %v783 = vpop.f32.mrf.mxu0
  %v784 = vadd.f32 %v517, %v783
  %785 = vmatmul.f32.gmra.mxu0 %v45
  %v786 = vpop.f32.mrf.mxu0
  %v787 = vadd.f32 %v517, %v786
  %788 = vmatmul.f32.gmra.mxu0 %v50
  %v789 = vpop.f32.mrf.mxu0
  %v790 = vadd.f32 %v517, %v789
  %791 = vmatmul.f32.gmra.mxu0 %v55
  %v792 = vpop.f32.mrf.mxu0
  %v793 = vadd.f32 %v517, %v792
  %794 = vmatmul.f32.gmra.mxu0 %v60
  %v795 = vpop.f32.mrf.mxu0
  %v796 = vadd.f32 %v517, %v795
  %797 = vmatmul.f32.gmra.mxu0 %v65
  %v798 = vpop.f32.mrf.mxu0
  %v799 = vadd.f32 %v517, %v798
  %800 = vmatmul.f32.gmra.mxu0 %v70
  %v801 = vpop.f32.mrf.mxu0
  %v802 = vadd.f32 %v517, %v801
  %803 = vmatmul.f32.gmra.mxu0 %v75
  %v804 = vpop.f32.mrf.mxu0
  %v805 = vadd.f32 %v517, %v804
  %806 = vmatmul.f32.gmra.mxu0 %v80
  %v807 = vpop.f32.mrf.mxu0
  %v808 = vadd.f32 %v517, %v807
  %809 = vmatmul.f32.gmra.mxu0 %v85
  %v810 = vpop.f32.mrf.mxu0
  %v811 = vadd.f32 %v517, %v810
  %812 = vmatmul.f32.gmra.mxu0 %v90
  %v813 = vpop.f32.mrf.mxu0
  %v814 = vadd.f32 %v517, %v813
  %815 = vmatmul.f32.gmra.mxu0 %v95
  %v816 = vpop.f32.mrf.mxu0
  %v817 = vadd.f32 %v517, %v816
  %818 = vmatmul.f32.gmra.mxu0 %v100
  %v819 = vpop.f32.mrf.mxu0
  %v820 = vadd.f32 %v517, %v819
  %821 = vmatmul.f32.gmra.mxu0 %v105
  %v822 = vpop.f32.mrf.mxu0
  %v823 = vadd.f32 %v517, %v822
  %824 = vmatmul.f32.gmra.mxu0 %v110
  %v825 = vpop.f32.mrf.mxu0
  %v826 = vadd.f32 %v517, %v825
  %827 = vmatmul.f32.gmra.mxu0 %v115
  %v828 = vpop.f32.mrf.mxu0
  %v829 = vadd.f32 %v517, %v828
  %830 = vmatmul.f32.gmra.mxu0 %v120
  %v831 = vpop.f32.mrf.mxu0
  %v832 = vadd.f32 %v517, %v831
  %833 = vmatmul.f32.gmra.mxu0 %v125
  %v834 = vpop.f32.mrf.mxu0
  %v835 = vadd.f32 %v517, %v834
  %836 = vmatmul.f32.gmra.mxu0 %v130
  %v837 = vpop.f32.mrf.mxu0
  %v838 = vadd.f32 %v517, %v837
  %839 = vmatmul.f32.gmra.mxu0 %v135
  %v840 = vpop.f32.mrf.mxu0
  %v841 = vadd.f32 %v517, %v840
  %842 = vmatmul.f32.gmra.mxu0 %v140
  %v843 = vpop.f32.mrf.mxu0
  %v844 = vadd.f32 %v517, %v843
  %845 = vmatmul.f32.gmra.mxu0 %v145
  %v846 = vpop.f32.mrf.mxu0
  %v847 = vadd.f32 %v517, %v846
  %848 = vmatmul.f32.gmra.mxu0 %v150
  %v849 = vpop.f32.mrf.mxu0
  %v850 = vadd.f32 %v517, %v849
  %851 = vmatmul.f32.gmra.mxu0 %v155
  %v852 = vpop.f32.mrf.mxu0
  %v853 = vadd.f32 %v517, %v852
  %854 = vmatmul.f32.gmra.mxu0 %v160
  %v855 = vpop.f32.mrf.mxu0
  %v856 = vadd.f32 %v517, %v855
  %857 = vmatmul.f32.gmra.mxu0 %v165
  %v858 = vpop.f32.mrf.mxu0
  %v859 = vadd.f32 %v517, %v858
  %860 = vmatmul.f32.gmra.mxu0 %v170
  %v861 = vpop.f32.mrf.mxu0
  %v862 = vadd.f32 %v517, %v861
  %863 = vmatmul.f32.gmra.mxu0 %v175
  %v864 = vpop.f32.mrf.mxu0
  %v865 = vadd.f32 %v517, %v864
  %866 = vmatmul.f32.gmra.mxu0 %v180
  %v867 = vpop.f32.mrf.mxu0
  %v868 = vadd.f32 %v517, %v867
  %869 = vmatmul.f32.gmra.mxu0 %v185
  %v870 = vpop.f32.mrf.mxu0
  %v871 = vadd.f32 %v517, %v870
  %872 = vmatmul.f32.gmra.mxu0 %v190
  %v873 = vpop.f32.mrf.mxu0
  %v874 = vadd.f32 %v517, %v873
  %875 = vmatmul.f32.gmra.mxu0 %v195
  %v876 = vpop.f32.mrf.mxu0
  %v877 = vadd.f32 %v517, %v876
  %878 = vmatmul.f32.gmra.mxu0 %v200
  %v879 = vpop.f32.mrf.mxu0
  %v880 = vadd.f32 %v517, %v879
  %881 = vmatmul.f32.gmra.mxu0 %v205
  %v882 = vpop.f32.mrf.mxu0
  %v883 = vadd.f32 %v517, %v882
  %884 = vmatmul.f32.gmra.mxu0 %v210
  %v885 = vpop.f32.mrf.mxu0
  %v886 = vadd.f32 %v517, %v885
  %887 = vmatmul.f32.gmra.mxu0 %v215
  %v888 = vpop.f32.mrf.mxu0
  %v889 = vadd.f32 %v517, %v888
  %890 = vmatmul.f32.gmra.mxu0 %v220
  %v891 = vpop.f32.mrf.mxu0
  %v892 = vadd.f32 %v517, %v891
  %893 = vmatmul.f32.gmra.mxu0 %v225
  %v894 = vpop.f32.mrf.mxu0
  %v895 = vadd.f32 %v517, %v894
  %896 = vmatmul.f32.gmra.mxu0 %v230
  %v897 = vpop.f32.mrf.mxu0
  %v898 = vadd.f32 %v517, %v897
  %899 = vmatmul.f32.gmra.mxu0 %v235
  %v900 = vpop.f32.mrf.mxu0
  %v901 = vadd.f32 %v517, %v900
  %902 = vmatmul.f32.gmra.mxu0 %v240
  %v903 = vpop.f32.mrf.mxu0
  %v904 = vadd.f32 %v517, %v903
  %905 = vmatmul.f32.gmra.mxu0 %v245
  %v906 = vpop.f32.mrf.mxu0
  %v907 = vadd.f32 %v517, %v906
  %908 = vmatmul.f32.gmra.mxu0 %v250
  %v909 = vpop.f32.mrf.mxu0
  %v910 = vadd.f32 %v517, %v909
  %911 = vmatmul.f32.gmra.mxu0 %v255
  %v912 = vpop.f32.mrf.mxu0
  %v913 = vadd.f32 %v517, %v912
  %914 = vmatmul.f32.gmra.mxu0 %v260
  %v915 = vpop.f32.mrf.mxu0
  %v916 = vadd.f32 %v517, %v915
  %917 = vmatmul.f32.gmra.mxu0 %v265
  %v918 = vpop.f32.mrf.mxu0
  %v919 = vadd.f32 %v517, %v918
  %920 = vmatmul.f32.gmra.mxu0 %v270
  %v921 = vpop.f32.mrf.mxu0
  %v922 = vadd.f32 %v517, %v921
  %923 = vmatmul.f32.gmra.mxu0 %v275
  %v924 = vpop.f32.mrf.mxu0
  %v925 = vadd.f32 %v517, %v924
  %926 = vmatmul.f32.gmra.mxu0 %v280
  %v927 = vpop.f32.mrf.mxu0
  %v928 = vadd.f32 %v517, %v927
  %929 = vmatmul.f32.gmra.mxu0 %v285
  %v930 = vpop.f32.mrf.mxu0
  %v931 = vadd.f32 %v517, %v930
  %932 = vmatmul.f32.gmra.mxu0 %v290
  %v933 = vpop.f32.mrf.mxu0
  %v934 = vadd.f32 %v517, %v933
  %935 = vmatmul.f32.gmra.mxu0 %v295
  %v936 = vpop.f32.mrf.mxu0
  %v937 = vadd.f32 %v517, %v936
  %938 = vmatmul.f32.gmra.mxu0 %v300
  %v939 = vpop.f32.mrf.mxu0
  %v940 = vadd.f32 %v517, %v939
  %941 = vmatmul.f32.gmra.mxu0 %v305
  %v942 = vpop.f32.mrf.mxu0
  %v943 = vadd.f32 %v517, %v942
  %944 = vmatmul.f32.gmra.mxu0 %v310
  %v945 = vpop.f32.mrf.mxu0
  %v946 = vadd.f32 %v517, %v945
  %947 = vmatmul.f32.gmra.mxu0 %v315
  %v948 = vpop.f32.mrf.mxu0
  %v949 = vadd.f32 %v517, %v948
  %950 = vmatmul.f32.gmra.mxu0 %v320
  %v951 = vpop.f32.mrf.mxu0
  %v952 = vadd.f32 %v517, %v951
  %953 = vmatmul.f32.gmra.mxu0 %v325
  %v954 = vpop.f32.mrf.mxu0
  %v955 = vadd.f32 %v517, %v954
  %956 = vmatmul.f32.gmra.mxu0 %v330
  %v957 = vpop.f32.mrf.mxu0
  %v958 = vadd.f32 %v517, %v957
  %959 = vmatmul.f32.gmra.mxu0 %v335
  %v960 = vpop.f32.mrf.mxu0
  %v961 = vadd.f32 %v517, %v960
  %962 = vmatmul.f32.gmra.mxu0 %v340
  %v963 = vpop.f32.mrf.mxu0
  %v964 = vadd.f32 %v517, %v963
  %965 = vmatmul.f32.gmra.mxu0 %v345
  %v966 = vpop.f32.mrf.mxu0
  %v967 = vadd.f32 %v517, %v966
  %968 = vmatmul.f32.gmra.mxu0 %v350
  %v969 = vpop.f32.mrf.mxu0
  %v970 = vadd.f32 %v517, %v969
  %971 = vmatmul.f32.gmra.mxu0 %v355
  %v972 = vpop.f32.mrf.mxu0
  %v973 = vadd.f32 %v517, %v972
  %974 = vmatmul.f32.gmra.mxu0 %v360
  %v975 = vpop.f32.mrf.mxu0
  %v976 = vadd.f32 %v517, %v975
  %977 = vmatmul.f32.gmra.mxu0 %v365
  %v978 = vpop.f32.mrf.mxu0
  %v979 = vadd.f32 %v517, %v978
  %980 = vmatmul.f32.gmra.mxu0 %v370
  %v981 = vpop.f32.mrf.mxu0
  %v982 = vadd.f32 %v517, %v981
  %983 = vmatmul.f32.gmra.mxu0 %v375
  %v984 = vpop.f32.mrf.mxu0
  %v985 = vadd.f32 %v517, %v984
  %986 = vmatmul.f32.gmra.mxu0 %v380
  %v987 = vpop.f32.mrf.mxu0
  %v988 = vadd.f32 %v517, %v987
  %989 = vmatmul.f32.gmra.mxu0 %v385
  %v990 = vpop.f32.mrf.mxu0
  %v991 = vadd.f32 %v517, %v990
  %992 = vmatmul.f32.gmra.mxu0 %v390
  %v993 = vpop.f32.mrf.mxu0
  %v994 = vadd.f32 %v517, %v993
  %995 = vmatmul.f32.gmra.mxu0 %v395
  %v996 = vpop.f32.mrf.mxu0
  %v997 = vadd.f32 %v517, %v996
  %998 = vmatmul.f32.gmra.mxu0 %v400
  %v999 = vpop.f32.mrf.mxu0
  %v1000 = vadd.f32 %v517, %v999
  %1001 = vmatmul.f32.gmra.mxu0 %v405
  %v1002 = vpop.f32.mrf.mxu0
  %v1003 = vadd.f32 %v517, %v1002
  %1004 = vmatmul.f32.gmra.mxu0 %v410
  %v1005 = vpop.f32.mrf.mxu0
  %v1006 = vadd.f32 %v517, %v1005
  %1007 = vmatmul.f32.gmra.mxu0 %v415
  %v1008 = vpop.f32.mrf.mxu0
  %v1009 = vadd.f32 %v517, %v1008
  %1010 = vmatmul.f32.gmra.mxu0 %v420
  %v1011 = vpop.f32.mrf.mxu0
  %v1012 = vadd.f32 %v517, %v1011
  %1013 = vmatmul.f32.gmra.mxu0 %v425
  %v1014 = vpop.f32.mrf.mxu0
  %v1015 = vadd.f32 %v517, %v1014
  %1016 = vmatmul.f32.gmra.mxu0 %v430
  %v1017 = vpop.f32.mrf.mxu0
  %v1018 = vadd.f32 %v517, %v1017
  %1019 = vmatmul.f32.gmra.mxu0 %v435
  %v1020 = vpop.f32.mrf.mxu0
  %v1021 = vadd.f32 %v517, %v1020
  %1022 = vdwg.mxu0
  %1023 = vmatpush.msra.mxu0 %v471
  %1024 = vmatpush.msra.mxu0 %v470
  %1025 = vmatpush.msra.mxu0 %v469
  %1026 = vmatpush.msra.mxu0 %v468
  %1027 = vmatpush.msra.mxu0 %v467
  %1028 = vmatpush.msra.mxu0 %v466
  %1029 = vmatpush.msra.mxu0 %v465
  %1030 = vmatpush.msra.mxu0 %v464
  %1031 = vmatpush.msra.mxu0 %v463
  %1032 = vmatpush.msra.mxu0 %v462
  %1033 = vmatpush.msra.mxu0 %v461
  %1034 = vmatpush.msra.mxu0 %v460
  %1035 = vmatpush.msra.mxu0 %v459
  %1036 = vmatpush.msra.mxu0 %v458
  %1037 = vmatpush.msra.mxu0 %v457
  %1038 = vmatpush.msra.mxu0 %v456
  %1039 = vmatmul.f32.gmra.mxu0 %v36
  %v1040 = vpop.f32.mrf.mxu0
  %v1041 = vadd.f32 %v781, %v1040
  %1042 = vmatmul.f32.gmra.mxu0 %v41
  %v1043 = vpop.f32.mrf.mxu0
  %v1044 = vadd.f32 %v784, %v1043
  %1045 = vmatmul.f32.gmra.mxu0 %v46
  %v1046 = vpop.f32.mrf.mxu0
  %v1047 = vadd.f32 %v787, %v1046
  %1048 = vmatmul.f32.gmra.mxu0 %v51
  %v1049 = vpop.f32.mrf.mxu0
  %v1050 = vadd.f32 %v790, %v1049
  %1051 = vmatmul.f32.gmra.mxu0 %v56
  %v1052 = vpop.f32.mrf.mxu0
  %v1053 = vadd.f32 %v793, %v1052
  %1054 = vmatmul.f32.gmra.mxu0 %v61
  %v1055 = vpop.f32.mrf.mxu0
  %v1056 = vadd.f32 %v796, %v1055
  %1057 = vmatmul.f32.gmra.mxu0 %v66
  %v1058 = vpop.f32.mrf.mxu0
  %v1059 = vadd.f32 %v799, %v1058
  %1060 = vmatmul.f32.gmra.mxu0 %v71
  %v1061 = vpop.f32.mrf.mxu0
  %v1062 = vadd.f32 %v802, %v1061
  %1063 = vmatmul.f32.gmra.mxu0 %v76
  %v1064 = vpop.f32.mrf.mxu0
  %v1065 = vadd.f32 %v805, %v1064
  %1066 = vmatmul.f32.gmra.mxu0 %v81
  %v1067 = vpop.f32.mrf.mxu0
  %v1068 = vadd.f32 %v808, %v1067
  %1069 = vmatmul.f32.gmra.mxu0 %v86
  %v1070 = vpop.f32.mrf.mxu0
  %v1071 = vadd.f32 %v811, %v1070
  %1072 = vmatmul.f32.gmra.mxu0 %v91
  %v1073 = vpop.f32.mrf.mxu0
  %v1074 = vadd.f32 %v814, %v1073
  %1075 = vmatmul.f32.gmra.mxu0 %v96
  %v1076 = vpop.f32.mrf.mxu0
  %v1077 = vadd.f32 %v817, %v1076
  %1078 = vmatmul.f32.gmra.mxu0 %v101
  %v1079 = vpop.f32.mrf.mxu0
  %v1080 = vadd.f32 %v820, %v1079
  %1081 = vmatmul.f32.gmra.mxu0 %v106
  %v1082 = vpop.f32.mrf.mxu0
  %v1083 = vadd.f32 %v823, %v1082
  %1084 = vmatmul.f32.gmra.mxu0 %v111
  %v1085 = vpop.f32.mrf.mxu0
  %v1086 = vadd.f32 %v826, %v1085
  %1087 = vmatmul.f32.gmra.mxu0 %v116
  %v1088 = vpop.f32.mrf.mxu0
  %v1089 = vadd.f32 %v829, %v1088
  %1090 = vmatmul.f32.gmra.mxu0 %v121
  %v1091 = vpop.f32.mrf.mxu0
  %v1092 = vadd.f32 %v832, %v1091
  %1093 = vmatmul.f32.gmra.mxu0 %v126
  %v1094 = vpop.f32.mrf.mxu0
  %v1095 = vadd.f32 %v835, %v1094
  %1096 = vmatmul.f32.gmra.mxu0 %v131
  %v1097 = vpop.f32.mrf.mxu0
  %v1098 = vadd.f32 %v838, %v1097
  %1099 = vmatmul.f32.gmra.mxu0 %v136
  %v1100 = vpop.f32.mrf.mxu0
  %v1101 = vadd.f32 %v841, %v1100
  %1102 = vmatmul.f32.gmra.mxu0 %v141
  %v1103 = vpop.f32.mrf.mxu0
  %v1104 = vadd.f32 %v844, %v1103
  %1105 = vmatmul.f32.gmra.mxu0 %v146
  %v1106 = vpop.f32.mrf.mxu0
  %v1107 = vadd.f32 %v847, %v1106
  %1108 = vmatmul.f32.gmra.mxu0 %v151
  %v1109 = vpop.f32.mrf.mxu0
  %v1110 = vadd.f32 %v850, %v1109
  %1111 = vmatmul.f32.gmra.mxu0 %v156
  %v1112 = vpop.f32.mrf.mxu0
  %v1113 = vadd.f32 %v853, %v1112
  %1114 = vmatmul.f32.gmra.mxu0 %v161
  %v1115 = vpop.f32.mrf.mxu0
  %v1116 = vadd.f32 %v856, %v1115
  %1117 = vmatmul.f32.gmra.mxu0 %v166
  %v1118 = vpop.f32.mrf.mxu0
  %v1119 = vadd.f32 %v859, %v1118
  %1120 = vmatmul.f32.gmra.mxu0 %v171
  %v1121 = vpop.f32.mrf.mxu0
  %v1122 = vadd.f32 %v862, %v1121
  %1123 = vmatmul.f32.gmra.mxu0 %v176
  %v1124 = vpop.f32.mrf.mxu0
  %v1125 = vadd.f32 %v865, %v1124
  %1126 = vmatmul.f32.gmra.mxu0 %v181
  %v1127 = vpop.f32.mrf.mxu0
  %v1128 = vadd.f32 %v868, %v1127
  %1129 = vmatmul.f32.gmra.mxu0 %v186
  %v1130 = vpop.f32.mrf.mxu0
  %v1131 = vadd.f32 %v871, %v1130
  %1132 = vmatmul.f32.gmra.mxu0 %v191
  %v1133 = vpop.f32.mrf.mxu0
  %v1134 = vadd.f32 %v874, %v1133
  %1135 = vmatmul.f32.gmra.mxu0 %v196
  %v1136 = vpop.f32.mrf.mxu0
  %v1137 = vadd.f32 %v877, %v1136
  %1138 = vmatmul.f32.gmra.mxu0 %v201
  %v1139 = vpop.f32.mrf.mxu0
  %v1140 = vadd.f32 %v880, %v1139
  %1141 = vmatmul.f32.gmra.mxu0 %v206
  %v1142 = vpop.f32.mrf.mxu0
  %v1143 = vadd.f32 %v883, %v1142
  %1144 = vmatmul.f32.gmra.mxu0 %v211
  %v1145 = vpop.f32.mrf.mxu0
  %v1146 = vadd.f32 %v886, %v1145
  %1147 = vmatmul.f32.gmra.mxu0 %v216
  %v1148 = vpop.f32.mrf.mxu0
  %v1149 = vadd.f32 %v889, %v1148
  %1150 = vmatmul.f32.gmra.mxu0 %v221
  %v1151 = vpop.f32.mrf.mxu0
  %v1152 = vadd.f32 %v892, %v1151
  %1153 = vmatmul.f32.gmra.mxu0 %v226
  %v1154 = vpop.f32.mrf.mxu0
  %v1155 = vadd.f32 %v895, %v1154
  %1156 = vmatmul.f32.gmra.mxu0 %v231
  %v1157 = vpop.f32.mrf.mxu0
  %v1158 = vadd.f32 %v898, %v1157
  %1159 = vmatmul.f32.gmra.mxu0 %v236
  %v1160 = vpop.f32.mrf.mxu0
  %v1161 = vadd.f32 %v901, %v1160
  %1162 = vmatmul.f32.gmra.mxu0 %v241
  %v1163 = vpop.f32.mrf.mxu0
  %v1164 = vadd.f32 %v904, %v1163
  %1165 = vmatmul.f32.gmra.mxu0 %v246
  %v1166 = vpop.f32.mrf.mxu0
  %v1167 = vadd.f32 %v907, %v1166
  %1168 = vmatmul.f32.gmra.mxu0 %v251
  %v1169 = vpop.f32.mrf.mxu0
  %v1170 = vadd.f32 %v910, %v1169
  %1171 = vmatmul.f32.gmra.mxu0 %v256
  %v1172 = vpop.f32.mrf.mxu0
  %v1173 = vadd.f32 %v913, %v1172
  %1174 = vmatmul.f32.gmra.mxu0 %v261
  %v1175 = vpop.f32.mrf.mxu0
  %v1176 = vadd.f32 %v916, %v1175
  %1177 = vmatmul.f32.gmra.mxu0 %v266
  %v1178 = vpop.f32.mrf.mxu0
  %v1179 = vadd.f32 %v919, %v1178
  %1180 = vmatmul.f32.gmra.mxu0 %v271
  %v1181 = vpop.f32.mrf.mxu0
  %v1182 = vadd.f32 %v922, %v1181
  %1183 = vmatmul.f32.gmra.mxu0 %v276
  %v1184 = vpop.f32.mrf.mxu0
  %v1185 = vadd.f32 %v925, %v1184
  %1186 = vmatmul.f32.gmra.mxu0 %v281
  %v1187 = vpop.f32.mrf.mxu0
  %v1188 = vadd.f32 %v928, %v1187
  %1189 = vmatmul.f32.gmra.mxu0 %v286
  %v1190 = vpop.f32.mrf.mxu0
  %v1191 = vadd.f32 %v931, %v1190
  %1192 = vmatmul.f32.gmra.mxu0 %v291
  %v1193 = vpop.f32.mrf.mxu0
  %v1194 = vadd.f32 %v934, %v1193
  %1195 = vmatmul.f32.gmra.mxu0 %v296
  %v1196 = vpop.f32.mrf.mxu0
  %v1197 = vadd.f32 %v937, %v1196
  %1198 = vmatmul.f32.gmra.mxu0 %v301
  %v1199 = vpop.f32.mrf.mxu0
  %v1200 = vadd.f32 %v940, %v1199
  %1201 = vmatmul.f32.gmra.mxu0 %v306
  %v1202 = vpop.f32.mrf.mxu0
  %v1203 = vadd.f32 %v943, %v1202
  %1204 = vmatmul.f32.gmra.mxu0 %v311
  %v1205 = vpop.f32.mrf.mxu0
  %v1206 = vadd.f32 %v946, %v1205
  %1207 = vmatmul.f32.gmra.mxu0 %v316
  %v1208 = vpop.f32.mrf.mxu0
  %v1209 = vadd.f32 %v949, %v1208
  %1210 = vmatmul.f32.gmra.mxu0 %v321
  %v1211 = vpop.f32.mrf.mxu0
  %v1212 = vadd.f32 %v952, %v1211
  %1213 = vmatmul.f32.gmra.mxu0 %v326
  %v1214 = vpop.f32.mrf.mxu0
  %v1215 = vadd.f32 %v955, %v1214
  %1216 = vmatmul.f32.gmra.mxu0 %v331
  %v1217 = vpop.f32.mrf.mxu0
  %v1218 = vadd.f32 %v958, %v1217
  %1219 = vmatmul.f32.gmra.mxu0 %v336
  %v1220 = vpop.f32.mrf.mxu0
  %v1221 = vadd.f32 %v961, %v1220
  %1222 = vmatmul.f32.gmra.mxu0 %v341
  %v1223 = vpop.f32.mrf.mxu0
  %v1224 = vadd.f32 %v964, %v1223
  %1225 = vmatmul.f32.gmra.mxu0 %v346
  %v1226 = vpop.f32.mrf.mxu0
  %v1227 = vadd.f32 %v967, %v1226
  %1228 = vmatmul.f32.gmra.mxu0 %v351
  %v1229 = vpop.f32.mrf.mxu0
  %v1230 = vadd.f32 %v970, %v1229
  %1231 = vmatmul.f32.gmra.mxu0 %v356
  %v1232 = vpop.f32.mrf.mxu0
  %v1233 = vadd.f32 %v973, %v1232
  %1234 = vmatmul.f32.gmra.mxu0 %v361
  %v1235 = vpop.f32.mrf.mxu0
  %v1236 = vadd.f32 %v976, %v1235
  %1237 = vmatmul.f32.gmra.mxu0 %v366
  %v1238 = vpop.f32.mrf.mxu0
  %v1239 = vadd.f32 %v979, %v1238
  %1240 = vmatmul.f32.gmra.mxu0 %v371
  %v1241 = vpop.f32.mrf.mxu0
  %v1242 = vadd.f32 %v982, %v1241
  %1243 = vmatmul.f32.gmra.mxu0 %v376
  %v1244 = vpop.f32.mrf.mxu0
  %v1245 = vadd.f32 %v985, %v1244
  %1246 = vmatmul.f32.gmra.mxu0 %v381
  %v1247 = vpop.f32.mrf.mxu0
  %v1248 = vadd.f32 %v988, %v1247
  %1249 = vmatmul.f32.gmra.mxu0 %v386
  %v1250 = vpop.f32.mrf.mxu0
  %v1251 = vadd.f32 %v991, %v1250
  %1252 = vmatmul.f32.gmra.mxu0 %v391
  %v1253 = vpop.f32.mrf.mxu0
  %v1254 = vadd.f32 %v994, %v1253
  %1255 = vmatmul.f32.gmra.mxu0 %v396
  %v1256 = vpop.f32.mrf.mxu0
  %v1257 = vadd.f32 %v997, %v1256
  %1258 = vmatmul.f32.gmra.mxu0 %v401
  %v1259 = vpop.f32.mrf.mxu0
  %v1260 = vadd.f32 %v1000, %v1259
  %1261 = vmatmul.f32.gmra.mxu0 %v406
  %v1262 = vpop.f32.mrf.mxu0
  %v1263 = vadd.f32 %v1003, %v1262
  %1264 = vmatmul.f32.gmra.mxu0 %v411
  %v1265 = vpop.f32.mrf.mxu0
  %v1266 = vadd.f32 %v1006, %v1265
  %1267 = vmatmul.f32.gmra.mxu0 %v416
  %v1268 = vpop.f32.mrf.mxu0
  %v1269 = vadd.f32 %v1009, %v1268
  %1270 = vmatmul.f32.gmra.mxu0 %v421
  %v1271 = vpop.f32.mrf.mxu0
  %v1272 = vadd.f32 %v1012, %v1271
  %1273 = vmatmul.f32.gmra.mxu0 %v426
  %v1274 = vpop.f32.mrf.mxu0
  %v1275 = vadd.f32 %v1015, %v1274
  %1276 = vmatmul.f32.gmra.mxu0 %v431
  %v1277 = vpop.f32.mrf.mxu0
  %v1278 = vadd.f32 %v1018, %v1277
  %1279 = vmatmul.f32.gmra.mxu0 %v436
  %v1280 = vpop.f32.mrf.mxu0
  %v1281 = vadd.f32 %v1021, %v1280
  %1282 = vdwg.mxu0
  %1283 = vmatpush.msra.mxu0 %v487
  %1284 = vmatpush.msra.mxu0 %v486
  %1285 = vmatpush.msra.mxu0 %v485
  %1286 = vmatpush.msra.mxu0 %v484
  %1287 = vmatpush.msra.mxu0 %v483
  %1288 = vmatpush.msra.mxu0 %v482
  %1289 = vmatpush.msra.mxu0 %v481
  %1290 = vmatpush.msra.mxu0 %v480
  %1291 = vmatpush.msra.mxu0 %v479
  %1292 = vmatpush.msra.mxu0 %v478
  %1293 = vmatpush.msra.mxu0 %v477
  %1294 = vmatpush.msra.mxu0 %v476
  %1295 = vmatpush.msra.mxu0 %v475
  %1296 = vmatpush.msra.mxu0 %v474
  %1297 = vmatpush.msra.mxu0 %v473
  %1298 = vmatpush.msra.mxu0 %v472
  %1299 = vmatmul.f32.gmra.mxu0 %v37
  %v1300 = vpop.f32.mrf.mxu0
  %v1301 = vadd.f32 %v1041, %v1300
  %1302 = vmatmul.f32.gmra.mxu0 %v42
  %v1303 = vpop.f32.mrf.mxu0
  %v1304 = vadd.f32 %v1044, %v1303
  %1305 = vmatmul.f32.gmra.mxu0 %v47
  %v1306 = vpop.f32.mrf.mxu0
  %v1307 = vadd.f32 %v1047, %v1306
  %1308 = vmatmul.f32.gmra.mxu0 %v52
  %v1309 = vpop.f32.mrf.mxu0
  %v1310 = vadd.f32 %v1050, %v1309
  %1311 = vmatmul.f32.gmra.mxu0 %v57
  %v1312 = vpop.f32.mrf.mxu0
  %v1313 = vadd.f32 %v1053, %v1312
  %1314 = vmatmul.f32.gmra.mxu0 %v62
  %v1315 = vpop.f32.mrf.mxu0
  %v1316 = vadd.f32 %v1056, %v1315
  %1317 = vmatmul.f32.gmra.mxu0 %v67
  %v1318 = vpop.f32.mrf.mxu0
  %v1319 = vadd.f32 %v1059, %v1318
  %1320 = vmatmul.f32.gmra.mxu0 %v72
  %v1321 = vpop.f32.mrf.mxu0
  %v1322 = vadd.f32 %v1062, %v1321
  %1323 = vmatmul.f32.gmra.mxu0 %v77
  %v1324 = vpop.f32.mrf.mxu0
  %v1325 = vadd.f32 %v1065, %v1324
  %1326 = vmatmul.f32.gmra.mxu0 %v82
  %v1327 = vpop.f32.mrf.mxu0
  %v1328 = vadd.f32 %v1068, %v1327
  %1329 = vmatmul.f32.gmra.mxu0 %v87
  %v1330 = vpop.f32.mrf.mxu0
  %v1331 = vadd.f32 %v1071, %v1330
  %1332 = vmatmul.f32.gmra.mxu0 %v92
  %v1333 = vpop.f32.mrf.mxu0
  %v1334 = vadd.f32 %v1074, %v1333
  %1335 = vmatmul.f32.gmra.mxu0 %v97
  %v1336 = vpop.f32.mrf.mxu0
  %v1337 = vadd.f32 %v1077, %v1336
  %1338 = vmatmul.f32.gmra.mxu0 %v102
  %v1339 = vpop.f32.mrf.mxu0
  %v1340 = vadd.f32 %v1080, %v1339
  %1341 = vmatmul.f32.gmra.mxu0 %v107
  %v1342 = vpop.f32.mrf.mxu0
  %v1343 = vadd.f32 %v1083, %v1342
  %1344 = vmatmul.f32.gmra.mxu0 %v112
  %v1345 = vpop.f32.mrf.mxu0
  %v1346 = vadd.f32 %v1086, %v1345
  %1347 = vmatmul.f32.gmra.mxu0 %v117
  %v1348 = vpop.f32.mrf.mxu0
  %v1349 = vadd.f32 %v1089, %v1348
  %1350 = vmatmul.f32.gmra.mxu0 %v122
  %v1351 = vpop.f32.mrf.mxu0
  %v1352 = vadd.f32 %v1092, %v1351
  %1353 = vmatmul.f32.gmra.mxu0 %v127
  %v1354 = vpop.f32.mrf.mxu0
  %v1355 = vadd.f32 %v1095, %v1354
  %1356 = vmatmul.f32.gmra.mxu0 %v132
  %v1357 = vpop.f32.mrf.mxu0
  %v1358 = vadd.f32 %v1098, %v1357
  %1359 = vmatmul.f32.gmra.mxu0 %v137
  %v1360 = vpop.f32.mrf.mxu0
  %v1361 = vadd.f32 %v1101, %v1360
  %1362 = vmatmul.f32.gmra.mxu0 %v142
  %v1363 = vpop.f32.mrf.mxu0
  %v1364 = vadd.f32 %v1104, %v1363
  %1365 = vmatmul.f32.gmra.mxu0 %v147
  %v1366 = vpop.f32.mrf.mxu0
  %v1367 = vadd.f32 %v1107, %v1366
  %1368 = vmatmul.f32.gmra.mxu0 %v152
  %v1369 = vpop.f32.mrf.mxu0
  %v1370 = vadd.f32 %v1110, %v1369
  %1371 = vmatmul.f32.gmra.mxu0 %v157
  %v1372 = vpop.f32.mrf.mxu0
  %v1373 = vadd.f32 %v1113, %v1372
  %1374 = vmatmul.f32.gmra.mxu0 %v162
  %v1375 = vpop.f32.mrf.mxu0
  %v1376 = vadd.f32 %v1116, %v1375
  %1377 = vmatmul.f32.gmra.mxu0 %v167
  %v1378 = vpop.f32.mrf.mxu0
  %v1379 = vadd.f32 %v1119, %v1378
  %1380 = vmatmul.f32.gmra.mxu0 %v172
  %v1381 = vpop.f32.mrf.mxu0
  %v1382 = vadd.f32 %v1122, %v1381
  %1383 = vmatmul.f32.gmra.mxu0 %v177
  %v1384 = vpop.f32.mrf.mxu0
  %v1385 = vadd.f32 %v1125, %v1384
  %1386 = vmatmul.f32.gmra.mxu0 %v182
  %v1387 = vpop.f32.mrf.mxu0
  %v1388 = vadd.f32 %v1128, %v1387
  %1389 = vmatmul.f32.gmra.mxu0 %v187
  %v1390 = vpop.f32.mrf.mxu0
  %v1391 = vadd.f32 %v1131, %v1390
  %1392 = vmatmul.f32.gmra.mxu0 %v192
  %v1393 = vpop.f32.mrf.mxu0
  %v1394 = vadd.f32 %v1134, %v1393
  %1395 = vmatmul.f32.gmra.mxu0 %v197
  %v1396 = vpop.f32.mrf.mxu0
  %v1397 = vadd.f32 %v1137, %v1396
  %1398 = vmatmul.f32.gmra.mxu0 %v202
  %v1399 = vpop.f32.mrf.mxu0
  %v1400 = vadd.f32 %v1140, %v1399
  %1401 = vmatmul.f32.gmra.mxu0 %v207
  %v1402 = vpop.f32.mrf.mxu0
  %v1403 = vadd.f32 %v1143, %v1402
  %1404 = vmatmul.f32.gmra.mxu0 %v212
  %v1405 = vpop.f32.mrf.mxu0
  %v1406 = vadd.f32 %v1146, %v1405
  %1407 = vmatmul.f32.gmra.mxu0 %v217
  %v1408 = vpop.f32.mrf.mxu0
  %v1409 = vadd.f32 %v1149, %v1408
  %1410 = vmatmul.f32.gmra.mxu0 %v222
  %v1411 = vpop.f32.mrf.mxu0
  %v1412 = vadd.f32 %v1152, %v1411
  %1413 = vmatmul.f32.gmra.mxu0 %v227
  %v1414 = vpop.f32.mrf.mxu0
  %v1415 = vadd.f32 %v1155, %v1414
  %1416 = vmatmul.f32.gmra.mxu0 %v232
  %v1417 = vpop.f32.mrf.mxu0
  %v1418 = vadd.f32 %v1158, %v1417
  %1419 = vmatmul.f32.gmra.mxu0 %v237
  %v1420 = vpop.f32.mrf.mxu0
  %v1421 = vadd.f32 %v1161, %v1420
  %1422 = vmatmul.f32.gmra.mxu0 %v242
  %v1423 = vpop.f32.mrf.mxu0
  %v1424 = vadd.f32 %v1164, %v1423
  %1425 = vmatmul.f32.gmra.mxu0 %v247
  %v1426 = vpop.f32.mrf.mxu0
  %v1427 = vadd.f32 %v1167, %v1426
  %1428 = vmatmul.f32.gmra.mxu0 %v252
  %v1429 = vpop.f32.mrf.mxu0
  %v1430 = vadd.f32 %v1170, %v1429
  %1431 = vmatmul.f32.gmra.mxu0 %v257
  %v1432 = vpop.f32.mrf.mxu0
  %v1433 = vadd.f32 %v1173, %v1432
  %1434 = vmatmul.f32.gmra.mxu0 %v262
  %v1435 = vpop.f32.mrf.mxu0
  %v1436 = vadd.f32 %v1176, %v1435
  %1437 = vmatmul.f32.gmra.mxu0 %v267
  %v1438 = vpop.f32.mrf.mxu0
  %v1439 = vadd.f32 %v1179, %v1438
  %1440 = vmatmul.f32.gmra.mxu0 %v272
  %v1441 = vpop.f32.mrf.mxu0
  %v1442 = vadd.f32 %v1182, %v1441
  %1443 = vmatmul.f32.gmra.mxu0 %v277
  %v1444 = vpop.f32.mrf.mxu0
  %v1445 = vadd.f32 %v1185, %v1444
  %1446 = vmatmul.f32.gmra.mxu0 %v282
  %v1447 = vpop.f32.mrf.mxu0
  %v1448 = vadd.f32 %v1188, %v1447
  %1449 = vmatmul.f32.gmra.mxu0 %v287
  %v1450 = vpop.f32.mrf.mxu0
  %v1451 = vadd.f32 %v1191, %v1450
  %1452 = vmatmul.f32.gmra.mxu0 %v292
  %v1453 = vpop.f32.mrf.mxu0
  %v1454 = vadd.f32 %v1194, %v1453
  %1455 = vmatmul.f32.gmra.mxu0 %v297
  %v1456 = vpop.f32.mrf.mxu0
  %v1457 = vadd.f32 %v1197, %v1456
  %1458 = vmatmul.f32.gmra.mxu0 %v302
  %v1459 = vpop.f32.mrf.mxu0
  %v1460 = vadd.f32 %v1200, %v1459
  %1461 = vmatmul.f32.gmra.mxu0 %v307
  %v1462 = vpop.f32.mrf.mxu0
  %v1463 = vadd.f32 %v1203, %v1462
  %1464 = vmatmul.f32.gmra.mxu0 %v312
  %v1465 = vpop.f32.mrf.mxu0
  %v1466 = vadd.f32 %v1206, %v1465
  %1467 = vmatmul.f32.gmra.mxu0 %v317
  %v1468 = vpop.f32.mrf.mxu0
  %v1469 = vadd.f32 %v1209, %v1468
  %1470 = vmatmul.f32.gmra.mxu0 %v322
  %v1471 = vpop.f32.mrf.mxu0
  %v1472 = vadd.f32 %v1212, %v1471
  %1473 = vmatmul.f32.gmra.mxu0 %v327
  %v1474 = vpop.f32.mrf.mxu0
  %v1475 = vadd.f32 %v1215, %v1474
  %1476 = vmatmul.f32.gmra.mxu0 %v332
  %v1477 = vpop.f32.mrf.mxu0
  %v1478 = vadd.f32 %v1218, %v1477
  %1479 = vmatmul.f32.gmra.mxu0 %v337
  %v1480 = vpop.f32.mrf.mxu0
  %v1481 = vadd.f32 %v1221, %v1480
  %1482 = vmatmul.f32.gmra.mxu0 %v342
  %v1483 = vpop.f32.mrf.mxu0
  %v1484 = vadd.f32 %v1224, %v1483
  %1485 = vmatmul.f32.gmra.mxu0 %v347
  %v1486 = vpop.f32.mrf.mxu0
  %v1487 = vadd.f32 %v1227, %v1486
  %1488 = vmatmul.f32.gmra.mxu0 %v352
  %v1489 = vpop.f32.mrf.mxu0
  %v1490 = vadd.f32 %v1230, %v1489
  %1491 = vmatmul.f32.gmra.mxu0 %v357
  %v1492 = vpop.f32.mrf.mxu0
  %v1493 = vadd.f32 %v1233, %v1492
  %1494 = vmatmul.f32.gmra.mxu0 %v362
  %v1495 = vpop.f32.mrf.mxu0
  %v1496 = vadd.f32 %v1236, %v1495
  %1497 = vmatmul.f32.gmra.mxu0 %v367
  %v1498 = vpop.f32.mrf.mxu0
  %v1499 = vadd.f32 %v1239, %v1498
  %1500 = vmatmul.f32.gmra.mxu0 %v372
  %v1501 = vpop.f32.mrf.mxu0
  %v1502 = vadd.f32 %v1242, %v1501
  %1503 = vmatmul.f32.gmra.mxu0 %v377
  %v1504 = vpop.f32.mrf.mxu0
  %v1505 = vadd.f32 %v1245, %v1504
  %1506 = vmatmul.f32.gmra.mxu0 %v382
  %v1507 = vpop.f32.mrf.mxu0
  %v1508 = vadd.f32 %v1248, %v1507
  %1509 = vmatmul.f32.gmra.mxu0 %v387
  %v1510 = vpop.f32.mrf.mxu0
  %v1511 = vadd.f32 %v1251, %v1510
  %1512 = vmatmul.f32.gmra.mxu0 %v392
  %v1513 = vpop.f32.mrf.mxu0
  %v1514 = vadd.f32 %v1254, %v1513
  %1515 = vmatmul.f32.gmra.mxu0 %v397
  %v1516 = vpop.f32.mrf.mxu0
  %v1517 = vadd.f32 %v1257, %v1516
  %1518 = vmatmul.f32.gmra.mxu0 %v402
  %v1519 = vpop.f32.mrf.mxu0
  %v1520 = vadd.f32 %v1260, %v1519
  %1521 = vmatmul.f32.gmra.mxu0 %v407
  %v1522 = vpop.f32.mrf.mxu0
  %v1523 = vadd.f32 %v1263, %v1522
  %1524 = vmatmul.f32.gmra.mxu0 %v412
  %v1525 = vpop.f32.mrf.mxu0
  %v1526 = vadd.f32 %v1266, %v1525
  %1527 = vmatmul.f32.gmra.mxu0 %v417
  %v1528 = vpop.f32.mrf.mxu0
  %v1529 = vadd.f32 %v1269, %v1528
  %1530 = vmatmul.f32.gmra.mxu0 %v422
  %v1531 = vpop.f32.mrf.mxu0
  %v1532 = vadd.f32 %v1272, %v1531
  %1533 = vmatmul.f32.gmra.mxu0 %v427
  %v1534 = vpop.f32.mrf.mxu0
  %v1535 = vadd.f32 %v1275, %v1534
  %1536 = vmatmul.f32.gmra.mxu0 %v432
  %v1537 = vpop.f32.mrf.mxu0
  %v1538 = vadd.f32 %v1278, %v1537
  %1539 = vmatmul.f32.gmra.mxu0 %v437
  %v1540 = vpop.f32.mrf.mxu0
  %v1541 = vadd.f32 %v1281, %v1540
  %1542 = vdwg.mxu0
  %1543 = vmatpush.msra.mxu0 %v503
  %1544 = vmatpush.msra.mxu0 %v502
  %1545 = vmatpush.msra.mxu0 %v501
  %1546 = vmatpush.msra.mxu0 %v500
  %1547 = vmatpush.msra.mxu0 %v499
  %1548 = vmatpush.msra.mxu0 %v498
  %1549 = vmatpush.msra.mxu0 %v497
  %1550 = vmatpush.msra.mxu0 %v496
  %1551 = vmatpush.msra.mxu0 %v495
  %1552 = vmatpush.msra.mxu0 %v494
  %1553 = vmatpush.msra.mxu0 %v493
  %1554 = vmatpush.msra.mxu0 %v492
  %1555 = vmatpush.msra.mxu0 %v491
  %1556 = vmatpush.msra.mxu0 %v490
  %1557 = vmatpush.msra.mxu0 %v489
  %1558 = vmatpush.msra.mxu0 %v488
  %1559 = vmatmul.f32.gmra.mxu0 %v38
  %v1560 = vpop.f32.mrf.mxu0
  %v1561 = vadd.f32 %v1301, %v1560
  %1562 = vmatmul.f32.gmra.mxu0 %v43
  %v1563 = vpop.f32.mrf.mxu0
  %v1564 = vadd.f32 %v1304, %v1563
  %1565 = vmatmul.f32.gmra.mxu0 %v48
  %v1566 = vpop.f32.mrf.mxu0
  %v1567 = vadd.f32 %v1307, %v1566
  %1568 = vmatmul.f32.gmra.mxu0 %v53
  %v1569 = vpop.f32.mrf.mxu0
  %v1570 = vadd.f32 %v1310, %v1569
  %1571 = vmatmul.f32.gmra.mxu0 %v58
  %v1572 = vpop.f32.mrf.mxu0
  %v1573 = vadd.f32 %v1313, %v1572
  %1574 = vmatmul.f32.gmra.mxu0 %v63
  %v1575 = vpop.f32.mrf.mxu0
  %v1576 = vadd.f32 %v1316, %v1575
  %1577 = vmatmul.f32.gmra.mxu0 %v68
  %v1578 = vpop.f32.mrf.mxu0
  %v1579 = vadd.f32 %v1319, %v1578
  %1580 = vmatmul.f32.gmra.mxu0 %v73
  %v1581 = vpop.f32.mrf.mxu0
  %v1582 = vadd.f32 %v1322, %v1581
  %1583 = vmatmul.f32.gmra.mxu0 %v78
  %v1584 = vpop.f32.mrf.mxu0
  %v1585 = vadd.f32 %v1325, %v1584
  %1586 = vmatmul.f32.gmra.mxu0 %v83
  %v1587 = vpop.f32.mrf.mxu0
  %v1588 = vadd.f32 %v1328, %v1587
  %1589 = vmatmul.f32.gmra.mxu0 %v88
  %v1590 = vpop.f32.mrf.mxu0
  %v1591 = vadd.f32 %v1331, %v1590
  %1592 = vmatmul.f32.gmra.mxu0 %v93
  %v1593 = vpop.f32.mrf.mxu0
  %v1594 = vadd.f32 %v1334, %v1593
  %1595 = vmatmul.f32.gmra.mxu0 %v98
  %v1596 = vpop.f32.mrf.mxu0
  %v1597 = vadd.f32 %v1337, %v1596
  %1598 = vmatmul.f32.gmra.mxu0 %v103
  %v1599 = vpop.f32.mrf.mxu0
  %v1600 = vadd.f32 %v1340, %v1599
  %1601 = vmatmul.f32.gmra.mxu0 %v108
  %v1602 = vpop.f32.mrf.mxu0
  %v1603 = vadd.f32 %v1343, %v1602
  %1604 = vmatmul.f32.gmra.mxu0 %v113
  %v1605 = vpop.f32.mrf.mxu0
  %v1606 = vadd.f32 %v1346, %v1605
  %1607 = vmatmul.f32.gmra.mxu0 %v118
  %v1608 = vpop.f32.mrf.mxu0
  %v1609 = vadd.f32 %v1349, %v1608
  %1610 = vmatmul.f32.gmra.mxu0 %v123
  %v1611 = vpop.f32.mrf.mxu0
  %v1612 = vadd.f32 %v1352, %v1611
  %1613 = vmatmul.f32.gmra.mxu0 %v128
  %v1614 = vpop.f32.mrf.mxu0
  %v1615 = vadd.f32 %v1355, %v1614
  %1616 = vmatmul.f32.gmra.mxu0 %v133
  %v1617 = vpop.f32.mrf.mxu0
  %v1618 = vadd.f32 %v1358, %v1617
  %1619 = vmatmul.f32.gmra.mxu0 %v138
  %v1620 = vpop.f32.mrf.mxu0
  %v1621 = vadd.f32 %v1361, %v1620
  %1622 = vmatmul.f32.gmra.mxu0 %v143
  %v1623 = vpop.f32.mrf.mxu0
  %v1624 = vadd.f32 %v1364, %v1623
  %1625 = vmatmul.f32.gmra.mxu0 %v148
  %v1626 = vpop.f32.mrf.mxu0
  %v1627 = vadd.f32 %v1367, %v1626
  %1628 = vmatmul.f32.gmra.mxu0 %v153
  %v1629 = vpop.f32.mrf.mxu0
  %v1630 = vadd.f32 %v1370, %v1629
  %1631 = vmatmul.f32.gmra.mxu0 %v158
  %v1632 = vpop.f32.mrf.mxu0
  %v1633 = vadd.f32 %v1373, %v1632
  %1634 = vmatmul.f32.gmra.mxu0 %v163
  %v1635 = vpop.f32.mrf.mxu0
  %v1636 = vadd.f32 %v1376, %v1635
  %1637 = vmatmul.f32.gmra.mxu0 %v168
  %v1638 = vpop.f32.mrf.mxu0
  %v1639 = vadd.f32 %v1379, %v1638
  %1640 = vmatmul.f32.gmra.mxu0 %v173
  %v1641 = vpop.f32.mrf.mxu0
  %v1642 = vadd.f32 %v1382, %v1641
  %1643 = vmatmul.f32.gmra.mxu0 %v178
  %v1644 = vpop.f32.mrf.mxu0
  %v1645 = vadd.f32 %v1385, %v1644
  %1646 = vmatmul.f32.gmra.mxu0 %v183
  %v1647 = vpop.f32.mrf.mxu0
  %v1648 = vadd.f32 %v1388, %v1647
  %1649 = vmatmul.f32.gmra.mxu0 %v188
  %v1650 = vpop.f32.mrf.mxu0
  %v1651 = vadd.f32 %v1391, %v1650
  %1652 = vmatmul.f32.gmra.mxu0 %v193
  %v1653 = vpop.f32.mrf.mxu0
  %v1654 = vadd.f32 %v1394, %v1653
  %1655 = vmatmul.f32.gmra.mxu0 %v198
  %v1656 = vpop.f32.mrf.mxu0
  %v1657 = vadd.f32 %v1397, %v1656
  %1658 = vmatmul.f32.gmra.mxu0 %v203
  %v1659 = vpop.f32.mrf.mxu0
  %v1660 = vadd.f32 %v1400, %v1659
  %1661 = vmatmul.f32.gmra.mxu0 %v208
  %v1662 = vpop.f32.mrf.mxu0
  %v1663 = vadd.f32 %v1403, %v1662
  %1664 = vmatmul.f32.gmra.mxu0 %v213
  %v1665 = vpop.f32.mrf.mxu0
  %v1666 = vadd.f32 %v1406, %v1665
  %1667 = vmatmul.f32.gmra.mxu0 %v218
  %v1668 = vpop.f32.mrf.mxu0
  %v1669 = vadd.f32 %v1409, %v1668
  %1670 = vmatmul.f32.gmra.mxu0 %v223
  %v1671 = vpop.f32.mrf.mxu0
  %v1672 = vadd.f32 %v1412, %v1671
  %1673 = vmatmul.f32.gmra.mxu0 %v228
  %v1674 = vpop.f32.mrf.mxu0
  %v1675 = vadd.f32 %v1415, %v1674
  %1676 = vmatmul.f32.gmra.mxu0 %v233
  %v1677 = vpop.f32.mrf.mxu0
  %v1678 = vadd.f32 %v1418, %v1677
  %1679 = vmatmul.f32.gmra.mxu0 %v238
  %v1680 = vpop.f32.mrf.mxu0
  %v1681 = vadd.f32 %v1421, %v1680
  %1682 = vmatmul.f32.gmra.mxu0 %v243
  %v1683 = vpop.f32.mrf.mxu0
  %v1684 = vadd.f32 %v1424, %v1683
  %1685 = vmatmul.f32.gmra.mxu0 %v248
  %v1686 = vpop.f32.mrf.mxu0
  %v1687 = vadd.f32 %v1427, %v1686
  %1688 = vmatmul.f32.gmra.mxu0 %v253
  %v1689 = vpop.f32.mrf.mxu0
  %v1690 = vadd.f32 %v1430, %v1689
  %1691 = vmatmul.f32.gmra.mxu0 %v258
  %v1692 = vpop.f32.mrf.mxu0
  %v1693 = vadd.f32 %v1433, %v1692
  %1694 = vmatmul.f32.gmra.mxu0 %v263
  %v1695 = vpop.f32.mrf.mxu0
  %v1696 = vadd.f32 %v1436, %v1695
  %1697 = vmatmul.f32.gmra.mxu0 %v268
  %v1698 = vpop.f32.mrf.mxu0
  %v1699 = vadd.f32 %v1439, %v1698
  %1700 = vmatmul.f32.gmra.mxu0 %v273
  %v1701 = vpop.f32.mrf.mxu0
  %v1702 = vadd.f32 %v1442, %v1701
  %1703 = vmatmul.f32.gmra.mxu0 %v278
  %v1704 = vpop.f32.mrf.mxu0
  %v1705 = vadd.f32 %v1445, %v1704
  %1706 = vmatmul.f32.gmra.mxu0 %v283
  %v1707 = vpop.f32.mrf.mxu0
  %v1708 = vadd.f32 %v1448, %v1707
  %1709 = vmatmul.f32.gmra.mxu0 %v288
  %v1710 = vpop.f32.mrf.mxu0
  %v1711 = vadd.f32 %v1451, %v1710
  %1712 = vmatmul.f32.gmra.mxu0 %v293
  %v1713 = vpop.f32.mrf.mxu0
  %v1714 = vadd.f32 %v1454, %v1713
  %1715 = vmatmul.f32.gmra.mxu0 %v298
  %v1716 = vpop.f32.mrf.mxu0
  %v1717 = vadd.f32 %v1457, %v1716
  %1718 = vmatmul.f32.gmra.mxu0 %v303
  %v1719 = vpop.f32.mrf.mxu0
  %v1720 = vadd.f32 %v1460, %v1719
  %1721 = vmatmul.f32.gmra.mxu0 %v308
  %v1722 = vpop.f32.mrf.mxu0
  %v1723 = vadd.f32 %v1463, %v1722
  %1724 = vmatmul.f32.gmra.mxu0 %v313
  %v1725 = vpop.f32.mrf.mxu0
  %v1726 = vadd.f32 %v1466, %v1725
  %1727 = vmatmul.f32.gmra.mxu0 %v318
  %v1728 = vpop.f32.mrf.mxu0
  %v1729 = vadd.f32 %v1469, %v1728
  %1730 = vmatmul.f32.gmra.mxu0 %v323
  %v1731 = vpop.f32.mrf.mxu0
  %v1732 = vadd.f32 %v1472, %v1731
  %1733 = vmatmul.f32.gmra.mxu0 %v328
  %v1734 = vpop.f32.mrf.mxu0
  %v1735 = vadd.f32 %v1475, %v1734
  %1736 = vmatmul.f32.gmra.mxu0 %v333
  %v1737 = vpop.f32.mrf.mxu0
  %v1738 = vadd.f32 %v1478, %v1737
  %1739 = vmatmul.f32.gmra.mxu0 %v338
  %v1740 = vpop.f32.mrf.mxu0
  %v1741 = vadd.f32 %v1481, %v1740
  %1742 = vmatmul.f32.gmra.mxu0 %v343
  %v1743 = vpop.f32.mrf.mxu0
  %v1744 = vadd.f32 %v1484, %v1743
  %1745 = vmatmul.f32.gmra.mxu0 %v348
  %v1746 = vpop.f32.mrf.mxu0
  %v1747 = vadd.f32 %v1487, %v1746
  %1748 = vmatmul.f32.gmra.mxu0 %v353
  %v1749 = vpop.f32.mrf.mxu0
  %v1750 = vadd.f32 %v1490, %v1749
  %1751 = vmatmul.f32.gmra.mxu0 %v358
  %v1752 = vpop.f32.mrf.mxu0
  %v1753 = vadd.f32 %v1493, %v1752
  %1754 = vmatmul.f32.gmra.mxu0 %v363
  %v1755 = vpop.f32.mrf.mxu0
  %v1756 = vadd.f32 %v1496, %v1755
  %1757 = vmatmul.f32.gmra.mxu0 %v368
  %v1758 = vpop.f32.mrf.mxu0
  %v1759 = vadd.f32 %v1499, %v1758
  %1760 = vmatmul.f32.gmra.mxu0 %v373
  %v1761 = vpop.f32.mrf.mxu0
  %v1762 = vadd.f32 %v1502, %v1761
  %1763 = vmatmul.f32.gmra.mxu0 %v378
  %v1764 = vpop.f32.mrf.mxu0
  %v1765 = vadd.f32 %v1505, %v1764
  %1766 = vmatmul.f32.gmra.mxu0 %v383
  %v1767 = vpop.f32.mrf.mxu0
  %v1768 = vadd.f32 %v1508, %v1767
  %1769 = vmatmul.f32.gmra.mxu0 %v388
  %v1770 = vpop.f32.mrf.mxu0
  %v1771 = vadd.f32 %v1511, %v1770
  %1772 = vmatmul.f32.gmra.mxu0 %v393
  %v1773 = vpop.f32.mrf.mxu0
  %v1774 = vadd.f32 %v1514, %v1773
  %1775 = vmatmul.f32.gmra.mxu0 %v398
  %v1776 = vpop.f32.mrf.mxu0
  %v1777 = vadd.f32 %v1517, %v1776
  %1778 = vmatmul.f32.gmra.mxu0 %v403
  %v1779 = vpop.f32.mrf.mxu0
  %v1780 = vadd.f32 %v1520, %v1779
  %1781 = vmatmul.f32.gmra.mxu0 %v408
  %v1782 = vpop.f32.mrf.mxu0
  %v1783 = vadd.f32 %v1523, %v1782
  %1784 = vmatmul.f32.gmra.mxu0 %v413
  %v1785 = vpop.f32.mrf.mxu0
  %v1786 = vadd.f32 %v1526, %v1785
  %1787 = vmatmul.f32.gmra.mxu0 %v418
  %v1788 = vpop.f32.mrf.mxu0
  %v1789 = vadd.f32 %v1529, %v1788
  %1790 = vmatmul.f32.gmra.mxu0 %v423
  %v1791 = vpop.f32.mrf.mxu0
  %v1792 = vadd.f32 %v1532, %v1791
  %1793 = vmatmul.f32.gmra.mxu0 %v428
  %v1794 = vpop.f32.mrf.mxu0
  %v1795 = vadd.f32 %v1535, %v1794
  %1796 = vmatmul.f32.gmra.mxu0 %v433
  %v1797 = vpop.f32.mrf.mxu0
  %v1798 = vadd.f32 %v1538, %v1797
  %1799 = vmatmul.f32.gmra.mxu0 %v438
  %v1800 = vpop.f32.mrf.mxu0
  %v1801 = vadd.f32 %v1541, %v1800
  %1802 = vdwg.mxu0
  %1803 = vmatpush.msra.mxu0 0.0
  %1804 = vmatpush.msra.mxu0 0.0
  %1805 = vmatpush.msra.mxu0 0.0
  %1806 = vmatpush.msra.mxu0 0.0
  %1807 = vmatpush.msra.mxu0 0.0
  %1808 = vmatpush.msra.mxu0 %v514
  %1809 = vmatpush.msra.mxu0 %v513
  %1810 = vmatpush.msra.mxu0 %v512
  %1811 = vmatpush.msra.mxu0 %v511
  %1812 = vmatpush.msra.mxu0 %v510
  %1813 = vmatpush.msra.mxu0 %v509
  %1814 = vmatpush.msra.mxu0 %v508
  %1815 = vmatpush.msra.mxu0 %v507
  %1816 = vmatpush.msra.mxu0 %v506
  %1817 = vmatpush.msra.mxu0 %v505
  %1818 = vmatpush.msra.mxu0 %v504
  %1819 = vmatmul.f32.gmra.mxu0 %v521
  %v1820 = vpop.f32.mrf.mxu0
  %v1821 = vadd.f32 %v1561, %v1820
  %1822 = vmatmul.f32.gmra.mxu0 %v524
  %v1823 = vpop.f32.mrf.mxu0
  %v1824 = vadd.f32 %v1564, %v1823
  %1825 = vmatmul.f32.gmra.mxu0 %v527
  %v1826 = vpop.f32.mrf.mxu0
  %v1827 = vadd.f32 %v1567, %v1826
  %1828 = vmatmul.f32.gmra.mxu0 %v530
  %v1829 = vpop.f32.mrf.mxu0
  %v1830 = vadd.f32 %v1570, %v1829
  %1831 = vmatmul.f32.gmra.mxu0 %v533
  %v1832 = vpop.f32.mrf.mxu0
  %v1833 = vadd.f32 %v1573, %v1832
  %1834 = vmatmul.f32.gmra.mxu0 %v536
  %v1835 = vpop.f32.mrf.mxu0
  %v1836 = vadd.f32 %v1576, %v1835
  %1837 = vmatmul.f32.gmra.mxu0 %v539
  %v1838 = vpop.f32.mrf.mxu0
  %v1839 = vadd.f32 %v1579, %v1838
  %1840 = vmatmul.f32.gmra.mxu0 %v542
  %v1841 = vpop.f32.mrf.mxu0
  %v1842 = vadd.f32 %v1582, %v1841
  %1843 = vmatmul.f32.gmra.mxu0 %v545
  %v1844 = vpop.f32.mrf.mxu0
  %v1845 = vadd.f32 %v1585, %v1844
  %1846 = vmatmul.f32.gmra.mxu0 %v548
  %v1847 = vpop.f32.mrf.mxu0
  %v1848 = vadd.f32 %v1588, %v1847
  %1849 = vmatmul.f32.gmra.mxu0 %v551
  %v1850 = vpop.f32.mrf.mxu0
  %v1851 = vadd.f32 %v1591, %v1850
  %1852 = vmatmul.f32.gmra.mxu0 %v554
  %v1853 = vpop.f32.mrf.mxu0
  %v1854 = vadd.f32 %v1594, %v1853
  %1855 = vmatmul.f32.gmra.mxu0 %v557
  %v1856 = vpop.f32.mrf.mxu0
  %v1857 = vadd.f32 %v1597, %v1856
  %1858 = vmatmul.f32.gmra.mxu0 %v560
  %v1859 = vpop.f32.mrf.mxu0
  %v1860 = vadd.f32 %v1600, %v1859
  %1861 = vmatmul.f32.gmra.mxu0 %v563
  %v1862 = vpop.f32.mrf.mxu0
  %v1863 = vadd.f32 %v1603, %v1862
  %1864 = vmatmul.f32.gmra.mxu0 %v566
  %v1865 = vpop.f32.mrf.mxu0
  %v1866 = vadd.f32 %v1606, %v1865
  %1867 = vmatmul.f32.gmra.mxu0 %v569
  %v1868 = vpop.f32.mrf.mxu0
  %v1869 = vadd.f32 %v1609, %v1868
  %1870 = vmatmul.f32.gmra.mxu0 %v572
  %v1871 = vpop.f32.mrf.mxu0
  %v1872 = vadd.f32 %v1612, %v1871
  %1873 = vmatmul.f32.gmra.mxu0 %v575
  %v1874 = vpop.f32.mrf.mxu0
  %v1875 = vadd.f32 %v1615, %v1874
  %1876 = vmatmul.f32.gmra.mxu0 %v578
  %v1877 = vpop.f32.mrf.mxu0
  %v1878 = vadd.f32 %v1618, %v1877
  %1879 = vmatmul.f32.gmra.mxu0 %v581
  %v1880 = vpop.f32.mrf.mxu0
  %v1881 = vadd.f32 %v1621, %v1880
  %1882 = vmatmul.f32.gmra.mxu0 %v584
  %v1883 = vpop.f32.mrf.mxu0
  %v1884 = vadd.f32 %v1624, %v1883
  %1885 = vmatmul.f32.gmra.mxu0 %v587
  %v1886 = vpop.f32.mrf.mxu0
  %v1887 = vadd.f32 %v1627, %v1886
  %1888 = vmatmul.f32.gmra.mxu0 %v590
  %v1889 = vpop.f32.mrf.mxu0
  %v1890 = vadd.f32 %v1630, %v1889
  %1891 = vmatmul.f32.gmra.mxu0 %v593
  %v1892 = vpop.f32.mrf.mxu0
  %v1893 = vadd.f32 %v1633, %v1892
  %1894 = vmatmul.f32.gmra.mxu0 %v596
  %v1895 = vpop.f32.mrf.mxu0
  %v1896 = vadd.f32 %v1636, %v1895
  %1897 = vmatmul.f32.gmra.mxu0 %v599
  %v1898 = vpop.f32.mrf.mxu0
  %v1899 = vadd.f32 %v1639, %v1898
  %1900 = vmatmul.f32.gmra.mxu0 %v602
  %v1901 = vpop.f32.mrf.mxu0
  %v1902 = vadd.f32 %v1642, %v1901
  %1903 = vmatmul.f32.gmra.mxu0 %v605
  %v1904 = vpop.f32.mrf.mxu0
  %v1905 = vadd.f32 %v1645, %v1904
  %1906 = vmatmul.f32.gmra.mxu0 %v608
  %v1907 = vpop.f32.mrf.mxu0
  %v1908 = vadd.f32 %v1648, %v1907
  %1909 = vmatmul.f32.gmra.mxu0 %v611
  %v1910 = vpop.f32.mrf.mxu0
  %v1911 = vadd.f32 %v1651, %v1910
  %1912 = vmatmul.f32.gmra.mxu0 %v614
  %v1913 = vpop.f32.mrf.mxu0
  %v1914 = vadd.f32 %v1654, %v1913
  %1915 = vmatmul.f32.gmra.mxu0 %v617
  %v1916 = vpop.f32.mrf.mxu0
  %v1917 = vadd.f32 %v1657, %v1916
  %1918 = vmatmul.f32.gmra.mxu0 %v620
  %v1919 = vpop.f32.mrf.mxu0
  %v1920 = vadd.f32 %v1660, %v1919
  %1921 = vmatmul.f32.gmra.mxu0 %v623
  %v1922 = vpop.f32.mrf.mxu0
  %v1923 = vadd.f32 %v1663, %v1922
  %1924 = vmatmul.f32.gmra.mxu0 %v626
  %v1925 = vpop.f32.mrf.mxu0
  %v1926 = vadd.f32 %v1666, %v1925
  %1927 = vmatmul.f32.gmra.mxu0 %v629
  %v1928 = vpop.f32.mrf.mxu0
  %v1929 = vadd.f32 %v1669, %v1928
  %1930 = vmatmul.f32.gmra.mxu0 %v632
  %v1931 = vpop.f32.mrf.mxu0
  %v1932 = vadd.f32 %v1672, %v1931
  %1933 = vmatmul.f32.gmra.mxu0 %v635
  %v1934 = vpop.f32.mrf.mxu0
  %v1935 = vadd.f32 %v1675, %v1934
  %1936 = vmatmul.f32.gmra.mxu0 %v638
  %v1937 = vpop.f32.mrf.mxu0
  %v1938 = vadd.f32 %v1678, %v1937
  %1939 = vmatmul.f32.gmra.mxu0 %v641
  %v1940 = vpop.f32.mrf.mxu0
  %v1941 = vadd.f32 %v1681, %v1940
  %1942 = vmatmul.f32.gmra.mxu0 %v644
  %v1943 = vpop.f32.mrf.mxu0
  %v1944 = vadd.f32 %v1684, %v1943
  %1945 = vmatmul.f32.gmra.mxu0 %v647
  %v1946 = vpop.f32.mrf.mxu0
  %v1947 = vadd.f32 %v1687, %v1946
  %1948 = vmatmul.f32.gmra.mxu0 %v650
  %v1949 = vpop.f32.mrf.mxu0
  %v1950 = vadd.f32 %v1690, %v1949
  %1951 = vmatmul.f32.gmra.mxu0 %v653
  %v1952 = vpop.f32.mrf.mxu0
  %v1953 = vadd.f32 %v1693, %v1952
  %1954 = vmatmul.f32.gmra.mxu0 %v656
  %v1955 = vpop.f32.mrf.mxu0
  %v1956 = vadd.f32 %v1696, %v1955
  %1957 = vmatmul.f32.gmra.mxu0 %v659
  %v1958 = vpop.f32.mrf.mxu0
  %v1959 = vadd.f32 %v1699, %v1958
  %1960 = vmatmul.f32.gmra.mxu0 %v662
  %v1961 = vpop.f32.mrf.mxu0
  %v1962 = vadd.f32 %v1702, %v1961
  %1963 = vmatmul.f32.gmra.mxu0 %v665
  %v1964 = vpop.f32.mrf.mxu0
  %v1965 = vadd.f32 %v1705, %v1964
  %1966 = vmatmul.f32.gmra.mxu0 %v668
  %v1967 = vpop.f32.mrf.mxu0
  %v1968 = vadd.f32 %v1708, %v1967
  %1969 = vmatmul.f32.gmra.mxu0 %v671
  %v1970 = vpop.f32.mrf.mxu0
  %v1971 = vadd.f32 %v1711, %v1970
  %1972 = vmatmul.f32.gmra.mxu0 %v674
  %v1973 = vpop.f32.mrf.mxu0
  %v1974 = vadd.f32 %v1714, %v1973
  %1975 = vmatmul.f32.gmra.mxu0 %v677
  %v1976 = vpop.f32.mrf.mxu0
  %v1977 = vadd.f32 %v1717, %v1976
  %1978 = vmatmul.f32.gmra.mxu0 %v680
  %v1979 = vpop.f32.mrf.mxu0
  %v1980 = vadd.f32 %v1720, %v1979
  %1981 = vmatmul.f32.gmra.mxu0 %v683
  %v1982 = vpop.f32.mrf.mxu0
  %v1983 = vadd.f32 %v1723, %v1982
  %1984 = vmatmul.f32.gmra.mxu0 %v686
  %v1985 = vpop.f32.mrf.mxu0
  %v1986 = vadd.f32 %v1726, %v1985
  %1987 = vmatmul.f32.gmra.mxu0 %v689
  %v1988 = vpop.f32.mrf.mxu0
  %v1989 = vadd.f32 %v1729, %v1988
  %1990 = vmatmul.f32.gmra.mxu0 %v692
  %v1991 = vpop.f32.mrf.mxu0
  %v1992 = vadd.f32 %v1732, %v1991
  %1993 = vmatmul.f32.gmra.mxu0 %v695
  %v1994 = vpop.f32.mrf.mxu0
  %v1995 = vadd.f32 %v1735, %v1994
  %1996 = vmatmul.f32.gmra.mxu0 %v698
  %v1997 = vpop.f32.mrf.mxu0
  %v1998 = vadd.f32 %v1738, %v1997
  %1999 = vmatmul.f32.gmra.mxu0 %v701
  %v2000 = vpop.f32.mrf.mxu0
  %v2001 = vadd.f32 %v1741, %v2000
  %2002 = vmatmul.f32.gmra.mxu0 %v704
  %v2003 = vpop.f32.mrf.mxu0
  %v2004 = vadd.f32 %v1744, %v2003
  %2005 = vmatmul.f32.gmra.mxu0 %v707
  %v2006 = vpop.f32.mrf.mxu0
  %v2007 = vadd.f32 %v1747, %v2006
  %2008 = vmatmul.f32.gmra.mxu0 %v710
  %v2009 = vpop.f32.mrf.mxu0
  %v2010 = vadd.f32 %v1750, %v2009
  %2011 = vmatmul.f32.gmra.mxu0 %v713
  %v2012 = vpop.f32.mrf.mxu0
  %v2013 = vadd.f32 %v1753, %v2012
  %2014 = vmatmul.f32.gmra.mxu0 %v716
  %v2015 = vpop.f32.mrf.mxu0
  %v2016 = vadd.f32 %v1756, %v2015
  %2017 = vmatmul.f32.gmra.mxu0 %v719
  %v2018 = vpop.f32.mrf.mxu0
  %v2019 = vadd.f32 %v1759, %v2018
  %2020 = vmatmul.f32.gmra.mxu0 %v722
  %v2021 = vpop.f32.mrf.mxu0
  %v2022 = vadd.f32 %v1762, %v2021
  %2023 = vmatmul.f32.gmra.mxu0 %v725
  %v2024 = vpop.f32.mrf.mxu0
  %v2025 = vadd.f32 %v1765, %v2024
  %2026 = vmatmul.f32.gmra.mxu0 %v728
  %v2027 = vpop.f32.mrf.mxu0
  %v2028 = vadd.f32 %v1768, %v2027
  %2029 = vmatmul.f32.gmra.mxu0 %v731
  %v2030 = vpop.f32.mrf.mxu0
  %v2031 = vadd.f32 %v1771, %v2030
  %2032 = vmatmul.f32.gmra.mxu0 %v734
  %v2033 = vpop.f32.mrf.mxu0
  %v2034 = vadd.f32 %v1774, %v2033
  %2035 = vmatmul.f32.gmra.mxu0 %v737
  %v2036 = vpop.f32.mrf.mxu0
  %v2037 = vadd.f32 %v1777, %v2036
  %2038 = vmatmul.f32.gmra.mxu0 %v740
  %v2039 = vpop.f32.mrf.mxu0
  %v2040 = vadd.f32 %v1780, %v2039
  %2041 = vmatmul.f32.gmra.mxu0 %v743
  %v2042 = vpop.f32.mrf.mxu0
  %v2043 = vadd.f32 %v1783, %v2042
  %2044 = vmatmul.f32.gmra.mxu0 %v746
  %v2045 = vpop.f32.mrf.mxu0
  %v2046 = vadd.f32 %v1786, %v2045
  %2047 = vmatmul.f32.gmra.mxu0 %v749
  %v2048 = vpop.f32.mrf.mxu0
  %v2049 = vadd.f32 %v1789, %v2048
  %2050 = vmatmul.f32.gmra.mxu0 %v752
  %v2051 = vpop.f32.mrf.mxu0
  %v2052 = vadd.f32 %v1792, %v2051
  %2053 = vmatmul.f32.gmra.mxu0 %v755
  %v2054 = vpop.f32.mrf.mxu0
  %v2055 = vadd.f32 %v1795, %v2054
  %2056 = vmatmul.f32.gmra.mxu0 %v758
  %v2057 = vpop.f32.mrf.mxu0
  %v2058 = vadd.f32 %v1798, %v2057
  %2059 = vmatmul.f32.gmra.mxu0 %v761
  %v2060 = vpop.f32.mrf.mxu0
  %v2061 = vadd.f32 %v1801, %v2060
  %2062 = vdwg.mxu0
  %v2063 = vmax.f32 %v1821, 0.0
  %v2064 = vmax.f32 %v1824, 0.0
  %v2065 = vmax.f32 %v1827, 0.0
  %v2066 = vmax.f32 %v1830, 0.0
  %v2067 = vmax.f32 %v1833, 0.0
  %v2068 = vmax.f32 %v1836, 0.0
  %v2069 = vmax.f32 %v1839, 0.0
  %v2070 = vmax.f32 %v1842, 0.0
  %v2071 = vmax.f32 %v1845, 0.0
  %v2072 = vmax.f32 %v1848, 0.0
  %v2073 = vmax.f32 %v1851, 0.0
  %v2074 = vmax.f32 %v1854, 0.0
  %v2075 = vmax.f32 %v1857, 0.0
  %v2076 = vmax.f32 %v1860, 0.0
  %v2077 = vmax.f32 %v1863, 0.0
  %v2078 = vmax.f32 %v1866, 0.0
  %v2079 = vmax.f32 %v1869, 0.0
  %v2080 = vmax.f32 %v1872, 0.0
  %v2081 = vmax.f32 %v1875, 0.0
  %v2082 = vmax.f32 %v1878, 0.0
  %v2083 = vmax.f32 %v1881, 0.0
  %v2084 = vmax.f32 %v1884, 0.0
  %v2085 = vmax.f32 %v1887, 0.0
  %v2086 = vmax.f32 %v1890, 0.0
  %v2087 = vmax.f32 %v1893, 0.0
  %v2088 = vmax.f32 %v1896, 0.0
  %v2089 = vmax.f32 %v1899, 0.0
  %v2090 = vmax.f32 %v1902, 0.0
  %v2091 = vmax.f32 %v1905, 0.0
  %v2092 = vmax.f32 %v1908, 0.0
  %v2093 = vmax.f32 %v1911, 0.0
  %v2094 = vmax.f32 %v1914, 0.0
  %v2095 = vmax.f32 %v1917, 0.0
  %v2096 = vmax.f32 %v1920, 0.0
  %v2097 = vmax.f32 %v1923, 0.0
  %v2098 = vmax.f32 %v1926, 0.0
  %v2099 = vmax.f32 %v1929, 0.0
  %v2100 = vmax.f32 %v1932, 0.0
  %v2101 = vmax.f32 %v1935, 0.0
  %v2102 = vmax.f32 %v1938, 0.0
  %v2103 = vmax.f32 %v1941, 0.0
  %v2104 = vmax.f32 %v1944, 0.0
  %v2105 = vmax.f32 %v1947, 0.0
  %v2106 = vmax.f32 %v1950, 0.0
  %v2107 = vmax.f32 %v1953, 0.0
  %v2108 = vmax.f32 %v1956, 0.0
  %v2109 = vmax.f32 %v1959, 0.0
  %v2110 = vmax.f32 %v1962, 0.0
  %v2111 = vmax.f32 %v1965, 0.0
  %v2112 = vmax.f32 %v1968, 0.0
  %v2113 = vmax.f32 %v1971, 0.0
  %v2114 = vmax.f32 %v1974, 0.0
  %v2115 = vmax.f32 %v1977, 0.0
  %v2116 = vmax.f32 %v1980, 0.0
  %v2117 = vmax.f32 %v1983, 0.0
  %v2118 = vmax.f32 %v1986, 0.0
  %v2119 = vmax.f32 %v1989, 0.0
  %v2120 = vmax.f32 %v1992, 0.0
  %v2121 = vmax.f32 %v1995, 0.0
  %v2122 = vmax.f32 %v1998, 0.0
  %v2123 = vmax.f32 %v2001, 0.0
  %v2124 = vmax.f32 %v2004, 0.0
  %v2125 = vmax.f32 %v2007, 0.0
  %v2126 = vmax.f32 %v2010, 0.0
  %v2127 = vmax.f32 %v2013, 0.0
  %v2128 = vmax.f32 %v2016, 0.0
  %v2129 = vmax.f32 %v2019, 0.0
  %v2130 = vmax.f32 %v2022, 0.0
  %v2131 = vmax.f32 %v2025, 0.0
  %v2132 = vmax.f32 %v2028, 0.0
  %v2133 = vmax.f32 %v2031, 0.0
  %v2134 = vmax.f32 %v2034, 0.0
  %v2135 = vmax.f32 %v2037, 0.0
  %v2136 = vmax.f32 %v2040, 0.0
  %v2137 = vmax.f32 %v2043, 0.0
  %v2138 = vmax.f32 %v2046, 0.0
  %v2139 = vmax.f32 %v2049, 0.0
  %v2140 = vmax.f32 %v2052, 0.0
  %v2141 = vmax.f32 %v2055, 0.0
  %v2142 = vmax.f32 %v2058, 0.0
  %v2143 = vmax.f32 %v2061, 0.0
  %vm2144 = vcmask 293888
  %2145 = vst.msk [vmem:[%s9] sm:$0xff] %vm2144, %v2063
  %2146 = vst.msk [vmem:[%s9 + $0x8] sm:$0xff] %vm2144, %v2064
  %2147 = vst.msk [vmem:[%s9 + $0x10] sm:$0xff] %vm2144, %v2065
  %2148 = vst.msk [vmem:[%s9 + $0x18] sm:$0xff] %vm2144, %v2066
  %2149 = vst.msk [vmem:[%s9 + $0x20] sm:$0xff] %vm2144, %v2067
  %2150 = vst.msk [vmem:[%s9 + $0x28] sm:$0xff] %vm2144, %v2068
  %2151 = vst.msk [vmem:[%s9 + $0x30] sm:$0xff] %vm2144, %v2069
  %2152 = vst.msk [vmem:[%s9 + $0x38] sm:$0xff] %vm2144, %v2070
  %2153 = vst.msk [vmem:[%s9 + $0x40] sm:$0xff] %vm2144, %v2071
  %2154 = vst.msk [vmem:[%s9 + $0x48] sm:$0xff] %vm2144, %v2072
  %2155 = vst.msk [vmem:[%s9 + $0x50] sm:$0xff] %vm2144, %v2073
  %2156 = vst.msk [vmem:[%s9 + $0x58] sm:$0xff] %vm2144, %v2074
  %2157 = vst.msk [vmem:[%s9 + $0x60] sm:$0xff] %vm2144, %v2075
  %2158 = vst.msk [vmem:[%s9 + $0x68] sm:$0xff] %vm2144, %v2076
  %2159 = vst.msk [vmem:[%s9 + $0x70] sm:$0xff] %vm2144, %v2077
  %2160 = vst.msk [vmem:[%s9 + $0x78] sm:$0xff] %vm2144, %v2078
  %2161 = vst.msk [vmem:[%s9 + $0x80] sm:$0xff] %vm2144, %v2079
  %2162 = vst.msk [vmem:[%s9 + $0x88] sm:$0xff] %vm2144, %v2080
  %2163 = vst.msk [vmem:[%s9 + $0x90] sm:$0xff] %vm2144, %v2081
  %2164 = vst.msk [vmem:[%s9 + $0x98] sm:$0xff] %vm2144, %v2082
  %2165 = vst.msk [vmem:[%s9 + $0xa0] sm:$0xff] %vm2144, %v2083
  %2166 = vst.msk [vmem:[%s9 + $0xa8] sm:$0xff] %vm2144, %v2084
  %2167 = vst.msk [vmem:[%s9 + $0xb0] sm:$0xff] %vm2144, %v2085
  %2168 = vst.msk [vmem:[%s9 + $0xb8] sm:$0xff] %vm2144, %v2086
  %2169 = vst.msk [vmem:[%s9 + $0xc0] sm:$0xff] %vm2144, %v2087
  %2170 = vst.msk [vmem:[%s9 + $0xc8] sm:$0xff] %vm2144, %v2088
  %2171 = vst.msk [vmem:[%s9 + $0xd0] sm:$0xff] %vm2144, %v2089
  %2172 = vst.msk [vmem:[%s9 + $0xd8] sm:$0xff] %vm2144, %v2090
  %2173 = vst.msk [vmem:[%s9 + $0xe0] sm:$0xff] %vm2144, %v2091
  %2174 = vst.msk [vmem:[%s9 + $0xe8] sm:$0xff] %vm2144, %v2092
  %2175 = vst.msk [vmem:[%s9 + $0xf0] sm:$0xff] %vm2144, %v2093
  %2176 = vst.msk [vmem:[%s9 + $0xf8] sm:$0xff] %vm2144, %v2094
  %2177 = vst.msk [vmem:[%s9 + $0x100] sm:$0xff] %vm2144, %v2095
  %2178 = vst.msk [vmem:[%s9 + $0x108] sm:$0xff] %vm2144, %v2096
  %2179 = vst.msk [vmem:[%s9 + $0x110] sm:$0xff] %vm2144, %v2097
  %2180 = vst.msk [vmem:[%s9 + $0x118] sm:$0xff] %vm2144, %v2098
  %2181 = vst.msk [vmem:[%s9 + $0x120] sm:$0xff] %vm2144, %v2099
  %2182 = vst.msk [vmem:[%s9 + $0x128] sm:$0xff] %vm2144, %v2100
  %2183 = vst.msk [vmem:[%s9 + $0x130] sm:$0xff] %vm2144, %v2101
  %2184 = vst.msk [vmem:[%s9 + $0x138] sm:$0xff] %vm2144, %v2102
  %2185 = vst.msk [vmem:[%s9 + $0x140] sm:$0xff] %vm2144, %v2103
  %2186 = vst.msk [vmem:[%s9 + $0x148] sm:$0xff] %vm2144, %v2104
  %2187 = vst.msk [vmem:[%s9 + $0x150] sm:$0xff] %vm2144, %v2105
  %2188 = vst.msk [vmem:[%s9 + $0x158] sm:$0xff] %vm2144, %v2106
  %2189 = vst.msk [vmem:[%s9 + $0x160] sm:$0xff] %vm2144, %v2107
  %2190 = vst.msk [vmem:[%s9 + $0x168] sm:$0xff] %vm2144, %v2108
  %2191 = vst.msk [vmem:[%s9 + $0x170] sm:$0xff] %vm2144, %v2109
  %2192 = vst.msk [vmem:[%s9 + $0x178] sm:$0xff] %vm2144, %v2110
  %2193 = vst.msk [vmem:[%s9 + $0x180] sm:$0xff] %vm2144, %v2111
  %2194 = vst.msk [vmem:[%s9 + $0x188] sm:$0xff] %vm2144, %v2112
  %2195 = vst.msk [vmem:[%s9 + $0x190] sm:$0xff] %vm2144, %v2113
  %2196 = vst.msk [vmem:[%s9 + $0x198] sm:$0xff] %vm2144, %v2114
  %2197 = vst.msk [vmem:[%s9 + $0x1a0] sm:$0xff] %vm2144, %v2115
  %2198 = vst.msk [vmem:[%s9 + $0x1a8] sm:$0xff] %vm2144, %v2116
  %2199 = vst.msk [vmem:[%s9 + $0x1b0] sm:$0xff] %vm2144, %v2117
  %2200 = vst.msk [vmem:[%s9 + $0x1b8] sm:$0xff] %vm2144, %v2118
  %2201 = vst.msk [vmem:[%s9 + $0x1c0] sm:$0xff] %vm2144, %v2119
  %2202 = vst.msk [vmem:[%s9 + $0x1c8] sm:$0xff] %vm2144, %v2120
  %2203 = vst.msk [vmem:[%s9 + $0x1d0] sm:$0xff] %vm2144, %v2121
  %2204 = vst.msk [vmem:[%s9 + $0x1d8] sm:$0xff] %vm2144, %v2122
  %2205 = vst.msk [vmem:[%s9 + $0x1e0] sm:$0xff] %vm2144, %v2123
  %2206 = vst.msk [vmem:[%s9 + $0x1e8] sm:$0xff] %vm2144, %v2124
  %2207 = vst.msk [vmem:[%s9 + $0x1f0] sm:$0xff] %vm2144, %v2125
  %2208 = vst.msk [vmem:[%s9 + $0x1f8] sm:$0xff] %vm2144, %v2126
  %2209 = vst.msk [vmem:[%s9 + $0x200] sm:$0xff] %vm2144, %v2127
  %2210 = vst.msk [vmem:[%s9 + $0x208] sm:$0xff] %vm2144, %v2128
  %2211 = vst.msk [vmem:[%s9 + $0x210] sm:$0xff] %vm2144, %v2129
  %2212 = vst.msk [vmem:[%s9 + $0x218] sm:$0xff] %vm2144, %v2130
  %2213 = vst.msk [vmem:[%s9 + $0x220] sm:$0xff] %vm2144, %v2131
  %2214 = vst.msk [vmem:[%s9 + $0x228] sm:$0xff] %vm2144, %v2132
  %2215 = vst.msk [vmem:[%s9 + $0x230] sm:$0xff] %vm2144, %v2133
  %2216 = vst.msk [vmem:[%s9 + $0x238] sm:$0xff] %vm2144, %v2134
  %2217 = vst.msk [vmem:[%s9 + $0x240] sm:$0xff] %vm2144, %v2135
  %2218 = vst.msk [vmem:[%s9 + $0x248] sm:$0xff] %vm2144, %v2136
  %2219 = vst.msk [vmem:[%s9 + $0x250] sm:$0xff] %vm2144, %v2137
  %2220 = vst.msk [vmem:[%s9 + $0x258] sm:$0xff] %vm2144, %v2138
  %2221 = vst.msk [vmem:[%s9 + $0x260] sm:$0xff] %vm2144, %v2139
  %2222 = vst.msk [vmem:[%s9 + $0x268] sm:$0xff] %vm2144, %v2140
  %2223 = vst.msk [vmem:[%s9 + $0x270] sm:$0xff] %vm2144, %v2141
  %2224 = vst.msk [vmem:[%s9 + $0x278] sm:$0xff] %vm2144, %v2142
  %2225 = vst.msk [vmem:[%s9 + $0x280] sm:$0xff] %vm2144, %v2143
  %v2226 = vld [vmem:[%s1] sm:$0xff]
  %v2227 = vld [vmem:[%s1 + $0x8] sm:$0xff]
  %v2228 = vld [vmem:[%s1 + $0x10] sm:$0xff]
  %v2229 = vld [vmem:[%s1 + $0x18] sm:$0xff]
  %v2230 = vld [vmem:[%s1 + $0x20] sm:$0xff]
  %v2231 = vld [vmem:[%s1 + $0x28] sm:$0xff]
  %v2232 = vld [vmem:[%s1 + $0x30] sm:$0xff]
  %v2233 = vld [vmem:[%s1 + $0x38] sm:$0xff]
  %v2234 = vld [vmem:[%s1 + $0x40] sm:$0xff]
  %v2235 = vld [vmem:[%s1 + $0x48] sm:$0xff]
  %v2236 = vld [vmem:[%s1 + $0x50] sm:$0xff]
  %v2237 = vld [vmem:[%s1 + $0x58] sm:$0xff]
  %v2238 = vld [vmem:[%s1 + $0x60] sm:$0xff]
  %v2239 = vld [vmem:[%s1 + $0x68] sm:$0xff]
  %v2240 = vld [vmem:[%s1 + $0x70] sm:$0xff]
  %v2241 = vld [vmem:[%s1 + $0x78] sm:$0xff]
  %v2242 = vld [vmem:[%s1 + $0x80] sm:$0xff]
  %v2243 = vld [vmem:[%s1 + $0x88] sm:$0xff]
  %v2244 = vld [vmem:[%s1 + $0x90] sm:$0xff]
  %v2245 = vld [vmem:[%s1 + $0x98] sm:$0xff]
  %v2246 = vld [vmem:[%s1 + $0xa0] sm:$0xff]
  %v2247 = vld [vmem:[%s1 + $0xa8] sm:$0xff]
  %v2248 = vld [vmem:[%s1 + $0xb0] sm:$0xff]
  %v2249 = vld [vmem:[%s1 + $0xb8] sm:$0xff]
  %v2250 = vld [vmem:[%s1 + $0xc0] sm:$0xff]
  %v2251 = vld [vmem:[%s1 + $0xc8] sm:$0xff]
  %v2252 = vld [vmem:[%s1 + $0xd0] sm:$0xff]
  %v2253 = vld [vmem:[%s1 + $0xd8] sm:$0xff]
  %v2254 = vld [vmem:[%s1 + $0xe0] sm:$0xff]
  %v2255 = vld [vmem:[%s1 + $0xe8] sm:$0xff]
  %v2256 = vld [vmem:[%s1 + $0xf0] sm:$0xff]
  %v2257 = vld [vmem:[%s1 + $0xf8] sm:$0xff]
  %v2258 = vld [vmem:[%s1 + $0x100] sm:$0xff]
  %v2259 = vld [vmem:[%s1 + $0x108] sm:$0xff]
  %v2260 = vld [vmem:[%s1 + $0x110] sm:$0xff]
  %v2261 = vld [vmem:[%s1 + $0x118] sm:$0xff]
  %v2262 = vld [vmem:[%s1 + $0x120] sm:$0xff]
  %v2263 = vld [vmem:[%s1 + $0x128] sm:$0xff]
  %v2264 = vld [vmem:[%s1 + $0x130] sm:$0xff]
  %v2265 = vld [vmem:[%s1 + $0x138] sm:$0xff]
  %v2266 = vld [vmem:[%s1 + $0x140] sm:$0xff]
  %v2267 = vld [vmem:[%s1 + $0x148] sm:$0xff]
  %v2268 = vld [vmem:[%s1 + $0x150] sm:$0xff]
  %v2269 = vld [vmem:[%s1 + $0x158] sm:$0xff]
  %v2270 = vld [vmem:[%s1 + $0x160] sm:$0xff]
  %v2271 = vld [vmem:[%s1 + $0x168] sm:$0xff]
  %v2272 = vld [vmem:[%s1 + $0x170] sm:$0xff]
  %v2273 = vld [vmem:[%s1 + $0x178] sm:$0xff]
  %v2274 = vld [vmem:[%s1 + $0x180] sm:$0xff]
  %v2275 = vld [vmem:[%s1 + $0x188] sm:$0xff]
  %v2276 = vld [vmem:[%s4] sm:$0xff]
  %v2277 = vld [vmem:[%s4 + $0x8] sm:$0xff]
  %v2278 = vld [vmem:[%s4 + $0x10] sm:$0xff]
  %v2279 = vld [vmem:[%s4 + $0x18] sm:$0xff]
  %v2280 = vld [vmem:[%s4 + $0x20] sm:$0xff]
  %v2281 = vld [vmem:[%s4 + $0x28] sm:$0xff]
  %v2282 = vld [vmem:[%s4 + $0x30] sm:$0xff]
  %v2283 = vld [vmem:[%s4 + $0x38] sm:$0xff]
  %v2284 = vld [vmem:[%s4 + $0x40] sm:$0xff]
  %v2285 = vld [vmem:[%s4 + $0x48] sm:$0xff]
  %v2286 = vld [vmem:[%s4 + $0x50] sm:$0xff]
  %v2287 = vld [vmem:[%s4 + $0x58] sm:$0xff]
  %v2288 = vld [vmem:[%s4 + $0x60] sm:$0xff]
  %v2289 = vld [vmem:[%s4 + $0x68] sm:$0xff]
  %v2290 = vld [vmem:[%s4 + $0x70] sm:$0xff]
  %v2291 = vld [vmem:[%s4 + $0x78] sm:$0xff]
  %v2292 = vld [vmem:[%s4 + $0x80] sm:$0xff]
  %v2293 = vld [vmem:[%s4 + $0x88] sm:$0xff]
  %v2294 = vld [vmem:[%s4 + $0x90] sm:$0x3f]
  %v2295 = vld [vmem:[%s7] sm:$0x1]
  %v2297 = vperm.slane %v2295, 0
  %vm2299 = vcmask 179200
  %v2301 = vsel %vm2299, %v2227, 0
  %v2304 = vsel %vm2299, %v2229, 0
  %v2307 = vsel %vm2299, %v2231, 0
  %v2310 = vsel %vm2299, %v2233, 0
  %v2313 = vsel %vm2299, %v2235, 0
  %v2316 = vsel %vm2299, %v2237, 0
  %v2319 = vsel %vm2299, %v2239, 0
  %v2322 = vsel %vm2299, %v2241, 0
  %v2325 = vsel %vm2299, %v2243, 0
  %v2328 = vsel %vm2299, %v2245, 0
  %v2331 = vsel %vm2299, %v2247, 0
  %v2334 = vsel %vm2299, %v2249, 0
  %v2337 = vsel %vm2299, %v2251, 0
  %v2340 = vsel %vm2299, %v2253, 0
  %v2343 = vsel %vm2299, %v2255, 0
  %v2346 = vsel %vm2299, %v2257, 0
  %v2349 = vsel %vm2299, %v2259, 0
  %v2352 = vsel %vm2299, %v2261, 0
  %v2355 = vsel %vm2299, %v2263, 0
  %v2358 = vsel %vm2299, %v2265, 0
  %v2361 = vsel %vm2299, %v2267, 0
  %v2364 = vsel %vm2299, %v2269, 0
  %v2367 = vsel %vm2299, %v2271, 0
  %v2370 = vsel %vm2299, %v2273, 0
  %v2373 = vsel %vm2299, %v2275, 0
  %vm2375 = vcmask 1045504
  %v2377 = vsel %vm2375, %v2294, 0
  %2379 = vmatpush.msra.mxu0 %v2291
  %2380 = vmatpush.msra.mxu0 %v2290
  %2381 = vmatpush.msra.mxu0 %v2289
  %2382 = vmatpush.msra.mxu0 %v2288
  %2383 = vmatpush.msra.mxu0 %v2287
  %2384 = vmatpush.msra.mxu0 %v2286
  %2385 = vmatpush.msra.mxu0 %v2285
  %2386 = vmatpush.msra.mxu0 %v2284
  %2387 = vmatpush.msra.mxu0 %v2283
  %2388 = vmatpush.msra.mxu0 %v2282
  %2389 = vmatpush.msra.mxu0 %v2281
  %2390 = vmatpush.msra.mxu0 %v2280
  %2391 = vmatpush.msra.mxu0 %v2279
  %2392 = vmatpush.msra.mxu0 %v2278
  %2393 = vmatpush.msra.mxu0 %v2277
  %2394 = vmatpush.msra.mxu0 %v2276
  %2395 = vmatmul.f32.gmra.mxu0 %v2226
  %v2396 = vpop.f32.mrf.mxu0
  %v2397 = vadd.f32 %v2297, %v2396
  %2398 = vmatmul.f32.gmra.mxu0 %v2228
  %v2399 = vpop.f32.mrf.mxu0
  %v2400 = vadd.f32 %v2297, %v2399
  %2401 = vmatmul.f32.gmra.mxu0 %v2230
  %v2402 = vpop.f32.mrf.mxu0
  %v2403 = vadd.f32 %v2297, %v2402
  %2404 = vmatmul.f32.gmra.mxu0 %v2232
  %v2405 = vpop.f32.mrf.mxu0
  %v2406 = vadd.f32 %v2297, %v2405
  %2407 = vmatmul.f32.gmra.mxu0 %v2234
  %v2408 = vpop.f32.mrf.mxu0
  %v2409 = vadd.f32 %v2297, %v2408
  %2410 = vmatmul.f32.gmra.mxu0 %v2236
  %v2411 = vpop.f32.mrf.mxu0
  %v2412 = vadd.f32 %v2297, %v2411
  %2413 = vmatmul.f32.gmra.mxu0 %v2238
  %v2414 = vpop.f32.mrf.mxu0
  %v2415 = vadd.f32 %v2297, %v2414
  %2416 = vmatmul.f32.gmra.mxu0 %v2240
  %v2417 = vpop.f32.mrf.mxu0
  %v2418 = vadd.f32 %v2297, %v2417
  %2419 = vmatmul.f32.gmra.mxu0 %v2242
  %v2420 = vpop.f32.mrf.mxu0
  %v2421 = vadd.f32 %v2297, %v2420
  %2422 = vmatmul.f32.gmra.mxu0 %v2244
  %v2423 = vpop.f32.mrf.mxu0
  %v2424 = vadd.f32 %v2297, %v2423
  %2425 = vmatmul.f32.gmra.mxu0 %v2246
  %v2426 = vpop.f32.mrf.mxu0
  %v2427 = vadd.f32 %v2297, %v2426
  %2428 = vmatmul.f32.gmra.mxu0 %v2248
  %v2429 = vpop.f32.mrf.mxu0
  %v2430 = vadd.f32 %v2297, %v2429
  %2431 = vmatmul.f32.gmra.mxu0 %v2250
  %v2432 = vpop.f32.mrf.mxu0
  %v2433 = vadd.f32 %v2297, %v2432
  %2434 = vmatmul.f32.gmra.mxu0 %v2252
  %v2435 = vpop.f32.mrf.mxu0
  %v2436 = vadd.f32 %v2297, %v2435
  %2437 = vmatmul.f32.gmra.mxu0 %v2254
  %v2438 = vpop.f32.mrf.mxu0
  %v2439 = vadd.f32 %v2297, %v2438
  %2440 = vmatmul.f32.gmra.mxu0 %v2256
  %v2441 = vpop.f32.mrf.mxu0
  %v2442 = vadd.f32 %v2297, %v2441
  %2443 = vmatmul.f32.gmra.mxu0 %v2258
  %v2444 = vpop.f32.mrf.mxu0
  %v2445 = vadd.f32 %v2297, %v2444
  %2446 = vmatmul.f32.gmra.mxu0 %v2260
  %v2447 = vpop.f32.mrf.mxu0
  %v2448 = vadd.f32 %v2297, %v2447
  %2449 = vmatmul.f32.gmra.mxu0 %v2262
  %v2450 = vpop.f32.mrf.mxu0
  %v2451 = vadd.f32 %v2297, %v2450
  %2452 = vmatmul.f32.gmra.mxu0 %v2264
  %v2453 = vpop.f32.mrf.mxu0
  %v2454 = vadd.f32 %v2297, %v2453
  %2455 = vmatmul.f32.gmra.mxu0 %v2266
  %v2456 = vpop.f32.mrf.mxu0
  %v2457 = vadd.f32 %v2297, %v2456
  %2458 = vmatmul.f32.gmra.mxu0 %v2268
  %v2459 = vpop.f32.mrf.mxu0
  %v2460 = vadd.f32 %v2297, %v2459
  %2461 = vmatmul.f32.gmra.mxu0 %v2270
  %v2462 = vpop.f32.mrf.mxu0
  %v2463 = vadd.f32 %v2297, %v2462
  %2464 = vmatmul.f32.gmra.mxu0 %v2272
  %v2465 = vpop.f32.mrf.mxu0
  %v2466 = vadd.f32 %v2297, %v2465
  %2467 = vmatmul.f32.gmra.mxu0 %v2274
  %v2468 = vpop.f32.mrf.mxu0
  %v2469 = vadd.f32 %v2297, %v2468
  %2470 = vdwg.mxu0
  %2471 = vmatpush.msra.mxu0 0.0
  %2472 = vmatpush.msra.mxu0 0.0
  %2473 = vmatpush.msra.mxu0 0.0
  %2474 = vmatpush.msra.mxu0 0.0
  %2475 = vmatpush.msra.mxu0 0.0
  %2476 = vmatpush.msra.mxu0 0.0
  %2477 = vmatpush.msra.mxu0 0.0
  %2478 = vmatpush.msra.mxu0 0.0
  %2479 = vmatpush.msra.mxu0 0.0
  %2480 = vmatpush.msra.mxu0 0.0
  %2481 = vmatpush.msra.mxu0 0.0
  %2482 = vmatpush.msra.mxu0 0.0
  %2483 = vmatpush.msra.mxu0 0.0
  %2484 = vmatpush.msra.mxu0 %v2377
  %2485 = vmatpush.msra.mxu0 %v2293
  %2486 = vmatpush.msra.mxu0 %v2292
  %2487 = vmatmul.f32.gmra.mxu0 %v2301
  %v2488 = vpop.f32.mrf.mxu0
  %v2489 = vadd.f32 %v2397, %v2488
  %2490 = vmatmul.f32.gmra.mxu0 %v2304
  %v2491 = vpop.f32.mrf.mxu0
  %v2492 = vadd.f32 %v2400, %v2491
  %2493 = vmatmul.f32.gmra.mxu0 %v2307
  %v2494 = vpop.f32.mrf.mxu0
  %v2495 = vadd.f32 %v2403, %v2494
  %2496 = vmatmul.f32.gmra.mxu0 %v2310
  %v2497 = vpop.f32.mrf.mxu0
  %v2498 = vadd.f32 %v2406, %v2497
  %2499 = vmatmul.f32.gmra.mxu0 %v2313
  %v2500 = vpop.f32.mrf.mxu0
  %v2501 = vadd.f32 %v2409, %v2500
  %2502 = vmatmul.f32.gmra.mxu0 %v2316
  %v2503 = vpop.f32.mrf.mxu0
  %v2504 = vadd.f32 %v2412, %v2503
  %2505 = vmatmul.f32.gmra.mxu0 %v2319
  %v2506 = vpop.f32.mrf.mxu0
  %v2507 = vadd.f32 %v2415, %v2506
  %2508 = vmatmul.f32.gmra.mxu0 %v2322
  %v2509 = vpop.f32.mrf.mxu0
  %v2510 = vadd.f32 %v2418, %v2509
  %2511 = vmatmul.f32.gmra.mxu0 %v2325
  %v2512 = vpop.f32.mrf.mxu0
  %v2513 = vadd.f32 %v2421, %v2512
  %2514 = vmatmul.f32.gmra.mxu0 %v2328
  %v2515 = vpop.f32.mrf.mxu0
  %v2516 = vadd.f32 %v2424, %v2515
  %2517 = vmatmul.f32.gmra.mxu0 %v2331
  %v2518 = vpop.f32.mrf.mxu0
  %v2519 = vadd.f32 %v2427, %v2518
  %2520 = vmatmul.f32.gmra.mxu0 %v2334
  %v2521 = vpop.f32.mrf.mxu0
  %v2522 = vadd.f32 %v2430, %v2521
  %2523 = vmatmul.f32.gmra.mxu0 %v2337
  %v2524 = vpop.f32.mrf.mxu0
  %v2525 = vadd.f32 %v2433, %v2524
  %2526 = vmatmul.f32.gmra.mxu0 %v2340
  %v2527 = vpop.f32.mrf.mxu0
  %v2528 = vadd.f32 %v2436, %v2527
  %2529 = vmatmul.f32.gmra.mxu0 %v2343
  %v2530 = vpop.f32.mrf.mxu0
  %v2531 = vadd.f32 %v2439, %v2530
  %2532 = vmatmul.f32.gmra.mxu0 %v2346
  %v2533 = vpop.f32.mrf.mxu0
  %v2534 = vadd.f32 %v2442, %v2533
  %2535 = vmatmul.f32.gmra.mxu0 %v2349
  %v2536 = vpop.f32.mrf.mxu0
  %v2537 = vadd.f32 %v2445, %v2536
  %2538 = vmatmul.f32.gmra.mxu0 %v2352
  %v2539 = vpop.f32.mrf.mxu0
  %v2540 = vadd.f32 %v2448, %v2539
  %2541 = vmatmul.f32.gmra.mxu0 %v2355
  %v2542 = vpop.f32.mrf.mxu0
  %v2543 = vadd.f32 %v2451, %v2542
  %2544 = vmatmul.f32.gmra.mxu0 %v2358
  %v2545 = vpop.f32.mrf.mxu0
  %v2546 = vadd.f32 %v2454, %v2545
  %2547 = vmatmul.f32.gmra.mxu0 %v2361
  %v2548 = vpop.f32.mrf.mxu0
  %v2549 = vadd.f32 %v2457, %v2548
  %2550 = vmatmul.f32.gmra.mxu0 %v2364
  %v2551 = vpop.f32.mrf.mxu0
  %v2552 = vadd.f32 %v2460, %v2551
  %2553 = vmatmul.f32.gmra.mxu0 %v2367
  %v2554 = vpop.f32.mrf.mxu0
  %v2555 = vadd.f32 %v2463, %v2554
  %2556 = vmatmul.f32.gmra.mxu0 %v2370
  %v2557 = vpop.f32.mrf.mxu0
  %v2558 = vadd.f32 %v2466, %v2557
  %2559 = vmatmul.f32.gmra.mxu0 %v2373
  %v2560 = vpop.f32.mrf.mxu0
  %v2561 = vadd.f32 %v2469, %v2560
  %2562 = vdwg.mxu0
  %v2563 = vmax.f32 %v2489, 0.0
  %v2564 = vmax.f32 %v2492, 0.0
  %v2565 = vmax.f32 %v2495, 0.0
  %v2566 = vmax.f32 %v2498, 0.0
  %v2567 = vmax.f32 %v2501, 0.0
  %v2568 = vmax.f32 %v2504, 0.0
  %v2569 = vmax.f32 %v2507, 0.0
  %v2570 = vmax.f32 %v2510, 0.0
  %v2571 = vmax.f32 %v2513, 0.0
  %v2572 = vmax.f32 %v2516, 0.0
  %v2573 = vmax.f32 %v2519, 0.0
  %v2574 = vmax.f32 %v2522, 0.0
  %v2575 = vmax.f32 %v2525, 0.0
  %v2576 = vmax.f32 %v2528, 0.0
  %v2577 = vmax.f32 %v2531, 0.0
  %v2578 = vmax.f32 %v2534, 0.0
  %v2579 = vmax.f32 %v2537, 0.0
  %v2580 = vmax.f32 %v2540, 0.0
  %v2581 = vmax.f32 %v2543, 0.0
  %v2582 = vmax.f32 %v2546, 0.0
  %v2583 = vmax.f32 %v2549, 0.0
  %v2584 = vmax.f32 %v2552, 0.0
  %v2585 = vmax.f32 %v2555, 0.0
  %v2586 = vmax.f32 %v2558, 0.0
  %v2587 = vmax.f32 %v2561, 0.0
  %vm2588 = vcmask 97280
  %2589 = vst.msk [vmem:[%s10] sm:$0xff] %vm2588, %v2563
  %2590 = vst.msk [vmem:[%s10 + $0x8] sm:$0xff] %vm2588, %v2564
  %2591 = vst.msk [vmem:[%s10 + $0x10] sm:$0xff] %vm2588, %v2565
  %2592 = vst.msk [vmem:[%s10 + $0x18] sm:$0xff] %vm2588, %v2566
  %2593 = vst.msk [vmem:[%s10 + $0x20] sm:$0xff] %vm2588, %v2567
  %2594 = vst.msk [vmem:[%s10 + $0x28] sm:$0xff] %vm2588, %v2568
  %2595 = vst.msk [vmem:[%s10 + $0x30] sm:$0xff] %vm2588, %v2569
  %2596 = vst.msk [vmem:[%s10 + $0x38] sm:$0xff] %vm2588, %v2570
  %2597 = vst.msk [vmem:[%s10 + $0x40] sm:$0xff] %vm2588, %v2571
  %2598 = vst.msk [vmem:[%s10 + $0x48] sm:$0xff] %vm2588, %v2572
  %2599 = vst.msk [vmem:[%s10 + $0x50] sm:$0xff] %vm2588, %v2573
  %2600 = vst.msk [vmem:[%s10 + $0x58] sm:$0xff] %vm2588, %v2574
  %2601 = vst.msk [vmem:[%s10 + $0x60] sm:$0xff] %vm2588, %v2575
  %2602 = vst.msk [vmem:[%s10 + $0x68] sm:$0xff] %vm2588, %v2576
  %2603 = vst.msk [vmem:[%s10 + $0x70] sm:$0xff] %vm2588, %v2577
  %2604 = vst.msk [vmem:[%s10 + $0x78] sm:$0xff] %vm2588, %v2578
  %2605 = vst.msk [vmem:[%s10 + $0x80] sm:$0xff] %vm2588, %v2579
  %2606 = vst.msk [vmem:[%s10 + $0x88] sm:$0xff] %vm2588, %v2580
  %2607 = vst.msk [vmem:[%s10 + $0x90] sm:$0xff] %vm2588, %v2581
  %2608 = vst.msk [vmem:[%s10 + $0x98] sm:$0xff] %vm2588, %v2582
  %2609 = vst.msk [vmem:[%s10 + $0xa0] sm:$0xff] %vm2588, %v2583
  %2610 = vst.msk [vmem:[%s10 + $0xa8] sm:$0xff] %vm2588, %v2584
  %2611 = vst.msk [vmem:[%s10 + $0xb0] sm:$0xff] %vm2588, %v2585
  %2612 = vst.msk [vmem:[%s10 + $0xb8] sm:$0xff] %vm2588, %v2586
  %2613 = vst.msk [vmem:[%s10 + $0xc0] sm:$0xff] %vm2588, %v2587
  %v2614 = vld [vmem:[%s2] sm:$0xf]
  %v2615 = vld [vmem:[%s5] sm:$0xff]
  %v2616 = vld [vmem:[%s5 + $0x8] sm:$0xff]
  %v2617 = vld [vmem:[%s5 + $0x10] sm:$0xff]
  %v2618 = vld [vmem:[%s5 + $0x18] sm:$0xff]
  %v2619 = vld [vmem:[%s5 + $0x20] sm:$0xff]
  %v2620 = vld [vmem:[%s5 + $0x28] sm:$0xff]
  %v2621 = vld [vmem:[%s5 + $0x30] sm:$0xff]
  %v2622 = vld [vmem:[%s5 + $0x38] sm:$0xff]
  %v2623 = vld [vmem:[%s5 + $0x40] sm:$0xff]
  %v2624 = vld [vmem:[%s5 + $0x48] sm:$0xff]
  %v2625 = vld [vmem:[%s5 + $0x50] sm:$0xff]
  %v2626 = vld [vmem:[%s5 + $0x58] sm:$0xff]
  %v2627 = vld [vmem:[%s5 + $0x60] sm:$0xff]
  %v2628 = vld [vmem:[%s5 + $0x68] sm:$0xff]
  %v2629 = vld [vmem:[%s5 + $0x70] sm:$0xff]
  %v2630 = vld [vmem:[%s5 + $0x78] sm:$0xff]
  %v2631 = vld [vmem:[%s5 + $0x80] sm:$0xff]
  %v2632 = vld [vmem:[%s5 + $0x88] sm:$0xff]
  %v2633 = vld [vmem:[%s5 + $0x90] sm:$0x3f]
  %v2634 = vld [vmem:[%s8] sm:$0x1]
  %v2636 = vperm.slane %v2634, 0
  %2639 = vst [vmem:[#allocation1] ss:$4 sm:$0xff] %v2614
  %v2640 = vld.sshfl [vmem:[#allocation1] sm:$0xff pattern:$0x73625140]
  %v2641 = vld.sshfl [vmem:[#allocation1 + $0x8] sm:$0xff pattern:$0x73625140]
  %v2643 = vsel %vm2299, %v2641, 0
  %v2646 = vsel %vm2375, %v2633, 0
  %2648 = vmatpush.msra.mxu0 %v2630
  %2649 = vmatpush.msra.mxu0 %v2629
  %2650 = vmatpush.msra.mxu0 %v2628
  %2651 = vmatpush.msra.mxu0 %v2627
  %2652 = vmatpush.msra.mxu0 %v2626
  %2653 = vmatpush.msra.mxu0 %v2625
  %2654 = vmatpush.msra.mxu0 %v2624
  %2655 = vmatpush.msra.mxu0 %v2623
  %2656 = vmatpush.msra.mxu0 %v2622
  %2657 = vmatpush.msra.mxu0 %v2621
  %2658 = vmatpush.msra.mxu0 %v2620
  %2659 = vmatpush.msra.mxu0 %v2619
  %2660 = vmatpush.msra.mxu0 %v2618
  %2661 = vmatpush.msra.mxu0 %v2617
  %2662 = vmatpush.msra.mxu0 %v2616
  %2663 = vmatpush.msra.mxu0 %v2615
  %2664 = vmatmul.f32.gmra.mxu0 %v2640
  %v2665 = vpop.f32.mrf.mxu0
  %v2666 = vadd.f32 %v2636, %v2665
  %2667 = vdwg.mxu0
  %2668 = vmatpush.msra.mxu0 0.0
  %2669 = vmatpush.msra.mxu0 0.0
  %2670 = vmatpush.msra.mxu0 0.0
  %2671 = vmatpush.msra.mxu0 0.0
  %2672 = vmatpush.msra.mxu0 0.0
  %2673 = vmatpush.msra.mxu0 0.0
  %2674 = vmatpush.msra.mxu0 0.0
  %2675 = vmatpush.msra.mxu0 0.0
  %2676 = vmatpush.msra.mxu0 0.0
  %2677 = vmatpush.msra.mxu0 0.0
  %2678 = vmatpush.msra.mxu0 0.0
  %2679 = vmatpush.msra.mxu0 0.0
  %2680 = vmatpush.msra.mxu0 0.0
  %2681 = vmatpush.msra.mxu0 %v2646
  %2682 = vmatpush.msra.mxu0 %v2632
  %2683 = vmatpush.msra.mxu0 %v2631
  %2684 = vmatmul.f32.gmra.mxu0 %v2643
  %v2685 = vpop.f32.mrf.mxu0
  %v2686 = vadd.f32 %v2666, %v2685
  %2687 = vdwg.mxu0
  %vm2688 = vcmask 91136
  %2689 = vst.msk [vmem:[%s11] sm:$0x3] %vm2688, %v2686
  // Predicated region
  $region38: #{nvidia_arch_forward.7} parent=0 // pred_check
    _
  $region39: #{nvidia_arch_forward.7} parent=0 // pred_check_branch
    %2691 = sbr.rel (0) target = $region41
  $region40: #{nvidia_arch_forward.7} parent=0 // pred_region
    _
  $region41: #{nvidia_arch_forward.7} parent=0 // pred_fallthru
    _
  // Predicated region
  $region42: #{nvidia_arch_forward.7} parent=0 // pred_check
    _
  $region43: #{nvidia_arch_forward.7} parent=0 // pred_check_branch
    %2693 = sbr.rel (0) target = $region45
  $region44: #{nvidia_arch_forward.7} parent=0 // pred_region
    _
  $region45: #{nvidia_arch_forward.7} parent=0 // pred_fallthru
    _
  // Predicated region
  $region46: #{nvidia_arch_forward.7} parent=0 // pred_check
    _
  $region47: #{nvidia_arch_forward.7} parent=0 // pred_check_branch
    %2695 = sbr.rel (0) target = $region49
  $region48: #{nvidia_arch_forward.7} parent=0 // pred_region
    _
  $region49: #{nvidia_arch_forward.7} parent=0 // pred_fallthru
    _
  // Predicated region
  $region50: #{nvidia_arch_forward.7} parent=0 // pred_check
    _
  $region51: #{nvidia_arch_forward.7} parent=0 // pred_check_branch
    %2697 = sbr.rel (0) target = $region53
  $region52: #{nvidia_arch_forward.7} parent=0 // pred_region
    _
  $region53: #{nvidia_arch_forward.7} parent=0 // pred_fallthru
    _
  // Predicated region
  $region54: #{nvidia_arch_forward.7} parent=0 // pred_check
    _
  $region55: #{nvidia_arch_forward.7} parent=0 // pred_check_branch
    %2699 = sbr.rel (0) target = $region57
  $region56: #{nvidia_arch_forward.7} parent=0 // pred_region
    _
  $region57: #{nvidia_arch_forward.7} parent=0 // pred_fallthru
    _
  // Predicated region
  $region58: #{nvidia_arch_forward.7} parent=0 // pred_check
    _
  $region59: #{nvidia_arch_forward.7} parent=0 // pred_check_branch
    %2701 = sbr.rel (0) target = $region61
  $region60: #{nvidia_arch_forward.7} parent=0 // pred_region
    _
  $region61: #{nvidia_arch_forward.7} parent=0 // pred_fallthru
    _

// kernel: nvidia_arch_forward.8
$region0: #{nvidia_arch_forward.8}
  #allocation0 [shape = 'u32[]', space=smem, size = 0x4, offset = 0x4, fixed_abs, tag = 'smem constant byte address 0x4 - core index']
  #allocation1 [shape = 'u32[72,128]{1,0:T(1,128)}', space=vmem, size = 0x9000, scoped, tag = 'internal scratch']
  %s0 = inlined_call_operand.vmem [shape: f32[96,900], index: 0, kind: input, shape index: {}]
  %s1 = inlined_call_operand.vmem [shape: f32[18,300], index: 1, kind: input, shape index: {}]
  %s2 = inlined_call_operand.vmem [shape: f32[900,48], index: 2, kind: input, shape index: {}]
  %s3 = inlined_call_operand.vmem [shape: f32[300,18], index: 3, kind: input, shape index: {}]
  %s4 = inlined_call_operand.vmem [shape: f32[1,48], index: 4, kind: input, shape index: {}]
  %s5 = inlined_call_operand.vmem [shape: f32[1,18], index: 5, kind: input, shape index: {}]
  %s6 = inlined_call_operand.vmem [shape: f32[96,48], index: 6, kind: output, shape index: {0}]
  %s7 = inlined_call_operand.vmem [shape: f32[18,18], index: 7, kind: output, shape index: {1}]
  %8 = xla_tuple %s6, %s7
  %s9 = sld [smem:[#allocation0]]
  $region42: #{nvidia_arch_forward.8} parent=0
    _
  %s11 = ssub.s32 1, %s9
  %s12 = scalar_select 0, %s11, %s9
  // Predicated region
  $region2: #{nvidia_arch_forward.8} parent=0 // pred_check
    _
  $region3: #{nvidia_arch_forward.8} parent=0 // pred_check_branch
    %14 = sbr.rel (0) target = $region5
  $region4: #{nvidia_arch_forward.8} parent=0 // pred_region
    _
  $region5: #{nvidia_arch_forward.8} parent=0 // pred_fallthru
    _
  // Predicated region
  $region6: #{nvidia_arch_forward.8} parent=0 // pred_check
    _
  $region7: #{nvidia_arch_forward.8} parent=0 // pred_check_branch
    %16 = sbr.rel (0) target = $region9
  $region8: #{nvidia_arch_forward.8} parent=0 // pred_region
    _
  $region9: #{nvidia_arch_forward.8} parent=0 // pred_fallthru
    _
  // Predicated region
  $region10: #{nvidia_arch_forward.8} parent=0 // pred_check
    _
  $region11: #{nvidia_arch_forward.8} parent=0 // pred_check_branch
    %18 = sbr.rel (0) target = $region13
  $region12: #{nvidia_arch_forward.8} parent=0 // pred_region
    _
  $region13: #{nvidia_arch_forward.8} parent=0 // pred_fallthru
    _
  // Predicated region
  $region14: #{nvidia_arch_forward.8} parent=0 // pred_check
    _
  $region15: #{nvidia_arch_forward.8} parent=0 // pred_check_branch
    %20 = sbr.rel (0) target = $region17
  $region16: #{nvidia_arch_forward.8} parent=0 // pred_region
    _
  $region17: #{nvidia_arch_forward.8} parent=0 // pred_fallthru
    _
  // Predicated region
  $region18: #{nvidia_arch_forward.8} parent=0 // pred_check
    _
  $region19: #{nvidia_arch_forward.8} parent=0 // pred_check_branch
    %22 = sbr.rel (0) target = $region21
  $region20: #{nvidia_arch_forward.8} parent=0 // pred_region
    _
  $region21: #{nvidia_arch_forward.8} parent=0 // pred_fallthru
    _
  // Predicated region
  $region22: #{nvidia_arch_forward.8} parent=0 // pred_check
    _
  $region23: #{nvidia_arch_forward.8} parent=0 // pred_check_branch
    %24 = sbr.rel (0) target = $region25
  $region24: #{nvidia_arch_forward.8} parent=0 // pred_region
    _
  $region25: #{nvidia_arch_forward.8} parent=0 // pred_fallthru
    _
  %v25 = vld [vmem:[%s0] sm:$0xff]
  %v26 = vld [vmem:[%s0 + $0x8] sm:$0xff]
  %v27 = vld [vmem:[%s0 + $0x10] sm:$0xff]
  %v28 = vld [vmem:[%s0 + $0x18] sm:$0xff]
  %v29 = vld [vmem:[%s0 + $0x20] sm:$0xff]
  %v30 = vld [vmem:[%s0 + $0x28] sm:$0xff]
  %v31 = vld [vmem:[%s0 + $0x30] sm:$0xff]
  %v32 = vld [vmem:[%s0 + $0x38] sm:$0xff]
  %v33 = vld [vmem:[%s0 + $0x40] sm:$0xff]
  %v34 = vld [vmem:[%s0 + $0x48] sm:$0xff]
  %v35 = vld [vmem:[%s0 + $0x50] sm:$0xff]
  %v36 = vld [vmem:[%s0 + $0x58] sm:$0xff]
  %v37 = vld [vmem:[%s0 + $0x60] sm:$0xff]
  %v38 = vld [vmem:[%s0 + $0x68] sm:$0xff]
  %v39 = vld [vmem:[%s0 + $0x70] sm:$0xff]
  %v40 = vld [vmem:[%s0 + $0x78] sm:$0xff]
  %v41 = vld [vmem:[%s0 + $0x80] sm:$0xff]
  %v42 = vld [vmem:[%s0 + $0x88] sm:$0xff]
  %v43 = vld [vmem:[%s0 + $0x90] sm:$0xff]
  %v44 = vld [vmem:[%s0 + $0x98] sm:$0xff]
  %v45 = vld [vmem:[%s0 + $0xa0] sm:$0xff]
  %v46 = vld [vmem:[%s0 + $0xa8] sm:$0xff]
  %v47 = vld [vmem:[%s0 + $0xb0] sm:$0xff]
  %v48 = vld [vmem:[%s0 + $0xb8] sm:$0xff]
  %v49 = vld [vmem:[%s0 + $0xc0] sm:$0xff]
  %v50 = vld [vmem:[%s0 + $0xc8] sm:$0xff]
  %v51 = vld [vmem:[%s0 + $0xd0] sm:$0xff]
  %v52 = vld [vmem:[%s0 + $0xd8] sm:$0xff]
  %v53 = vld [vmem:[%s0 + $0xe0] sm:$0xff]
  %v54 = vld [vmem:[%s0 + $0xe8] sm:$0xff]
  %v55 = vld [vmem:[%s0 + $0xf0] sm:$0xff]
  %v56 = vld [vmem:[%s0 + $0xf8] sm:$0xff]
  %v57 = vld [vmem:[%s0 + $0x100] sm:$0xff]
  %v58 = vld [vmem:[%s0 + $0x108] sm:$0xff]
  %v59 = vld [vmem:[%s0 + $0x110] sm:$0xff]
  %v60 = vld [vmem:[%s0 + $0x118] sm:$0xff]
  %v61 = vld [vmem:[%s0 + $0x120] sm:$0xff]
  %v62 = vld [vmem:[%s0 + $0x128] sm:$0xff]
  %v63 = vld [vmem:[%s0 + $0x130] sm:$0xff]
  %v64 = vld [vmem:[%s0 + $0x138] sm:$0xff]
  %v65 = vld [vmem:[%s0 + $0x140] sm:$0xff]
  %v66 = vld [vmem:[%s0 + $0x148] sm:$0xff]
  %v67 = vld [vmem:[%s0 + $0x150] sm:$0xff]
  %v68 = vld [vmem:[%s0 + $0x158] sm:$0xff]
  %v69 = vld [vmem:[%s0 + $0x160] sm:$0xff]
  %v70 = vld [vmem:[%s0 + $0x168] sm:$0xff]
  %v71 = vld [vmem:[%s0 + $0x170] sm:$0xff]
  %v72 = vld [vmem:[%s0 + $0x178] sm:$0xff]
  %v73 = vld [vmem:[%s0 + $0x180] sm:$0xff]
  %v74 = vld [vmem:[%s0 + $0x188] sm:$0xff]
  %v75 = vld [vmem:[%s0 + $0x190] sm:$0xff]
  %v76 = vld [vmem:[%s0 + $0x198] sm:$0xff]
  %v77 = vld [vmem:[%s0 + $0x1a0] sm:$0xff]
  %v78 = vld [vmem:[%s0 + $0x1a8] sm:$0xff]
  %v79 = vld [vmem:[%s0 + $0x1b0] sm:$0xff]
  %v80 = vld [vmem:[%s0 + $0x1b8] sm:$0xff]
  %v81 = vld [vmem:[%s0 + $0x1c0] sm:$0xff]
  %v82 = vld [vmem:[%s0 + $0x1c8] sm:$0xff]
  %v83 = vld [vmem:[%s0 + $0x1d0] sm:$0xff]
  %v84 = vld [vmem:[%s0 + $0x1d8] sm:$0xff]
  %v85 = vld [vmem:[%s0 + $0x1e0] sm:$0xff]
  %v86 = vld [vmem:[%s0 + $0x1e8] sm:$0xff]
  %v87 = vld [vmem:[%s0 + $0x1f0] sm:$0xff]
  %v88 = vld [vmem:[%s0 + $0x1f8] sm:$0xff]
  %v89 = vld [vmem:[%s0 + $0x200] sm:$0xff]
  %v90 = vld [vmem:[%s0 + $0x208] sm:$0xff]
  %v91 = vld [vmem:[%s0 + $0x210] sm:$0xff]
  %v92 = vld [vmem:[%s0 + $0x218] sm:$0xff]
  %v93 = vld [vmem:[%s0 + $0x220] sm:$0xff]
  %v94 = vld [vmem:[%s0 + $0x228] sm:$0xff]
  %v95 = vld [vmem:[%s0 + $0x230] sm:$0xff]
  %v96 = vld [vmem:[%s0 + $0x238] sm:$0xff]
  %v97 = vld [vmem:[%s0 + $0x240] sm:$0xff]
  %v98 = vld [vmem:[%s0 + $0x248] sm:$0xff]
  %v99 = vld [vmem:[%s0 + $0x250] sm:$0xff]
  %v100 = vld [vmem:[%s0 + $0x258] sm:$0xff]
  %v101 = vld [vmem:[%s0 + $0x260] sm:$0xff]
  %v102 = vld [vmem:[%s0 + $0x268] sm:$0xff]
  %v103 = vld [vmem:[%s0 + $0x270] sm:$0xff]
  %v104 = vld [vmem:[%s0 + $0x278] sm:$0xff]
  %v105 = vld [vmem:[%s0 + $0x280] sm:$0xff]
  %v106 = vld [vmem:[%s0 + $0x288] sm:$0xff]
  %v107 = vld [vmem:[%s0 + $0x290] sm:$0xff]
  %v108 = vld [vmem:[%s0 + $0x298] sm:$0xff]
  %v109 = vld [vmem:[%s0 + $0x2a0] sm:$0xff]
  %v110 = vld [vmem:[%s0 + $0x2a8] sm:$0xff]
  %v111 = vld [vmem:[%s0 + $0x2b0] sm:$0xff]
  %v112 = vld [vmem:[%s0 + $0x2b8] sm:$0xff]
  %v113 = vld [vmem:[%s0 + $0x2c0] sm:$0xff]
  %v114 = vld [vmem:[%s0 + $0x2c8] sm:$0xff]
  %v115 = vld [vmem:[%s0 + $0x2d0] sm:$0xff]
  %v116 = vld [vmem:[%s0 + $0x2d8] sm:$0xff]
  %v117 = vld [vmem:[%s0 + $0x2e0] sm:$0xff]
  %v118 = vld [vmem:[%s0 + $0x2e8] sm:$0xff]
  %v119 = vld [vmem:[%s0 + $0x2f0] sm:$0xff]
  %v120 = vld [vmem:[%s0 + $0x2f8] sm:$0xff]
  %v121 = vld [vmem:[%s2] sm:$0xff]
  %v122 = vld [vmem:[%s2 + $0x8] sm:$0xff]
  %v123 = vld [vmem:[%s2 + $0x10] sm:$0xff]
  %v124 = vld [vmem:[%s2 + $0x18] sm:$0xff]
  %v125 = vld [vmem:[%s2 + $0x20] sm:$0xff]
  %v126 = vld [vmem:[%s2 + $0x28] sm:$0xff]
  %v127 = vld [vmem:[%s2 + $0x30] sm:$0xff]
  %v128 = vld [vmem:[%s2 + $0x38] sm:$0xff]
  %v129 = vld [vmem:[%s2 + $0x40] sm:$0xff]
  %v130 = vld [vmem:[%s2 + $0x48] sm:$0xff]
  %v131 = vld [vmem:[%s2 + $0x50] sm:$0xff]
  %v132 = vld [vmem:[%s2 + $0x58] sm:$0xff]
  %v133 = vld [vmem:[%s2 + $0x60] sm:$0xff]
  %v134 = vld [vmem:[%s2 + $0x68] sm:$0xff]
  %v135 = vld [vmem:[%s2 + $0x70] sm:$0xff]
  %v136 = vld [vmem:[%s2 + $0x78] sm:$0xff]
  %v137 = vld [vmem:[%s2 + $0x80] sm:$0xff]
  %v138 = vld [vmem:[%s2 + $0x88] sm:$0xff]
  %v139 = vld [vmem:[%s2 + $0x90] sm:$0xff]
  %v140 = vld [vmem:[%s2 + $0x98] sm:$0xff]
  %v141 = vld [vmem:[%s2 + $0xa0] sm:$0xff]
  %v142 = vld [vmem:[%s2 + $0xa8] sm:$0xff]
  %v143 = vld [vmem:[%s2 + $0xb0] sm:$0xff]
  %v144 = vld [vmem:[%s2 + $0xb8] sm:$0xff]
  %v145 = vld [vmem:[%s2 + $0xc0] sm:$0xff]
  %v146 = vld [vmem:[%s2 + $0xc8] sm:$0xff]
  %v147 = vld [vmem:[%s2 + $0xd0] sm:$0xff]
  %v148 = vld [vmem:[%s2 + $0xd8] sm:$0xff]
  %v149 = vld [vmem:[%s2 + $0xe0] sm:$0xff]
  %v150 = vld [vmem:[%s2 + $0xe8] sm:$0xff]
  %v151 = vld [vmem:[%s2 + $0xf0] sm:$0xff]
  %v152 = vld [vmem:[%s2 + $0xf8] sm:$0xff]
  %v153 = vld [vmem:[%s2 + $0x100] sm:$0xff]
  %v154 = vld [vmem:[%s2 + $0x108] sm:$0xff]
  %v155 = vld [vmem:[%s2 + $0x110] sm:$0xff]
  %v156 = vld [vmem:[%s2 + $0x118] sm:$0xff]
  %v157 = vld [vmem:[%s2 + $0x120] sm:$0xff]
  %v158 = vld [vmem:[%s2 + $0x128] sm:$0xff]
  %v159 = vld [vmem:[%s2 + $0x130] sm:$0xff]
  %v160 = vld [vmem:[%s2 + $0x138] sm:$0xff]
  %v161 = vld [vmem:[%s2 + $0x140] sm:$0xff]
  %v162 = vld [vmem:[%s2 + $0x148] sm:$0xff]
  %v163 = vld [vmem:[%s2 + $0x150] sm:$0xff]
  %v164 = vld [vmem:[%s2 + $0x158] sm:$0xff]
  %v165 = vld [vmem:[%s2 + $0x160] sm:$0xff]
  %v166 = vld [vmem:[%s2 + $0x168] sm:$0xff]
  %v167 = vld [vmem:[%s2 + $0x170] sm:$0xff]
  %v168 = vld [vmem:[%s2 + $0x178] sm:$0xff]
  %v169 = vld [vmem:[%s2 + $0x180] sm:$0xff]
  %v170 = vld [vmem:[%s2 + $0x188] sm:$0xff]
  %v171 = vld [vmem:[%s2 + $0x190] sm:$0xff]
  %v172 = vld [vmem:[%s2 + $0x198] sm:$0xff]
  %v173 = vld [vmem:[%s2 + $0x1a0] sm:$0xff]
  %v174 = vld [vmem:[%s2 + $0x1a8] sm:$0xff]
  %v175 = vld [vmem:[%s2 + $0x1b0] sm:$0xff]
  %v176 = vld [vmem:[%s2 + $0x1b8] sm:$0xff]
  %v177 = vld [vmem:[%s2 + $0x1c0] sm:$0xff]
  %v178 = vld [vmem:[%s2 + $0x1c8] sm:$0xff]
  %v179 = vld [vmem:[%s2 + $0x1d0] sm:$0xff]
  %v180 = vld [vmem:[%s2 + $0x1d8] sm:$0xff]
  %v181 = vld [vmem:[%s2 + $0x1e0] sm:$0xff]
  %v182 = vld [vmem:[%s2 + $0x1e8] sm:$0xff]
  %v183 = vld [vmem:[%s2 + $0x1f0] sm:$0xff]
  %v184 = vld [vmem:[%s2 + $0x1f8] sm:$0xff]
  %v185 = vld [vmem:[%s2 + $0x200] sm:$0xff]
  %v186 = vld [vmem:[%s2 + $0x208] sm:$0xff]
  %v187 = vld [vmem:[%s2 + $0x210] sm:$0xff]
  %v188 = vld [vmem:[%s2 + $0x218] sm:$0xff]
  %v189 = vld [vmem:[%s2 + $0x220] sm:$0xff]
  %v190 = vld [vmem:[%s2 + $0x228] sm:$0xff]
  %v191 = vld [vmem:[%s2 + $0x230] sm:$0xff]
  %v192 = vld [vmem:[%s2 + $0x238] sm:$0xff]
  %v193 = vld [vmem:[%s2 + $0x240] sm:$0xff]
  %v194 = vld [vmem:[%s2 + $0x248] sm:$0xff]
  %v195 = vld [vmem:[%s2 + $0x250] sm:$0xff]
  %v196 = vld [vmem:[%s2 + $0x258] sm:$0xff]
  %v197 = vld [vmem:[%s2 + $0x260] sm:$0xff]
  %v198 = vld [vmem:[%s2 + $0x268] sm:$0xff]
  %v199 = vld [vmem:[%s2 + $0x270] sm:$0xff]
  %v200 = vld [vmem:[%s2 + $0x278] sm:$0xff]
  %v201 = vld [vmem:[%s2 + $0x280] sm:$0xff]
  %v202 = vld [vmem:[%s2 + $0x288] sm:$0xff]
  %v203 = vld [vmem:[%s2 + $0x290] sm:$0xff]
  %v204 = vld [vmem:[%s2 + $0x298] sm:$0xff]
  %v205 = vld [vmem:[%s2 + $0x2a0] sm:$0xff]
  %v206 = vld [vmem:[%s2 + $0x2a8] sm:$0xff]
  %v207 = vld [vmem:[%s2 + $0x2b0] sm:$0xff]
  %v208 = vld [vmem:[%s2 + $0x2b8] sm:$0xff]
  %v209 = vld [vmem:[%s2 + $0x2c0] sm:$0xff]
  %v210 = vld [vmem:[%s2 + $0x2c8] sm:$0xff]
  %v211 = vld [vmem:[%s2 + $0x2d0] sm:$0xff]
  %v212 = vld [vmem:[%s2 + $0x2d8] sm:$0xff]
  %v213 = vld [vmem:[%s2 + $0x2e0] sm:$0xff]
  %v214 = vld [vmem:[%s2 + $0x2e8] sm:$0xff]
  %v215 = vld [vmem:[%s2 + $0x2f0] sm:$0xff]
  %v216 = vld [vmem:[%s2 + $0x2f8] sm:$0xff]
  %v217 = vld [vmem:[%s2 + $0x300] sm:$0xff]
  %v218 = vld [vmem:[%s2 + $0x308] sm:$0xff]
  %v219 = vld [vmem:[%s2 + $0x310] sm:$0xff]
  %v220 = vld [vmem:[%s2 + $0x318] sm:$0xff]
  %v221 = vld [vmem:[%s2 + $0x320] sm:$0xff]
  %v222 = vld [vmem:[%s2 + $0x328] sm:$0xff]
  %v223 = vld [vmem:[%s2 + $0x330] sm:$0xff]
  %v224 = vld [vmem:[%s2 + $0x338] sm:$0xff]
  %v225 = vld [vmem:[%s2 + $0x340] sm:$0xff]
  %v226 = vld [vmem:[%s2 + $0x348] sm:$0xff]
  %v227 = vld [vmem:[%s2 + $0x350] sm:$0xff]
  %v228 = vld [vmem:[%s2 + $0x358] sm:$0xff]
  %v229 = vld [vmem:[%s2 + $0x360] sm:$0xff]
  %v230 = vld [vmem:[%s2 + $0x368] sm:$0xff]
  %v231 = vld [vmem:[%s2 + $0x370] sm:$0xff]
  %v232 = vld [vmem:[%s2 + $0x378] sm:$0xff]
  %v233 = vld [vmem:[%s2 + $0x380] sm:$0xf]
  %v234 = vld [vmem:[%s4] sm:$0x1]
  %v236 = vperm.slane %v234, 0
  %vm238 = vcmask 31744
  %v240 = vsel %vm238, %v32, 0
  %v243 = vsel %vm238, %v40, 0
  %v246 = vsel %vm238, %v48, 0
  %v249 = vsel %vm238, %v56, 0
  %v252 = vsel %vm238, %v64, 0
  %v255 = vsel %vm238, %v72, 0
  %v258 = vsel %vm238, %v80, 0
  %v261 = vsel %vm238, %v88, 0
  %v264 = vsel %vm238, %v96, 0
  %v267 = vsel %vm238, %v104, 0
  %v270 = vsel %vm238, %v112, 0
  %v273 = vsel %vm238, %v120, 0
  %vm275 = vcmask 1043456
  %v277 = vsel %vm275, %v233, 0
  %279 = vmatpush.msra.mxu0 %v136
  %280 = vmatpush.msra.mxu0 %v135
  %281 = vmatpush.msra.mxu0 %v134
  %282 = vmatpush.msra.mxu0 %v133
  %283 = vmatpush.msra.mxu0 %v132
  %284 = vmatpush.msra.mxu0 %v131
  %285 = vmatpush.msra.mxu0 %v130
  %286 = vmatpush.msra.mxu0 %v129
  %287 = vmatpush.msra.mxu0 %v128
  %288 = vmatpush.msra.mxu0 %v127
  %289 = vmatpush.msra.mxu0 %v126
  %290 = vmatpush.msra.mxu0 %v125
  %291 = vmatpush.msra.mxu0 %v124
  %292 = vmatpush.msra.mxu0 %v123
  %293 = vmatpush.msra.mxu0 %v122
  %294 = vmatpush.msra.mxu0 %v121
  %295 = vmatmul.f32.gmra.mxu0 %v25
  %v296 = vpop.f32.mrf.mxu0
  %v297 = vadd.f32 %v236, %v296
  %298 = vmatmul.f32.gmra.mxu0 %v33
  %v299 = vpop.f32.mrf.mxu0
  %v300 = vadd.f32 %v236, %v299
  %301 = vmatmul.f32.gmra.mxu0 %v41
  %v302 = vpop.f32.mrf.mxu0
  %v303 = vadd.f32 %v236, %v302
  %304 = vmatmul.f32.gmra.mxu0 %v49
  %v305 = vpop.f32.mrf.mxu0
  %v306 = vadd.f32 %v236, %v305
  %307 = vmatmul.f32.gmra.mxu0 %v57
  %v308 = vpop.f32.mrf.mxu0
  %v309 = vadd.f32 %v236, %v308
  %310 = vmatmul.f32.gmra.mxu0 %v65
  %v311 = vpop.f32.mrf.mxu0
  %v312 = vadd.f32 %v236, %v311
  %313 = vmatmul.f32.gmra.mxu0 %v73
  %v314 = vpop.f32.mrf.mxu0
  %v315 = vadd.f32 %v236, %v314
  %316 = vmatmul.f32.gmra.mxu0 %v81
  %v317 = vpop.f32.mrf.mxu0
  %v318 = vadd.f32 %v236, %v317
  %319 = vmatmul.f32.gmra.mxu0 %v89
  %v320 = vpop.f32.mrf.mxu0
  %v321 = vadd.f32 %v236, %v320
  %322 = vmatmul.f32.gmra.mxu0 %v97
  %v323 = vpop.f32.mrf.mxu0
  %v324 = vadd.f32 %v236, %v323
  %325 = vmatmul.f32.gmra.mxu0 %v105
  %v326 = vpop.f32.mrf.mxu0
  %v327 = vadd.f32 %v236, %v326
  %328 = vmatmul.f32.gmra.mxu0 %v113
  %v329 = vpop.f32.mrf.mxu0
  %v330 = vadd.f32 %v236, %v329
  %331 = vdwg.mxu0
  %332 = vmatpush.msra.mxu0 %v152
  %333 = vmatpush.msra.mxu0 %v151
  %334 = vmatpush.msra.mxu0 %v150
  %335 = vmatpush.msra.mxu0 %v149
  %336 = vmatpush.msra.mxu0 %v148
  %337 = vmatpush.msra.mxu0 %v147
  %338 = vmatpush.msra.mxu0 %v146
  %339 = vmatpush.msra.mxu0 %v145
  %340 = vmatpush.msra.mxu0 %v144
  %341 = vmatpush.msra.mxu0 %v143
  %342 = vmatpush.msra.mxu0 %v142
  %343 = vmatpush.msra.mxu0 %v141
  %344 = vmatpush.msra.mxu0 %v140
  %345 = vmatpush.msra.mxu0 %v139
  %346 = vmatpush.msra.mxu0 %v138
  %347 = vmatpush.msra.mxu0 %v137
  %348 = vmatmul.f32.gmra.mxu0 %v26
  %v349 = vpop.f32.mrf.mxu0
  %v350 = vadd.f32 %v297, %v349
  %351 = vmatmul.f32.gmra.mxu0 %v34
  %v352 = vpop.f32.mrf.mxu0
  %v353 = vadd.f32 %v300, %v352
  %354 = vmatmul.f32.gmra.mxu0 %v42
  %v355 = vpop.f32.mrf.mxu0
  %v356 = vadd.f32 %v303, %v355
  %357 = vmatmul.f32.gmra.mxu0 %v50
  %v358 = vpop.f32.mrf.mxu0
  %v359 = vadd.f32 %v306, %v358
  %360 = vmatmul.f32.gmra.mxu0 %v58
  %v361 = vpop.f32.mrf.mxu0
  %v362 = vadd.f32 %v309, %v361
  %363 = vmatmul.f32.gmra.mxu0 %v66
  %v364 = vpop.f32.mrf.mxu0
  %v365 = vadd.f32 %v312, %v364
  %366 = vmatmul.f32.gmra.mxu0 %v74
  %v367 = vpop.f32.mrf.mxu0
  %v368 = vadd.f32 %v315, %v367
  %369 = vmatmul.f32.gmra.mxu0 %v82
  %v370 = vpop.f32.mrf.mxu0
  %v371 = vadd.f32 %v318, %v370
  %372 = vmatmul.f32.gmra.mxu0 %v90
  %v373 = vpop.f32.mrf.mxu0
  %v374 = vadd.f32 %v321, %v373
  %375 = vmatmul.f32.gmra.mxu0 %v98
  %v376 = vpop.f32.mrf.mxu0
  %v377 = vadd.f32 %v324, %v376
  %378 = vmatmul.f32.gmra.mxu0 %v106
  %v379 = vpop.f32.mrf.mxu0
  %v380 = vadd.f32 %v327, %v379
  %381 = vmatmul.f32.gmra.mxu0 %v114
  %v382 = vpop.f32.mrf.mxu0
  %v383 = vadd.f32 %v330, %v382
  %384 = vdwg.mxu0
  %385 = vmatpush.msra.mxu0 %v168
  %386 = vmatpush.msra.mxu0 %v167
  %387 = vmatpush.msra.mxu0 %v166
  %388 = vmatpush.msra.mxu0 %v165
  %389 = vmatpush.msra.mxu0 %v164
  %390 = vmatpush.msra.mxu0 %v163
  %391 = vmatpush.msra.mxu0 %v162
  %392 = vmatpush.msra.mxu0 %v161
  %393 = vmatpush.msra.mxu0 %v160
  %394 = vmatpush.msra.mxu0 %v159
  %395 = vmatpush.msra.mxu0 %v158
  %396 = vmatpush.msra.mxu0 %v157
  %397 = vmatpush.msra.mxu0 %v156
  %398 = vmatpush.msra.mxu0 %v155
  %399 = vmatpush.msra.mxu0 %v154
  %400 = vmatpush.msra.mxu0 %v153
  %401 = vmatmul.f32.gmra.mxu0 %v27
  %v402 = vpop.f32.mrf.mxu0
  %v403 = vadd.f32 %v350, %v402
  %404 = vmatmul.f32.gmra.mxu0 %v35
  %v405 = vpop.f32.mrf.mxu0
  %v406 = vadd.f32 %v353, %v405
  %407 = vmatmul.f32.gmra.mxu0 %v43
  %v408 = vpop.f32.mrf.mxu0
  %v409 = vadd.f32 %v356, %v408
  %410 = vmatmul.f32.gmra.mxu0 %v51
  %v411 = vpop.f32.mrf.mxu0
  %v412 = vadd.f32 %v359, %v411
  %413 = vmatmul.f32.gmra.mxu0 %v59
  %v414 = vpop.f32.mrf.mxu0
  %v415 = vadd.f32 %v362, %v414
  %416 = vmatmul.f32.gmra.mxu0 %v67
  %v417 = vpop.f32.mrf.mxu0
  %v418 = vadd.f32 %v365, %v417
  %419 = vmatmul.f32.gmra.mxu0 %v75
  %v420 = vpop.f32.mrf.mxu0
  %v421 = vadd.f32 %v368, %v420
  %422 = vmatmul.f32.gmra.mxu0 %v83
  %v423 = vpop.f32.mrf.mxu0
  %v424 = vadd.f32 %v371, %v423
  %425 = vmatmul.f32.gmra.mxu0 %v91
  %v426 = vpop.f32.mrf.mxu0
  %v427 = vadd.f32 %v374, %v426
  %428 = vmatmul.f32.gmra.mxu0 %v99
  %v429 = vpop.f32.mrf.mxu0
  %v430 = vadd.f32 %v377, %v429
  %431 = vmatmul.f32.gmra.mxu0 %v107
  %v432 = vpop.f32.mrf.mxu0
  %v433 = vadd.f32 %v380, %v432
  %434 = vmatmul.f32.gmra.mxu0 %v115
  %v435 = vpop.f32.mrf.mxu0
  %v436 = vadd.f32 %v383, %v435
  %437 = vdwg.mxu0
  %438 = vmatpush.msra.mxu0 %v184
  %439 = vmatpush.msra.mxu0 %v183
  %440 = vmatpush.msra.mxu0 %v182
  %441 = vmatpush.msra.mxu0 %v181
  %442 = vmatpush.msra.mxu0 %v180
  %443 = vmatpush.msra.mxu0 %v179
  %444 = vmatpush.msra.mxu0 %v178
  %445 = vmatpush.msra.mxu0 %v177
  %446 = vmatpush.msra.mxu0 %v176
  %447 = vmatpush.msra.mxu0 %v175
  %448 = vmatpush.msra.mxu0 %v174
  %449 = vmatpush.msra.mxu0 %v173
  %450 = vmatpush.msra.mxu0 %v172
  %451 = vmatpush.msra.mxu0 %v171
  %452 = vmatpush.msra.mxu0 %v170
  %453 = vmatpush.msra.mxu0 %v169
  %454 = vmatmul.f32.gmra.mxu0 %v28
  %v455 = vpop.f32.mrf.mxu0
  %v456 = vadd.f32 %v403, %v455
  %457 = vmatmul.f32.gmra.mxu0 %v36
  %v458 = vpop.f32.mrf.mxu0
  %v459 = vadd.f32 %v406, %v458
  %460 = vmatmul.f32.gmra.mxu0 %v44
  %v461 = vpop.f32.mrf.mxu0
  %v462 = vadd.f32 %v409, %v461
  %463 = vmatmul.f32.gmra.mxu0 %v52
  %v464 = vpop.f32.mrf.mxu0
  %v465 = vadd.f32 %v412, %v464
  %466 = vmatmul.f32.gmra.mxu0 %v60
  %v467 = vpop.f32.mrf.mxu0
  %v468 = vadd.f32 %v415, %v467
  %469 = vmatmul.f32.gmra.mxu0 %v68
  %v470 = vpop.f32.mrf.mxu0
  %v471 = vadd.f32 %v418, %v470
  %472 = vmatmul.f32.gmra.mxu0 %v76
  %v473 = vpop.f32.mrf.mxu0
  %v474 = vadd.f32 %v421, %v473
  %475 = vmatmul.f32.gmra.mxu0 %v84
  %v476 = vpop.f32.mrf.mxu0
  %v477 = vadd.f32 %v424, %v476
  %478 = vmatmul.f32.gmra.mxu0 %v92
  %v479 = vpop.f32.mrf.mxu0
  %v480 = vadd.f32 %v427, %v479
  %481 = vmatmul.f32.gmra.mxu0 %v100
  %v482 = vpop.f32.mrf.mxu0
  %v483 = vadd.f32 %v430, %v482
  %484 = vmatmul.f32.gmra.mxu0 %v108
  %v485 = vpop.f32.mrf.mxu0
  %v486 = vadd.f32 %v433, %v485
  %487 = vmatmul.f32.gmra.mxu0 %v116
  %v488 = vpop.f32.mrf.mxu0
  %v489 = vadd.f32 %v436, %v488
  %490 = vdwg.mxu0
  %491 = vmatpush.msra.mxu0 %v200
  %492 = vmatpush.msra.mxu0 %v199
  %493 = vmatpush.msra.mxu0 %v198
  %494 = vmatpush.msra.mxu0 %v197
  %495 = vmatpush.msra.mxu0 %v196
  %496 = vmatpush.msra.mxu0 %v195
  %497 = vmatpush.msra.mxu0 %v194
  %498 = vmatpush.msra.mxu0 %v193
  %499 = vmatpush.msra.mxu0 %v192
  %500 = vmatpush.msra.mxu0 %v191
  %501 = vmatpush.msra.mxu0 %v190
  %502 = vmatpush.msra.mxu0 %v189
  %503 = vmatpush.msra.mxu0 %v188
  %504 = vmatpush.msra.mxu0 %v187
  %505 = vmatpush.msra.mxu0 %v186
  %506 = vmatpush.msra.mxu0 %v185
  %507 = vmatmul.f32.gmra.mxu0 %v29
  %v508 = vpop.f32.mrf.mxu0
  %v509 = vadd.f32 %v456, %v508
  %510 = vmatmul.f32.gmra.mxu0 %v37
  %v511 = vpop.f32.mrf.mxu0
  %v512 = vadd.f32 %v459, %v511
  %513 = vmatmul.f32.gmra.mxu0 %v45
  %v514 = vpop.f32.mrf.mxu0
  %v515 = vadd.f32 %v462, %v514
  %516 = vmatmul.f32.gmra.mxu0 %v53
  %v517 = vpop.f32.mrf.mxu0
  %v518 = vadd.f32 %v465, %v517
  %519 = vmatmul.f32.gmra.mxu0 %v61
  %v520 = vpop.f32.mrf.mxu0
  %v521 = vadd.f32 %v468, %v520
  %522 = vmatmul.f32.gmra.mxu0 %v69
  %v523 = vpop.f32.mrf.mxu0
  %v524 = vadd.f32 %v471, %v523
  %525 = vmatmul.f32.gmra.mxu0 %v77
  %v526 = vpop.f32.mrf.mxu0
  %v527 = vadd.f32 %v474, %v526
  %528 = vmatmul.f32.gmra.mxu0 %v85
  %v529 = vpop.f32.mrf.mxu0
  %v530 = vadd.f32 %v477, %v529
  %531 = vmatmul.f32.gmra.mxu0 %v93
  %v532 = vpop.f32.mrf.mxu0
  %v533 = vadd.f32 %v480, %v532
  %534 = vmatmul.f32.gmra.mxu0 %v101
  %v535 = vpop.f32.mrf.mxu0
  %v536 = vadd.f32 %v483, %v535
  %537 = vmatmul.f32.gmra.mxu0 %v109
  %v538 = vpop.f32.mrf.mxu0
  %v539 = vadd.f32 %v486, %v538
  %540 = vmatmul.f32.gmra.mxu0 %v117
  %v541 = vpop.f32.mrf.mxu0
  %v542 = vadd.f32 %v489, %v541
  %543 = vdwg.mxu0
  %544 = vmatpush.msra.mxu0 %v216
  %545 = vmatpush.msra.mxu0 %v215
  %546 = vmatpush.msra.mxu0 %v214
  %547 = vmatpush.msra.mxu0 %v213
  %548 = vmatpush.msra.mxu0 %v212
  %549 = vmatpush.msra.mxu0 %v211
  %550 = vmatpush.msra.mxu0 %v210
  %551 = vmatpush.msra.mxu0 %v209
  %552 = vmatpush.msra.mxu0 %v208
  %553 = vmatpush.msra.mxu0 %v207
  %554 = vmatpush.msra.mxu0 %v206
  %555 = vmatpush.msra.mxu0 %v205
  %556 = vmatpush.msra.mxu0 %v204
  %557 = vmatpush.msra.mxu0 %v203
  %558 = vmatpush.msra.mxu0 %v202
  %559 = vmatpush.msra.mxu0 %v201
  %560 = vmatmul.f32.gmra.mxu0 %v30
  %v561 = vpop.f32.mrf.mxu0
  %v562 = vadd.f32 %v509, %v561
  %563 = vmatmul.f32.gmra.mxu0 %v38
  %v564 = vpop.f32.mrf.mxu0
  %v565 = vadd.f32 %v512, %v564
  %566 = vmatmul.f32.gmra.mxu0 %v46
  %v567 = vpop.f32.mrf.mxu0
  %v568 = vadd.f32 %v515, %v567
  %569 = vmatmul.f32.gmra.mxu0 %v54
  %v570 = vpop.f32.mrf.mxu0
  %v571 = vadd.f32 %v518, %v570
  %572 = vmatmul.f32.gmra.mxu0 %v62
  %v573 = vpop.f32.mrf.mxu0
  %v574 = vadd.f32 %v521, %v573
  %575 = vmatmul.f32.gmra.mxu0 %v70
  %v576 = vpop.f32.mrf.mxu0
  %v577 = vadd.f32 %v524, %v576
  %578 = vmatmul.f32.gmra.mxu0 %v78
  %v579 = vpop.f32.mrf.mxu0
  %v580 = vadd.f32 %v527, %v579
  %581 = vmatmul.f32.gmra.mxu0 %v86
  %v582 = vpop.f32.mrf.mxu0
  %v583 = vadd.f32 %v530, %v582
  %584 = vmatmul.f32.gmra.mxu0 %v94
  %v585 = vpop.f32.mrf.mxu0
  %v586 = vadd.f32 %v533, %v585
  %587 = vmatmul.f32.gmra.mxu0 %v102
  %v588 = vpop.f32.mrf.mxu0
  %v589 = vadd.f32 %v536, %v588
  %590 = vmatmul.f32.gmra.mxu0 %v110
  %v591 = vpop.f32.mrf.mxu0
  %v592 = vadd.f32 %v539, %v591
  %593 = vmatmul.f32.gmra.mxu0 %v118
  %v594 = vpop.f32.mrf.mxu0
  %v595 = vadd.f32 %v542, %v594
  %596 = vdwg.mxu0
  %597 = vmatpush.msra.mxu0 %v232
  %598 = vmatpush.msra.mxu0 %v231
  %599 = vmatpush.msra.mxu0 %v230
  %600 = vmatpush.msra.mxu0 %v229
  %601 = vmatpush.msra.mxu0 %v228
  %602 = vmatpush.msra.mxu0 %v227
  %603 = vmatpush.msra.mxu0 %v226
  %604 = vmatpush.msra.mxu0 %v225
  %605 = vmatpush.msra.mxu0 %v224
  %606 = vmatpush.msra.mxu0 %v223
  %607 = vmatpush.msra.mxu0 %v222
  %608 = vmatpush.msra.mxu0 %v221
  %609 = vmatpush.msra.mxu0 %v220
  %610 = vmatpush.msra.mxu0 %v219
  %611 = vmatpush.msra.mxu0 %v218
  %612 = vmatpush.msra.mxu0 %v217
  %613 = vmatmul.f32.gmra.mxu0 %v31
  %v614 = vpop.f32.mrf.mxu0
  %v615 = vadd.f32 %v562, %v614
  %616 = vmatmul.f32.gmra.mxu0 %v39
  %v617 = vpop.f32.mrf.mxu0
  %v618 = vadd.f32 %v565, %v617
  %619 = vmatmul.f32.gmra.mxu0 %v47
  %v620 = vpop.f32.mrf.mxu0
  %v621 = vadd.f32 %v568, %v620
  %622 = vmatmul.f32.gmra.mxu0 %v55
  %v623 = vpop.f32.mrf.mxu0
  %v624 = vadd.f32 %v571, %v623
  %625 = vmatmul.f32.gmra.mxu0 %v63
  %v626 = vpop.f32.mrf.mxu0
  %v627 = vadd.f32 %v574, %v626
  %628 = vmatmul.f32.gmra.mxu0 %v71
  %v629 = vpop.f32.mrf.mxu0
  %v630 = vadd.f32 %v577, %v629
  %631 = vmatmul.f32.gmra.mxu0 %v79
  %v632 = vpop.f32.mrf.mxu0
  %v633 = vadd.f32 %v580, %v632
  %634 = vmatmul.f32.gmra.mxu0 %v87
  %v635 = vpop.f32.mrf.mxu0
  %v636 = vadd.f32 %v583, %v635
  %637 = vmatmul.f32.gmra.mxu0 %v95
  %v638 = vpop.f32.mrf.mxu0
  %v639 = vadd.f32 %v586, %v638
  %640 = vmatmul.f32.gmra.mxu0 %v103
  %v641 = vpop.f32.mrf.mxu0
  %v642 = vadd.f32 %v589, %v641
  %643 = vmatmul.f32.gmra.mxu0 %v111
  %v644 = vpop.f32.mrf.mxu0
  %v645 = vadd.f32 %v592, %v644
  %646 = vmatmul.f32.gmra.mxu0 %v119
  %v647 = vpop.f32.mrf.mxu0
  %v648 = vadd.f32 %v595, %v647
  %649 = vdwg.mxu0
  %650 = vmatpush.msra.mxu0 0.0
  %651 = vmatpush.msra.mxu0 0.0
  %652 = vmatpush.msra.mxu0 0.0
  %653 = vmatpush.msra.mxu0 0.0
  %654 = vmatpush.msra.mxu0 0.0
  %655 = vmatpush.msra.mxu0 0.0
  %656 = vmatpush.msra.mxu0 0.0
  %657 = vmatpush.msra.mxu0 0.0
  %658 = vmatpush.msra.mxu0 0.0
  %659 = vmatpush.msra.mxu0 0.0
  %660 = vmatpush.msra.mxu0 0.0
  %661 = vmatpush.msra.mxu0 0.0
  %662 = vmatpush.msra.mxu0 0.0
  %663 = vmatpush.msra.mxu0 0.0
  %664 = vmatpush.msra.mxu0 0.0
  %665 = vmatpush.msra.mxu0 %v277
  %666 = vmatmul.f32.gmra.mxu0 %v240
  %v667 = vpop.f32.mrf.mxu0
  %v668 = vadd.f32 %v615, %v667
  %669 = vmatmul.f32.gmra.mxu0 %v243
  %v670 = vpop.f32.mrf.mxu0
  %v671 = vadd.f32 %v618, %v670
  %672 = vmatmul.f32.gmra.mxu0 %v246
  %v673 = vpop.f32.mrf.mxu0
  %v674 = vadd.f32 %v621, %v673
  %675 = vmatmul.f32.gmra.mxu0 %v249
  %v676 = vpop.f32.mrf.mxu0
  %v677 = vadd.f32 %v624, %v676
  %678 = vmatmul.f32.gmra.mxu0 %v252
  %v679 = vpop.f32.mrf.mxu0
  %v680 = vadd.f32 %v627, %v679
  %681 = vmatmul.f32.gmra.mxu0 %v255
  %v682 = vpop.f32.mrf.mxu0
  %v683 = vadd.f32 %v630, %v682
  %684 = vmatmul.f32.gmra.mxu0 %v258
  %v685 = vpop.f32.mrf.mxu0
  %v686 = vadd.f32 %v633, %v685
  %687 = vmatmul.f32.gmra.mxu0 %v261
  %v688 = vpop.f32.mrf.mxu0
  %v689 = vadd.f32 %v636, %v688
  %690 = vmatmul.f32.gmra.mxu0 %v264
  %v691 = vpop.f32.mrf.mxu0
  %v692 = vadd.f32 %v639, %v691
  %693 = vmatmul.f32.gmra.mxu0 %v267
  %v694 = vpop.f32.mrf.mxu0
  %v695 = vadd.f32 %v642, %v694
  %696 = vmatmul.f32.gmra.mxu0 %v270
  %v697 = vpop.f32.mrf.mxu0
  %v698 = vadd.f32 %v645, %v697
  %699 = vmatmul.f32.gmra.mxu0 %v273
  %v700 = vpop.f32.mrf.mxu0
  %v701 = vadd.f32 %v648, %v700
  %702 = vdwg.mxu0
  %v703 = vmax.f32 %v668, 0.0
  %v704 = vmax.f32 %v671, 0.0
  %v705 = vmax.f32 %v674, 0.0
  %v706 = vmax.f32 %v677, 0.0
  %v707 = vmax.f32 %v680, 0.0
  %v708 = vmax.f32 %v683, 0.0
  %v709 = vmax.f32 %v686, 0.0
  %v710 = vmax.f32 %v689, 0.0
  %v711 = vmax.f32 %v692, 0.0
  %v712 = vmax.f32 %v695, 0.0
  %v713 = vmax.f32 %v698, 0.0
  %v714 = vmax.f32 %v701, 0.0
  %vm715 = vcmask 392192
  %716 = vst.msk [vmem:[%s6] sm:$0xff] %vm715, %v703
  %717 = vst.msk [vmem:[%s6 + $0x8] sm:$0xff] %vm715, %v704
  %718 = vst.msk [vmem:[%s6 + $0x10] sm:$0xff] %vm715, %v705
  %719 = vst.msk [vmem:[%s6 + $0x18] sm:$0xff] %vm715, %v706
  %720 = vst.msk [vmem:[%s6 + $0x20] sm:$0xff] %vm715, %v707
  %721 = vst.msk [vmem:[%s6 + $0x28] sm:$0xff] %vm715, %v708
  %722 = vst.msk [vmem:[%s6 + $0x30] sm:$0xff] %vm715, %v709
  %723 = vst.msk [vmem:[%s6 + $0x38] sm:$0xff] %vm715, %v710
  %724 = vst.msk [vmem:[%s6 + $0x40] sm:$0xff] %vm715, %v711
  %725 = vst.msk [vmem:[%s6 + $0x48] sm:$0xff] %vm715, %v712
  %726 = vst.msk [vmem:[%s6 + $0x50] sm:$0xff] %vm715, %v713
  %727 = vst.msk [vmem:[%s6 + $0x58] sm:$0xff] %vm715, %v714
  %v728 = vld [vmem:[%s1] sm:$0xff]
  %v729 = vld [vmem:[%s1 + $0x8] sm:$0xff]
  %v730 = vld [vmem:[%s1 + $0x10] sm:$0xff]
  %v731 = vld [vmem:[%s1 + $0x18] sm:$0xff]
  %v732 = vld [vmem:[%s1 + $0x20] sm:$0xff]
  %v733 = vld [vmem:[%s1 + $0x28] sm:$0xff]
  %v734 = vld [vmem:[%s1 + $0x30] sm:$0x3]
  %v735 = vld [vmem:[%s1 + $0x38] sm:$0x3]
  %v736 = vld [vmem:[%s1 + $0x40] sm:$0x3]
  %v737 = vld [vmem:[%s3] sm:$0xff]
  %v738 = vld [vmem:[%s3 + $0x8] sm:$0xff]
  %v739 = vld [vmem:[%s3 + $0x10] sm:$0xff]
  %v740 = vld [vmem:[%s3 + $0x18] sm:$0xff]
  %v741 = vld [vmem:[%s3 + $0x20] sm:$0xff]
  %v742 = vld [vmem:[%s3 + $0x28] sm:$0xff]
  %v743 = vld [vmem:[%s3 + $0x30] sm:$0xff]
  %v744 = vld [vmem:[%s3 + $0x38] sm:$0xff]
  %v745 = vld [vmem:[%s3 + $0x40] sm:$0xff]
  %v746 = vld [vmem:[%s3 + $0x48] sm:$0xff]
  %v747 = vld [vmem:[%s3 + $0x50] sm:$0xff]
  %v748 = vld [vmem:[%s3 + $0x58] sm:$0xff]
  %v749 = vld [vmem:[%s3 + $0x60] sm:$0xff]
  %v750 = vld [vmem:[%s3 + $0x68] sm:$0xff]
  %v751 = vld [vmem:[%s3 + $0x70] sm:$0xff]
  %v752 = vld [vmem:[%s3 + $0x78] sm:$0xff]
  %v753 = vld [vmem:[%s3 + $0x80] sm:$0xff]
  %v754 = vld [vmem:[%s3 + $0x88] sm:$0xff]
  %v755 = vld [vmem:[%s3 + $0x90] sm:$0xff]
  %v756 = vld [vmem:[%s3 + $0x98] sm:$0xff]
  %v757 = vld [vmem:[%s3 + $0xa0] sm:$0xff]
  %v758 = vld [vmem:[%s3 + $0xa8] sm:$0xff]
  %v759 = vld [vmem:[%s3 + $0xb0] sm:$0xff]
  %v760 = vld [vmem:[%s3 + $0xb8] sm:$0xff]
  %v761 = vld [vmem:[%s3 + $0xc0] sm:$0xff]
  %v762 = vld [vmem:[%s3 + $0xc8] sm:$0xff]
  %v763 = vld [vmem:[%s3 + $0xd0] sm:$0xff]
  %v764 = vld [vmem:[%s3 + $0xd8] sm:$0xff]
  %v765 = vld [vmem:[%s3 + $0xe0] sm:$0xff]
  %v766 = vld [vmem:[%s3 + $0xe8] sm:$0xff]
  %v767 = vld [vmem:[%s3 + $0xf0] sm:$0xff]
  %v768 = vld [vmem:[%s3 + $0xf8] sm:$0xff]
  %v769 = vld [vmem:[%s3 + $0x100] sm:$0xff]
  %v770 = vld [vmem:[%s3 + $0x108] sm:$0xff]
  %v771 = vld [vmem:[%s3 + $0x110] sm:$0xff]
  %v772 = vld [vmem:[%s3 + $0x118] sm:$0xff]
  %v773 = vld [vmem:[%s3 + $0x120] sm:$0xff]
  %v774 = vld [vmem:[%s3 + $0x128] sm:$0xf]
  %v775 = vld [vmem:[%s5] sm:$0x1]
  %v777 = vperm.slane %v775, 0
  %vm779 = vcmask 359424
  %v781 = vsel %vm779, %v730, 0
  %v784 = vsel %vm779, %v733, 0
  %v787 = vsel %vm779, %v736, 0
  %v790 = vsel %vm275, %v774, 0
  %792 = vmatpush.msra.mxu0 %v752
  %793 = vmatpush.msra.mxu0 %v751
  %794 = vmatpush.msra.mxu0 %v750
  %795 = vmatpush.msra.mxu0 %v749
  %796 = vmatpush.msra.mxu0 %v748
  %797 = vmatpush.msra.mxu0 %v747
  %798 = vmatpush.msra.mxu0 %v746
  %799 = vmatpush.msra.mxu0 %v745
  %800 = vmatpush.msra.mxu0 %v744
  %801 = vmatpush.msra.mxu0 %v743
  %802 = vmatpush.msra.mxu0 %v742
  %803 = vmatpush.msra.mxu0 %v741
  %804 = vmatpush.msra.mxu0 %v740
  %805 = vmatpush.msra.mxu0 %v739
  %806 = vmatpush.msra.mxu0 %v738
  %807 = vmatpush.msra.mxu0 %v737
  %808 = vmatmul.f32.gmra.mxu0 %v728
  %v809 = vpop.f32.mrf.mxu0
  %v810 = vadd.f32 %v777, %v809
  %811 = vmatmul.f32.gmra.mxu0 %v731
  %v812 = vpop.f32.mrf.mxu0
  %v813 = vadd.f32 %v777, %v812
  %814 = vmatmul.f32.gmra.mxu0 %v734
  %v815 = vpop.f32.mrf.mxu0
  %v816 = vadd.f32 %v777, %v815
  %817 = vdwg.mxu0
  %818 = vmatpush.msra.mxu0 %v768
  %819 = vmatpush.msra.mxu0 %v767
  %820 = vmatpush.msra.mxu0 %v766
  %821 = vmatpush.msra.mxu0 %v765
  %822 = vmatpush.msra.mxu0 %v764
  %823 = vmatpush.msra.mxu0 %v763
  %824 = vmatpush.msra.mxu0 %v762
  %825 = vmatpush.msra.mxu0 %v761
  %826 = vmatpush.msra.mxu0 %v760
  %827 = vmatpush.msra.mxu0 %v759
  %828 = vmatpush.msra.mxu0 %v758
  %829 = vmatpush.msra.mxu0 %v757
  %830 = vmatpush.msra.mxu0 %v756
  %831 = vmatpush.msra.mxu0 %v755
  %832 = vmatpush.msra.mxu0 %v754
  %833 = vmatpush.msra.mxu0 %v753
  %834 = vmatmul.f32.gmra.mxu0 %v729
  %v835 = vpop.f32.mrf.mxu0
  %v836 = vadd.f32 %v810, %v835
  %837 = vmatmul.f32.gmra.mxu0 %v732
  %v838 = vpop.f32.mrf.mxu0
  %v839 = vadd.f32 %v813, %v838
  %840 = vmatmul.f32.gmra.mxu0 %v735
  %v841 = vpop.f32.mrf.mxu0
  %v842 = vadd.f32 %v816, %v841
  %843 = vdwg.mxu0
  %844 = vmatpush.msra.mxu0 0.0
  %845 = vmatpush.msra.mxu0 0.0
  %846 = vmatpush.msra.mxu0 0.0
  %847 = vmatpush.msra.mxu0 0.0
  %848 = vmatpush.msra.mxu0 0.0
  %849 = vmatpush.msra.mxu0 0.0
  %850 = vmatpush.msra.mxu0 0.0
  %851 = vmatpush.msra.mxu0 0.0
  %852 = vmatpush.msra.mxu0 0.0
  %853 = vmatpush.msra.mxu0 0.0
  %854 = vmatpush.msra.mxu0 %v790
  %855 = vmatpush.msra.mxu0 %v773
  %856 = vmatpush.msra.mxu0 %v772
  %857 = vmatpush.msra.mxu0 %v771
  %858 = vmatpush.msra.mxu0 %v770
  %859 = vmatpush.msra.mxu0 %v769
  %860 = vmatmul.f32.gmra.mxu0 %v781
  %v861 = vpop.f32.mrf.mxu0
  %v862 = vadd.f32 %v836, %v861
  %863 = vmatmul.f32.gmra.mxu0 %v784
  %v864 = vpop.f32.mrf.mxu0
  %v865 = vadd.f32 %v839, %v864
  %866 = vmatmul.f32.gmra.mxu0 %v787
  %v867 = vpop.f32.mrf.mxu0
  %v868 = vadd.f32 %v842, %v867
  %869 = vdwg.mxu0
  %vm870 = vcmask 146432
  %871 = vst.msk [vmem:[%s7] sm:$0xff] %vm870, %v862
  %872 = vst.msk [vmem:[%s7 + $0x8] sm:$0xff] %vm870, %v865
  %vm873 = vcmask 140288
  %874 = vst.msk [vmem:[%s7 + $0x10] sm:$0x3] %vm873, %v868
  // Predicated region
  $region26: #{nvidia_arch_forward.8} parent=0 // pred_check
    _
  $region27: #{nvidia_arch_forward.8} parent=0 // pred_check_branch
    %876 = sbr.rel (0) target = $region29
  $region28: #{nvidia_arch_forward.8} parent=0 // pred_region
    _
  $region29: #{nvidia_arch_forward.8} parent=0 // pred_fallthru
    _
  // Predicated region
  $region30: #{nvidia_arch_forward.8} parent=0 // pred_check
    _
  $region31: #{nvidia_arch_forward.8} parent=0 // pred_check_branch
    %878 = sbr.rel (0) target = $region33
  $region32: #{nvidia_arch_forward.8} parent=0 // pred_region
    _
  $region33: #{nvidia_arch_forward.8} parent=0 // pred_fallthru
    _
  // Predicated region
  $region34: #{nvidia_arch_forward.8} parent=0 // pred_check
    _
  $region35: #{nvidia_arch_forward.8} parent=0 // pred_check_branch
    %880 = sbr.rel (0) target = $region37
  $region36: #{nvidia_arch_forward.8} parent=0 // pred_region
    _
  $region37: #{nvidia_arch_forward.8} parent=0 // pred_fallthru
    _
  // Predicated region
  $region38: #{nvidia_arch_forward.8} parent=0 // pred_check
    _
  $region39: #{nvidia_arch_forward.8} parent=0 // pred_check_branch
    %882 = sbr.rel (0) target = $region41
  $region40: #{nvidia_arch_forward.8} parent=0 // pred_region
    _
  $region41: #{nvidia_arch_forward.8} parent=0 // pred_fallthru
    _

// kernel: nvidia_arch_forward.9
$region0: #{nvidia_arch_forward.9}
  #allocation0 [shape = 'u32[]', space=smem, size = 0x4, offset = 0x4, fixed_abs, tag = 'smem constant byte address 0x4 - core index']
  #allocation1 [shape = 'u32[72,128]{1,0:T(1,128)}', space=vmem, size = 0x9000, scoped, tag = 'internal scratch']
  %s0 = inlined_call_operand.vmem [shape: f32[96,432], index: 0, kind: input, shape index: {}]
  %s1 = inlined_call_operand.vmem [shape: f32[432,64], index: 1, kind: input, shape index: {}]
  %s2 = inlined_call_operand.vmem [shape: f32[1,64], index: 2, kind: input, shape index: {}]
  %s3 = inlined_call_operand.vmem [shape: f32[96,64], index: 3, kind: output, shape index: {}]
  %s4 = sld [smem:[#allocation0]]
  $region22: #{nvidia_arch_forward.9} parent=0
    _
  %s6 = ssub.s32 1, %s4
  %s7 = scalar_select 0, %s6, %s4
  // Predicated region
  $region2: #{nvidia_arch_forward.9} parent=0 // pred_check
    _
  $region3: #{nvidia_arch_forward.9} parent=0 // pred_check_branch
    %9 = sbr.rel (0) target = $region5
  $region4: #{nvidia_arch_forward.9} parent=0 // pred_region
    _
  $region5: #{nvidia_arch_forward.9} parent=0 // pred_fallthru
    _
  // Predicated region
  $region6: #{nvidia_arch_forward.9} parent=0 // pred_check
    _
  $region7: #{nvidia_arch_forward.9} parent=0 // pred_check_branch
    %11 = sbr.rel (0) target = $region9
  $region8: #{nvidia_arch_forward.9} parent=0 // pred_region
    _
  $region9: #{nvidia_arch_forward.9} parent=0 // pred_fallthru
    _
  // Predicated region
  $region10: #{nvidia_arch_forward.9} parent=0 // pred_check
    _
  $region11: #{nvidia_arch_forward.9} parent=0 // pred_check_branch
    %13 = sbr.rel (0) target = $region13
  $region12: #{nvidia_arch_forward.9} parent=0 // pred_region
    _
  $region13: #{nvidia_arch_forward.9} parent=0 // pred_fallthru
    _
  %v14 = vld [vmem:[%s0] sm:$0xff]
  %v15 = vld [vmem:[%s0 + $0x8] sm:$0xff]
  %v16 = vld [vmem:[%s0 + $0x10] sm:$0xff]
  %v17 = vld [vmem:[%s0 + $0x18] sm:$0xff]
  %v18 = vld [vmem:[%s0 + $0x20] sm:$0xff]
  %v19 = vld [vmem:[%s0 + $0x28] sm:$0xff]
  %v20 = vld [vmem:[%s0 + $0x30] sm:$0xff]
  %v21 = vld [vmem:[%s0 + $0x38] sm:$0xff]
  %v22 = vld [vmem:[%s0 + $0x40] sm:$0xff]
  %v23 = vld [vmem:[%s0 + $0x48] sm:$0xff]
  %v24 = vld [vmem:[%s0 + $0x50] sm:$0xff]
  %v25 = vld [vmem:[%s0 + $0x58] sm:$0xff]
  %v26 = vld [vmem:[%s0 + $0x60] sm:$0xff]
  %v27 = vld [vmem:[%s0 + $0x68] sm:$0xff]
  %v28 = vld [vmem:[%s0 + $0x70] sm:$0xff]
  %v29 = vld [vmem:[%s0 + $0x78] sm:$0xff]
  %v30 = vld [vmem:[%s0 + $0x80] sm:$0xff]
  %v31 = vld [vmem:[%s0 + $0x88] sm:$0xff]
  %v32 = vld [vmem:[%s0 + $0x90] sm:$0xff]
  %v33 = vld [vmem:[%s0 + $0x98] sm:$0xff]
  %v34 = vld [vmem:[%s0 + $0xa0] sm:$0xff]
  %v35 = vld [vmem:[%s0 + $0xa8] sm:$0xff]
  %v36 = vld [vmem:[%s0 + $0xb0] sm:$0xff]
  %v37 = vld [vmem:[%s0 + $0xb8] sm:$0xff]
  %v38 = vld [vmem:[%s0 + $0xc0] sm:$0xff]
  %v39 = vld [vmem:[%s0 + $0xc8] sm:$0xff]
  %v40 = vld [vmem:[%s0 + $0xd0] sm:$0xff]
  %v41 = vld [vmem:[%s0 + $0xd8] sm:$0xff]
  %v42 = vld [vmem:[%s0 + $0xe0] sm:$0xff]
  %v43 = vld [vmem:[%s0 + $0xe8] sm:$0xff]
  %v44 = vld [vmem:[%s0 + $0xf0] sm:$0xff]
  %v45 = vld [vmem:[%s0 + $0xf8] sm:$0xff]
  %v46 = vld [vmem:[%s0 + $0x100] sm:$0xff]
  %v47 = vld [vmem:[%s0 + $0x108] sm:$0xff]
  %v48 = vld [vmem:[%s0 + $0x110] sm:$0xff]
  %v49 = vld [vmem:[%s0 + $0x118] sm:$0xff]
  %v50 = vld [vmem:[%s0 + $0x120] sm:$0xff]
  %v51 = vld [vmem:[%s0 + $0x128] sm:$0xff]
  %v52 = vld [vmem:[%s0 + $0x130] sm:$0xff]
  %v53 = vld [vmem:[%s0 + $0x138] sm:$0xff]
  %v54 = vld [vmem:[%s0 + $0x140] sm:$0xff]
  %v55 = vld [vmem:[%s0 + $0x148] sm:$0xff]
  %v56 = vld [vmem:[%s0 + $0x150] sm:$0xff]
  %v57 = vld [vmem:[%s0 + $0x158] sm:$0xff]
  %v58 = vld [vmem:[%s0 + $0x160] sm:$0xff]
  %v59 = vld [vmem:[%s0 + $0x168] sm:$0xff]
  %v60 = vld [vmem:[%s0 + $0x170] sm:$0xff]
  %v61 = vld [vmem:[%s0 + $0x178] sm:$0xff]
  %v62 = vld [vmem:[%s1] sm:$0xff]
  %v63 = vld [vmem:[%s1 + $0x8] sm:$0xff]
  %v64 = vld [vmem:[%s1 + $0x10] sm:$0xff]
  %v65 = vld [vmem:[%s1 + $0x18] sm:$0xff]
  %v66 = vld [vmem:[%s1 + $0x20] sm:$0xff]
  %v67 = vld [vmem:[%s1 + $0x28] sm:$0xff]
  %v68 = vld [vmem:[%s1 + $0x30] sm:$0xff]
  %v69 = vld [vmem:[%s1 + $0x38] sm:$0xff]
  %v70 = vld [vmem:[%s1 + $0x40] sm:$0xff]
  %v71 = vld [vmem:[%s1 + $0x48] sm:$0xff]
  %v72 = vld [vmem:[%s1 + $0x50] sm:$0xff]
  %v73 = vld [vmem:[%s1 + $0x58] sm:$0xff]
  %v74 = vld [vmem:[%s1 + $0x60] sm:$0xff]
  %v75 = vld [vmem:[%s1 + $0x68] sm:$0xff]
  %v76 = vld [vmem:[%s1 + $0x70] sm:$0xff]
  %v77 = vld [vmem:[%s1 + $0x78] sm:$0xff]
  %v78 = vld [vmem:[%s1 + $0x80] sm:$0xff]
  %v79 = vld [vmem:[%s1 + $0x88] sm:$0xff]
  %v80 = vld [vmem:[%s1 + $0x90] sm:$0xff]
  %v81 = vld [vmem:[%s1 + $0x98] sm:$0xff]
  %v82 = vld [vmem:[%s1 + $0xa0] sm:$0xff]
  %v83 = vld [vmem:[%s1 + $0xa8] sm:$0xff]
  %v84 = vld [vmem:[%s1 + $0xb0] sm:$0xff]
  %v85 = vld [vmem:[%s1 + $0xb8] sm:$0xff]
  %v86 = vld [vmem:[%s1 + $0xc0] sm:$0xff]
  %v87 = vld [vmem:[%s1 + $0xc8] sm:$0xff]
  %v88 = vld [vmem:[%s1 + $0xd0] sm:$0xff]
  %v89 = vld [vmem:[%s1 + $0xd8] sm:$0xff]
  %v90 = vld [vmem:[%s1 + $0xe0] sm:$0xff]
  %v91 = vld [vmem:[%s1 + $0xe8] sm:$0xff]
  %v92 = vld [vmem:[%s1 + $0xf0] sm:$0xff]
  %v93 = vld [vmem:[%s1 + $0xf8] sm:$0xff]
  %v94 = vld [vmem:[%s1 + $0x100] sm:$0xff]
  %v95 = vld [vmem:[%s1 + $0x108] sm:$0xff]
  %v96 = vld [vmem:[%s1 + $0x110] sm:$0xff]
  %v97 = vld [vmem:[%s1 + $0x118] sm:$0xff]
  %v98 = vld [vmem:[%s1 + $0x120] sm:$0xff]
  %v99 = vld [vmem:[%s1 + $0x128] sm:$0xff]
  %v100 = vld [vmem:[%s1 + $0x130] sm:$0xff]
  %v101 = vld [vmem:[%s1 + $0x138] sm:$0xff]
  %v102 = vld [vmem:[%s1 + $0x140] sm:$0xff]
  %v103 = vld [vmem:[%s1 + $0x148] sm:$0xff]
  %v104 = vld [vmem:[%s1 + $0x150] sm:$0xff]
  %v105 = vld [vmem:[%s1 + $0x158] sm:$0xff]
  %v106 = vld [vmem:[%s1 + $0x160] sm:$0xff]
  %v107 = vld [vmem:[%s1 + $0x168] sm:$0xff]
  %v108 = vld [vmem:[%s1 + $0x170] sm:$0xff]
  %v109 = vld [vmem:[%s1 + $0x178] sm:$0xff]
  %v110 = vld [vmem:[%s1 + $0x180] sm:$0xff]
  %v111 = vld [vmem:[%s1 + $0x188] sm:$0xff]
  %v112 = vld [vmem:[%s1 + $0x190] sm:$0xff]
  %v113 = vld [vmem:[%s1 + $0x198] sm:$0xff]
  %v114 = vld [vmem:[%s1 + $0x1a0] sm:$0xff]
  %v115 = vld [vmem:[%s1 + $0x1a8] sm:$0xff]
  %v116 = vld [vmem:[%s2] sm:$0x1]
  %v118 = vperm.slane %v116, 0
  %vm120 = vcmask 392192
  %v122 = vsel %vm120, %v17, 0
  %v125 = vsel %vm120, %v21, 0
  %v128 = vsel %vm120, %v25, 0
  %v131 = vsel %vm120, %v29, 0
  %v134 = vsel %vm120, %v33, 0
  %v137 = vsel %vm120, %v37, 0
  %v140 = vsel %vm120, %v41, 0
  %v143 = vsel %vm120, %v45, 0
  %v146 = vsel %vm120, %v49, 0
  %v149 = vsel %vm120, %v53, 0
  %v152 = vsel %vm120, %v57, 0
  %v155 = vsel %vm120, %v61, 0
  %157 = vmatpush.msra.mxu0 %v77
  %158 = vmatpush.msra.mxu0 %v76
  %159 = vmatpush.msra.mxu0 %v75
  %160 = vmatpush.msra.mxu0 %v74
  %161 = vmatpush.msra.mxu0 %v73
  %162 = vmatpush.msra.mxu0 %v72
  %163 = vmatpush.msra.mxu0 %v71
  %164 = vmatpush.msra.mxu0 %v70
  %165 = vmatpush.msra.mxu0 %v69
  %166 = vmatpush.msra.mxu0 %v68
  %167 = vmatpush.msra.mxu0 %v67
  %168 = vmatpush.msra.mxu0 %v66
  %169 = vmatpush.msra.mxu0 %v65
  %170 = vmatpush.msra.mxu0 %v64
  %171 = vmatpush.msra.mxu0 %v63
  %172 = vmatpush.msra.mxu0 %v62
  %173 = vmatmul.f32.gmra.mxu0 %v14
  %v174 = vpop.f32.mrf.mxu0
  %v175 = vadd.f32 %v118, %v174
  %176 = vmatmul.f32.gmra.mxu0 %v18
  %v177 = vpop.f32.mrf.mxu0
  %v178 = vadd.f32 %v118, %v177
  %179 = vmatmul.f32.gmra.mxu0 %v22
  %v180 = vpop.f32.mrf.mxu0
  %v181 = vadd.f32 %v118, %v180
  %182 = vmatmul.f32.gmra.mxu0 %v26
  %v183 = vpop.f32.mrf.mxu0
  %v184 = vadd.f32 %v118, %v183
  %185 = vmatmul.f32.gmra.mxu0 %v30
  %v186 = vpop.f32.mrf.mxu0
  %v187 = vadd.f32 %v118, %v186
  %188 = vmatmul.f32.gmra.mxu0 %v34
  %v189 = vpop.f32.mrf.mxu0
  %v190 = vadd.f32 %v118, %v189
  %191 = vmatmul.f32.gmra.mxu0 %v38
  %v192 = vpop.f32.mrf.mxu0
  %v193 = vadd.f32 %v118, %v192
  %194 = vmatmul.f32.gmra.mxu0 %v42
  %v195 = vpop.f32.mrf.mxu0
  %v196 = vadd.f32 %v118, %v195
  %197 = vmatmul.f32.gmra.mxu0 %v46
  %v198 = vpop.f32.mrf.mxu0
  %v199 = vadd.f32 %v118, %v198
  %200 = vmatmul.f32.gmra.mxu0 %v50
  %v201 = vpop.f32.mrf.mxu0
  %v202 = vadd.f32 %v118, %v201
  %203 = vmatmul.f32.gmra.mxu0 %v54
  %v204 = vpop.f32.mrf.mxu0
  %v205 = vadd.f32 %v118, %v204
  %206 = vmatmul.f32.gmra.mxu0 %v58
  %v207 = vpop.f32.mrf.mxu0
  %v208 = vadd.f32 %v118, %v207
  %209 = vdwg.mxu0
  %210 = vmatpush.msra.mxu0 %v93
  %211 = vmatpush.msra.mxu0 %v92
  %212 = vmatpush.msra.mxu0 %v91
  %213 = vmatpush.msra.mxu0 %v90
  %214 = vmatpush.msra.mxu0 %v89
  %215 = vmatpush.msra.mxu0 %v88
  %216 = vmatpush.msra.mxu0 %v87
  %217 = vmatpush.msra.mxu0 %v86
  %218 = vmatpush.msra.mxu0 %v85
  %219 = vmatpush.msra.mxu0 %v84
  %220 = vmatpush.msra.mxu0 %v83
  %221 = vmatpush.msra.mxu0 %v82
  %222 = vmatpush.msra.mxu0 %v81
  %223 = vmatpush.msra.mxu0 %v80
  %224 = vmatpush.msra.mxu0 %v79
  %225 = vmatpush.msra.mxu0 %v78
  %226 = vmatmul.f32.gmra.mxu0 %v15
  %v227 = vpop.f32.mrf.mxu0
  %v228 = vadd.f32 %v175, %v227
  %229 = vmatmul.f32.gmra.mxu0 %v19
  %v230 = vpop.f32.mrf.mxu0
  %v231 = vadd.f32 %v178, %v230
  %232 = vmatmul.f32.gmra.mxu0 %v23
  %v233 = vpop.f32.mrf.mxu0
  %v234 = vadd.f32 %v181, %v233
  %235 = vmatmul.f32.gmra.mxu0 %v27
  %v236 = vpop.f32.mrf.mxu0
  %v237 = vadd.f32 %v184, %v236
  %238 = vmatmul.f32.gmra.mxu0 %v31
  %v239 = vpop.f32.mrf.mxu0
  %v240 = vadd.f32 %v187, %v239
  %241 = vmatmul.f32.gmra.mxu0 %v35
  %v242 = vpop.f32.mrf.mxu0
  %v243 = vadd.f32 %v190, %v242
  %244 = vmatmul.f32.gmra.mxu0 %v39
  %v245 = vpop.f32.mrf.mxu0
  %v246 = vadd.f32 %v193, %v245
  %247 = vmatmul.f32.gmra.mxu0 %v43
  %v248 = vpop.f32.mrf.mxu0
  %v249 = vadd.f32 %v196, %v248
  %250 = vmatmul.f32.gmra.mxu0 %v47
  %v251 = vpop.f32.mrf.mxu0
  %v252 = vadd.f32 %v199, %v251
  %253 = vmatmul.f32.gmra.mxu0 %v51
  %v254 = vpop.f32.mrf.mxu0
  %v255 = vadd.f32 %v202, %v254
  %256 = vmatmul.f32.gmra.mxu0 %v55
  %v257 = vpop.f32.mrf.mxu0
  %v258 = vadd.f32 %v205, %v257
  %259 = vmatmul.f32.gmra.mxu0 %v59
  %v260 = vpop.f32.mrf.mxu0
  %v261 = vadd.f32 %v208, %v260
  %262 = vdwg.mxu0
  %263 = vmatpush.msra.mxu0 %v109
  %264 = vmatpush.msra.mxu0 %v108
  %265 = vmatpush.msra.mxu0 %v107
  %266 = vmatpush.msra.mxu0 %v106
  %267 = vmatpush.msra.mxu0 %v105
  %268 = vmatpush.msra.mxu0 %v104
  %269 = vmatpush.msra.mxu0 %v103
  %270 = vmatpush.msra.mxu0 %v102
  %271 = vmatpush.msra.mxu0 %v101
  %272 = vmatpush.msra.mxu0 %v100
  %273 = vmatpush.msra.mxu0 %v99
  %274 = vmatpush.msra.mxu0 %v98
  %275 = vmatpush.msra.mxu0 %v97
  %276 = vmatpush.msra.mxu0 %v96
  %277 = vmatpush.msra.mxu0 %v95
  %278 = vmatpush.msra.mxu0 %v94
  %279 = vmatmul.f32.gmra.mxu0 %v16
  %v280 = vpop.f32.mrf.mxu0
  %v281 = vadd.f32 %v228, %v280
  %282 = vmatmul.f32.gmra.mxu0 %v20
  %v283 = vpop.f32.mrf.mxu0
  %v284 = vadd.f32 %v231, %v283
  %285 = vmatmul.f32.gmra.mxu0 %v24
  %v286 = vpop.f32.mrf.mxu0
  %v287 = vadd.f32 %v234, %v286
  %288 = vmatmul.f32.gmra.mxu0 %v28
  %v289 = vpop.f32.mrf.mxu0
  %v290 = vadd.f32 %v237, %v289
  %291 = vmatmul.f32.gmra.mxu0 %v32
  %v292 = vpop.f32.mrf.mxu0
  %v293 = vadd.f32 %v240, %v292
  %294 = vmatmul.f32.gmra.mxu0 %v36
  %v295 = vpop.f32.mrf.mxu0
  %v296 = vadd.f32 %v243, %v295
  %297 = vmatmul.f32.gmra.mxu0 %v40
  %v298 = vpop.f32.mrf.mxu0
  %v299 = vadd.f32 %v246, %v298
  %300 = vmatmul.f32.gmra.mxu0 %v44
  %v301 = vpop.f32.mrf.mxu0
  %v302 = vadd.f32 %v249, %v301
  %303 = vmatmul.f32.gmra.mxu0 %v48
  %v304 = vpop.f32.mrf.mxu0
  %v305 = vadd.f32 %v252, %v304
  %306 = vmatmul.f32.gmra.mxu0 %v52
  %v307 = vpop.f32.mrf.mxu0
  %v308 = vadd.f32 %v255, %v307
  %309 = vmatmul.f32.gmra.mxu0 %v56
  %v310 = vpop.f32.mrf.mxu0
  %v311 = vadd.f32 %v258, %v310
  %312 = vmatmul.f32.gmra.mxu0 %v60
  %v313 = vpop.f32.mrf.mxu0
  %v314 = vadd.f32 %v261, %v313
  %315 = vdwg.mxu0
  %316 = vmatpush.msra.mxu0 0.0
  %317 = vmatpush.msra.mxu0 0.0
  %318 = vmatpush.msra.mxu0 0.0
  %319 = vmatpush.msra.mxu0 0.0
  %320 = vmatpush.msra.mxu0 0.0
  %321 = vmatpush.msra.mxu0 0.0
  %322 = vmatpush.msra.mxu0 0.0
  %323 = vmatpush.msra.mxu0 0.0
  %324 = vmatpush.msra.mxu0 0.0
  %325 = vmatpush.msra.mxu0 0.0
  %326 = vmatpush.msra.mxu0 %v115
  %327 = vmatpush.msra.mxu0 %v114
  %328 = vmatpush.msra.mxu0 %v113
  %329 = vmatpush.msra.mxu0 %v112
  %330 = vmatpush.msra.mxu0 %v111
  %331 = vmatpush.msra.mxu0 %v110
  %332 = vmatmul.f32.gmra.mxu0 %v122
  %v333 = vpop.f32.mrf.mxu0
  %v334 = vadd.f32 %v281, %v333
  %335 = vmatmul.f32.gmra.mxu0 %v125
  %v336 = vpop.f32.mrf.mxu0
  %v337 = vadd.f32 %v284, %v336
  %338 = vmatmul.f32.gmra.mxu0 %v128
  %v339 = vpop.f32.mrf.mxu0
  %v340 = vadd.f32 %v287, %v339
  %341 = vmatmul.f32.gmra.mxu0 %v131
  %v342 = vpop.f32.mrf.mxu0
  %v343 = vadd.f32 %v290, %v342
  %344 = vmatmul.f32.gmra.mxu0 %v134
  %v345 = vpop.f32.mrf.mxu0
  %v346 = vadd.f32 %v293, %v345
  %347 = vmatmul.f32.gmra.mxu0 %v137
  %v348 = vpop.f32.mrf.mxu0
  %v349 = vadd.f32 %v296, %v348
  %350 = vmatmul.f32.gmra.mxu0 %v140
  %v351 = vpop.f32.mrf.mxu0
  %v352 = vadd.f32 %v299, %v351
  %353 = vmatmul.f32.gmra.mxu0 %v143
  %v354 = vpop.f32.mrf.mxu0
  %v355 = vadd.f32 %v302, %v354
  %356 = vmatmul.f32.gmra.mxu0 %v146
  %v357 = vpop.f32.mrf.mxu0
  %v358 = vadd.f32 %v305, %v357
  %359 = vmatmul.f32.gmra.mxu0 %v149
  %v360 = vpop.f32.mrf.mxu0
  %v361 = vadd.f32 %v308, %v360
  %362 = vmatmul.f32.gmra.mxu0 %v152
  %v363 = vpop.f32.mrf.mxu0
  %v364 = vadd.f32 %v311, %v363
  %365 = vmatmul.f32.gmra.mxu0 %v155
  %v366 = vpop.f32.mrf.mxu0
  %v367 = vadd.f32 %v314, %v366
  %368 = vdwg.mxu0
  %v369 = vmax.f32 %v334, 0.0
  %v370 = vmax.f32 %v337, 0.0
  %v371 = vmax.f32 %v340, 0.0
  %v372 = vmax.f32 %v343, 0.0
  %v373 = vmax.f32 %v346, 0.0
  %v374 = vmax.f32 %v349, 0.0
  %v375 = vmax.f32 %v352, 0.0
  %v376 = vmax.f32 %v355, 0.0
  %v377 = vmax.f32 %v358, 0.0
  %v378 = vmax.f32 %v361, 0.0
  %v379 = vmax.f32 %v364, 0.0
  %v380 = vmax.f32 %v367, 0.0
  %vm381 = vcmask 523264
  %382 = vst.msk [vmem:[%s3] sm:$0xff] %vm381, %v369
  %383 = vst.msk [vmem:[%s3 + $0x8] sm:$0xff] %vm381, %v370
  %384 = vst.msk [vmem:[%s3 + $0x10] sm:$0xff] %vm381, %v371
  %385 = vst.msk [vmem:[%s3 + $0x18] sm:$0xff] %vm381, %v372
  %386 = vst.msk [vmem:[%s3 + $0x20] sm:$0xff] %vm381, %v373
  %387 = vst.msk [vmem:[%s3 + $0x28] sm:$0xff] %vm381, %v374
  %388 = vst.msk [vmem:[%s3 + $0x30] sm:$0xff] %vm381, %v375
  %389 = vst.msk [vmem:[%s3 + $0x38] sm:$0xff] %vm381, %v376
  %390 = vst.msk [vmem:[%s3 + $0x40] sm:$0xff] %vm381, %v377
  %391 = vst.msk [vmem:[%s3 + $0x48] sm:$0xff] %vm381, %v378
  %392 = vst.msk [vmem:[%s3 + $0x50] sm:$0xff] %vm381, %v379
  %393 = vst.msk [vmem:[%s3 + $0x58] sm:$0xff] %vm381, %v380
  // Predicated region
  $region14: #{nvidia_arch_forward.9} parent=0 // pred_check
    _
  $region15: #{nvidia_arch_forward.9} parent=0 // pred_check_branch
    %395 = sbr.rel (0) target = $region17
  $region16: #{nvidia_arch_forward.9} parent=0 // pred_region
    _
  $region17: #{nvidia_arch_forward.9} parent=0 // pred_fallthru
    _
  // Predicated region
  $region18: #{nvidia_arch_forward.9} parent=0 // pred_check
    _
  $region19: #{nvidia_arch_forward.9} parent=0 // pred_check_branch
    %397 = sbr.rel (0) target = $region21
  $region20: #{nvidia_arch_forward.9} parent=0 // pred_region
    _
  $region21: #{nvidia_arch_forward.9} parent=0 // pred_fallthru
    _

// kernel: nvidia_arch_forward.10
$region0: #{nvidia_arch_forward.10}
  #allocation0 [shape = 'u32[]', space=smem, size = 0x4, offset = 0x4, fixed_abs, tag = 'smem constant byte address 0x4 - core index']
  #allocation1 [shape = 'u32[72,128]{1,0:T(1,128)}', space=vmem, size = 0x9000, scoped, tag = 'internal scratch']
  %s0 = inlined_call_operand.vmem [shape: f32[40,576], index: 0, kind: input, shape index: {}]
  %s1 = inlined_call_operand.vmem [shape: f32[576,64], index: 1, kind: input, shape index: {}]
  %s2 = inlined_call_operand.vmem [shape: f32[1,64], index: 2, kind: input, shape index: {}]
  %s3 = inlined_call_operand.vmem [shape: f32[40,64], index: 3, kind: output, shape index: {}]
  %s4 = sld [smem:[#allocation0]]
  $region22: #{nvidia_arch_forward.10} parent=0
    _
  %s6 = ssub.s32 1, %s4
  %s7 = scalar_select 0, %s6, %s4
  // Predicated region
  $region2: #{nvidia_arch_forward.10} parent=0 // pred_check
    _
  $region3: #{nvidia_arch_forward.10} parent=0 // pred_check_branch
    %9 = sbr.rel (0) target = $region5
  $region4: #{nvidia_arch_forward.10} parent=0 // pred_region
    _
  $region5: #{nvidia_arch_forward.10} parent=0 // pred_fallthru
    _
  // Predicated region
  $region6: #{nvidia_arch_forward.10} parent=0 // pred_check
    _
  $region7: #{nvidia_arch_forward.10} parent=0 // pred_check_branch
    %11 = sbr.rel (0) target = $region9
  $region8: #{nvidia_arch_forward.10} parent=0 // pred_region
    _
  $region9: #{nvidia_arch_forward.10} parent=0 // pred_fallthru
    _
  // Predicated region
  $region10: #{nvidia_arch_forward.10} parent=0 // pred_check
    _
  $region11: #{nvidia_arch_forward.10} parent=0 // pred_check_branch
    %13 = sbr.rel (0) target = $region13
  $region12: #{nvidia_arch_forward.10} parent=0 // pred_region
    _
  $region13: #{nvidia_arch_forward.10} parent=0 // pred_fallthru
    _
  %v14 = vld [vmem:[%s0] sm:$0xff]
  %v15 = vld [vmem:[%s0 + $0x8] sm:$0xff]
  %v16 = vld [vmem:[%s0 + $0x10] sm:$0xff]
  %v17 = vld [vmem:[%s0 + $0x18] sm:$0xff]
  %v18 = vld [vmem:[%s0 + $0x20] sm:$0xff]
  %v19 = vld [vmem:[%s0 + $0x28] sm:$0xff]
  %v20 = vld [vmem:[%s0 + $0x30] sm:$0xff]
  %v21 = vld [vmem:[%s0 + $0x38] sm:$0xff]
  %v22 = vld [vmem:[%s0 + $0x40] sm:$0xff]
  %v23 = vld [vmem:[%s0 + $0x48] sm:$0xff]
  %v24 = vld [vmem:[%s0 + $0x50] sm:$0xff]
  %v25 = vld [vmem:[%s0 + $0x58] sm:$0xff]
  %v26 = vld [vmem:[%s0 + $0x60] sm:$0xff]
  %v27 = vld [vmem:[%s0 + $0x68] sm:$0xff]
  %v28 = vld [vmem:[%s0 + $0x70] sm:$0xff]
  %v29 = vld [vmem:[%s0 + $0x78] sm:$0xff]
  %v30 = vld [vmem:[%s0 + $0x80] sm:$0xff]
  %v31 = vld [vmem:[%s0 + $0x88] sm:$0xff]
  %v32 = vld [vmem:[%s0 + $0x90] sm:$0xff]
  %v33 = vld [vmem:[%s0 + $0x98] sm:$0xff]
  %v34 = vld [vmem:[%s0 + $0xa0] sm:$0xff]
  %v35 = vld [vmem:[%s0 + $0xa8] sm:$0xff]
  %v36 = vld [vmem:[%s0 + $0xb0] sm:$0xff]
  %v37 = vld [vmem:[%s0 + $0xb8] sm:$0xff]
  %v38 = vld [vmem:[%s0 + $0xc0] sm:$0xff]
  %v39 = vld [vmem:[%s1] sm:$0xff]
  %v40 = vld [vmem:[%s1 + $0x8] sm:$0xff]
  %v41 = vld [vmem:[%s1 + $0x10] sm:$0xff]
  %v42 = vld [vmem:[%s1 + $0x18] sm:$0xff]
  %v43 = vld [vmem:[%s1 + $0x20] sm:$0xff]
  %v44 = vld [vmem:[%s1 + $0x28] sm:$0xff]
  %v45 = vld [vmem:[%s1 + $0x30] sm:$0xff]
  %v46 = vld [vmem:[%s1 + $0x38] sm:$0xff]
  %v47 = vld [vmem:[%s1 + $0x40] sm:$0xff]
  %v48 = vld [vmem:[%s1 + $0x48] sm:$0xff]
  %v49 = vld [vmem:[%s1 + $0x50] sm:$0xff]
  %v50 = vld [vmem:[%s1 + $0x58] sm:$0xff]
  %v51 = vld [vmem:[%s1 + $0x60] sm:$0xff]
  %v52 = vld [vmem:[%s1 + $0x68] sm:$0xff]
  %v53 = vld [vmem:[%s1 + $0x70] sm:$0xff]
  %v54 = vld [vmem:[%s1 + $0x78] sm:$0xff]
  %v55 = vld [vmem:[%s1 + $0x80] sm:$0xff]
  %v56 = vld [vmem:[%s1 + $0x88] sm:$0xff]
  %v57 = vld [vmem:[%s1 + $0x90] sm:$0xff]
  %v58 = vld [vmem:[%s1 + $0x98] sm:$0xff]
  %v59 = vld [vmem:[%s1 + $0xa0] sm:$0xff]
  %v60 = vld [vmem:[%s1 + $0xa8] sm:$0xff]
  %v61 = vld [vmem:[%s1 + $0xb0] sm:$0xff]
  %v62 = vld [vmem:[%s1 + $0xb8] sm:$0xff]
  %v63 = vld [vmem:[%s1 + $0xc0] sm:$0xff]
  %v64 = vld [vmem:[%s1 + $0xc8] sm:$0xff]
  %v65 = vld [vmem:[%s1 + $0xd0] sm:$0xff]
  %v66 = vld [vmem:[%s1 + $0xd8] sm:$0xff]
  %v67 = vld [vmem:[%s1 + $0xe0] sm:$0xff]
  %v68 = vld [vmem:[%s1 + $0xe8] sm:$0xff]
  %v69 = vld [vmem:[%s1 + $0xf0] sm:$0xff]
  %v70 = vld [vmem:[%s1 + $0xf8] sm:$0xff]
  %v71 = vld [vmem:[%s1 + $0x100] sm:$0xff]
  %v72 = vld [vmem:[%s1 + $0x108] sm:$0xff]
  %v73 = vld [vmem:[%s1 + $0x110] sm:$0xff]
  %v74 = vld [vmem:[%s1 + $0x118] sm:$0xff]
  %v75 = vld [vmem:[%s1 + $0x120] sm:$0xff]
  %v76 = vld [vmem:[%s1 + $0x128] sm:$0xff]
  %v77 = vld [vmem:[%s1 + $0x130] sm:$0xff]
  %v78 = vld [vmem:[%s1 + $0x138] sm:$0xff]
  %v79 = vld [vmem:[%s1 + $0x140] sm:$0xff]
  %v80 = vld [vmem:[%s1 + $0x148] sm:$0xff]
  %v81 = vld [vmem:[%s1 + $0x150] sm:$0xff]
  %v82 = vld [vmem:[%s1 + $0x158] sm:$0xff]
  %v83 = vld [vmem:[%s1 + $0x160] sm:$0xff]
  %v84 = vld [vmem:[%s1 + $0x168] sm:$0xff]
  %v85 = vld [vmem:[%s1 + $0x170] sm:$0xff]
  %v86 = vld [vmem:[%s1 + $0x178] sm:$0xff]
  %v87 = vld [vmem:[%s1 + $0x180] sm:$0xff]
  %v88 = vld [vmem:[%s1 + $0x188] sm:$0xff]
  %v89 = vld [vmem:[%s1 + $0x190] sm:$0xff]
  %v90 = vld [vmem:[%s1 + $0x198] sm:$0xff]
  %v91 = vld [vmem:[%s1 + $0x1a0] sm:$0xff]
  %v92 = vld [vmem:[%s1 + $0x1a8] sm:$0xff]
  %v93 = vld [vmem:[%s1 + $0x1b0] sm:$0xff]
  %v94 = vld [vmem:[%s1 + $0x1b8] sm:$0xff]
  %v95 = vld [vmem:[%s1 + $0x1c0] sm:$0xff]
  %v96 = vld [vmem:[%s1 + $0x1c8] sm:$0xff]
  %v97 = vld [vmem:[%s1 + $0x1d0] sm:$0xff]
  %v98 = vld [vmem:[%s1 + $0x1d8] sm:$0xff]
  %v99 = vld [vmem:[%s1 + $0x1e0] sm:$0xff]
  %v100 = vld [vmem:[%s1 + $0x1e8] sm:$0xff]
  %v101 = vld [vmem:[%s1 + $0x1f0] sm:$0xff]
  %v102 = vld [vmem:[%s1 + $0x1f8] sm:$0xff]
  %v103 = vld [vmem:[%s1 + $0x200] sm:$0xff]
  %v104 = vld [vmem:[%s1 + $0x208] sm:$0xff]
  %v105 = vld [vmem:[%s1 + $0x210] sm:$0xff]
  %v106 = vld [vmem:[%s1 + $0x218] sm:$0xff]
  %v107 = vld [vmem:[%s1 + $0x220] sm:$0xff]
  %v108 = vld [vmem:[%s1 + $0x228] sm:$0xff]
  %v109 = vld [vmem:[%s1 + $0x230] sm:$0xff]
  %v110 = vld [vmem:[%s1 + $0x238] sm:$0xff]
  %v111 = vld [vmem:[%s2] sm:$0x1]
  %v113 = vperm.slane %v111, 0
  %vm115 = vcmask 523264
  %v117 = vsel %vm115, %v18, 0
  %v120 = vsel %vm115, %v23, 0
  %v123 = vsel %vm115, %v28, 0
  %v126 = vsel %vm115, %v33, 0
  %v129 = vsel %vm115, %v38, 0
  %131 = vmatpush.msra.mxu0 %v54
  %132 = vmatpush.msra.mxu0 %v53
  %133 = vmatpush.msra.mxu0 %v52
  %134 = vmatpush.msra.mxu0 %v51
  %135 = vmatpush.msra.mxu0 %v50
  %136 = vmatpush.msra.mxu0 %v49
  %137 = vmatpush.msra.mxu0 %v48
  %138 = vmatpush.msra.mxu0 %v47
  %139 = vmatpush.msra.mxu0 %v46
  %140 = vmatpush.msra.mxu0 %v45
  %141 = vmatpush.msra.mxu0 %v44
  %142 = vmatpush.msra.mxu0 %v43
  %143 = vmatpush.msra.mxu0 %v42
  %144 = vmatpush.msra.mxu0 %v41
  %145 = vmatpush.msra.mxu0 %v40
  %146 = vmatpush.msra.mxu0 %v39
  %147 = vmatmul.f32.gmra.mxu0 %v14
  %v148 = vpop.f32.mrf.mxu0
  %v149 = vadd.f32 %v113, %v148
  %150 = vmatmul.f32.gmra.mxu0 %v19
  %v151 = vpop.f32.mrf.mxu0
  %v152 = vadd.f32 %v113, %v151
  %153 = vmatmul.f32.gmra.mxu0 %v24
  %v154 = vpop.f32.mrf.mxu0
  %v155 = vadd.f32 %v113, %v154
  %156 = vmatmul.f32.gmra.mxu0 %v29
  %v157 = vpop.f32.mrf.mxu0
  %v158 = vadd.f32 %v113, %v157
  %159 = vmatmul.f32.gmra.mxu0 %v34
  %v160 = vpop.f32.mrf.mxu0
  %v161 = vadd.f32 %v113, %v160
  %162 = vdwg.mxu0
  %163 = vmatpush.msra.mxu0 %v70
  %164 = vmatpush.msra.mxu0 %v69
  %165 = vmatpush.msra.mxu0 %v68
  %166 = vmatpush.msra.mxu0 %v67
  %167 = vmatpush.msra.mxu0 %v66
  %168 = vmatpush.msra.mxu0 %v65
  %169 = vmatpush.msra.mxu0 %v64
  %170 = vmatpush.msra.mxu0 %v63
  %171 = vmatpush.msra.mxu0 %v62
  %172 = vmatpush.msra.mxu0 %v61
  %173 = vmatpush.msra.mxu0 %v60
  %174 = vmatpush.msra.mxu0 %v59
  %175 = vmatpush.msra.mxu0 %v58
  %176 = vmatpush.msra.mxu0 %v57
  %177 = vmatpush.msra.mxu0 %v56
  %178 = vmatpush.msra.mxu0 %v55
  %179 = vmatmul.f32.gmra.mxu0 %v15
  %v180 = vpop.f32.mrf.mxu0
  %v181 = vadd.f32 %v149, %v180
  %182 = vmatmul.f32.gmra.mxu0 %v20
  %v183 = vpop.f32.mrf.mxu0
  %v184 = vadd.f32 %v152, %v183
  %185 = vmatmul.f32.gmra.mxu0 %v25
  %v186 = vpop.f32.mrf.mxu0
  %v187 = vadd.f32 %v155, %v186
  %188 = vmatmul.f32.gmra.mxu0 %v30
  %v189 = vpop.f32.mrf.mxu0
  %v190 = vadd.f32 %v158, %v189
  %191 = vmatmul.f32.gmra.mxu0 %v35
  %v192 = vpop.f32.mrf.mxu0
  %v193 = vadd.f32 %v161, %v192
  %194 = vdwg.mxu0
  %195 = vmatpush.msra.mxu0 %v86
  %196 = vmatpush.msra.mxu0 %v85
  %197 = vmatpush.msra.mxu0 %v84
  %198 = vmatpush.msra.mxu0 %v83
  %199 = vmatpush.msra.mxu0 %v82
  %200 = vmatpush.msra.mxu0 %v81
  %201 = vmatpush.msra.mxu0 %v80
  %202 = vmatpush.msra.mxu0 %v79
  %203 = vmatpush.msra.mxu0 %v78
  %204 = vmatpush.msra.mxu0 %v77
  %205 = vmatpush.msra.mxu0 %v76
  %206 = vmatpush.msra.mxu0 %v75
  %207 = vmatpush.msra.mxu0 %v74
  %208 = vmatpush.msra.mxu0 %v73
  %209 = vmatpush.msra.mxu0 %v72
  %210 = vmatpush.msra.mxu0 %v71
  %211 = vmatmul.f32.gmra.mxu0 %v16
  %v212 = vpop.f32.mrf.mxu0
  %v213 = vadd.f32 %v181, %v212
  %214 = vmatmul.f32.gmra.mxu0 %v21
  %v215 = vpop.f32.mrf.mxu0
  %v216 = vadd.f32 %v184, %v215
  %217 = vmatmul.f32.gmra.mxu0 %v26
  %v218 = vpop.f32.mrf.mxu0
  %v219 = vadd.f32 %v187, %v218
  %220 = vmatmul.f32.gmra.mxu0 %v31
  %v221 = vpop.f32.mrf.mxu0
  %v222 = vadd.f32 %v190, %v221
  %223 = vmatmul.f32.gmra.mxu0 %v36
  %v224 = vpop.f32.mrf.mxu0
  %v225 = vadd.f32 %v193, %v224
  %226 = vdwg.mxu0
  %227 = vmatpush.msra.mxu0 %v102
  %228 = vmatpush.msra.mxu0 %v101
  %229 = vmatpush.msra.mxu0 %v100
  %230 = vmatpush.msra.mxu0 %v99
  %231 = vmatpush.msra.mxu0 %v98
  %232 = vmatpush.msra.mxu0 %v97
  %233 = vmatpush.msra.mxu0 %v96
  %234 = vmatpush.msra.mxu0 %v95
  %235 = vmatpush.msra.mxu0 %v94
  %236 = vmatpush.msra.mxu0 %v93
  %237 = vmatpush.msra.mxu0 %v92
  %238 = vmatpush.msra.mxu0 %v91
  %239 = vmatpush.msra.mxu0 %v90
  %240 = vmatpush.msra.mxu0 %v89
  %241 = vmatpush.msra.mxu0 %v88
  %242 = vmatpush.msra.mxu0 %v87
  %243 = vmatmul.f32.gmra.mxu0 %v17
  %v244 = vpop.f32.mrf.mxu0
  %v245 = vadd.f32 %v213, %v244
  %246 = vmatmul.f32.gmra.mxu0 %v22
  %v247 = vpop.f32.mrf.mxu0
  %v248 = vadd.f32 %v216, %v247
  %249 = vmatmul.f32.gmra.mxu0 %v27
  %v250 = vpop.f32.mrf.mxu0
  %v251 = vadd.f32 %v219, %v250
  %252 = vmatmul.f32.gmra.mxu0 %v32
  %v253 = vpop.f32.mrf.mxu0
  %v254 = vadd.f32 %v222, %v253
  %255 = vmatmul.f32.gmra.mxu0 %v37
  %v256 = vpop.f32.mrf.mxu0
  %v257 = vadd.f32 %v225, %v256
  %258 = vdwg.mxu0
  %259 = vmatpush.msra.mxu0 0.0
  %260 = vmatpush.msra.mxu0 0.0
  %261 = vmatpush.msra.mxu0 0.0
  %262 = vmatpush.msra.mxu0 0.0
  %263 = vmatpush.msra.mxu0 0.0
  %264 = vmatpush.msra.mxu0 0.0
  %265 = vmatpush.msra.mxu0 0.0
  %266 = vmatpush.msra.mxu0 0.0
  %267 = vmatpush.msra.mxu0 %v110
  %268 = vmatpush.msra.mxu0 %v109
  %269 = vmatpush.msra.mxu0 %v108
  %270 = vmatpush.msra.mxu0 %v107
  %271 = vmatpush.msra.mxu0 %v106
  %272 = vmatpush.msra.mxu0 %v105
  %273 = vmatpush.msra.mxu0 %v104
  %274 = vmatpush.msra.mxu0 %v103
  %275 = vmatmul.f32.gmra.mxu0 %v117
  %v276 = vpop.f32.mrf.mxu0
  %v277 = vadd.f32 %v245, %v276
  %278 = vmatmul.f32.gmra.mxu0 %v120
  %v279 = vpop.f32.mrf.mxu0
  %v280 = vadd.f32 %v248, %v279
  %281 = vmatmul.f32.gmra.mxu0 %v123
  %v282 = vpop.f32.mrf.mxu0
  %v283 = vadd.f32 %v251, %v282
  %284 = vmatmul.f32.gmra.mxu0 %v126
  %v285 = vpop.f32.mrf.mxu0
  %v286 = vadd.f32 %v254, %v285
  %287 = vmatmul.f32.gmra.mxu0 %v129
  %v288 = vpop.f32.mrf.mxu0
  %v289 = vadd.f32 %v257, %v288
  %290 = vdwg.mxu0
  %291 = vst.msk [vmem:[%s3] sm:$0xff] %vm115, %v277
  %292 = vst.msk [vmem:[%s3 + $0x8] sm:$0xff] %vm115, %v280
  %293 = vst.msk [vmem:[%s3 + $0x10] sm:$0xff] %vm115, %v283
  %294 = vst.msk [vmem:[%s3 + $0x18] sm:$0xff] %vm115, %v286
  %295 = vst.msk [vmem:[%s3 + $0x20] sm:$0xff] %vm115, %v289
  // Predicated region
  $region14: #{nvidia_arch_forward.10} parent=0 // pred_check
    _
  $region15: #{nvidia_arch_forward.10} parent=0 // pred_check_branch
    %297 = sbr.rel (0) target = $region17
  $region16: #{nvidia_arch_forward.10} parent=0 // pred_region
    _
  $region17: #{nvidia_arch_forward.10} parent=0 // pred_fallthru
    _
  // Predicated region
  $region18: #{nvidia_arch_forward.10} parent=0 // pred_check
    _
  $region19: #{nvidia_arch_forward.10} parent=0 // pred_check_branch
    %299 = sbr.rel (0) target = $region21
  $region20: #{nvidia_arch_forward.10} parent=0 // pred_region
    _
  $region21: #{nvidia_arch_forward.10} parent=0 // pred_fallthru
    _

// kernel: nvidia_arch_forward.11
$region0: #{nvidia_arch_forward.11}
  #allocation0 [shape = 'u32[]', space=smem, size = 0x4, offset = 0x4, fixed_abs, tag = 'smem constant byte address 0x4 - core index']
  #allocation1 [shape = 'u32[72,128]{1,0:T(1,128)}', space=vmem, size = 0x9000, scoped, tag = 'internal scratch']
  %s0 = inlined_call_operand.vmem [shape: f32[2,1280], index: 0, kind: input, shape index: {}]
  %s1 = inlined_call_operand.vmem [shape: f32[2,162], index: 1, kind: input, shape index: {}]
  %s2 = inlined_call_operand.vmem [shape: f32[2,12], index: 2, kind: input, shape index: {}]
  %s3 = inlined_call_operand.vmem [shape: f32[1280,100], index: 3, kind: input, shape index: {}]
  %s4 = inlined_call_operand.vmem [shape: f32[162,100], index: 4, kind: input, shape index: {}]
  %s5 = inlined_call_operand.vmem [shape: f32[12,100], index: 5, kind: input, shape index: {}]
  %s6 = inlined_call_operand.vmem [shape: f32[100,50], index: 6, kind: input, shape index: {}]
  %s7 = inlined_call_operand.vmem [shape: f32[50,10], index: 7, kind: input, shape index: {}]
  %s8 = inlined_call_operand.vmem [shape: f32[10,6], index: 8, kind: input, shape index: {}]
  %s9 = inlined_call_operand.hbm [shape: f32[2,6], index: 9, kind: output, shape index: {}]
  %s10 = sld [smem:[#allocation0]]
  $region46: #{nvidia_arch_forward.11} parent=0
    _
  %s12 = ssub.s32 1, %s10
  %s13 = scalar_select 0, %s12, %s10
  $region1: #{nvidia_arch_forward.11} parent=0
    #allocation2 [shape = 'u8[1024]{0}', space=vmem, size = 0x400, scoped, tag = 'output window, operand 0, single buffered']
    #allocation3 [shape = 's32[1]{0}', space=sflag, size = 0x4, scoped, tag = 'scoped memory for nvidia_arch_forward.11']
    %14 = vsyncpa [#allocation3], 0
    // Predicated region
    $region2: #{nvidia_arch_forward.11} parent=1 // pred_check
      _
    $region3: #{nvidia_arch_forward.11} parent=1 // pred_check_branch
      %16 = sbr.rel (0) target = $region5
    $region4: #{nvidia_arch_forward.11} parent=1 // pred_region
      _
    $region5: #{nvidia_arch_forward.11} parent=1 // pred_fallthru
      _
    // Predicated region
    $region6: #{nvidia_arch_forward.11} parent=1 // pred_check
      _
    $region7: #{nvidia_arch_forward.11} parent=1 // pred_check_branch
      %18 = sbr.rel (0) target = $region9
    $region8: #{nvidia_arch_forward.11} parent=1 // pred_region
      _
    $region9: #{nvidia_arch_forward.11} parent=1 // pred_fallthru
      _
    // Predicated region
    $region10: #{nvidia_arch_forward.11} parent=1 // pred_check
      _
    $region11: #{nvidia_arch_forward.11} parent=1 // pred_check_branch
      %20 = sbr.rel (0) target = $region13
    $region12: #{nvidia_arch_forward.11} parent=1 // pred_region
      _
    $region13: #{nvidia_arch_forward.11} parent=1 // pred_fallthru
      _
    // Predicated region
    $region14: #{nvidia_arch_forward.11} parent=1 // pred_check
      _
    $region15: #{nvidia_arch_forward.11} parent=1 // pred_check_branch
      %22 = sbr.rel (0) target = $region17
    $region16: #{nvidia_arch_forward.11} parent=1 // pred_region
      _
    $region17: #{nvidia_arch_forward.11} parent=1 // pred_fallthru
      _
    // Predicated region
    $region18: #{nvidia_arch_forward.11} parent=1 // pred_check
      _
    $region19: #{nvidia_arch_forward.11} parent=1 // pred_check_branch
      %24 = sbr.rel (0) target = $region21
    $region20: #{nvidia_arch_forward.11} parent=1 // pred_region
      _
    $region21: #{nvidia_arch_forward.11} parent=1 // pred_fallthru
      _
    // Predicated region
    $region22: #{nvidia_arch_forward.11} parent=1 // pred_check
      _
    $region23: #{nvidia_arch_forward.11} parent=1 // pred_check_branch
      %26 = sbr.rel (0) target = $region25
    $region24: #{nvidia_arch_forward.11} parent=1 // pred_region
      _
    $region25: #{nvidia_arch_forward.11} parent=1 // pred_fallthru
      _
    // Predicated region
    $region26: #{nvidia_arch_forward.11} parent=1 // pred_check
      _
    $region27: #{nvidia_arch_forward.11} parent=1 // pred_check_branch
      %28 = sbr.rel (0) target = $region29
    $region28: #{nvidia_arch_forward.11} parent=1 // pred_region
      _
    $region29: #{nvidia_arch_forward.11} parent=1 // pred_fallthru
      _
    // Predicated region
    $region30: #{nvidia_arch_forward.11} parent=1 // pred_check
      _
    $region31: #{nvidia_arch_forward.11} parent=1 // pred_check_branch
      %30 = sbr.rel (0) target = $region33
    $region32: #{nvidia_arch_forward.11} parent=1 // pred_region
      _
    $region33: #{nvidia_arch_forward.11} parent=1 // pred_fallthru
      _
    // Predicated region
    $region34: #{nvidia_arch_forward.11} parent=1 // pred_check
      _
    $region35: #{nvidia_arch_forward.11} parent=1 // pred_check_branch
      %32 = sbr.rel (0) target = $region37
    $region36: #{nvidia_arch_forward.11} parent=1 // pred_region
      _
    $region37: #{nvidia_arch_forward.11} parent=1 // pred_fallthru
      _
    %v33 = vld [vmem:[%s0] sm:$0xff]
    %v34 = vld [vmem:[%s0 + $0x8] sm:$0xff]
    %v35 = vld [vmem:[%s0 + $0x10] sm:$0xf]
    %v36 = vld [vmem:[%s3] sm:$0xff]
    %v37 = vld [vmem:[%s3 + $0x8] sm:$0xff]
    %v38 = vld [vmem:[%s3 + $0x10] sm:$0xff]
    %v39 = vld [vmem:[%s3 + $0x18] sm:$0xff]
    %v40 = vld [vmem:[%s3 + $0x20] sm:$0xff]
    %v41 = vld [vmem:[%s3 + $0x28] sm:$0xff]
    %v42 = vld [vmem:[%s3 + $0x30] sm:$0xff]
    %v43 = vld [vmem:[%s3 + $0x38] sm:$0xff]
    %v44 = vld [vmem:[%s3 + $0x40] sm:$0xff]
    %v45 = vld [vmem:[%s3 + $0x48] sm:$0xff]
    %v46 = vld [vmem:[%s3 + $0x50] sm:$0xff]
    %v47 = vld [vmem:[%s3 + $0x58] sm:$0xff]
    %v48 = vld [vmem:[%s3 + $0x60] sm:$0xff]
    %v49 = vld [vmem:[%s3 + $0x68] sm:$0xff]
    %v50 = vld [vmem:[%s3 + $0x70] sm:$0xff]
    %v51 = vld [vmem:[%s3 + $0x78] sm:$0xff]
    %v52 = vld [vmem:[%s3 + $0x80] sm:$0xff]
    %v53 = vld [vmem:[%s3 + $0x88] sm:$0xff]
    %v54 = vld [vmem:[%s3 + $0x90] sm:$0xff]
    %v55 = vld [vmem:[%s3 + $0x98] sm:$0xff]
    %v56 = vld [vmem:[%s3 + $0xa0] sm:$0xff]
    %v57 = vld [vmem:[%s3 + $0xa8] sm:$0xff]
    %v58 = vld [vmem:[%s3 + $0xb0] sm:$0xff]
    %v59 = vld [vmem:[%s3 + $0xb8] sm:$0xff]
    %v60 = vld [vmem:[%s3 + $0xc0] sm:$0xff]
    %v61 = vld [vmem:[%s3 + $0xc8] sm:$0xff]
    %v62 = vld [vmem:[%s3 + $0xd0] sm:$0xff]
    %v63 = vld [vmem:[%s3 + $0xd8] sm:$0xff]
    %v64 = vld [vmem:[%s3 + $0xe0] sm:$0xff]
    %v65 = vld [vmem:[%s3 + $0xe8] sm:$0xff]
    %v66 = vld [vmem:[%s3 + $0xf0] sm:$0xff]
    %v67 = vld [vmem:[%s3 + $0xf8] sm:$0xff]
    %v68 = vld [vmem:[%s3 + $0x100] sm:$0xff]
    %v69 = vld [vmem:[%s3 + $0x108] sm:$0xff]
    %v70 = vld [vmem:[%s3 + $0x110] sm:$0xff]
    %v71 = vld [vmem:[%s3 + $0x118] sm:$0xff]
    %v72 = vld [vmem:[%s3 + $0x120] sm:$0xff]
    %v73 = vld [vmem:[%s3 + $0x128] sm:$0xff]
    %v74 = vld [vmem:[%s3 + $0x130] sm:$0xff]
    %v75 = vld [vmem:[%s3 + $0x138] sm:$0xff]
    %v76 = vld [vmem:[%s3 + $0x140] sm:$0xff]
    %v77 = vld [vmem:[%s3 + $0x148] sm:$0xff]
    %v78 = vld [vmem:[%s3 + $0x150] sm:$0xff]
    %v79 = vld [vmem:[%s3 + $0x158] sm:$0xff]
    %v80 = vld [vmem:[%s3 + $0x160] sm:$0xff]
    %v81 = vld [vmem:[%s3 + $0x168] sm:$0xff]
    %v82 = vld [vmem:[%s3 + $0x170] sm:$0xff]
    %v83 = vld [vmem:[%s3 + $0x178] sm:$0xff]
    %v84 = vld [vmem:[%s3 + $0x180] sm:$0xff]
    %v85 = vld [vmem:[%s3 + $0x188] sm:$0xff]
    %v86 = vld [vmem:[%s3 + $0x190] sm:$0xff]
    %v87 = vld [vmem:[%s3 + $0x198] sm:$0xff]
    %v88 = vld [vmem:[%s3 + $0x1a0] sm:$0xff]
    %v89 = vld [vmem:[%s3 + $0x1a8] sm:$0xff]
    %v90 = vld [vmem:[%s3 + $0x1b0] sm:$0xff]
    %v91 = vld [vmem:[%s3 + $0x1b8] sm:$0xff]
    %v92 = vld [vmem:[%s3 + $0x1c0] sm:$0xff]
    %v93 = vld [vmem:[%s3 + $0x1c8] sm:$0xff]
    %v94 = vld [vmem:[%s3 + $0x1d0] sm:$0xff]
    %v95 = vld [vmem:[%s3 + $0x1d8] sm:$0xff]
    %v96 = vld [vmem:[%s3 + $0x1e0] sm:$0xff]
    %v97 = vld [vmem:[%s3 + $0x1e8] sm:$0xff]
    %v98 = vld [vmem:[%s3 + $0x1f0] sm:$0xff]
    %v99 = vld [vmem:[%s3 + $0x1f8] sm:$0xff]
    %v100 = vld [vmem:[%s3 + $0x200] sm:$0xff]
    %v101 = vld [vmem:[%s3 + $0x208] sm:$0xff]
    %v102 = vld [vmem:[%s3 + $0x210] sm:$0xff]
    %v103 = vld [vmem:[%s3 + $0x218] sm:$0xff]
    %v104 = vld [vmem:[%s3 + $0x220] sm:$0xff]
    %v105 = vld [vmem:[%s3 + $0x228] sm:$0xff]
    %v106 = vld [vmem:[%s3 + $0x230] sm:$0xff]
    %v107 = vld [vmem:[%s3 + $0x238] sm:$0xff]
    %v108 = vld [vmem:[%s3 + $0x240] sm:$0xff]
    %v109 = vld [vmem:[%s3 + $0x248] sm:$0xff]
    %v110 = vld [vmem:[%s3 + $0x250] sm:$0xff]
    %v111 = vld [vmem:[%s3 + $0x258] sm:$0xff]
    %v112 = vld [vmem:[%s3 + $0x260] sm:$0xff]
    %v113 = vld [vmem:[%s3 + $0x268] sm:$0xff]
    %v114 = vld [vmem:[%s3 + $0x270] sm:$0xff]
    %v115 = vld [vmem:[%s3 + $0x278] sm:$0xff]
    %v116 = vld [vmem:[%s3 + $0x280] sm:$0xff]
    %v117 = vld [vmem:[%s3 + $0x288] sm:$0xff]
    %v118 = vld [vmem:[%s3 + $0x290] sm:$0xff]
    %v119 = vld [vmem:[%s3 + $0x298] sm:$0xff]
    %v120 = vld [vmem:[%s3 + $0x2a0] sm:$0xff]
    %v121 = vld [vmem:[%s3 + $0x2a8] sm:$0xff]
    %v122 = vld [vmem:[%s3 + $0x2b0] sm:$0xff]
    %v123 = vld [vmem:[%s3 + $0x2b8] sm:$0xff]
    %v124 = vld [vmem:[%s3 + $0x2c0] sm:$0xff]
    %v125 = vld [vmem:[%s3 + $0x2c8] sm:$0xff]
    %v126 = vld [vmem:[%s3 + $0x2d0] sm:$0xff]
    %v127 = vld [vmem:[%s3 + $0x2d8] sm:$0xff]
    %v128 = vld [vmem:[%s3 + $0x2e0] sm:$0xff]
    %v129 = vld [vmem:[%s3 + $0x2e8] sm:$0xff]
    %v130 = vld [vmem:[%s3 + $0x2f0] sm:$0xff]
    %v131 = vld [vmem:[%s3 + $0x2f8] sm:$0xff]
    %v132 = vld [vmem:[%s3 + $0x300] sm:$0xff]
    %v133 = vld [vmem:[%s3 + $0x308] sm:$0xff]
    %v134 = vld [vmem:[%s3 + $0x310] sm:$0xff]
    %v135 = vld [vmem:[%s3 + $0x318] sm:$0xff]
    %v136 = vld [vmem:[%s3 + $0x320] sm:$0xff]
    %v137 = vld [vmem:[%s3 + $0x328] sm:$0xff]
    %v138 = vld [vmem:[%s3 + $0x330] sm:$0xff]
    %v139 = vld [vmem:[%s3 + $0x338] sm:$0xff]
    %v140 = vld [vmem:[%s3 + $0x340] sm:$0xff]
    %v141 = vld [vmem:[%s3 + $0x348] sm:$0xff]
    %v142 = vld [vmem:[%s3 + $0x350] sm:$0xff]
    %v143 = vld [vmem:[%s3 + $0x358] sm:$0xff]
    %v144 = vld [vmem:[%s3 + $0x360] sm:$0xff]
    %v145 = vld [vmem:[%s3 + $0x368] sm:$0xff]
    %v146 = vld [vmem:[%s3 + $0x370] sm:$0xff]
    %v147 = vld [vmem:[%s3 + $0x378] sm:$0xff]
    %v148 = vld [vmem:[%s3 + $0x380] sm:$0xff]
    %v149 = vld [vmem:[%s3 + $0x388] sm:$0xff]
    %v150 = vld [vmem:[%s3 + $0x390] sm:$0xff]
    %v151 = vld [vmem:[%s3 + $0x398] sm:$0xff]
    %v152 = vld [vmem:[%s3 + $0x3a0] sm:$0xff]
    %v153 = vld [vmem:[%s3 + $0x3a8] sm:$0xff]
    %v154 = vld [vmem:[%s3 + $0x3b0] sm:$0xff]
    %v155 = vld [vmem:[%s3 + $0x3b8] sm:$0xff]
    %v156 = vld [vmem:[%s3 + $0x3c0] sm:$0xff]
    %v157 = vld [vmem:[%s3 + $0x3c8] sm:$0xff]
    %v158 = vld [vmem:[%s3 + $0x3d0] sm:$0xff]
    %v159 = vld [vmem:[%s3 + $0x3d8] sm:$0xff]
    %v160 = vld [vmem:[%s3 + $0x3e0] sm:$0xff]
    %v161 = vld [vmem:[%s3 + $0x3e8] sm:$0xff]
    %v162 = vld [vmem:[%s3 + $0x3f0] sm:$0xff]
    %v163 = vld [vmem:[%s3 + $0x3f8] sm:$0xff]
    %v164 = vld [vmem:[%s3 + $0x400] sm:$0xff]
    %v165 = vld [vmem:[%s3 + $0x408] sm:$0xff]
    %v166 = vld [vmem:[%s3 + $0x410] sm:$0xff]
    %v167 = vld [vmem:[%s3 + $0x418] sm:$0xff]
    %v168 = vld [vmem:[%s3 + $0x420] sm:$0xff]
    %v169 = vld [vmem:[%s3 + $0x428] sm:$0xff]
    %v170 = vld [vmem:[%s3 + $0x430] sm:$0xff]
    %v171 = vld [vmem:[%s3 + $0x438] sm:$0xff]
    %v172 = vld [vmem:[%s3 + $0x440] sm:$0xff]
    %v173 = vld [vmem:[%s3 + $0x448] sm:$0xff]
    %v174 = vld [vmem:[%s3 + $0x450] sm:$0xff]
    %v175 = vld [vmem:[%s3 + $0x458] sm:$0xff]
    %v176 = vld [vmem:[%s3 + $0x460] sm:$0xff]
    %v177 = vld [vmem:[%s3 + $0x468] sm:$0xff]
    %v178 = vld [vmem:[%s3 + $0x470] sm:$0xff]
    %v179 = vld [vmem:[%s3 + $0x478] sm:$0xff]
    %v180 = vld [vmem:[%s3 + $0x480] sm:$0xff]
    %v181 = vld [vmem:[%s3 + $0x488] sm:$0xff]
    %v182 = vld [vmem:[%s3 + $0x490] sm:$0xff]
    %v183 = vld [vmem:[%s3 + $0x498] sm:$0xff]
    %v184 = vld [vmem:[%s3 + $0x4a0] sm:$0xff]
    %v185 = vld [vmem:[%s3 + $0x4a8] sm:$0xff]
    %v186 = vld [vmem:[%s3 + $0x4b0] sm:$0xff]
    %v187 = vld [vmem:[%s3 + $0x4b8] sm:$0xff]
    %v188 = vld [vmem:[%s3 + $0x4c0] sm:$0xff]
    %v189 = vld [vmem:[%s3 + $0x4c8] sm:$0xff]
    %v190 = vld [vmem:[%s3 + $0x4d0] sm:$0xff]
    %v191 = vld [vmem:[%s3 + $0x4d8] sm:$0xff]
    %v192 = vld [vmem:[%s3 + $0x4e0] sm:$0xff]
    %v193 = vld [vmem:[%s3 + $0x4e8] sm:$0xff]
    %v194 = vld [vmem:[%s3 + $0x4f0] sm:$0xff]
    %v195 = vld [vmem:[%s3 + $0x4f8] sm:$0xff]
    %v196 = vld [vmem:[%s1] sm:$0xf]
    %v197 = vld [vmem:[%s4] sm:$0xff]
    %v198 = vld [vmem:[%s4 + $0x8] sm:$0xff]
    %v199 = vld [vmem:[%s4 + $0x10] sm:$0xff]
    %v200 = vld [vmem:[%s4 + $0x18] sm:$0xff]
    %v201 = vld [vmem:[%s4 + $0x20] sm:$0xff]
    %v202 = vld [vmem:[%s4 + $0x28] sm:$0xff]
    %v203 = vld [vmem:[%s4 + $0x30] sm:$0xff]
    %v204 = vld [vmem:[%s4 + $0x38] sm:$0xff]
    %v205 = vld [vmem:[%s4 + $0x40] sm:$0xff]
    %v206 = vld [vmem:[%s4 + $0x48] sm:$0xff]
    %v207 = vld [vmem:[%s4 + $0x50] sm:$0xff]
    %v208 = vld [vmem:[%s4 + $0x58] sm:$0xff]
    %v209 = vld [vmem:[%s4 + $0x60] sm:$0xff]
    %v210 = vld [vmem:[%s4 + $0x68] sm:$0xff]
    %v211 = vld [vmem:[%s4 + $0x70] sm:$0xff]
    %v212 = vld [vmem:[%s4 + $0x78] sm:$0xff]
    %v213 = vld [vmem:[%s4 + $0x80] sm:$0xff]
    %v214 = vld [vmem:[%s4 + $0x88] sm:$0xff]
    %v215 = vld [vmem:[%s4 + $0x90] sm:$0xff]
    %v216 = vld [vmem:[%s4 + $0x98] sm:$0xff]
    %v217 = vld [vmem:[%s4 + $0xa0] sm:$0x3]
    %219 = vst [vmem:[#allocation1] ss:$4 sm:$0xff] %v196
    %v220 = vld.sshfl [vmem:[#allocation1] sm:$0xff pattern:$0x73625140]
    %v221 = vld.sshfl [vmem:[#allocation1 + $0x8] sm:$0xff pattern:$0x73625140]
    %vm223 = vcmask 277504
    %v224 = vsel %vm223, %v221, 0
    %vm226 = vcmask 1041408
    %v228 = vsel %vm226, %v217, 0
    %230 = vmatpush.msra.mxu0 %v212
    %231 = vmatpush.msra.mxu0 %v211
    %232 = vmatpush.msra.mxu0 %v210
    %233 = vmatpush.msra.mxu0 %v209
    %234 = vmatpush.msra.mxu0 %v208
    %235 = vmatpush.msra.mxu0 %v207
    %236 = vmatpush.msra.mxu0 %v206
    %237 = vmatpush.msra.mxu0 %v205
    %238 = vmatpush.msra.mxu0 %v204
    %239 = vmatpush.msra.mxu0 %v203
    %240 = vmatpush.msra.mxu0 %v202
    %241 = vmatpush.msra.mxu0 %v201
    %242 = vmatpush.msra.mxu0 %v200
    %243 = vmatpush.msra.mxu0 %v199
    %244 = vmatpush.msra.mxu0 %v198
    %245 = vmatpush.msra.mxu0 %v197
    %246 = vmatmul.f32.gmra.mxu0 %v220
    %v247 = vpop.f32.mrf.mxu0
    %v248 = vadd.f32 0.0, %v247
    %249 = vdwg.mxu0
    %250 = vmatpush.msra.mxu0 0.0
    %251 = vmatpush.msra.mxu0 0.0
    %252 = vmatpush.msra.mxu0 0.0
    %253 = vmatpush.msra.mxu0 0.0
    %254 = vmatpush.msra.mxu0 0.0
    %255 = vmatpush.msra.mxu0 0.0
    %256 = vmatpush.msra.mxu0 0.0
    %257 = vmatpush.msra.mxu0 0.0
    %258 = vmatpush.msra.mxu0 0.0
    %259 = vmatpush.msra.mxu0 0.0
    %260 = vmatpush.msra.mxu0 0.0
    %261 = vmatpush.msra.mxu0 %v228
    %262 = vmatpush.msra.mxu0 %v216
    %263 = vmatpush.msra.mxu0 %v215
    %264 = vmatpush.msra.mxu0 %v214
    %265 = vmatpush.msra.mxu0 %v213
    %266 = vmatmul.f32.gmra.mxu0 %v224
    %v267 = vpop.f32.mrf.mxu0
    %v268 = vadd.f32 %v248, %v267
    %269 = vdwg.mxu0
    %273 = vst [vmem:[#allocation1] ss:$4 sm:$0xff] %v33
    %s274 = scalar_lea.vmem [#allocation1], 32
    %275 = vst [vmem:[%s274] ss:$4 sm:$0xff] %v34
    %v276 = vld.sshfl [vmem:[#allocation1] sm:$0xff pattern:$0x73625140]
    %v277 = vld.sshfl [vmem:[#allocation1 + $0x8] sm:$0xff pattern:$0x73625140]
    %v278 = vld.sshfl [vmem:[#allocation1 + $0x10] sm:$0xff pattern:$0x73625140]
    %v279 = vld.sshfl [vmem:[#allocation1 + $0x18] sm:$0xff pattern:$0x73625140]
    %v280 = vld.sshfl [vmem:[#allocation1 + $0x20] sm:$0xff pattern:$0x73625140]
    %v281 = vld.sshfl [vmem:[#allocation1 + $0x28] sm:$0xff pattern:$0x73625140]
    %v282 = vld.sshfl [vmem:[#allocation1 + $0x30] sm:$0xff pattern:$0x73625140]
    %v283 = vld.sshfl [vmem:[#allocation1 + $0x38] sm:$0xff pattern:$0x73625140]
    %284 = vst [vmem:[#allocation1] ss:$4 sm:$0xff] %v35
    %v285 = vld.sshfl [vmem:[#allocation1] sm:$0xff pattern:$0x73625140]
    %v286 = vld.sshfl [vmem:[#allocation1 + $0x8] sm:$0xff pattern:$0x73625140]
    %297 = vmatpush.msra.mxu0 %v51
    %298 = vmatpush.msra.mxu0 %v50
    %299 = vmatpush.msra.mxu0 %v49
    %300 = vmatpush.msra.mxu0 %v48
    %301 = vmatpush.msra.mxu0 %v47
    %302 = vmatpush.msra.mxu0 %v46
    %303 = vmatpush.msra.mxu0 %v45
    %304 = vmatpush.msra.mxu0 %v44
    %305 = vmatpush.msra.mxu0 %v43
    %306 = vmatpush.msra.mxu0 %v42
    %307 = vmatpush.msra.mxu0 %v41
    %308 = vmatpush.msra.mxu0 %v40
    %309 = vmatpush.msra.mxu0 %v39
    %310 = vmatpush.msra.mxu0 %v38
    %311 = vmatpush.msra.mxu0 %v37
    %312 = vmatpush.msra.mxu0 %v36
    %313 = vmatmul.f32.gmra.mxu0 %v276
    %v314 = vpop.f32.mrf.mxu0
    %v315 = vadd.f32 %v268, %v314
    %316 = vdwg.mxu0
    %317 = vmatpush.msra.mxu0 %v67
    %318 = vmatpush.msra.mxu0 %v66
    %319 = vmatpush.msra.mxu0 %v65
    %320 = vmatpush.msra.mxu0 %v64
    %321 = vmatpush.msra.mxu0 %v63
    %322 = vmatpush.msra.mxu0 %v62
    %323 = vmatpush.msra.mxu0 %v61
    %324 = vmatpush.msra.mxu0 %v60
    %325 = vmatpush.msra.mxu0 %v59
    %326 = vmatpush.msra.mxu0 %v58
    %327 = vmatpush.msra.mxu0 %v57
    %328 = vmatpush.msra.mxu0 %v56
    %329 = vmatpush.msra.mxu0 %v55
    %330 = vmatpush.msra.mxu0 %v54
    %331 = vmatpush.msra.mxu0 %v53
    %332 = vmatpush.msra.mxu0 %v52
    %333 = vmatmul.f32.gmra.mxu0 %v277
    %v334 = vpop.f32.mrf.mxu0
    %v335 = vadd.f32 %v315, %v334
    %336 = vdwg.mxu0
    %337 = vmatpush.msra.mxu0 %v83
    %338 = vmatpush.msra.mxu0 %v82
    %339 = vmatpush.msra.mxu0 %v81
    %340 = vmatpush.msra.mxu0 %v80
    %341 = vmatpush.msra.mxu0 %v79
    %342 = vmatpush.msra.mxu0 %v78
    %343 = vmatpush.msra.mxu0 %v77
    %344 = vmatpush.msra.mxu0 %v76
    %345 = vmatpush.msra.mxu0 %v75
    %346 = vmatpush.msra.mxu0 %v74
    %347 = vmatpush.msra.mxu0 %v73
    %348 = vmatpush.msra.mxu0 %v72
    %349 = vmatpush.msra.mxu0 %v71
    %350 = vmatpush.msra.mxu0 %v70
    %351 = vmatpush.msra.mxu0 %v69
    %352 = vmatpush.msra.mxu0 %v68
    %353 = vmatmul.f32.gmra.mxu0 %v278
    %v354 = vpop.f32.mrf.mxu0
    %v355 = vadd.f32 %v335, %v354
    %356 = vdwg.mxu0
    %357 = vmatpush.msra.mxu0 %v99
    %358 = vmatpush.msra.mxu0 %v98
    %359 = vmatpush.msra.mxu0 %v97
    %360 = vmatpush.msra.mxu0 %v96
    %361 = vmatpush.msra.mxu0 %v95
    %362 = vmatpush.msra.mxu0 %v94
    %363 = vmatpush.msra.mxu0 %v93
    %364 = vmatpush.msra.mxu0 %v92
    %365 = vmatpush.msra.mxu0 %v91
    %366 = vmatpush.msra.mxu0 %v90
    %367 = vmatpush.msra.mxu0 %v89
    %368 = vmatpush.msra.mxu0 %v88
    %369 = vmatpush.msra.mxu0 %v87
    %370 = vmatpush.msra.mxu0 %v86
    %371 = vmatpush.msra.mxu0 %v85
    %372 = vmatpush.msra.mxu0 %v84
    %373 = vmatmul.f32.gmra.mxu0 %v279
    %v374 = vpop.f32.mrf.mxu0
    %v375 = vadd.f32 %v355, %v374
    %376 = vdwg.mxu0
    %377 = vmatpush.msra.mxu0 %v115
    %378 = vmatpush.msra.mxu0 %v114
    %379 = vmatpush.msra.mxu0 %v113
    %380 = vmatpush.msra.mxu0 %v112
    %381 = vmatpush.msra.mxu0 %v111
    %382 = vmatpush.msra.mxu0 %v110
    %383 = vmatpush.msra.mxu0 %v109
    %384 = vmatpush.msra.mxu0 %v108
    %385 = vmatpush.msra.mxu0 %v107
    %386 = vmatpush.msra.mxu0 %v106
    %387 = vmatpush.msra.mxu0 %v105
    %388 = vmatpush.msra.mxu0 %v104
    %389 = vmatpush.msra.mxu0 %v103
    %390 = vmatpush.msra.mxu0 %v102
    %391 = vmatpush.msra.mxu0 %v101
    %392 = vmatpush.msra.mxu0 %v100
    %393 = vmatmul.f32.gmra.mxu0 %v280
    %v394 = vpop.f32.mrf.mxu0
    %v395 = vadd.f32 %v375, %v394
    %396 = vdwg.mxu0
    %397 = vmatpush.msra.mxu0 %v131
    %398 = vmatpush.msra.mxu0 %v130
    %399 = vmatpush.msra.mxu0 %v129
    %400 = vmatpush.msra.mxu0 %v128
    %401 = vmatpush.msra.mxu0 %v127
    %402 = vmatpush.msra.mxu0 %v126
    %403 = vmatpush.msra.mxu0 %v125
    %404 = vmatpush.msra.mxu0 %v124
    %405 = vmatpush.msra.mxu0 %v123
    %406 = vmatpush.msra.mxu0 %v122
    %407 = vmatpush.msra.mxu0 %v121
    %408 = vmatpush.msra.mxu0 %v120
    %409 = vmatpush.msra.mxu0 %v119
    %410 = vmatpush.msra.mxu0 %v118
    %411 = vmatpush.msra.mxu0 %v117
    %412 = vmatpush.msra.mxu0 %v116
    %413 = vmatmul.f32.gmra.mxu0 %v281
    %v414 = vpop.f32.mrf.mxu0
    %v415 = vadd.f32 %v395, %v414
    %416 = vdwg.mxu0
    %417 = vmatpush.msra.mxu0 %v147
    %418 = vmatpush.msra.mxu0 %v146
    %419 = vmatpush.msra.mxu0 %v145
    %420 = vmatpush.msra.mxu0 %v144
    %421 = vmatpush.msra.mxu0 %v143
    %422 = vmatpush.msra.mxu0 %v142
    %423 = vmatpush.msra.mxu0 %v141
    %424 = vmatpush.msra.mxu0 %v140
    %425 = vmatpush.msra.mxu0 %v139
    %426 = vmatpush.msra.mxu0 %v138
    %427 = vmatpush.msra.mxu0 %v137
    %428 = vmatpush.msra.mxu0 %v136
    %429 = vmatpush.msra.mxu0 %v135
    %430 = vmatpush.msra.mxu0 %v134
    %431 = vmatpush.msra.mxu0 %v133
    %432 = vmatpush.msra.mxu0 %v132
    %433 = vmatmul.f32.gmra.mxu0 %v282
    %v434 = vpop.f32.mrf.mxu0
    %v435 = vadd.f32 %v415, %v434
    %436 = vdwg.mxu0
    %437 = vmatpush.msra.mxu0 %v163
    %438 = vmatpush.msra.mxu0 %v162
    %439 = vmatpush.msra.mxu0 %v161
    %440 = vmatpush.msra.mxu0 %v160
    %441 = vmatpush.msra.mxu0 %v159
    %442 = vmatpush.msra.mxu0 %v158
    %443 = vmatpush.msra.mxu0 %v157
    %444 = vmatpush.msra.mxu0 %v156
    %445 = vmatpush.msra.mxu0 %v155
    %446 = vmatpush.msra.mxu0 %v154
    %447 = vmatpush.msra.mxu0 %v153
    %448 = vmatpush.msra.mxu0 %v152
    %449 = vmatpush.msra.mxu0 %v151
    %450 = vmatpush.msra.mxu0 %v150
    %451 = vmatpush.msra.mxu0 %v149
    %452 = vmatpush.msra.mxu0 %v148
    %453 = vmatmul.f32.gmra.mxu0 %v283
    %v454 = vpop.f32.mrf.mxu0
    %v455 = vadd.f32 %v435, %v454
    %456 = vdwg.mxu0
    %457 = vmatpush.msra.mxu0 %v179
    %458 = vmatpush.msra.mxu0 %v178
    %459 = vmatpush.msra.mxu0 %v177
    %460 = vmatpush.msra.mxu0 %v176
    %461 = vmatpush.msra.mxu0 %v175
    %462 = vmatpush.msra.mxu0 %v174
    %463 = vmatpush.msra.mxu0 %v173
    %464 = vmatpush.msra.mxu0 %v172
    %465 = vmatpush.msra.mxu0 %v171
    %466 = vmatpush.msra.mxu0 %v170
    %467 = vmatpush.msra.mxu0 %v169
    %468 = vmatpush.msra.mxu0 %v168
    %469 = vmatpush.msra.mxu0 %v167
    %470 = vmatpush.msra.mxu0 %v166
    %471 = vmatpush.msra.mxu0 %v165
    %472 = vmatpush.msra.mxu0 %v164
    %473 = vmatmul.f32.gmra.mxu0 %v285
    %v474 = vpop.f32.mrf.mxu0
    %v475 = vadd.f32 %v455, %v474
    %476 = vdwg.mxu0
    %477 = vmatpush.msra.mxu0 %v195
    %478 = vmatpush.msra.mxu0 %v194
    %479 = vmatpush.msra.mxu0 %v193
    %480 = vmatpush.msra.mxu0 %v192
    %481 = vmatpush.msra.mxu0 %v191
    %482 = vmatpush.msra.mxu0 %v190
    %483 = vmatpush.msra.mxu0 %v189
    %484 = vmatpush.msra.mxu0 %v188
    %485 = vmatpush.msra.mxu0 %v187
    %486 = vmatpush.msra.mxu0 %v186
    %487 = vmatpush.msra.mxu0 %v185
    %488 = vmatpush.msra.mxu0 %v184
    %489 = vmatpush.msra.mxu0 %v183
    %490 = vmatpush.msra.mxu0 %v182
    %491 = vmatpush.msra.mxu0 %v181
    %492 = vmatpush.msra.mxu0 %v180
    %493 = vmatmul.f32.gmra.mxu0 %v286
    %v494 = vpop.f32.mrf.mxu0
    %v495 = vadd.f32 %v475, %v494
    %496 = vdwg.mxu0
    %v497 = vld [vmem:[%s2] sm:$0x3]
    %v498 = vld [vmem:[%s5] sm:$0xff]
    %v499 = vld [vmem:[%s5 + $0x8] sm:$0xf]
    %vm500 = vcmask 97280
    %v502 = vsel %vm500, %v497, 0
    %vm504 = vcmask 1043456
    %v506 = vsel %vm504, %v499, 0
    %508 = vmatpush.msra.mxu0 0.0
    %509 = vmatpush.msra.mxu0 0.0
    %510 = vmatpush.msra.mxu0 0.0
    %511 = vmatpush.msra.mxu0 0.0
    %512 = vmatpush.msra.mxu0 0.0
    %513 = vmatpush.msra.mxu0 0.0
    %514 = vmatpush.msra.mxu0 0.0
    %515 = vmatpush.msra.mxu0 0.0
    %516 = vmatpush.msra.mxu0 0.0
    %517 = vmatpush.msra.mxu0 0.0
    %518 = vmatpush.msra.mxu0 0.0
    %519 = vmatpush.msra.mxu0 0.0
    %520 = vmatpush.msra.mxu0 0.0
    %521 = vmatpush.msra.mxu0 0.0
    %522 = vmatpush.msra.mxu0 %v506
    %523 = vmatpush.msra.mxu0 %v498
    %524 = vmatmul.f32.gmra.mxu0 %v502
    %v525 = vpop.f32.mrf.mxu0
    %v526 = vadd.f32 0.0, %v525
    %527 = vdwg.mxu0
    %v528 = vadd.f32 %v495, %v526
    %v529 = vmax.f32 %v528, 0.0
    %v530 = vld [vmem:[%s6] sm:$0xff]
    %v531 = vld [vmem:[%s6 + $0x8] sm:$0xff]
    %v532 = vld [vmem:[%s6 + $0x10] sm:$0xff]
    %v533 = vld [vmem:[%s6 + $0x18] sm:$0xff]
    %v534 = vld [vmem:[%s6 + $0x20] sm:$0xff]
    %v535 = vld [vmem:[%s6 + $0x28] sm:$0xff]
    %v536 = vld [vmem:[%s6 + $0x30] sm:$0xff]
    %v537 = vld [vmem:[%s6 + $0x38] sm:$0xff]
    %v538 = vld [vmem:[%s6 + $0x40] sm:$0xff]
    %v539 = vld [vmem:[%s6 + $0x48] sm:$0xff]
    %v540 = vld [vmem:[%s6 + $0x50] sm:$0xff]
    %v541 = vld [vmem:[%s6 + $0x58] sm:$0xff]
    %v542 = vld [vmem:[%s6 + $0x60] sm:$0xf]
    %vm543 = vcmask 818176
    %v545 = vsel %vm543, %v529, 0
    %v548 = vsel %vm504, %v542, 0
    %550 = vmatpush.msra.mxu0 0.0
    %551 = vmatpush.msra.mxu0 0.0
    %552 = vmatpush.msra.mxu0 0.0
    %553 = vmatpush.msra.mxu0 %v548
    %554 = vmatpush.msra.mxu0 %v541
    %555 = vmatpush.msra.mxu0 %v540
    %556 = vmatpush.msra.mxu0 %v539
    %557 = vmatpush.msra.mxu0 %v538
    %558 = vmatpush.msra.mxu0 %v537
    %559 = vmatpush.msra.mxu0 %v536
    %560 = vmatpush.msra.mxu0 %v535
    %561 = vmatpush.msra.mxu0 %v534
    %562 = vmatpush.msra.mxu0 %v533
    %563 = vmatpush.msra.mxu0 %v532
    %564 = vmatpush.msra.mxu0 %v531
    %565 = vmatpush.msra.mxu0 %v530
    %566 = vmatmul.f32.gmra.mxu0 %v545
    %v567 = vpop.f32.mrf.mxu0
    %v568 = vadd.f32 0.0, %v567
    %569 = vdwg.mxu0
    %v570 = vmax.f32 %v568, 0.0
    %v571 = vld [vmem:[%s7] sm:$0xff]
    %v572 = vld [vmem:[%s7 + $0x8] sm:$0xff]
    %v573 = vld [vmem:[%s7 + $0x10] sm:$0xff]
    %v574 = vld [vmem:[%s7 + $0x18] sm:$0xff]
    %v575 = vld [vmem:[%s7 + $0x20] sm:$0xff]
    %v576 = vld [vmem:[%s7 + $0x28] sm:$0xff]
    %v577 = vld [vmem:[%s7 + $0x30] sm:$0x3]
    %vm578 = vcmask 408576
    %v580 = vsel %vm578, %v570, 0
    %v583 = vsel %vm226, %v577, 0
    %585 = vmatpush.msra.mxu0 0.0
    %586 = vmatpush.msra.mxu0 0.0
    %587 = vmatpush.msra.mxu0 0.0
    %588 = vmatpush.msra.mxu0 0.0
    %589 = vmatpush.msra.mxu0 0.0
    %590 = vmatpush.msra.mxu0 0.0
    %591 = vmatpush.msra.mxu0 0.0
    %592 = vmatpush.msra.mxu0 0.0
    %593 = vmatpush.msra.mxu0 0.0
    %594 = vmatpush.msra.mxu0 %v583
    %595 = vmatpush.msra.mxu0 %v576
    %596 = vmatpush.msra.mxu0 %v575
    %597 = vmatpush.msra.mxu0 %v574
    %598 = vmatpush.msra.mxu0 %v573
    %599 = vmatpush.msra.mxu0 %v572
    %600 = vmatpush.msra.mxu0 %v571
    %601 = vmatmul.f32.gmra.mxu0 %v580
    %v602 = vpop.f32.mrf.mxu0
    %v603 = vadd.f32 0.0, %v602
    %604 = vdwg.mxu0
    %v605 = vmax.f32 %v603, 0.0
    %v606 = vld [vmem:[%s8] sm:$0xff]
    %v607 = vld [vmem:[%s8 + $0x8] sm:$0x3]
    %vm608 = vcmask 80896
    %v610 = vsel %vm608, %v605, 0
    %v613 = vsel %vm226, %v607, 0
    %615 = vmatpush.msra.mxu0 0.0
    %616 = vmatpush.msra.mxu0 0.0
    %617 = vmatpush.msra.mxu0 0.0
    %618 = vmatpush.msra.mxu0 0.0
    %619 = vmatpush.msra.mxu0 0.0
    %620 = vmatpush.msra.mxu0 0.0
    %621 = vmatpush.msra.mxu0 0.0
    %622 = vmatpush.msra.mxu0 0.0
    %623 = vmatpush.msra.mxu0 0.0
    %624 = vmatpush.msra.mxu0 0.0
    %625 = vmatpush.msra.mxu0 0.0
    %626 = vmatpush.msra.mxu0 0.0
    %627 = vmatpush.msra.mxu0 0.0
    %628 = vmatpush.msra.mxu0 0.0
    %629 = vmatpush.msra.mxu0 %v613
    %630 = vmatpush.msra.mxu0 %v606
    %631 = vmatmul.f32.gmra.mxu0 %v610
    %v632 = vpop.f32.mrf.mxu0
    %v633 = vadd.f32 0.0, %v632
    %634 = vdwg.mxu0
    %vm635 = vcmask 41984
    %636 = vst.msk [vmem:[#allocation2] sm:$0x3] %vm635, %v633
    // Predicated region
    $region38: #{nvidia_arch_forward.11} parent=1 // pred_check
      _
    $region39: #{nvidia_arch_forward.11} parent=1 // pred_check_branch
      %638 = sbr.rel (0) target = $region41
    $region40: #{nvidia_arch_forward.11} parent=1 // pred_region
      %640 = vsyncadd [#allocation3], 0
      %s642 = sshll.u32 [#allocation2], 4
      %s643 = int_to_ptr.vmem [resolvable:$true] %s642
      %s644 = sshll.u32 %s9, 4
      %s645 = int_to_ptr.hbm [resolvable:$true] %s644
      %647 = dma.vmem_to_hbm [thread:$0]  %s643, 32, %s645, [#allocation3]
    $region41: #{nvidia_arch_forward.11} parent=1 // pred_fallthru
      _
    // Predicated region
    $region42: #{nvidia_arch_forward.11} parent=1 // pred_check
      _
    $region43: #{nvidia_arch_forward.11} parent=1 // pred_check_branch
      %649 = sbr.rel (0) target = $region45
    $region44: #{nvidia_arch_forward.11} parent=1 // pred_region
      %651 = dma.done [#allocation3], 32
    $region45: #{nvidia_arch_forward.11} parent=1 // pred_fallthru
      _
    %652 = vsyncpa [#allocation3], 1

</llo_original>
